<compile_context>
chip_gen: v5e
topology: v5e:2x2
jax: 0.10.0
libtpu: 0.0.40
codegen_flags: <defaults>
</compile_context>

<pallas_src>
import functools
import math

import numpy as np
import jax
import jax.numpy as jnp
from jax import lax
from jax.experimental import pallas as pl
from jax.experimental.pallas import tpu as pltpu

G = 4          # channel multiplier / pool size of the PRCN block
EPS = 1e-5     # BatchNorm eps (eval-mode BN folded to scale/bias)

# 3x3 SAME-conv taps: tap t = dh*3 + dw reads pixel (y+dh-1, x+dw-1).
_TAPS = [(dh, dw) for dh in range(3) for dw in range(3)]


def _tap(h, mask_ref, t, dh, dw, W):
    """Lane-shifted + border-masked copy of h (C, B*HW) for tap (dh, dw), bf16.

    out[:, p] = h[:, p + delta] inside the image, 0 at the image border.  The
    roll wraps over the whole B*HW lane axis, but every wrapped element is a
    border element and gets zeroed by the mask, so cross-image wrap is safe."""
    n = h.shape[-1]
    delta = (dh - 1) * W + (dw - 1)
    if delta == 0:
        return h.astype(jnp.bfloat16)
    rolled = pltpu.roll(h, (-delta) % n, axis=1)       # one XLU lane rotate
    return (rolled * mask_ref[t:t + 1, :]).astype(jnp.bfloat16)


def _prcn_kernel(x_ref, mask_ref, s1_ref, b1_ref, w1_ref,
                 s2_ref, b2_ref, w2_ref, s3_ref, b3_ref, wp_ref,
                 o_ref, *, W):
    xb = x_ref[...]                                    # (Cin, B*HW) f32, lane-dense
    Cin, n = xb.shape
    gG = wp_ref.shape[1]
    gr = gG // G
    keep = Cin - 2 * gr

    # ---- stage 1: BN1 -> ReLU -> 1x1 conv == one channel matmul on the MXU ----
    h1 = jnp.maximum(xb * s1_ref[...] + b1_ref[...], 0.0)
    out1 = jnp.dot(w1_ref[...], h1.astype(jnp.bfloat16),
                   preferred_element_type=jnp.float32)          # (interC, B*HW)

    # ---- stage 2: BN2 -> ReLU -> 3x3 conv; 9 taps fused into ONE matmul ----
    h2 = jnp.maximum(out1 * s2_ref[...] + b2_ref[...], 0.0)
    taps = [_tap(h2, mask_ref, t, dh, dw, W) for t, (dh, dw) in enumerate(_TAPS)]
    p2 = jnp.concatenate(taps, axis=0)                          # (9*interC, B*HW) bf16
    out_dc = jnp.dot(w2_ref[...], p2,
                     preferred_element_type=jnp.float32)        # (grp, B*HW); rows >= gr are 0

    # ---- stage 3: BN3 -> ReLU -> grouped 3x3 conv (dense-ified weights with the
    #      channel shuffle folded in) as 9 accumulating tap matmuls (no misaligned
    #      (9*gr, B*HW) concat; rows padded gr -> grp=8 keep everything tile-aligned)
    h3 = jnp.maximum(out_dc * s3_ref[...] + b3_ref[...], 0.0)   # (grp, B*HW)
    acc = jnp.zeros((gG, n), jnp.float32)
    for t, (dh, dw) in enumerate(_TAPS):
        tap = _tap(h3, mask_ref, t, dh, dw, W)                  # (grp, B*HW) bf16
        acc = acc + jnp.dot(wp_ref[t], tap,
                            preferred_element_type=jnp.float32)  # (gG, B*HW)

    # ---- channel shuffle + MaxPool3d((G,1,1)) == max over G contiguous row blocks ----
    pooled = acc[0:gr, :]
    for g in range(1, G):
        pooled = jnp.maximum(pooled, acc[g * gr:(g + 1) * gr, :])

    # ---- output: [pooled; out_dc; x[:keep]] via two row-sliced stores ----
    top = jnp.concatenate([pooled, out_dc[0:gr, :]], axis=0)    # (2*gr, B*HW)
    o_ref[0:2 * gr, :] = top.astype(o_ref.dtype)
    o_ref[2 * gr:Cin, :] = xb[0:keep, :].astype(o_ref.dtype)


def _border_masks(H, W, B):
    """(9, B*HW) f32 border masks for the 9 taps of a 3x3 SAME conv, tiled over
    B lane-concatenated images (mask depends only on p % HW)."""
    HW = H * W
    pp = np.arange(B * HW) % HW
    col = pp % W
    row = pp // W
    masks = np.ones((9, B * HW), np.float32)
    for dh in range(3):
        for dw in range(3):
            valid = ((col >= 1 - dw) & (col <= W - dw) &
                     (row >= 1 - dh) & (row <= H - dh))
            masks[dh * 3 + dw] = valid.astype(np.float32)
    return jnp.asarray(masks)


def _pick_batch_tile(N, target=8):
    """Largest power-of-two divisor of N up to `target`, keeping >= 2 grid steps
    when possible (both v7x TensorCores get work)."""
    b = math.gcd(N, target)
    while b > 1 and N // b < 2:
        b //= 2
    return b


def prcn_v7_bottleneck(x_nchw, p, *, batch_tile=None):
    """x_nchw: [N, Cin, H, W] float32. Returns [N, Cin, H, W] float32."""
    N, Cin, H, W = x_nchw.shape
    HW = H * W
    B = _pick_batch_tile(N) if batch_tile is None else batch_tile
    assert N % B == 0
    BHW = B * HW

    interC = p["w1t"].shape[0]
    grp = p["w2f"].shape[0]          # padded growth-rate rows (8)
    gG = p["wpf"].shape[1]

    # channel-major, lane-batched slab: (Cin, N*HW), images contiguous per channel
    x2d = x_nchw.reshape(N, Cin, HW).transpose(1, 0, 2).reshape(Cin, N * HW)
    masks = _border_masks(H, W, B)

    const2 = lambda n: (0, 0)
    out2d = pl.pallas_call(
        functools.partial(_prcn_kernel, W=W),
        out_shape=jax.ShapeDtypeStruct((Cin, N * HW), jnp.float32),
        grid=(N // B,),
        in_specs=[
            pl.BlockSpec((Cin, BHW), lambda n: (0, n)),     # x slab, lane-blocked
            pl.BlockSpec((9, BHW), const2),                 # border masks
            pl.BlockSpec((Cin, 1), const2),                 # s1
            pl.BlockSpec((Cin, 1), const2),                 # b1
            pl.BlockSpec((interC, Cin), const2),            # w1t
            pl.BlockSpec((interC, 1), const2),              # s2
            pl.BlockSpec((interC, 1), const2),              # b2
            pl.BlockSpec((grp, 9 * interC), const2),        # w2 (flattened, padded rows)
            pl.BlockSpec((grp, 1), const2),                 # s3 (padded)
            pl.BlockSpec((grp, 1), const2),                 # b3 (padded)
            pl.BlockSpec((9, gG, grp), lambda n: (0, 0, 0)),  # per-tap stage-3 weights
        ],
        out_specs=pl.BlockSpec((Cin, BHW), lambda n: (0, n)),
        compiler_params=pltpu.CompilerParams(
            dimension_semantics=("parallel",)),
    )(x2d, masks, p["s1"], p["b1"], p["w1t"], p["s2"], p["b2"], p["w2f"],
      p["s3"], p["b3"], p["wpf"])

    return out2d.reshape(Cin, N, HW).transpose(1, 0, 2).reshape(N, Cin, H, W)


def init_params(key, in_planes, growth_rate):
    interC = 4 * growth_rate
    gr = growth_rate
    gG = G * gr
    grp = ((gr + 7) // 8) * 8       # pad growth-rate rows to an f32 sublane tile
    ks = jax.random.split(key, 7)

    def bn_affine(k, c):
        kg, kb, km, kv = jax.random.split(k, 4)
        gamma = jax.random.uniform(kg, (c,), jnp.float32, 0.5, 1.5)
        beta = 0.1 * jax.random.normal(kb, (c,), dtype=jnp.float32)
        mean = 0.1 * jax.random.normal(km, (c,), dtype=jnp.float32)
        var = jax.random.uniform(kv, (c,), jnp.float32, 0.5, 1.5)
        s = gamma / jnp.sqrt(var + EPS)
        b = beta - mean * s
        return s, b

    s1, b1 = bn_affine(ks[0], in_planes)
    s2, b2 = bn_affine(ks[1], interC)
    s3, b3 = bn_affine(ks[2], gr)

    # conv weights, generated directly in HWIO-style layouts
    w1 = 0.1 * jax.random.normal(ks[3], (in_planes, interC), dtype=jnp.float32)
    w2 = 0.1 * jax.random.normal(ks[4], (3, 3, interC, gr), dtype=jnp.float32)
    wd = 0.1 * jax.random.normal(ks[5], (3, 3, 1, gG), dtype=jnp.float32)
    index = np.asarray(jax.random.permutation(ks[6], gG))   # fixed shuffle

    # dense-ify the grouped conv: output channel o reads input channel o // G
    wd_np = np.asarray(wd)
    wdense = np.zeros((3, 3, gr, gG), np.float32)
    for o in range(gG):
        wdense[:, :, o // G, o] = wd_np[:, :, 0, o]
    # fold channel shuffle + regroup group-major: kernel output row g*gr + r is
    # shuffled channel index[r*G + g]; MaxPool3d((G,1,1)) becomes a max over G
    # contiguous gr-row blocks of the matmul output.
    col_order = np.array([index[(j % gr) * G + (j // gr)] for j in range(gG)])
    wdp = wdense[:, :, :, col_order]                         # (3, 3, gr, gG)

    # per-tap stage-3 weights (9, gG, grp); padded input rows get zero weights
    wp = np.zeros((9, gG, grp), np.float32)
    for dh in range(3):
        for dw in range(3):
            wp[dh * 3 + dw, :, :gr] = wdp[dh, dw, :, :].T

    # stage-2 flattened weights (grp, 9*interC), zero-padded output rows
    w2f = np.zeros((grp, 9 * interC), np.float32)
    w2f[:gr, :] = np.asarray(w2).reshape(9 * interC, gr).T

    # padded BN3 affine (padded rows: scale=0, bias=0 -> relu(0) = 0)
    s3p = np.zeros((grp,), np.float32); s3p[:gr] = np.asarray(s3)
    b3p = np.zeros((grp,), np.float32); b3p[:gr] = np.asarray(b3)

    kernel_params = dict(
        s1=s1.reshape(-1, 1), b1=b1.reshape(-1, 1),
        s2=s2.reshape(-1, 1), b2=b2.reshape(-1, 1),
        s3=jnp.asarray(s3p).reshape(-1, 1), b3=jnp.asarray(b3p).reshape(-1, 1),
        # matmul weights as bf16 MXU operands
        w1t=jnp.asarray(np.asarray(w1).T, dtype=jnp.bfloat16),
        w2f=jnp.asarray(w2f, dtype=jnp.bfloat16),
        wpf=jnp.asarray(wp, dtype=jnp.bfloat16),
    )
    ref_params = dict(s1=s1, b1=b1, s2=s2, b2=b2, s3=s3, b3=b3,
                      w1=w1, w2=w2, wd=wd, index=jnp.asarray(index))
    return kernel_params, ref_params


def reference_nhwc(x, p, growth_rate):
    """Pure-JAX reference of the PyTorch forward (eval-mode BN), NHWC."""
    gr = growth_rate
    Cin = x.shape[-1]
    dn = ('NHWC', 'HWIO', 'NHWC')
    h1 = jnp.maximum(x * p['s1'] + p['b1'], 0.0)
    out1 = lax.conv_general_dilated(h1, p['w1'][None, None], (1, 1), 'VALID',
                                    dimension_numbers=dn)
    h2 = jnp.maximum(out1 * p['s2'] + p['b2'], 0.0)
    out_dc = lax.conv_general_dilated(h2, p['w2'], (1, 1), 'SAME',
                                      dimension_numbers=dn)
    h3 = jnp.maximum(out_dc * p['s3'] + p['b3'], 0.0)
    out_p = lax.conv_general_dilated(h3, p['wd'], (1, 1), 'SAME',
                                     dimension_numbers=dn,
                                     feature_group_count=gr)
    out_perm = out_p[..., p['index']]
    N, H, W, _ = x.shape
    pooled = out_perm.reshape(N, H, W, gr, G).max(axis=-1)
    return jnp.concatenate([pooled, out_dc, x[..., :Cin - 2 * gr]], axis=-1)


if __name__ == "__main__":
    in_planes, growth_rate = 16, 4        # requires in_planes >= 2*growth_rate
    N, H, W = 16, 16, 16                  # N=16 -> B=8 images per grid step, 2 steps

    key = jax.random.PRNGKey(0)
    kx, kp = jax.random.split(key)
    x_nchw = jax.random.normal(kx, (N, in_planes, H, W), dtype=jnp.float32)
    kernel_params, ref_params = init_params(kp, in_planes, growth_rate)

    out_nchw = jax.block_until_ready(prcn_v7_bottleneck(x_nchw, kernel_params))

    # verify against a pure-JAX f32 reference of the same (eval-mode BN) forward
    x_nhwc = jnp.transpose(x_nchw, (0, 2, 3, 1))
    ref_nchw = jnp.transpose(reference_nhwc(x_nhwc, ref_params, growth_rate),
                             (0, 3, 1, 2))
    err = float(jnp.max(jnp.abs(out_nchw - ref_nchw)))
    assert out_nchw.shape == (N, in_planes, H, W), out_nchw.shape
    # bf16 MXU operands (f32 accumulate) introduce ~1e-3-level drift vs f32 ref
    assert err < 2e-2, f"max abs error {err}"
    print("KERNEL_OK")
</pallas_src>

<mosaic_0001>
module attributes {stable_mosaic.version = 11 : i64} {
  func.func @_prcn_kernel(%arg0: i32, %arg1: memref<16x2048xf32, #tpu.memory_space<vmem>>, %arg2: memref<9x2048xf32, #tpu.memory_space<vmem>>, %arg3: memref<16x1xf32, #tpu.memory_space<vmem>>, %arg4: memref<16x1xf32, #tpu.memory_space<vmem>>, %arg5: memref<16x16xbf16, #tpu.memory_space<vmem>>, %arg6: memref<16x1xf32, #tpu.memory_space<vmem>>, %arg7: memref<16x1xf32, #tpu.memory_space<vmem>>, %arg8: memref<8x144xbf16, #tpu.memory_space<vmem>>, %arg9: memref<8x1xf32, #tpu.memory_space<vmem>>, %arg10: memref<8x1xf32, #tpu.memory_space<vmem>>, %arg11: memref<9x16x8xbf16, #tpu.memory_space<vmem>>, %arg12: memref<16x2048xf32, #tpu.memory_space<vmem>>) attributes {dimension_semantics = [#tpu.dimension_semantics<parallel>], iteration_bounds = array<i64: 2>, scalar_prefetch = 0 : i64, scratch_operands = 0 : i64, tpu.core_type = #tpu.core_type<tc>, window_params = [{transform_indices = @transform_0, window_bounds = array<i64: 16, 2048>}, {pipeline_mode = #tpu.pipeline_mode<synchronous>, transform_indices = @transform_1, window_bounds = array<i64: 9, 2048>}, {pipeline_mode = #tpu.pipeline_mode<synchronous>, transform_indices = @transform_2, window_bounds = array<i64: 16, 1>}, {pipeline_mode = #tpu.pipeline_mode<synchronous>, transform_indices = @transform_3, window_bounds = array<i64: 16, 1>}, {pipeline_mode = #tpu.pipeline_mode<synchronous>, transform_indices = @transform_4, window_bounds = array<i64: 16, 16>}, {pipeline_mode = #tpu.pipeline_mode<synchronous>, transform_indices = @transform_5, window_bounds = array<i64: 16, 1>}, {pipeline_mode = #tpu.pipeline_mode<synchronous>, transform_indices = @transform_6, window_bounds = array<i64: 16, 1>}, {pipeline_mode = #tpu.pipeline_mode<synchronous>, transform_indices = @transform_7, window_bounds = array<i64: 8, 144>}, {pipeline_mode = #tpu.pipeline_mode<synchronous>, transform_indices = @transform_8, window_bounds = array<i64: 8, 1>}, {pipeline_mode = #tpu.pipeline_mode<synchronous>, transform_indices = @transform_9, window_bounds = array<i64: 8, 1>}, {pipeline_mode = #tpu.pipeline_mode<synchronous>, transform_indices = @transform_10, window_bounds = array<i64: 9, 16, 8>}, {transform_indices = @transform_11, window_bounds = array<i64: 16, 2048>}]} {
    %c0 = arith.constant 0 : index
    %c0_0 = arith.constant 0 : index
    %0 = vector.load %arg1[%c0, %c0_0] : memref<16x2048xf32, #tpu.memory_space<vmem>>, vector<16x2048xf32>
    %c0_1 = arith.constant 0 : index
    %c0_2 = arith.constant 0 : index
    %1 = vector.load %arg3[%c0_1, %c0_2] : memref<16x1xf32, #tpu.memory_space<vmem>>, vector<16x1xf32>
    %2 = vector.broadcast %1 : vector<16x1xf32> to vector<16x2048xf32>
    %3 = arith.mulf %0, %2 : vector<16x2048xf32>
    %c0_3 = arith.constant 0 : index
    %c0_4 = arith.constant 0 : index
    %4 = vector.load %arg4[%c0_3, %c0_4] : memref<16x1xf32, #tpu.memory_space<vmem>>, vector<16x1xf32>
    %5 = vector.broadcast %4 : vector<16x1xf32> to vector<16x2048xf32>
    %6 = arith.addf %3, %5 : vector<16x2048xf32>
    %cst = arith.constant 0.000000e+00 : f32
    %7 = vector.broadcast %cst : f32 to vector<16x2048xf32>
    %8 = arith.maximumf %6, %7 : vector<16x2048xf32>
    %c0_5 = arith.constant 0 : index
    %c0_6 = arith.constant 0 : index
    %9 = vector.load %arg5[%c0_5, %c0_6] : memref<16x16xbf16, #tpu.memory_space<vmem>>, vector<16x16xbf16>
    %10 = arith.truncf %8 : vector<16x2048xf32> to vector<16x2048xbf16>
    %cst_7 = arith.constant dense<0.000000e+00> : vector<16x2048xf32>
    %11 = tpu.matmul %9, %10, %cst_7 {dimension_numbers = #tpu.dot_dimension_numbers<[1], [0], [0], [1], [0, 0, 1, 1], [], []>} : vector<16x16xbf16>, vector<16x2048xbf16>, vector<16x2048xf32> -> vector<16x2048xf32>
    %c0_8 = arith.constant 0 : index
    %c0_9 = arith.constant 0 : index
    %12 = vector.load %arg6[%c0_8, %c0_9] : memref<16x1xf32, #tpu.memory_space<vmem>>, vector<16x1xf32>
    %13 = vector.broadcast %12 : vector<16x1xf32> to vector<16x2048xf32>
    %14 = arith.mulf %11, %13 : vector<16x2048xf32>
    %c0_10 = arith.constant 0 : index
    %c0_11 = arith.constant 0 : index
    %15 = vector.load %arg7[%c0_10, %c0_11] : memref<16x1xf32, #tpu.memory_space<vmem>>, vector<16x1xf32>
    %16 = vector.broadcast %15 : vector<16x1xf32> to vector<16x2048xf32>
    %17 = arith.addf %14, %16 : vector<16x2048xf32>
    %cst_12 = arith.constant 0.000000e+00 : f32
    %18 = vector.broadcast %cst_12 : f32 to vector<16x2048xf32>
    %19 = arith.maximumf %17, %18 : vector<16x2048xf32>
    %c17_i32 = arith.constant 17 : i32
    %20 = tpu.dynamic_rotate %19 by %c17_i32 dim 1 : vector<16x2048xf32>, i32 -> vector<16x2048xf32>
    %c0_13 = arith.constant 0 : index
    %c0_14 = arith.constant 0 : index
    %21 = vector.load %arg2[%c0_13, %c0_14] : memref<9x2048xf32, #tpu.memory_space<vmem>>, vector<1x2048xf32>
    %22 = vector.broadcast %21 : vector<1x2048xf32> to vector<16x2048xf32>
    %23 = arith.mulf %20, %22 : vector<16x2048xf32>
    %24 = arith.truncf %23 : vector<16x2048xf32> to vector<16x2048xbf16>
    %c16_i32 = arith.constant 16 : i32
    %25 = tpu.dynamic_rotate %19 by %c16_i32 dim 1 : vector<16x2048xf32>, i32 -> vector<16x2048xf32>
    %c1 = arith.constant 1 : index
    %c0_15 = arith.constant 0 : index
    %26 = vector.load %arg2[%c1, %c0_15] : memref<9x2048xf32, #tpu.memory_space<vmem>>, vector<1x2048xf32>
    %27 = vector.broadcast %26 : vector<1x2048xf32> to vector<16x2048xf32>
    %28 = arith.mulf %25, %27 : vector<16x2048xf32>
    %29 = arith.truncf %28 : vector<16x2048xf32> to vector<16x2048xbf16>
    %c15_i32 = arith.constant 15 : i32
    %30 = tpu.dynamic_rotate %19 by %c15_i32 dim 1 : vector<16x2048xf32>, i32 -> vector<16x2048xf32>
    %c2 = arith.constant 2 : index
    %c0_16 = arith.constant 0 : index
    %31 = vector.load %arg2[%c2, %c0_16] : memref<9x2048xf32, #tpu.memory_space<vmem>>, vector<1x2048xf32>
    %32 = vector.broadcast %31 : vector<1x2048xf32> to vector<16x2048xf32>
    %33 = arith.mulf %30, %32 : vector<16x2048xf32>
    %34 = arith.truncf %33 : vector<16x2048xf32> to vector<16x2048xbf16>
    %c1_i32 = arith.constant 1 : i32
    %35 = tpu.dynamic_rotate %19 by %c1_i32 dim 1 : vector<16x2048xf32>, i32 -> vector<16x2048xf32>
    %c3 = arith.constant 3 : index
    %c0_17 = arith.constant 0 : index
    %36 = vector.load %arg2[%c3, %c0_17] : memref<9x2048xf32, #tpu.memory_space<vmem>>, vector<1x2048xf32>
    %37 = vector.broadcast %36 : vector<1x2048xf32> to vector<16x2048xf32>
    %38 = arith.mulf %35, %37 : vector<16x2048xf32>
    %39 = arith.truncf %38 : vector<16x2048xf32> to vector<16x2048xbf16>
    %40 = arith.truncf %19 : vector<16x2048xf32> to vector<16x2048xbf16>
    %c2047_i32 = arith.constant 2047 : i32
    %41 = tpu.dynamic_rotate %19 by %c2047_i32 dim 1 : vector<16x2048xf32>, i32 -> vector<16x2048xf32>
    %c5 = arith.constant 5 : index
    %c0_18 = arith.constant 0 : index
    %42 = vector.load %arg2[%c5, %c0_18] : memref<9x2048xf32, #tpu.memory_space<vmem>>, vector<1x2048xf32>
    %43 = vector.broadcast %42 : vector<1x2048xf32> to vector<16x2048xf32>
    %44 = arith.mulf %41, %43 : vector<16x2048xf32>
    %45 = arith.truncf %44 : vector<16x2048xf32> to vector<16x2048xbf16>
    %c2033_i32 = arith.constant 2033 : i32
    %46 = tpu.dynamic_rotate %19 by %c2033_i32 dim 1 : vector<16x2048xf32>, i32 -> vector<16x2048xf32>
    %c6 = arith.constant 6 : index
    %c0_19 = arith.constant 0 : index
    %47 = vector.load %arg2[%c6, %c0_19] : memref<9x2048xf32, #tpu.memory_space<vmem>>, vector<1x2048xf32>
    %48 = vector.broadcast %47 : vector<1x2048xf32> to vector<16x2048xf32>
    %49 = arith.mulf %46, %48 : vector<16x2048xf32>
    %50 = arith.truncf %49 : vector<16x2048xf32> to vector<16x2048xbf16>
    %c2032_i32 = arith.constant 2032 : i32
    %51 = tpu.dynamic_rotate %19 by %c2032_i32 dim 1 : vector<16x2048xf32>, i32 -> vector<16x2048xf32>
    %c7 = arith.constant 7 : index
    %c0_20 = arith.constant 0 : index
    %52 = vector.load %arg2[%c7, %c0_20] : memref<9x2048xf32, #tpu.memory_space<vmem>>, vector<1x2048xf32>
    %53 = vector.broadcast %52 : vector<1x2048xf32> to vector<16x2048xf32>
    %54 = arith.mulf %51, %53 : vector<16x2048xf32>
    %55 = arith.truncf %54 : vector<16x2048xf32> to vector<16x2048xbf16>
    %c2031_i32 = arith.constant 2031 : i32
    %56 = tpu.dynamic_rotate %19 by %c2031_i32 dim 1 : vector<16x2048xf32>, i32 -> vector<16x2048xf32>
    %c8 = arith.constant 8 : index
    %c0_21 = arith.constant 0 : index
    %57 = vector.load %arg2[%c8, %c0_21] : memref<9x2048xf32, #tpu.memory_space<vmem>>, vector<1x2048xf32>
    %58 = vector.broadcast %57 : vector<1x2048xf32> to vector<16x2048xf32>
    %59 = arith.mulf %56, %58 : vector<16x2048xf32>
    %60 = arith.truncf %59 : vector<16x2048xf32> to vector<16x2048xbf16>
    %61 = tpu.concatenate %24, %29, %34, %39, %40, %45, %50, %55, %60 in 0 : vector<16x2048xbf16>, vector<16x2048xbf16>, vector<16x2048xbf16>, vector<16x2048xbf16>, vector<16x2048xbf16>, vector<16x2048xbf16>, vector<16x2048xbf16>, vector<16x2048xbf16>, vector<16x2048xbf16> -> vector<144x2048xbf16>
    %c0_22 = arith.constant 0 : index
    %c0_23 = arith.constant 0 : index
    %62 = vector.load %arg8[%c0_22, %c0_23] : memref<8x144xbf16, #tpu.memory_space<vmem>>, vector<8x144xbf16>
    %cst_24 = arith.constant dense<0.000000e+00> : vector<8x2048xf32>
    %63 = tpu.matmul %62, %61, %cst_24 {dimension_numbers = #tpu.dot_dimension_numbers<[1], [0], [0], [1], [0, 0, 1, 1], [], []>} : vector<8x144xbf16>, vector<144x2048xbf16>, vector<8x2048xf32> -> vector<8x2048xf32>
    %c0_25 = arith.constant 0 : index
    %c0_26 = arith.constant 0 : index
    %64 = vector.load %arg9[%c0_25, %c0_26] : memref<8x1xf32, #tpu.memory_space<vmem>>, vector<8x1xf32>
    %65 = vector.broadcast %64 : vector<8x1xf32> to vector<8x2048xf32>
    %66 = arith.mulf %63, %65 : vector<8x2048xf32>
    %c0_27 = arith.constant 0 : index
    %c0_28 = arith.constant 0 : index
    %67 = vector.load %arg10[%c0_27, %c0_28] : memref<8x1xf32, #tpu.memory_space<vmem>>, vector<8x1xf32>
    %68 = vector.broadcast %67 : vector<8x1xf32> to vector<8x2048xf32>
    %69 = arith.addf %66, %68 : vector<8x2048xf32>
    %cst_29 = arith.constant 0.000000e+00 : f32
    %70 = vector.broadcast %cst_29 : f32 to vector<8x2048xf32>
    %71 = arith.maximumf %69, %70 : vector<8x2048xf32>
    %cst_30 = arith.constant 0.000000e+00 : f32
    %72 = vector.broadcast %cst_30 : f32 to vector<16x2048xf32>
    %c17_i32_31 = arith.constant 17 : i32
    %73 = tpu.dynamic_rotate %71 by %c17_i32_31 dim 1 : vector<8x2048xf32>, i32 -> vector<8x2048xf32>
    %c0_32 = arith.constant 0 : index
    %c0_33 = arith.constant 0 : index
    %74 = vector.load %arg2[%c0_32, %c0_33] : memref<9x2048xf32, #tpu.memory_space<vmem>>, vector<1x2048xf32>
    %75 = vector.broadcast %74 : vector<1x2048xf32> to vector<8x2048xf32>
    %76 = arith.mulf %73, %75 : vector<8x2048xf32>
    %77 = arith.truncf %76 : vector<8x2048xf32> to vector<8x2048xbf16>
    %c0_34 = arith.constant 0 : index
    %c0_35 = arith.constant 0 : index
    %c0_36 = arith.constant 0 : index
    %78 = vector.load %arg11[%c0_34, %c0_35, %c0_36] : memref<9x16x8xbf16, #tpu.memory_space<vmem>>, vector<1x16x8xbf16>
    %79 = vector.shape_cast %78 : vector<1x16x8xbf16> to vector<16x8xbf16>
    %cst_37 = arith.constant dense<0.000000e+00> : vector<16x2048xf32>
    %80 = tpu.matmul %79, %77, %cst_37 {dimension_numbers = #tpu.dot_dimension_numbers<[1], [0], [0], [1], [0, 0, 1, 1], [], []>} : vector<16x8xbf16>, vector<8x2048xbf16>, vector<16x2048xf32> -> vector<16x2048xf32>
    %81 = arith.addf %72, %80 : vector<16x2048xf32>
    %c16_i32_38 = arith.constant 16 : i32
    %82 = tpu.dynamic_rotate %71 by %c16_i32_38 dim 1 : vector<8x2048xf32>, i32 -> vector<8x2048xf32>
    %c1_39 = arith.constant 1 : index
    %c0_40 = arith.constant 0 : index
    %83 = vector.load %arg2[%c1_39, %c0_40] : memref<9x2048xf32, #tpu.memory_space<vmem>>, vector<1x2048xf32>
    %84 = vector.broadcast %83 : vector<1x2048xf32> to vector<8x2048xf32>
    %85 = arith.mulf %82, %84 : vector<8x2048xf32>
    %86 = arith.truncf %85 : vector<8x2048xf32> to vector<8x2048xbf16>
    %c1_41 = arith.constant 1 : index
    %c0_42 = arith.constant 0 : index
    %c0_43 = arith.constant 0 : index
    %87 = vector.load %arg11[%c1_41, %c0_42, %c0_43] : memref<9x16x8xbf16, #tpu.memory_space<vmem>>, vector<1x16x8xbf16>
    %88 = vector.shape_cast %87 : vector<1x16x8xbf16> to vector<16x8xbf16>
    %cst_44 = arith.constant dense<0.000000e+00> : vector<16x2048xf32>
    %89 = tpu.matmul %88, %86, %cst_44 {dimension_numbers = #tpu.dot_dimension_numbers<[1], [0], [0], [1], [0, 0, 1, 1], [], []>} : vector<16x8xbf16>, vector<8x2048xbf16>, vector<16x2048xf32> -> vector<16x2048xf32>
    %90 = arith.addf %81, %89 : vector<16x2048xf32>
    %c15_i32_45 = arith.constant 15 : i32
    %91 = tpu.dynamic_rotate %71 by %c15_i32_45 dim 1 : vector<8x2048xf32>, i32 -> vector<8x2048xf32>
    %c2_46 = arith.constant 2 : index
    %c0_47 = arith.constant 0 : index
    %92 = vector.load %arg2[%c2_46, %c0_47] : memref<9x2048xf32, #tpu.memory_space<vmem>>, vector<1x2048xf32>
    %93 = vector.broadcast %92 : vector<1x2048xf32> to vector<8x2048xf32>
    %94 = arith.mulf %91, %93 : vector<8x2048xf32>
    %95 = arith.truncf %94 : vector<8x2048xf32> to vector<8x2048xbf16>
    %c2_48 = arith.constant 2 : index
    %c0_49 = arith.constant 0 : index
    %c0_50 = arith.constant 0 : index
    %96 = vector.load %arg11[%c2_48, %c0_49, %c0_50] : memref<9x16x8xbf16, #tpu.memory_space<vmem>>, vector<1x16x8xbf16>
    %97 = vector.shape_cast %96 : vector<1x16x8xbf16> to vector<16x8xbf16>
    %cst_51 = arith.constant dense<0.000000e+00> : vector<16x2048xf32>
    %98 = tpu.matmul %97, %95, %cst_51 {dimension_numbers = #tpu.dot_dimension_numbers<[1], [0], [0], [1], [0, 0, 1, 1], [], []>} : vector<16x8xbf16>, vector<8x2048xbf16>, vector<16x2048xf32> -> vector<16x2048xf32>
    %99 = arith.addf %90, %98 : vector<16x2048xf32>
    %c1_i32_52 = arith.constant 1 : i32
    %100 = tpu.dynamic_rotate %71 by %c1_i32_52 dim 1 : vector<8x2048xf32>, i32 -> vector<8x2048xf32>
    %c3_53 = arith.constant 3 : index
    %c0_54 = arith.constant 0 : index
    %101 = vector.load %arg2[%c3_53, %c0_54] : memref<9x2048xf32, #tpu.memory_space<vmem>>, vector<1x2048xf32>
    %102 = vector.broadcast %101 : vector<1x2048xf32> to vector<8x2048xf32>
    %103 = arith.mulf %100, %102 : vector<8x2048xf32>
    %104 = arith.truncf %103 : vector<8x2048xf32> to vector<8x2048xbf16>
    %c3_55 = arith.constant 3 : index
    %c0_56 = arith.constant 0 : index
    %c0_57 = arith.constant 0 : index
    %105 = vector.load %arg11[%c3_55, %c0_56, %c0_57] : memref<9x16x8xbf16, #tpu.memory_space<vmem>>, vector<1x16x8xbf16>
    %106 = vector.shape_cast %105 : vector<1x16x8xbf16> to vector<16x8xbf16>
    %cst_58 = arith.constant dense<0.000000e+00> : vector<16x2048xf32>
    %107 = tpu.matmul %106, %104, %cst_58 {dimension_numbers = #tpu.dot_dimension_numbers<[1], [0], [0], [1], [0, 0, 1, 1], [], []>} : vector<16x8xbf16>, vector<8x2048xbf16>, vector<16x2048xf32> -> vector<16x2048xf32>
    %108 = arith.addf %99, %107 : vector<16x2048xf32>
    %109 = arith.truncf %71 : vector<8x2048xf32> to vector<8x2048xbf16>
    %c4 = arith.constant 4 : index
    %c0_59 = arith.constant 0 : index
    %c0_60 = arith.constant 0 : index
    %110 = vector.load %arg11[%c4, %c0_59, %c0_60] : memref<9x16x8xbf16, #tpu.memory_space<vmem>>, vector<1x16x8xbf16>
    %111 = vector.shape_cast %110 : vector<1x16x8xbf16> to vector<16x8xbf16>
    %cst_61 = arith.constant dense<0.000000e+00> : vector<16x2048xf32>
    %112 = tpu.matmul %111, %109, %cst_61 {dimension_numbers = #tpu.dot_dimension_numbers<[1], [0], [0], [1], [0, 0, 1, 1], [], []>} : vector<16x8xbf16>, vector<8x2048xbf16>, vector<16x2048xf32> -> vector<16x2048xf32>
    %113 = arith.addf %108, %112 : vector<16x2048xf32>
    %c2047_i32_62 = arith.constant 2047 : i32
    %114 = tpu.dynamic_rotate %71 by %c2047_i32_62 dim 1 : vector<8x2048xf32>, i32 -> vector<8x2048xf32>
    %c5_63 = arith.constant 5 : index
    %c0_64 = arith.constant 0 : index
    %115 = vector.load %arg2[%c5_63, %c0_64] : memref<9x2048xf32, #tpu.memory_space<vmem>>, vector<1x2048xf32>
    %116 = vector.broadcast %115 : vector<1x2048xf32> to vector<8x2048xf32>
    %117 = arith.mulf %114, %116 : vector<8x2048xf32>
    %118 = arith.truncf %117 : vector<8x2048xf32> to vector<8x2048xbf16>
    %c5_65 = arith.constant 5 : index
    %c0_66 = arith.constant 0 : index
    %c0_67 = arith.constant 0 : index
    %119 = vector.load %arg11[%c5_65, %c0_66, %c0_67] : memref<9x16x8xbf16, #tpu.memory_space<vmem>>, vector<1x16x8xbf16>
    %120 = vector.shape_cast %119 : vector<1x16x8xbf16> to vector<16x8xbf16>
    %cst_68 = arith.constant dense<0.000000e+00> : vector<16x2048xf32>
    %121 = tpu.matmul %120, %118, %cst_68 {dimension_numbers = #tpu.dot_dimension_numbers<[1], [0], [0], [1], [0, 0, 1, 1], [], []>} : vector<16x8xbf16>, vector<8x2048xbf16>, vector<16x2048xf32> -> vector<16x2048xf32>
    %122 = arith.addf %113, %121 : vector<16x2048xf32>
    %c2033_i32_69 = arith.constant 2033 : i32
    %123 = tpu.dynamic_rotate %71 by %c2033_i32_69 dim 1 : vector<8x2048xf32>, i32 -> vector<8x2048xf32>
    %c6_70 = arith.constant 6 : index
    %c0_71 = arith.constant 0 : index
    %124 = vector.load %arg2[%c6_70, %c0_71] : memref<9x2048xf32, #tpu.memory_space<vmem>>, vector<1x2048xf32>
    %125 = vector.broadcast %124 : vector<1x2048xf32> to vector<8x2048xf32>
    %126 = arith.mulf %123, %125 : vector<8x2048xf32>
    %127 = arith.truncf %126 : vector<8x2048xf32> to vector<8x2048xbf16>
    %c6_72 = arith.constant 6 : index
    %c0_73 = arith.constant 0 : index
    %c0_74 = arith.constant 0 : index
    %128 = vector.load %arg11[%c6_72, %c0_73, %c0_74] : memref<9x16x8xbf16, #tpu.memory_space<vmem>>, vector<1x16x8xbf16>
    %129 = vector.shape_cast %128 : vector<1x16x8xbf16> to vector<16x8xbf16>
    %cst_75 = arith.constant dense<0.000000e+00> : vector<16x2048xf32>
    %130 = tpu.matmul %129, %127, %cst_75 {dimension_numbers = #tpu.dot_dimension_numbers<[1], [0], [0], [1], [0, 0, 1, 1], [], []>} : vector<16x8xbf16>, vector<8x2048xbf16>, vector<16x2048xf32> -> vector<16x2048xf32>
    %131 = arith.addf %122, %130 : vector<16x2048xf32>
    %c2032_i32_76 = arith.constant 2032 : i32
    %132 = tpu.dynamic_rotate %71 by %c2032_i32_76 dim 1 : vector<8x2048xf32>, i32 -> vector<8x2048xf32>
    %c7_77 = arith.constant 7 : index
    %c0_78 = arith.constant 0 : index
    %133 = vector.load %arg2[%c7_77, %c0_78] : memref<9x2048xf32, #tpu.memory_space<vmem>>, vector<1x2048xf32>
    %134 = vector.broadcast %133 : vector<1x2048xf32> to vector<8x2048xf32>
    %135 = arith.mulf %132, %134 : vector<8x2048xf32>
    %136 = arith.truncf %135 : vector<8x2048xf32> to vector<8x2048xbf16>
    %c7_79 = arith.constant 7 : index
    %c0_80 = arith.constant 0 : index
    %c0_81 = arith.constant 0 : index
    %137 = vector.load %arg11[%c7_79, %c0_80, %c0_81] : memref<9x16x8xbf16, #tpu.memory_space<vmem>>, vector<1x16x8xbf16>
    %138 = vector.shape_cast %137 : vector<1x16x8xbf16> to vector<16x8xbf16>
    %cst_82 = arith.constant dense<0.000000e+00> : vector<16x2048xf32>
    %139 = tpu.matmul %138, %136, %cst_82 {dimension_numbers = #tpu.dot_dimension_numbers<[1], [0], [0], [1], [0, 0, 1, 1], [], []>} : vector<16x8xbf16>, vector<8x2048xbf16>, vector<16x2048xf32> -> vector<16x2048xf32>
    %140 = arith.addf %131, %139 : vector<16x2048xf32>
    %c2031_i32_83 = arith.constant 2031 : i32
    %141 = tpu.dynamic_rotate %71 by %c2031_i32_83 dim 1 : vector<8x2048xf32>, i32 -> vector<8x2048xf32>
    %c8_84 = arith.constant 8 : index
    %c0_85 = arith.constant 0 : index
    %142 = vector.load %arg2[%c8_84, %c0_85] : memref<9x2048xf32, #tpu.memory_space<vmem>>, vector<1x2048xf32>
    %143 = vector.broadcast %142 : vector<1x2048xf32> to vector<8x2048xf32>
    %144 = arith.mulf %141, %143 : vector<8x2048xf32>
    %145 = arith.truncf %144 : vector<8x2048xf32> to vector<8x2048xbf16>
    %c8_86 = arith.constant 8 : index
    %c0_87 = arith.constant 0 : index
    %c0_88 = arith.constant 0 : index
    %146 = vector.load %arg11[%c8_86, %c0_87, %c0_88] : memref<9x16x8xbf16, #tpu.memory_space<vmem>>, vector<1x16x8xbf16>
    %147 = vector.shape_cast %146 : vector<1x16x8xbf16> to vector<16x8xbf16>
    %cst_89 = arith.constant dense<0.000000e+00> : vector<16x2048xf32>
    %148 = tpu.matmul %147, %145, %cst_89 {dimension_numbers = #tpu.dot_dimension_numbers<[1], [0], [0], [1], [0, 0, 1, 1], [], []>} : vector<16x8xbf16>, vector<8x2048xbf16>, vector<16x2048xf32> -> vector<16x2048xf32>
    %149 = arith.addf %140, %148 : vector<16x2048xf32>
    %150 = vector.extract_strided_slice %149 {offsets = [0, 0], sizes = [4, 2048], strides = [1, 1]} : vector<16x2048xf32> to vector<4x2048xf32>
    %151 = vector.extract_strided_slice %149 {offsets = [4, 0], sizes = [4, 2048], strides = [1, 1]} : vector<16x2048xf32> to vector<4x2048xf32>
    %152 = arith.maximumf %150, %151 : vector<4x2048xf32>
    %153 = vector.extract_strided_slice %149 {offsets = [8, 0], sizes = [4, 2048], strides = [1, 1]} : vector<16x2048xf32> to vector<4x2048xf32>
    %154 = arith.maximumf %152, %153 : vector<4x2048xf32>
    %155 = vector.extract_strided_slice %149 {offsets = [12, 0], sizes = [4, 2048], strides = [1, 1]} : vector<16x2048xf32> to vector<4x2048xf32>
    %156 = arith.maximumf %154, %155 : vector<4x2048xf32>
    %157 = vector.extract_strided_slice %63 {offsets = [0, 0], sizes = [4, 2048], strides = [1, 1]} : vector<8x2048xf32> to vector<4x2048xf32>
    %158 = tpu.concatenate %156, %157 in 0 : vector<4x2048xf32>, vector<4x2048xf32> -> vector<8x2048xf32>
    %c0_90 = arith.constant 0 : index
    %c0_91 = arith.constant 0 : index
    %159 = vector.load %arg12[%c0_90, %c0_91] : memref<16x2048xf32, #tpu.memory_space<vmem>>, vector<8x2048xf32>
    tpu.vector_store %arg12[%c0_90, %c0_91], %158 {strides = array<i32>} : memref<16x2048xf32, #tpu.memory_space<vmem>>, vector<8x2048xf32>,
    %160 = vector.extract_strided_slice %0 {offsets = [0, 0], sizes = [8, 2048], strides = [1, 1]} : vector<16x2048xf32> to vector<8x2048xf32>
    %c8_92 = arith.constant 8 : index
    %c0_93 = arith.constant 0 : index
    %161 = vector.load %arg12[%c8_92, %c0_93] : memref<16x2048xf32, #tpu.memory_space<vmem>>, vector<8x2048xf32>
    tpu.vector_store %arg12[%c8_92, %c0_93], %160 {strides = array<i32>} : memref<16x2048xf32, #tpu.memory_space<vmem>>, vector<8x2048xf32>,
    return
  }
  func.func @transform_0(%arg0: i32) -> (i32, i32) {
    %c0_i32 = arith.constant 0 : i32
    %c0_i32_0 = arith.constant 0 : i32
    return %c0_i32, %arg0 : i32, i32
  }
  func.func @transform_1(%arg0: i32) -> (i32, i32) {
    %c0_i32 = arith.constant 0 : i32
    %c0_i32_0 = arith.constant 0 : i32
    %c0_i32_1 = arith.constant 0 : i32
    return %c0_i32, %c0_i32_0 : i32, i32
  }
  func.func @transform_2(%arg0: i32) -> (i32, i32) {
    %c0_i32 = arith.constant 0 : i32
    %c0_i32_0 = arith.constant 0 : i32
    %c0_i32_1 = arith.constant 0 : i32
    return %c0_i32, %c0_i32_0 : i32, i32
  }
  func.func @transform_3(%arg0: i32) -> (i32, i32) {
    %c0_i32 = arith.constant 0 : i32
    %c0_i32_0 = arith.constant 0 : i32
    %c0_i32_1 = arith.constant 0 : i32
    return %c0_i32, %c0_i32_0 : i32, i32
  }
  func.func @transform_4(%arg0: i32) -> (i32, i32) {
    %c0_i32 = arith.constant 0 : i32
    %c0_i32_0 = arith.constant 0 : i32
    %c0_i32_1 = arith.constant 0 : i32
    return %c0_i32, %c0_i32_0 : i32, i32
  }
  func.func @transform_5(%arg0: i32) -> (i32, i32) {
    %c0_i32 = arith.constant 0 : i32
    %c0_i32_0 = arith.constant 0 : i32
    %c0_i32_1 = arith.constant 0 : i32
    return %c0_i32, %c0_i32_0 : i32, i32
  }
  func.func @transform_6(%arg0: i32) -> (i32, i32) {
    %c0_i32 = arith.constant 0 : i32
    %c0_i32_0 = arith.constant 0 : i32
    %c0_i32_1 = arith.constant 0 : i32
    return %c0_i32, %c0_i32_0 : i32, i32
  }
  func.func @transform_7(%arg0: i32) -> (i32, i32) {
    %c0_i32 = arith.constant 0 : i32
    %c0_i32_0 = arith.constant 0 : i32
    %c0_i32_1 = arith.constant 0 : i32
    return %c0_i32, %c0_i32_0 : i32, i32
  }
  func.func @transform_8(%arg0: i32) -> (i32, i32) {
    %c0_i32 = arith.constant 0 : i32
    %c0_i32_0 = arith.constant 0 : i32
    %c0_i32_1 = arith.constant 0 : i32
    return %c0_i32, %c0_i32_0 : i32, i32
  }
  func.func @transform_9(%arg0: i32) -> (i32, i32) {
    %c0_i32 = arith.constant 0 : i32
    %c0_i32_0 = arith.constant 0 : i32
    %c0_i32_1 = arith.constant 0 : i32
    return %c0_i32, %c0_i32_0 : i32, i32
  }
  func.func @transform_10(%arg0: i32) -> (i32, i32, i32) {
    %c0_i32 = arith.constant 0 : i32
    %c0_i32_0 = arith.constant 0 : i32
    %c0_i32_1 = arith.constant 0 : i32
    %c0_i32_2 = arith.constant 0 : i32
    return %c0_i32, %c0_i32_0, %c0_i32_1 : i32, i32, i32
  }
  func.func @transform_11(%arg0: i32) -> (i32, i32) {
    %c0_i32 = arith.constant 0 : i32
    %c0_i32_0 = arith.constant 0 : i32
    return %c0_i32, %arg0 : i32, i32
  }
}

</mosaic_0001>

<llo_original>
// kernel: tpu_custom_call.1
$region0: #{tpu_custom_call.1}
  #allocation0 [shape = 'u32[]', space=smem, size = 0x4, offset = 0x4, fixed_abs, tag = 'smem constant byte address 0x4 - core index']
  #allocation1 [shape = 'u32[72,128]{1,0:T(1,128)}', space=vmem, size = 0x9000, scoped, tag = 'internal scratch']
  %s0 = inlined_call_operand.hbm [shape: f32[16,4096], index: 0, kind: input, shape index: {}]
  %s1 = inlined_call_operand.hbm [shape: f32[9,2048], index: 1, kind: input, shape index: {}]
  %s2 = inlined_call_operand.vmem [shape: f32[16,1], index: 2, kind: input, shape index: {}]
  %s3 = inlined_call_operand.vmem [shape: f32[16,1], index: 3, kind: input, shape index: {}]
  %s4 = inlined_call_operand.vmem [shape: bf16[16,16], index: 4, kind: input, shape index: {}]
  %s5 = inlined_call_operand.vmem [shape: f32[16,1], index: 5, kind: input, shape index: {}]
  %s6 = inlined_call_operand.vmem [shape: f32[16,1], index: 6, kind: input, shape index: {}]
  %s7 = inlined_call_operand.vmem [shape: bf16[8,144], index: 7, kind: input, shape index: {}]
  %s8 = inlined_call_operand.vmem [shape: f32[8,1], index: 8, kind: input, shape index: {}]
  %s9 = inlined_call_operand.vmem [shape: f32[8,1], index: 9, kind: input, shape index: {}]
  %s10 = inlined_call_operand.vmem [shape: bf16[9,16,8], index: 10, kind: input, shape index: {}]
  %s11 = inlined_call_operand.hbm [shape: f32[16,4096], index: 11, kind: output, shape index: {}]
  %s12 = sld [smem:[#allocation0]]
  $region85: #{tpu_custom_call.1} parent=0
    _
  %s14 = ssub.s32 1, %s12
  %s15 = scalar_select 0, %s14, %s12
  $region1: #{tpu_custom_call.1} parent=0
    #allocation2 [shape = 'u8[262144]{0}', space=vmem, size = 0x40000, scoped, tag = 'input window, operand 0']
    #allocation3 [shape = 's32[2]{0}', space=sflag, size = 0x8, scoped, tag = 'scoped memory for tpu_custom_call.1']
    #allocation4 [shape = 's32[2]{0}', space=sflag, size = 0x8, scoped, tag = 'scoped memory for tpu_custom_call.1']
    #allocation5 [shape = 'u8[131072]{0}', space=vmem, size = 0x20000, scoped, tag = 'input window, operand 1, single buffered']
    #allocation6 [shape = 's32[1]{0}', space=sflag, size = 0x4, scoped, tag = 'scoped memory for tpu_custom_call.1']
    #allocation7 [shape = 'u8[262144]{0}', space=vmem, size = 0x40000, scoped, tag = 'output window, operand 0']
    %16 = vsyncpa [#allocation3], 0
    %s17 = scalar_lea.sflag [#allocation3], 1
    %18 = vsyncpa %s17, 0
    %19 = vsyncpa [#allocation6], 0
    %20 = vsyncpa [#allocation4], 0
    %s21 = scalar_lea.sflag [#allocation4], 1
    %22 = vsyncpa %s21, 0
    loop: start=0, step=1, limit=4
    $region2: #{tpu_custom_call.1} parent=1 // loop_pre_header
      _
    $region3: #{tpu_custom_call.1} parent=1 // loop_header
      %s24 = sphi 0, %s28
      %p25 = scmp.ge.s32.totalorder %s24, 4
      %s34 = sphi 0, %s36
      %s37 = sphi 0, %s34
      %s38 = sphi 0, %s37
      %s54 = sphi 0, %s38
      %s58 = sphi 0, %s58
      %s60 = sphi 0, %s58
      %s61 = sphi 0, %s60
      %s75 = sphi 0, %s61
      %s79 = sphi 0, %s79
      %s81 = sphi 0, %s79
      %s82 = sphi 0, %s81
      %s96 = sphi 0, %s82
      %s100 = sphi 0, %s100
      %s102 = sphi 0, %s100
      %s103 = sphi 0, %s102
      %s117 = sphi 0, %s103
      %s121 = sphi 0, %s121
      %s123 = sphi 0, %s121
      %s124 = sphi 0, %s123
      %s138 = sphi 0, %s124
      %s142 = sphi 0, %s142
      %s144 = sphi 0, %s142
      %s145 = sphi 0, %s144
      %s159 = sphi 0, %s145
      %s163 = sphi 0, %s163
      %s165 = sphi 0, %s163
      %s166 = sphi 0, %s165
      %s180 = sphi 0, %s166
      %s184 = sphi 0, %s184
      %s186 = sphi 0, %s184
      %s187 = sphi 0, %s186
      %s201 = sphi 0, %s187
      %s205 = sphi 0, %s205
      %s207 = sphi 0, %s205
      %s208 = sphi 0, %s207
      %s222 = sphi 0, %s208
      %s226 = sphi 0, %s226
      %s228 = sphi 0, %s226
      %s229 = sphi 0, %s228
      %s243 = sphi 0, %s229
      %s247 = sphi 0, %s247
      %s249 = sphi 0, %s247
      %s250 = sphi 0, %s249
      %s264 = sphi 0, %s250
      %s270 = sphi 0, %s272
      %s273 = sphi 0, %s270
      %s274 = sphi 0, %s273
      %s290 = sphi 0, %s274
    $region4: #{tpu_custom_call.1} parent=1 // loop_header_branch
      %27 = sbr.rel (%p25) target = $region8
    $region5: #{tpu_custom_call.1} parent=1 // loop_body
      %s29 = ssub.s32 %s24, 1
      %s30 = ssub.s32 %s24, 2
      %s31 = sadd.s32 %s24, 1
      %s32 = ssub.s32 %s24, %s31
      %p33 = scmp.eq.s32.totalorder %s32, 0
      %s35 = sadd.s32 %s34, 1
      %s36 = scalar_select %p33, %s34, %s35
      %p39 = pneg %p33
      %p40 = scmp.eq.s32.totalorder %s24, 1
      %p41 = por %p39, %p40
      %p42 = scmp.ne.s32.totalorder %s34, %s37
      %p43 = scmp.eq.s32.totalorder %s24, 0
      %p44 = por %p42, %p43
      %p45 = scmp.ne.s32.totalorder %s34, %s37
      %p46 = scmp.eq.s32.totalorder %s29, 1
      %p47 = por %p45, %p46
      %p48 = scmp.ne.s32.totalorder %s37, %s38
      %p49 = scmp.eq.s32.totalorder %s29, 0
      %p50 = por %p48, %p49
      %p51 = scmp.ne.s32.totalorder %s37, %s38
      %p52 = scmp.eq.s32.totalorder %s30, 1
      %p53 = por %p51, %p52
      %p55 = scmp.ne.s32.totalorder %s38, %s54
      %p56 = scmp.eq.s32.totalorder %s30, 0
      %p57 = por %p55, %p56
      %s59 = sadd.s32 %s58, 1
      %p62 = scmp.eq.s32.totalorder %s24, 1
      %p63 = scmp.ne.s32.totalorder %s58, %s60
      %p64 = scmp.eq.s32.totalorder %s24, 0
      %p65 = por %p63, %p64
      %p66 = scmp.ne.s32.totalorder %s58, %s60
      %p67 = scmp.eq.s32.totalorder %s29, 1
      %p68 = por %p66, %p67
      %p69 = scmp.ne.s32.totalorder %s60, %s61
      %p70 = scmp.eq.s32.totalorder %s29, 0
      %p71 = por %p69, %p70
      %p72 = scmp.ne.s32.totalorder %s60, %s61
      %p73 = scmp.eq.s32.totalorder %s30, 1
      %p74 = por %p72, %p73
      %p76 = scmp.ne.s32.totalorder %s61, %s75
      %p77 = scmp.eq.s32.totalorder %s30, 0
      %p78 = por %p76, %p77
      %s80 = sadd.s32 %s79, 1
      %p83 = scmp.eq.s32.totalorder %s24, 1
      %p84 = scmp.ne.s32.totalorder %s79, %s81
      %p85 = scmp.eq.s32.totalorder %s24, 0
      %p86 = por %p84, %p85
      %p87 = scmp.ne.s32.totalorder %s79, %s81
      %p88 = scmp.eq.s32.totalorder %s29, 1
      %p89 = por %p87, %p88
      %p90 = scmp.ne.s32.totalorder %s81, %s82
      %p91 = scmp.eq.s32.totalorder %s29, 0
      %p92 = por %p90, %p91
      %p93 = scmp.ne.s32.totalorder %s81, %s82
      %p94 = scmp.eq.s32.totalorder %s30, 1
      %p95 = por %p93, %p94
      %p97 = scmp.ne.s32.totalorder %s82, %s96
      %p98 = scmp.eq.s32.totalorder %s30, 0
      %p99 = por %p97, %p98
      %s101 = sadd.s32 %s100, 1
      %p104 = scmp.eq.s32.totalorder %s24, 1
      %p105 = scmp.ne.s32.totalorder %s100, %s102
      %p106 = scmp.eq.s32.totalorder %s24, 0
      %p107 = por %p105, %p106
      %p108 = scmp.ne.s32.totalorder %s100, %s102
      %p109 = scmp.eq.s32.totalorder %s29, 1
      %p110 = por %p108, %p109
      %p111 = scmp.ne.s32.totalorder %s102, %s103
      %p112 = scmp.eq.s32.totalorder %s29, 0
      %p113 = por %p111, %p112
      %p114 = scmp.ne.s32.totalorder %s102, %s103
      %p115 = scmp.eq.s32.totalorder %s30, 1
      %p116 = por %p114, %p115
      %p118 = scmp.ne.s32.totalorder %s103, %s117
      %p119 = scmp.eq.s32.totalorder %s30, 0
      %p120 = por %p118, %p119
      %s122 = sadd.s32 %s121, 1
      %p125 = scmp.eq.s32.totalorder %s24, 1
      %p126 = scmp.ne.s32.totalorder %s121, %s123
      %p127 = scmp.eq.s32.totalorder %s24, 0
      %p128 = por %p126, %p127
      %p129 = scmp.ne.s32.totalorder %s121, %s123
      %p130 = scmp.eq.s32.totalorder %s29, 1
      %p131 = por %p129, %p130
      %p132 = scmp.ne.s32.totalorder %s123, %s124
      %p133 = scmp.eq.s32.totalorder %s29, 0
      %p134 = por %p132, %p133
      %p135 = scmp.ne.s32.totalorder %s123, %s124
      %p136 = scmp.eq.s32.totalorder %s30, 1
      %p137 = por %p135, %p136
      %p139 = scmp.ne.s32.totalorder %s124, %s138
      %p140 = scmp.eq.s32.totalorder %s30, 0
      %p141 = por %p139, %p140
      %s143 = sadd.s32 %s142, 1
      %p146 = scmp.eq.s32.totalorder %s24, 1
      %p147 = scmp.ne.s32.totalorder %s142, %s144
      %p148 = scmp.eq.s32.totalorder %s24, 0
      %p149 = por %p147, %p148
      %p150 = scmp.ne.s32.totalorder %s142, %s144
      %p151 = scmp.eq.s32.totalorder %s29, 1
      %p152 = por %p150, %p151
      %p153 = scmp.ne.s32.totalorder %s144, %s145
      %p154 = scmp.eq.s32.totalorder %s29, 0
      %p155 = por %p153, %p154
      %p156 = scmp.ne.s32.totalorder %s144, %s145
      %p157 = scmp.eq.s32.totalorder %s30, 1
      %p158 = por %p156, %p157
      %p160 = scmp.ne.s32.totalorder %s145, %s159
      %p161 = scmp.eq.s32.totalorder %s30, 0
      %p162 = por %p160, %p161
      %s164 = sadd.s32 %s163, 1
      %p167 = scmp.eq.s32.totalorder %s24, 1
      %p168 = scmp.ne.s32.totalorder %s163, %s165
      %p169 = scmp.eq.s32.totalorder %s24, 0
      %p170 = por %p168, %p169
      %p171 = scmp.ne.s32.totalorder %s163, %s165
      %p172 = scmp.eq.s32.totalorder %s29, 1
      %p173 = por %p171, %p172
      %p174 = scmp.ne.s32.totalorder %s165, %s166
      %p175 = scmp.eq.s32.totalorder %s29, 0
      %p176 = por %p174, %p175
      %p177 = scmp.ne.s32.totalorder %s165, %s166
      %p178 = scmp.eq.s32.totalorder %s30, 1
      %p179 = por %p177, %p178
      %p181 = scmp.ne.s32.totalorder %s166, %s180
      %p182 = scmp.eq.s32.totalorder %s30, 0
      %p183 = por %p181, %p182
      %s185 = sadd.s32 %s184, 1
      %p188 = scmp.eq.s32.totalorder %s24, 1
      %p189 = scmp.ne.s32.totalorder %s184, %s186
      %p190 = scmp.eq.s32.totalorder %s24, 0
      %p191 = por %p189, %p190
      %p192 = scmp.ne.s32.totalorder %s184, %s186
      %p193 = scmp.eq.s32.totalorder %s29, 1
      %p194 = por %p192, %p193
      %p195 = scmp.ne.s32.totalorder %s186, %s187
      %p196 = scmp.eq.s32.totalorder %s29, 0
      %p197 = por %p195, %p196
      %p198 = scmp.ne.s32.totalorder %s186, %s187
      %p199 = scmp.eq.s32.totalorder %s30, 1
      %p200 = por %p198, %p199
      %p202 = scmp.ne.s32.totalorder %s187, %s201
      %p203 = scmp.eq.s32.totalorder %s30, 0
      %p204 = por %p202, %p203
      %s206 = sadd.s32 %s205, 1
      %p209 = scmp.eq.s32.totalorder %s24, 1
      %p210 = scmp.ne.s32.totalorder %s205, %s207
      %p211 = scmp.eq.s32.totalorder %s24, 0
      %p212 = por %p210, %p211
      %p213 = scmp.ne.s32.totalorder %s205, %s207
      %p214 = scmp.eq.s32.totalorder %s29, 1
      %p215 = por %p213, %p214
      %p216 = scmp.ne.s32.totalorder %s207, %s208
      %p217 = scmp.eq.s32.totalorder %s29, 0
      %p218 = por %p216, %p217
      %p219 = scmp.ne.s32.totalorder %s207, %s208
      %p220 = scmp.eq.s32.totalorder %s30, 1
      %p221 = por %p219, %p220
      %p223 = scmp.ne.s32.totalorder %s208, %s222
      %p224 = scmp.eq.s32.totalorder %s30, 0
      %p225 = por %p223, %p224
      %s227 = sadd.s32 %s226, 1
      %p230 = scmp.eq.s32.totalorder %s24, 1
      %p231 = scmp.ne.s32.totalorder %s226, %s228
      %p232 = scmp.eq.s32.totalorder %s24, 0
      %p233 = por %p231, %p232
      %p234 = scmp.ne.s32.totalorder %s226, %s228
      %p235 = scmp.eq.s32.totalorder %s29, 1
      %p236 = por %p234, %p235
      %p237 = scmp.ne.s32.totalorder %s228, %s229
      %p238 = scmp.eq.s32.totalorder %s29, 0
      %p239 = por %p237, %p238
      %p240 = scmp.ne.s32.totalorder %s228, %s229
      %p241 = scmp.eq.s32.totalorder %s30, 1
      %p242 = por %p240, %p241
      %p244 = scmp.ne.s32.totalorder %s229, %s243
      %p245 = scmp.eq.s32.totalorder %s30, 0
      %p246 = por %p244, %p245
      %s248 = sadd.s32 %s247, 1
      %p251 = scmp.eq.s32.totalorder %s24, 1
      %p252 = scmp.ne.s32.totalorder %s247, %s249
      %p253 = scmp.eq.s32.totalorder %s24, 0
      %p254 = por %p252, %p253
      %p255 = scmp.ne.s32.totalorder %s247, %s249
      %p256 = scmp.eq.s32.totalorder %s29, 1
      %p257 = por %p255, %p256
      %p258 = scmp.ne.s32.totalorder %s249, %s250
      %p259 = scmp.eq.s32.totalorder %s29, 0
      %p260 = por %p258, %p259
      %p261 = scmp.ne.s32.totalorder %s249, %s250
      %p262 = scmp.eq.s32.totalorder %s30, 1
      %p263 = por %p261, %p262
      %p265 = scmp.ne.s32.totalorder %s250, %s264
      %p266 = scmp.eq.s32.totalorder %s30, 0
      %p267 = por %p265, %p266
      %s268 = ssub.s32 %s24, %s31
      %p269 = scmp.eq.s32.totalorder %s268, 0
      %s271 = sadd.s32 %s270, 1
      %s272 = scalar_select %p269, %s270, %s271
      %p275 = pneg %p269
      %p276 = scmp.eq.s32.totalorder %s24, 1
      %p277 = por %p275, %p276
      %p278 = scmp.ne.s32.totalorder %s270, %s273
      %p279 = scmp.eq.s32.totalorder %s24, 0
      %p280 = por %p278, %p279
      %p281 = scmp.ne.s32.totalorder %s270, %s273
      %p282 = scmp.eq.s32.totalorder %s29, 1
      %p283 = por %p281, %p282
      %p284 = scmp.ne.s32.totalorder %s273, %s274
      %p285 = scmp.eq.s32.totalorder %s29, 0
      %p286 = por %p284, %p285
      %p287 = scmp.ne.s32.totalorder %s273, %s274
      %p288 = scmp.eq.s32.totalorder %s30, 1
      %p289 = por %p287, %p288
      %p291 = scmp.ne.s32.totalorder %s274, %s290
      %p292 = scmp.eq.s32.totalorder %s30, 0
      %p293 = por %p291, %p292
      %p294 = scmp.le.s32.totalorder 1, %s24
      %p295 = scmp.lt.s32.totalorder %s24, 3
      %p296 = pnand %p294, %p295
      %p297 = pneg %p296
      // Predicated region
      $region9: #{tpu_custom_call.1} parent=5 // pred_check
        _
      $region10: #{tpu_custom_call.1} parent=5 // pred_check_branch
        %299 = sbr.rel (%p296) target = $region12
      $region11: #{tpu_custom_call.1} parent=5 // pred_region
        %s300 = ssub.s32 %s24, 1
        // Predicated region
        $region13: #{tpu_custom_call.1} parent=11 // pred_check
          %p301 = pneg %p71
        $region14: #{tpu_custom_call.1} parent=11 // pred_check_branch
          %303 = sbr.rel (%p301) target = $region16
        $region15: #{tpu_custom_call.1} parent=11 // pred_region
          %305 = vsyncadd [#allocation6], 0
          %s306 = sshll.u32 %s1, 4
          %s307 = int_to_ptr.hbm [resolvable:$true] %s306
          %s308 = sshll.u32 [#allocation5], 4
          %s309 = int_to_ptr.vmem [resolvable:$true] %s308
          %314 = dma.hbm_to_vmem [thread:$0]  %s307, 4096, %s309, [#allocation6], 2048, 2048, 128
        $region16: #{tpu_custom_call.1} parent=11 // pred_fallthru
          _
        // Predicated region
        $region17: #{tpu_custom_call.1} parent=11 // pred_check
          %p315 = pneg %p92
        $region18: #{tpu_custom_call.1} parent=11 // pred_check_branch
          %317 = sbr.rel (%p315) target = $region20
        $region19: #{tpu_custom_call.1} parent=11 // pred_region
          _
        $region20: #{tpu_custom_call.1} parent=11 // pred_fallthru
          _
        // Predicated region
        $region21: #{tpu_custom_call.1} parent=11 // pred_check
          %p318 = pneg %p113
        $region22: #{tpu_custom_call.1} parent=11 // pred_check_branch
          %320 = sbr.rel (%p318) target = $region24
        $region23: #{tpu_custom_call.1} parent=11 // pred_region
          _
        $region24: #{tpu_custom_call.1} parent=11 // pred_fallthru
          _
        // Predicated region
        $region25: #{tpu_custom_call.1} parent=11 // pred_check
          %p321 = pneg %p134
        $region26: #{tpu_custom_call.1} parent=11 // pred_check_branch
          %323 = sbr.rel (%p321) target = $region28
        $region27: #{tpu_custom_call.1} parent=11 // pred_region
          _
        $region28: #{tpu_custom_call.1} parent=11 // pred_fallthru
          _
        // Predicated region
        $region29: #{tpu_custom_call.1} parent=11 // pred_check
          %p324 = pneg %p155
        $region30: #{tpu_custom_call.1} parent=11 // pred_check_branch
          %326 = sbr.rel (%p324) target = $region32
        $region31: #{tpu_custom_call.1} parent=11 // pred_region
          _
        $region32: #{tpu_custom_call.1} parent=11 // pred_fallthru
          _
        // Predicated region
        $region33: #{tpu_custom_call.1} parent=11 // pred_check
          %p327 = pneg %p176
        $region34: #{tpu_custom_call.1} parent=11 // pred_check_branch
          %329 = sbr.rel (%p327) target = $region36
        $region35: #{tpu_custom_call.1} parent=11 // pred_region
          _
        $region36: #{tpu_custom_call.1} parent=11 // pred_fallthru
          _
        // Predicated region
        $region37: #{tpu_custom_call.1} parent=11 // pred_check
          %p330 = pneg %p197
        $region38: #{tpu_custom_call.1} parent=11 // pred_check_branch
          %332 = sbr.rel (%p330) target = $region40
        $region39: #{tpu_custom_call.1} parent=11 // pred_region
          _
        $region40: #{tpu_custom_call.1} parent=11 // pred_fallthru
          _
        // Predicated region
        $region41: #{tpu_custom_call.1} parent=11 // pred_check
          %p333 = pneg %p218
        $region42: #{tpu_custom_call.1} parent=11 // pred_check_branch
          %335 = sbr.rel (%p333) target = $region44
        $region43: #{tpu_custom_call.1} parent=11 // pred_region
          _
        $region44: #{tpu_custom_call.1} parent=11 // pred_fallthru
          _
        // Predicated region
        $region45: #{tpu_custom_call.1} parent=11 // pred_check
          %p336 = pneg %p239
        $region46: #{tpu_custom_call.1} parent=11 // pred_check_branch
          %338 = sbr.rel (%p336) target = $region48
        $region47: #{tpu_custom_call.1} parent=11 // pred_region
          _
        $region48: #{tpu_custom_call.1} parent=11 // pred_fallthru
          _
        // Predicated region
        $region49: #{tpu_custom_call.1} parent=11 // pred_check
          %p339 = pneg %p260
        $region50: #{tpu_custom_call.1} parent=11 // pred_check_branch
          %341 = sbr.rel (%p339) target = $region52
        $region51: #{tpu_custom_call.1} parent=11 // pred_region
          _
        $region52: #{tpu_custom_call.1} parent=11 // pred_fallthru
          _
      $region12: #{tpu_custom_call.1} parent=5 // pred_fallthru
        _
      %p342 = scmp.lt.s32.totalorder %s24, 2
      // Predicated region
      $region53: #{tpu_custom_call.1} parent=5 // pred_check
        %p343 = pneg %p342
      $region54: #{tpu_custom_call.1} parent=5 // pred_check_branch
        %345 = sbr.rel (%p343) target = $region56
      $region55: #{tpu_custom_call.1} parent=5 // pred_region
        // Predicated region
        $region57: #{tpu_custom_call.1} parent=55 // pred_check
          %p346 = pneg %p44
        $region58: #{tpu_custom_call.1} parent=55 // pred_check_branch
          %348 = sbr.rel (%p346) target = $region60
        $region59: #{tpu_custom_call.1} parent=55 // pred_region
          %s349 = sand.u32 %s34, 1
          %s350 = scalar_lea.sflag [#allocation3], %s349
          %s351 = sand.u32 %s34, 1
          %s352 = smul.addr %s351, 256
          %s353 = scalar_lea.vmem [#allocation2], %s352
          %s354 = smul.u32 16, %s24
          %356 = vsyncadd %s350, 0
          %s357 = smul.addr %s354, 8
          %s358 = scalar_lea.hbm %s0, %s357
          %s359 = sshll.u32 %s358, 4
          %s360 = int_to_ptr.hbm [resolvable:$true] %s359
          %s361 = sshll.u32 %s353, 4
          %s362 = int_to_ptr.vmem [resolvable:$true] %s361
          %367 = dma.hbm_to_vmem [thread:$0]  %s360, 4096, %s362, %s350, 4096, 2048, 128
        $region60: #{tpu_custom_call.1} parent=55 // pred_fallthru
          _
      $region56: #{tpu_custom_call.1} parent=5 // pred_fallthru
        _
      %p368 = scmp.le.s32.totalorder 1, %s24
      %p369 = scmp.lt.s32.totalorder %s24, 3
      %p370 = pnand %p368, %p369
      %p371 = pneg %p370
      // Predicated region
      $region61: #{tpu_custom_call.1} parent=5 // pred_check
        _
      $region62: #{tpu_custom_call.1} parent=5 // pred_check_branch
        %373 = sbr.rel (%p370) target = $region64
      $region63: #{tpu_custom_call.1} parent=5 // pred_region
        %s374 = ssub.s32 %s24, 1
        %s375 = sand.u32 %s37, 1
        %s376 = scalar_lea.sflag [#allocation3], %s375
        %s377 = sand.u32 %s37, 1
        %s378 = smul.addr %s377, 256
        %s379 = scalar_lea.vmem [#allocation2], %s378
        // Predicated region
        $region65: #{tpu_custom_call.1} parent=63 // pred_check
          %p380 = pneg %p50
        $region66: #{tpu_custom_call.1} parent=63 // pred_check_branch
          %382 = sbr.rel (%p380) target = $region68
        $region67: #{tpu_custom_call.1} parent=63 // pred_region
          %384 = dma.done %s376, 4096
        $region68: #{tpu_custom_call.1} parent=63 // pred_fallthru
          _
        // Predicated region
        $region69: #{tpu_custom_call.1} parent=63 // pred_check
          %p385 = pneg %p71
        $region70: #{tpu_custom_call.1} parent=63 // pred_check_branch
          %387 = sbr.rel (%p385) target = $region72
        $region71: #{tpu_custom_call.1} parent=63 // pred_region
          %389 = dma.done [#allocation6], 4096
        $region72: #{tpu_custom_call.1} parent=63 // pred_fallthru
          _
        %s390 = sand.u32 %s37, 1
        %s391 = scalar_lea.sflag [#allocation3], %s390
        %s392 = sand.u32 %s37, 1
        %s393 = smul.addr %s392, 256
        %s394 = scalar_lea.vmem [#allocation2], %s393
        %p395 = pneg %p50
        %p396 = pneg %p47
        %p397 = pneg %p71
        %p398 = pneg %p68
        %p399 = pneg %p92
        %p400 = pneg %p89
        %p401 = pneg %p113
        %p402 = pneg %p110
        %p403 = pneg %p134
        %p404 = pneg %p131
        %p405 = pneg %p155
        %p406 = pneg %p152
        %p407 = pneg %p176
        %p408 = pneg %p173
        %p409 = pneg %p197
        %p410 = pneg %p194
        %p411 = pneg %p218
        %p412 = pneg %p215
        %p413 = pneg %p239
        %p414 = pneg %p236
        %p415 = pneg %p260
        %p416 = pneg %p257
        %p417 = pneg %p286
        %p418 = pneg %p283
        %s419 = sand.u32 %s273, 1
        %s420 = scalar_lea.sflag [#allocation4], %s419
        %s421 = sand.u32 %s273, 1
        %s422 = smul.addr %s421, 256
        %s423 = scalar_lea.vmem [#allocation7], %s422
        %s424 = smul.u32 16, %s29
        %s425 = smul.u32 16, %s29
        %v427 = vld [vmem:[%s379] sm:$0xff]
        %v428 = vld [vmem:[%s379 + $0x8] sm:$0xff]
        %v429 = vld [vmem:[%s379 + $0x10] sm:$0xff]
        %v430 = vld [vmem:[%s379 + $0x18] sm:$0xff]
        %v431 = vld [vmem:[%s379 + $0x20] sm:$0xff]
        %v432 = vld [vmem:[%s379 + $0x28] sm:$0xff]
        %v433 = vld [vmem:[%s379 + $0x30] sm:$0xff]
        %v434 = vld [vmem:[%s379 + $0x38] sm:$0xff]
        %v435 = vld [vmem:[%s379 + $0x40] sm:$0xff]
        %v436 = vld [vmem:[%s379 + $0x48] sm:$0xff]
        %v437 = vld [vmem:[%s379 + $0x50] sm:$0xff]
        %v438 = vld [vmem:[%s379 + $0x58] sm:$0xff]
        %v439 = vld [vmem:[%s379 + $0x60] sm:$0xff]
        %v440 = vld [vmem:[%s379 + $0x68] sm:$0xff]
        %v441 = vld [vmem:[%s379 + $0x70] sm:$0xff]
        %v442 = vld [vmem:[%s379 + $0x78] sm:$0xff]
        %v443 = vld [vmem:[%s379 + $0x80] sm:$0xff]
        %v444 = vld [vmem:[%s379 + $0x88] sm:$0xff]
        %v445 = vld [vmem:[%s379 + $0x90] sm:$0xff]
        %v446 = vld [vmem:[%s379 + $0x98] sm:$0xff]
        %v447 = vld [vmem:[%s379 + $0xa0] sm:$0xff]
        %v448 = vld [vmem:[%s379 + $0xa8] sm:$0xff]
        %v449 = vld [vmem:[%s379 + $0xb0] sm:$0xff]
        %v450 = vld [vmem:[%s379 + $0xb8] sm:$0xff]
        %v451 = vld [vmem:[%s379 + $0xc0] sm:$0xff]
        %v452 = vld [vmem:[%s379 + $0xc8] sm:$0xff]
        %v453 = vld [vmem:[%s379 + $0xd0] sm:$0xff]
        %v454 = vld [vmem:[%s379 + $0xd8] sm:$0xff]
        %v455 = vld [vmem:[%s379 + $0xe0] sm:$0xff]
        %v456 = vld [vmem:[%s379 + $0xe8] sm:$0xff]
        %v457 = vld [vmem:[%s379 + $0xf0] sm:$0xff]
        %v458 = vld [vmem:[%s379 + $0xf8] sm:$0xff]
        %v459 = vld [vmem:[%s2] sm:$0xff]
        %v460 = vld [vmem:[%s2 + $0x8] sm:$0xff]
        %462 = vset.pattern.permute.xlu0 0
        %463 = vperm.xlu0 %462, %v459
        %v464 = vpop.permute.xlu0 %463
        %467 = vset.pattern.permute.xlu0 0
        %468 = vperm.xlu0 %467, %v460
        %v469 = vpop.permute.xlu0 %468
        %v471 = vmul.f32 %v427, %v464
        %v472 = vmul.f32 %v428, %v464
        %v473 = vmul.f32 %v429, %v464
        %v474 = vmul.f32 %v430, %v464
        %v475 = vmul.f32 %v431, %v464
        %v476 = vmul.f32 %v432, %v464
        %v477 = vmul.f32 %v433, %v464
        %v478 = vmul.f32 %v434, %v464
        %v479 = vmul.f32 %v435, %v464
        %v480 = vmul.f32 %v436, %v464
        %v481 = vmul.f32 %v437, %v464
        %v482 = vmul.f32 %v438, %v464
        %v483 = vmul.f32 %v439, %v464
        %v484 = vmul.f32 %v440, %v464
        %v485 = vmul.f32 %v441, %v464
        %v486 = vmul.f32 %v442, %v464
        %v487 = vmul.f32 %v443, %v469
        %v488 = vmul.f32 %v444, %v469
        %v489 = vmul.f32 %v445, %v469
        %v490 = vmul.f32 %v446, %v469
        %v491 = vmul.f32 %v447, %v469
        %v492 = vmul.f32 %v448, %v469
        %v493 = vmul.f32 %v449, %v469
        %v494 = vmul.f32 %v450, %v469
        %v495 = vmul.f32 %v451, %v469
        %v496 = vmul.f32 %v452, %v469
        %v497 = vmul.f32 %v453, %v469
        %v498 = vmul.f32 %v454, %v469
        %v499 = vmul.f32 %v455, %v469
        %v500 = vmul.f32 %v456, %v469
        %v501 = vmul.f32 %v457, %v469
        %v502 = vmul.f32 %v458, %v469
        %v503 = vld [vmem:[%s3] sm:$0xff]
        %v504 = vld [vmem:[%s3 + $0x8] sm:$0xff]
        %506 = vset.pattern.permute.xlu0 0
        %507 = vperm.xlu0 %506, %v503
        %v508 = vpop.permute.xlu0 %507
        %511 = vset.pattern.permute.xlu0 0
        %512 = vperm.xlu0 %511, %v504
        %v513 = vpop.permute.xlu0 %512
        %v515 = vadd.f32 %v471, %v508
        %v516 = vadd.f32 %v472, %v508
        %v517 = vadd.f32 %v473, %v508
        %v518 = vadd.f32 %v474, %v508
        %v519 = vadd.f32 %v475, %v508
        %v520 = vadd.f32 %v476, %v508
        %v521 = vadd.f32 %v477, %v508
        %v522 = vadd.f32 %v478, %v508
        %v523 = vadd.f32 %v479, %v508
        %v524 = vadd.f32 %v480, %v508
        %v525 = vadd.f32 %v481, %v508
        %v526 = vadd.f32 %v482, %v508
        %v527 = vadd.f32 %v483, %v508
        %v528 = vadd.f32 %v484, %v508
        %v529 = vadd.f32 %v485, %v508
        %v530 = vadd.f32 %v486, %v508
        %v531 = vadd.f32 %v487, %v513
        %v532 = vadd.f32 %v488, %v513
        %v533 = vadd.f32 %v489, %v513
        %v534 = vadd.f32 %v490, %v513
        %v535 = vadd.f32 %v491, %v513
        %v536 = vadd.f32 %v492, %v513
        %v537 = vadd.f32 %v493, %v513
        %v538 = vadd.f32 %v494, %v513
        %v539 = vadd.f32 %v495, %v513
        %v540 = vadd.f32 %v496, %v513
        %v541 = vadd.f32 %v497, %v513
        %v542 = vadd.f32 %v498, %v513
        %v543 = vadd.f32 %v499, %v513
        %v544 = vadd.f32 %v500, %v513
        %v545 = vadd.f32 %v501, %v513
        %v546 = vadd.f32 %v502, %v513
        %v547 = vmax.f32 %v515, 0.0
        %v548 = vmax.f32 %v516, 0.0
        %v549 = vmax.f32 %v517, 0.0
        %v550 = vmax.f32 %v518, 0.0
        %v551 = vmax.f32 %v519, 0.0
        %v552 = vmax.f32 %v520, 0.0
        %v553 = vmax.f32 %v521, 0.0
        %v554 = vmax.f32 %v522, 0.0
        %v555 = vmax.f32 %v523, 0.0
        %v556 = vmax.f32 %v524, 0.0
        %v557 = vmax.f32 %v525, 0.0
        %v558 = vmax.f32 %v526, 0.0
        %v559 = vmax.f32 %v527, 0.0
        %v560 = vmax.f32 %v528, 0.0
        %v561 = vmax.f32 %v529, 0.0
        %v562 = vmax.f32 %v530, 0.0
        %v563 = vmax.f32 %v531, 0.0
        %v564 = vmax.f32 %v532, 0.0
        %v565 = vmax.f32 %v533, 0.0
        %v566 = vmax.f32 %v534, 0.0
        %v567 = vmax.f32 %v535, 0.0
        %v568 = vmax.f32 %v536, 0.0
        %v569 = vmax.f32 %v537, 0.0
        %v570 = vmax.f32 %v538, 0.0
        %v571 = vmax.f32 %v539, 0.0
        %v572 = vmax.f32 %v540, 0.0
        %v573 = vmax.f32 %v541, 0.0
        %v574 = vmax.f32 %v542, 0.0
        %v575 = vmax.f32 %v543, 0.0
        %v576 = vmax.f32 %v544, 0.0
        %v577 = vmax.f32 %v545, 0.0
        %v578 = vmax.f32 %v546, 0.0
        %v579 = vld [vmem:[%s4] sm:$0xf]
        %v580 = vld [vmem:[%s4 + $0x4] sm:$0xf]
        %v581 = vpack.c.bf16 %v563, %v547
        %v582 = vpack.c.bf16 %v564, %v548
        %v583 = vpack.c.bf16 %v565, %v549
        %v584 = vpack.c.bf16 %v566, %v550
        %v585 = vpack.c.bf16 %v567, %v551
        %v586 = vpack.c.bf16 %v568, %v552
        %v587 = vpack.c.bf16 %v569, %v553
        %v588 = vpack.c.bf16 %v570, %v554
        %v589 = vpack.c.bf16 %v571, %v555
        %v590 = vpack.c.bf16 %v572, %v556
        %v591 = vpack.c.bf16 %v573, %v557
        %v592 = vpack.c.bf16 %v574, %v558
        %v593 = vpack.c.bf16 %v575, %v559
        %v594 = vpack.c.bf16 %v576, %v560
        %v595 = vpack.c.bf16 %v577, %v561
        %v596 = vpack.c.bf16 %v578, %v562
        %v599 = vunpack.c.l.b16 %v579
        %v600 = vunpack.c.l.b16 %v580
        %v601 = vpack.c.b16 %v600, %v599
        %vm602 = vcmask 130048
        %v604 = vsel %vm602, %v601, 0
        %606 = vmatpush.bf16.msra.mxu0 0
        %607 = vmatpush.bf16.msra.mxu0 0
        %608 = vmatpush.bf16.msra.mxu0 0
        %609 = vmatpush.bf16.msra.mxu0 0
        %610 = vmatpush.bf16.msra.mxu0 0
        %611 = vmatpush.bf16.msra.mxu0 0
        %612 = vmatpush.bf16.msra.mxu0 0
        %613 = vmatpush.bf16.msra.mxu0 %v581
        %614 = vmatmul.bf16.gmra.mxu0 %v604
        %v615 = vpop.f32.mrf.mxu0
        %v616 = vadd.f32 0.0, %v615
        %v617 = vpop.f32.mrf.mxu0
        %v618 = vadd.f32 0.0, %v617
        %619 = vdwg.mxu0
        %620 = vmatpush.bf16.msra.mxu0 0
        %621 = vmatpush.bf16.msra.mxu0 0
        %622 = vmatpush.bf16.msra.mxu0 0
        %623 = vmatpush.bf16.msra.mxu0 0
        %624 = vmatpush.bf16.msra.mxu0 0
        %625 = vmatpush.bf16.msra.mxu0 0
        %626 = vmatpush.bf16.msra.mxu0 0
        %627 = vmatpush.bf16.msra.mxu0 %v582
        %628 = vmatmul.bf16.gmra.mxu0 %v604
        %v629 = vpop.f32.mrf.mxu0
        %v630 = vadd.f32 0.0, %v629
        %v631 = vpop.f32.mrf.mxu0
        %v632 = vadd.f32 0.0, %v631
        %633 = vdwg.mxu0
        %634 = vmatpush.bf16.msra.mxu0 0
        %635 = vmatpush.bf16.msra.mxu0 0
        %636 = vmatpush.bf16.msra.mxu0 0
        %637 = vmatpush.bf16.msra.mxu0 0
        %638 = vmatpush.bf16.msra.mxu0 0
        %639 = vmatpush.bf16.msra.mxu0 0
        %640 = vmatpush.bf16.msra.mxu0 0
        %641 = vmatpush.bf16.msra.mxu0 %v583
        %642 = vmatmul.bf16.gmra.mxu0 %v604
        %v643 = vpop.f32.mrf.mxu0
        %v644 = vadd.f32 0.0, %v643
        %v645 = vpop.f32.mrf.mxu0
        %v646 = vadd.f32 0.0, %v645
        %647 = vdwg.mxu0
        %648 = vmatpush.bf16.msra.mxu0 0
        %649 = vmatpush.bf16.msra.mxu0 0
        %650 = vmatpush.bf16.msra.mxu0 0
        %651 = vmatpush.bf16.msra.mxu0 0
        %652 = vmatpush.bf16.msra.mxu0 0
        %653 = vmatpush.bf16.msra.mxu0 0
        %654 = vmatpush.bf16.msra.mxu0 0
        %655 = vmatpush.bf16.msra.mxu0 %v584
        %656 = vmatmul.bf16.gmra.mxu0 %v604
        %v657 = vpop.f32.mrf.mxu0
        %v658 = vadd.f32 0.0, %v657
        %v659 = vpop.f32.mrf.mxu0
        %v660 = vadd.f32 0.0, %v659
        %661 = vdwg.mxu0
        %662 = vmatpush.bf16.msra.mxu0 0
        %663 = vmatpush.bf16.msra.mxu0 0
        %664 = vmatpush.bf16.msra.mxu0 0
        %665 = vmatpush.bf16.msra.mxu0 0
        %666 = vmatpush.bf16.msra.mxu0 0
        %667 = vmatpush.bf16.msra.mxu0 0
        %668 = vmatpush.bf16.msra.mxu0 0
        %669 = vmatpush.bf16.msra.mxu0 %v585
        %670 = vmatmul.bf16.gmra.mxu0 %v604
        %v671 = vpop.f32.mrf.mxu0
        %v672 = vadd.f32 0.0, %v671
        %v673 = vpop.f32.mrf.mxu0
        %v674 = vadd.f32 0.0, %v673
        %675 = vdwg.mxu0
        %676 = vmatpush.bf16.msra.mxu0 0
        %677 = vmatpush.bf16.msra.mxu0 0
        %678 = vmatpush.bf16.msra.mxu0 0
        %679 = vmatpush.bf16.msra.mxu0 0
        %680 = vmatpush.bf16.msra.mxu0 0
        %681 = vmatpush.bf16.msra.mxu0 0
        %682 = vmatpush.bf16.msra.mxu0 0
        %683 = vmatpush.bf16.msra.mxu0 %v586
        %684 = vmatmul.bf16.gmra.mxu0 %v604
        %v685 = vpop.f32.mrf.mxu0
        %v686 = vadd.f32 0.0, %v685
        %v687 = vpop.f32.mrf.mxu0
        %v688 = vadd.f32 0.0, %v687
        %689 = vdwg.mxu0
        %690 = vmatpush.bf16.msra.mxu0 0
        %691 = vmatpush.bf16.msra.mxu0 0
        %692 = vmatpush.bf16.msra.mxu0 0
        %693 = vmatpush.bf16.msra.mxu0 0
        %694 = vmatpush.bf16.msra.mxu0 0
        %695 = vmatpush.bf16.msra.mxu0 0
        %696 = vmatpush.bf16.msra.mxu0 0
        %697 = vmatpush.bf16.msra.mxu0 %v587
        %698 = vmatmul.bf16.gmra.mxu0 %v604
        %v699 = vpop.f32.mrf.mxu0
        %v700 = vadd.f32 0.0, %v699
        %v701 = vpop.f32.mrf.mxu0
        %v702 = vadd.f32 0.0, %v701
        %703 = vdwg.mxu0
        %704 = vmatpush.bf16.msra.mxu0 0
        %705 = vmatpush.bf16.msra.mxu0 0
        %706 = vmatpush.bf16.msra.mxu0 0
        %707 = vmatpush.bf16.msra.mxu0 0
        %708 = vmatpush.bf16.msra.mxu0 0
        %709 = vmatpush.bf16.msra.mxu0 0
        %710 = vmatpush.bf16.msra.mxu0 0
        %711 = vmatpush.bf16.msra.mxu0 %v588
        %712 = vmatmul.bf16.gmra.mxu0 %v604
        %v713 = vpop.f32.mrf.mxu0
        %v714 = vadd.f32 0.0, %v713
        %v715 = vpop.f32.mrf.mxu0
        %v716 = vadd.f32 0.0, %v715
        %717 = vdwg.mxu0
        %718 = vmatpush.bf16.msra.mxu0 0
        %719 = vmatpush.bf16.msra.mxu0 0
        %720 = vmatpush.bf16.msra.mxu0 0
        %721 = vmatpush.bf16.msra.mxu0 0
        %722 = vmatpush.bf16.msra.mxu0 0
        %723 = vmatpush.bf16.msra.mxu0 0
        %724 = vmatpush.bf16.msra.mxu0 0
        %725 = vmatpush.bf16.msra.mxu0 %v589
        %726 = vmatmul.bf16.gmra.mxu0 %v604
        %v727 = vpop.f32.mrf.mxu0
        %v728 = vadd.f32 0.0, %v727
        %v729 = vpop.f32.mrf.mxu0
        %v730 = vadd.f32 0.0, %v729
        %731 = vdwg.mxu0
        %732 = vmatpush.bf16.msra.mxu0 0
        %733 = vmatpush.bf16.msra.mxu0 0
        %734 = vmatpush.bf16.msra.mxu0 0
        %735 = vmatpush.bf16.msra.mxu0 0
        %736 = vmatpush.bf16.msra.mxu0 0
        %737 = vmatpush.bf16.msra.mxu0 0
        %738 = vmatpush.bf16.msra.mxu0 0
        %739 = vmatpush.bf16.msra.mxu0 %v590
        %740 = vmatmul.bf16.gmra.mxu0 %v604
        %v741 = vpop.f32.mrf.mxu0
        %v742 = vadd.f32 0.0, %v741
        %v743 = vpop.f32.mrf.mxu0
        %v744 = vadd.f32 0.0, %v743
        %745 = vdwg.mxu0
        %746 = vmatpush.bf16.msra.mxu0 0
        %747 = vmatpush.bf16.msra.mxu0 0
        %748 = vmatpush.bf16.msra.mxu0 0
        %749 = vmatpush.bf16.msra.mxu0 0
        %750 = vmatpush.bf16.msra.mxu0 0
        %751 = vmatpush.bf16.msra.mxu0 0
        %752 = vmatpush.bf16.msra.mxu0 0
        %753 = vmatpush.bf16.msra.mxu0 %v591
        %754 = vmatmul.bf16.gmra.mxu0 %v604
        %v755 = vpop.f32.mrf.mxu0
        %v756 = vadd.f32 0.0, %v755
        %v757 = vpop.f32.mrf.mxu0
        %v758 = vadd.f32 0.0, %v757
        %759 = vdwg.mxu0
        %760 = vmatpush.bf16.msra.mxu0 0
        %761 = vmatpush.bf16.msra.mxu0 0
        %762 = vmatpush.bf16.msra.mxu0 0
        %763 = vmatpush.bf16.msra.mxu0 0
        %764 = vmatpush.bf16.msra.mxu0 0
        %765 = vmatpush.bf16.msra.mxu0 0
        %766 = vmatpush.bf16.msra.mxu0 0
        %767 = vmatpush.bf16.msra.mxu0 %v592
        %768 = vmatmul.bf16.gmra.mxu0 %v604
        %v769 = vpop.f32.mrf.mxu0
        %v770 = vadd.f32 0.0, %v769
        %v771 = vpop.f32.mrf.mxu0
        %v772 = vadd.f32 0.0, %v771
        %773 = vdwg.mxu0
        %774 = vmatpush.bf16.msra.mxu0 0
        %775 = vmatpush.bf16.msra.mxu0 0
        %776 = vmatpush.bf16.msra.mxu0 0
        %777 = vmatpush.bf16.msra.mxu0 0
        %778 = vmatpush.bf16.msra.mxu0 0
        %779 = vmatpush.bf16.msra.mxu0 0
        %780 = vmatpush.bf16.msra.mxu0 0
        %781 = vmatpush.bf16.msra.mxu0 %v593
        %782 = vmatmul.bf16.gmra.mxu0 %v604
        %v783 = vpop.f32.mrf.mxu0
        %v784 = vadd.f32 0.0, %v783
        %v785 = vpop.f32.mrf.mxu0
        %v786 = vadd.f32 0.0, %v785
        %787 = vdwg.mxu0
        %788 = vmatpush.bf16.msra.mxu0 0
        %789 = vmatpush.bf16.msra.mxu0 0
        %790 = vmatpush.bf16.msra.mxu0 0
        %791 = vmatpush.bf16.msra.mxu0 0
        %792 = vmatpush.bf16.msra.mxu0 0
        %793 = vmatpush.bf16.msra.mxu0 0
        %794 = vmatpush.bf16.msra.mxu0 0
        %795 = vmatpush.bf16.msra.mxu0 %v594
        %796 = vmatmul.bf16.gmra.mxu0 %v604
        %v797 = vpop.f32.mrf.mxu0
        %v798 = vadd.f32 0.0, %v797
        %v799 = vpop.f32.mrf.mxu0
        %v800 = vadd.f32 0.0, %v799
        %801 = vdwg.mxu0
        %802 = vmatpush.bf16.msra.mxu0 0
        %803 = vmatpush.bf16.msra.mxu0 0
        %804 = vmatpush.bf16.msra.mxu0 0
        %805 = vmatpush.bf16.msra.mxu0 0
        %806 = vmatpush.bf16.msra.mxu0 0
        %807 = vmatpush.bf16.msra.mxu0 0
        %808 = vmatpush.bf16.msra.mxu0 0
        %809 = vmatpush.bf16.msra.mxu0 %v595
        %810 = vmatmul.bf16.gmra.mxu0 %v604
        %v811 = vpop.f32.mrf.mxu0
        %v812 = vadd.f32 0.0, %v811
        %v813 = vpop.f32.mrf.mxu0
        %v814 = vadd.f32 0.0, %v813
        %815 = vdwg.mxu0
        %816 = vmatpush.bf16.msra.mxu0 0
        %817 = vmatpush.bf16.msra.mxu0 0
        %818 = vmatpush.bf16.msra.mxu0 0
        %819 = vmatpush.bf16.msra.mxu0 0
        %820 = vmatpush.bf16.msra.mxu0 0
        %821 = vmatpush.bf16.msra.mxu0 0
        %822 = vmatpush.bf16.msra.mxu0 0
        %823 = vmatpush.bf16.msra.mxu0 %v596
        %824 = vmatmul.bf16.gmra.mxu0 %v604
        %v825 = vpop.f32.mrf.mxu0
        %v826 = vadd.f32 0.0, %v825
        %v827 = vpop.f32.mrf.mxu0
        %v828 = vadd.f32 0.0, %v827
        %829 = vdwg.mxu0
        %v830 = vld [vmem:[%s5] sm:$0xff]
        %v831 = vld [vmem:[%s5 + $0x8] sm:$0xff]
        %833 = vset.pattern.permute.xlu0 0
        %834 = vperm.xlu0 %833, %v830
        %v835 = vpop.permute.xlu0 %834
        %838 = vset.pattern.permute.xlu0 0
        %839 = vperm.xlu0 %838, %v831
        %v840 = vpop.permute.xlu0 %839
        %v842 = vmul.f32 %v616, %v835
        %v843 = vmul.f32 %v630, %v835
        %v844 = vmul.f32 %v644, %v835
        %v845 = vmul.f32 %v658, %v835
        %v846 = vmul.f32 %v672, %v835
        %v847 = vmul.f32 %v686, %v835
        %v848 = vmul.f32 %v700, %v835
        %v849 = vmul.f32 %v714, %v835
        %v850 = vmul.f32 %v728, %v835
        %v851 = vmul.f32 %v742, %v835
        %v852 = vmul.f32 %v756, %v835
        %v853 = vmul.f32 %v770, %v835
        %v854 = vmul.f32 %v784, %v835
        %v855 = vmul.f32 %v798, %v835
        %v856 = vmul.f32 %v812, %v835
        %v857 = vmul.f32 %v826, %v835
        %v858 = vmul.f32 %v618, %v840
        %v859 = vmul.f32 %v632, %v840
        %v860 = vmul.f32 %v646, %v840
        %v861 = vmul.f32 %v660, %v840
        %v862 = vmul.f32 %v674, %v840
        %v863 = vmul.f32 %v688, %v840
        %v864 = vmul.f32 %v702, %v840
        %v865 = vmul.f32 %v716, %v840
        %v866 = vmul.f32 %v730, %v840
        %v867 = vmul.f32 %v744, %v840
        %v868 = vmul.f32 %v758, %v840
        %v869 = vmul.f32 %v772, %v840
        %v870 = vmul.f32 %v786, %v840
        %v871 = vmul.f32 %v800, %v840
        %v872 = vmul.f32 %v814, %v840
        %v873 = vmul.f32 %v828, %v840
        %v874 = vld [vmem:[%s6] sm:$0xff]
        %v875 = vld [vmem:[%s6 + $0x8] sm:$0xff]
        %877 = vset.pattern.permute.xlu0 0
        %878 = vperm.xlu0 %877, %v874
        %v879 = vpop.permute.xlu0 %878
        %882 = vset.pattern.permute.xlu0 0
        %883 = vperm.xlu0 %882, %v875
        %v884 = vpop.permute.xlu0 %883
        %v886 = vadd.f32 %v842, %v879
        %v887 = vadd.f32 %v843, %v879
        %v888 = vadd.f32 %v844, %v879
        %v889 = vadd.f32 %v845, %v879
        %v890 = vadd.f32 %v846, %v879
        %v891 = vadd.f32 %v847, %v879
        %v892 = vadd.f32 %v848, %v879
        %v893 = vadd.f32 %v849, %v879
        %v894 = vadd.f32 %v850, %v879
        %v895 = vadd.f32 %v851, %v879
        %v896 = vadd.f32 %v852, %v879
        %v897 = vadd.f32 %v853, %v879
        %v898 = vadd.f32 %v854, %v879
        %v899 = vadd.f32 %v855, %v879
        %v900 = vadd.f32 %v856, %v879
        %v901 = vadd.f32 %v857, %v879
        %v902 = vadd.f32 %v858, %v884
        %v903 = vadd.f32 %v859, %v884
        %v904 = vadd.f32 %v860, %v884
        %v905 = vadd.f32 %v861, %v884
        %v906 = vadd.f32 %v862, %v884
        %v907 = vadd.f32 %v863, %v884
        %v908 = vadd.f32 %v864, %v884
        %v909 = vadd.f32 %v865, %v884
        %v910 = vadd.f32 %v866, %v884
        %v911 = vadd.f32 %v867, %v884
        %v912 = vadd.f32 %v868, %v884
        %v913 = vadd.f32 %v869, %v884
        %v914 = vadd.f32 %v870, %v884
        %v915 = vadd.f32 %v871, %v884
        %v916 = vadd.f32 %v872, %v884
        %v917 = vadd.f32 %v873, %v884
        %v918 = vmax.f32 %v886, 0.0
        %v919 = vmax.f32 %v887, 0.0
        %v920 = vmax.f32 %v888, 0.0
        %v921 = vmax.f32 %v889, 0.0
        %v922 = vmax.f32 %v890, 0.0
        %v923 = vmax.f32 %v891, 0.0
        %v924 = vmax.f32 %v892, 0.0
        %v925 = vmax.f32 %v893, 0.0
        %v926 = vmax.f32 %v894, 0.0
        %v927 = vmax.f32 %v895, 0.0
        %v928 = vmax.f32 %v896, 0.0
        %v929 = vmax.f32 %v897, 0.0
        %v930 = vmax.f32 %v898, 0.0
        %v931 = vmax.f32 %v899, 0.0
        %v932 = vmax.f32 %v900, 0.0
        %v933 = vmax.f32 %v901, 0.0
        %v934 = vmax.f32 %v902, 0.0
        %v935 = vmax.f32 %v903, 0.0
        %v936 = vmax.f32 %v904, 0.0
        %v937 = vmax.f32 %v905, 0.0
        %v938 = vmax.f32 %v906, 0.0
        %v939 = vmax.f32 %v907, 0.0
        %v940 = vmax.f32 %v908, 0.0
        %v941 = vmax.f32 %v909, 0.0
        %v942 = vmax.f32 %v910, 0.0
        %v943 = vmax.f32 %v911, 0.0
        %v944 = vmax.f32 %v912, 0.0
        %v945 = vmax.f32 %v913, 0.0
        %v946 = vmax.f32 %v914, 0.0
        %v947 = vmax.f32 %v915, 0.0
        %v948 = vmax.f32 %v916, 0.0
        %v949 = vmax.f32 %v917, 0.0
        %950 = vrot.lane.b32.xlu0 %v918, 17
        %v951 = vpop.permute.xlu0 %950
        %952 = vrot.lane.b32.xlu0 %v934, 17
        %v953 = vpop.permute.xlu0 %952
        %954 = vrot.lane.b32.xlu0 %v919, 17
        %v955 = vpop.permute.xlu0 %954
        %956 = vrot.lane.b32.xlu0 %v935, 17
        %v957 = vpop.permute.xlu0 %956
        %958 = vrot.lane.b32.xlu0 %v920, 17
        %v959 = vpop.permute.xlu0 %958
        %960 = vrot.lane.b32.xlu0 %v936, 17
        %v961 = vpop.permute.xlu0 %960
        %962 = vrot.lane.b32.xlu0 %v921, 17
        %v963 = vpop.permute.xlu0 %962
        %964 = vrot.lane.b32.xlu0 %v937, 17
        %v965 = vpop.permute.xlu0 %964
        %966 = vrot.lane.b32.xlu0 %v922, 17
        %v967 = vpop.permute.xlu0 %966
        %968 = vrot.lane.b32.xlu0 %v938, 17
        %v969 = vpop.permute.xlu0 %968
        %970 = vrot.lane.b32.xlu0 %v923, 17
        %v971 = vpop.permute.xlu0 %970
        %972 = vrot.lane.b32.xlu0 %v939, 17
        %v973 = vpop.permute.xlu0 %972
        %974 = vrot.lane.b32.xlu0 %v924, 17
        %v975 = vpop.permute.xlu0 %974
        %976 = vrot.lane.b32.xlu0 %v940, 17
        %v977 = vpop.permute.xlu0 %976
        %978 = vrot.lane.b32.xlu0 %v925, 17
        %v979 = vpop.permute.xlu0 %978
        %980 = vrot.lane.b32.xlu0 %v941, 17
        %v981 = vpop.permute.xlu0 %980
        %982 = vrot.lane.b32.xlu0 %v926, 17
        %v983 = vpop.permute.xlu0 %982
        %984 = vrot.lane.b32.xlu0 %v942, 17
        %v985 = vpop.permute.xlu0 %984
        %986 = vrot.lane.b32.xlu0 %v927, 17
        %v987 = vpop.permute.xlu0 %986
        %988 = vrot.lane.b32.xlu0 %v943, 17
        %v989 = vpop.permute.xlu0 %988
        %990 = vrot.lane.b32.xlu0 %v928, 17
        %v991 = vpop.permute.xlu0 %990
        %992 = vrot.lane.b32.xlu0 %v944, 17
        %v993 = vpop.permute.xlu0 %992
        %994 = vrot.lane.b32.xlu0 %v929, 17
        %v995 = vpop.permute.xlu0 %994
        %996 = vrot.lane.b32.xlu0 %v945, 17
        %v997 = vpop.permute.xlu0 %996
        %998 = vrot.lane.b32.xlu0 %v930, 17
        %v999 = vpop.permute.xlu0 %998
        %1000 = vrot.lane.b32.xlu0 %v946, 17
        %v1001 = vpop.permute.xlu0 %1000
        %1002 = vrot.lane.b32.xlu0 %v931, 17
        %v1003 = vpop.permute.xlu0 %1002
        %1004 = vrot.lane.b32.xlu0 %v947, 17
        %v1005 = vpop.permute.xlu0 %1004
        %1006 = vrot.lane.b32.xlu0 %v932, 17
        %v1007 = vpop.permute.xlu0 %1006
        %1008 = vrot.lane.b32.xlu0 %v948, 17
        %v1009 = vpop.permute.xlu0 %1008
        %1010 = vrot.lane.b32.xlu0 %v933, 17
        %v1011 = vpop.permute.xlu0 %1010
        %1012 = vrot.lane.b32.xlu0 %v949, 17
        %v1013 = vpop.permute.xlu0 %1012
        %v1014 = vlaneseq
        %v1015 = vand.u32 %v1014, 127
        %vm1016 = vcmp.lt.s32.totalorder %v1015, 17
        %v1017 = vsel %vm1016, %v1007, %v1011
        %v1018 = vsel %vm1016, %v1009, %v1013
        %v1019 = vsel %vm1016, %v1003, %v1007
        %v1020 = vsel %vm1016, %v1005, %v1009
        %v1021 = vsel %vm1016, %v999, %v1003
        %v1022 = vsel %vm1016, %v1001, %v1005
        %v1023 = vsel %vm1016, %v995, %v999
        %v1024 = vsel %vm1016, %v997, %v1001
        %v1025 = vsel %vm1016, %v991, %v995
        %v1026 = vsel %vm1016, %v993, %v997
        %v1027 = vsel %vm1016, %v987, %v991
        %v1028 = vsel %vm1016, %v989, %v993
        %v1029 = vsel %vm1016, %v983, %v987
        %v1030 = vsel %vm1016, %v985, %v989
        %v1031 = vsel %vm1016, %v979, %v983
        %v1032 = vsel %vm1016, %v981, %v985
        %v1033 = vsel %vm1016, %v975, %v979
        %v1034 = vsel %vm1016, %v977, %v981
        %v1035 = vsel %vm1016, %v971, %v975
        %v1036 = vsel %vm1016, %v973, %v977
        %v1037 = vsel %vm1016, %v967, %v971
        %v1038 = vsel %vm1016, %v969, %v973
        %v1039 = vsel %vm1016, %v963, %v967
        %v1040 = vsel %vm1016, %v965, %v969
        %v1041 = vsel %vm1016, %v959, %v963
        %v1042 = vsel %vm1016, %v961, %v965
        %v1043 = vsel %vm1016, %v955, %v959
        %v1044 = vsel %vm1016, %v957, %v961
        %v1045 = vsel %vm1016, %v951, %v955
        %v1046 = vsel %vm1016, %v953, %v957
        %v1047 = vsel %vm1016, %v1011, %v951
        %v1048 = vsel %vm1016, %v1013, %v953
        %v1049 = vld [vmem:[#allocation5] ss:$8 sm:$0xf]
        %v1050 = vld [vmem:[#allocation5] ss:$8 sm:$0xf0]
        %v1051 = vor.u32 %v1049, %v1050
        %s1052 = scalar_lea.vmem [#allocation5], 64
        %v1053 = vld [vmem:[%s1052] ss:$8 sm:$0xf]
        %v1054 = vld [vmem:[%s1052] ss:$8 sm:$0xf0]
        %v1055 = vor.u32 %v1053, %v1054
        %v1058 = vperm.slane %v1051, 0
        %v1059 = vperm.slane %v1051, 1
        %v1060 = vperm.slane %v1051, 2
        %v1061 = vperm.slane %v1051, 3
        %v1062 = vperm.slane %v1051, 4
        %v1063 = vperm.slane %v1051, 5
        %v1064 = vperm.slane %v1051, 6
        %v1065 = vperm.slane %v1051, 7
        %v1066 = vperm.slane %v1055, 0
        %v1067 = vperm.slane %v1055, 1
        %v1068 = vperm.slane %v1055, 2
        %v1069 = vperm.slane %v1055, 3
        %v1070 = vperm.slane %v1055, 4
        %v1071 = vperm.slane %v1055, 5
        %v1072 = vperm.slane %v1055, 6
        %v1073 = vperm.slane %v1055, 7
        %v1090 = vmul.f32 %v1047, %v1058
        %v1091 = vmul.f32 %v1045, %v1059
        %v1092 = vmul.f32 %v1043, %v1060
        %v1093 = vmul.f32 %v1041, %v1061
        %v1094 = vmul.f32 %v1039, %v1062
        %v1095 = vmul.f32 %v1037, %v1063
        %v1096 = vmul.f32 %v1035, %v1064
        %v1097 = vmul.f32 %v1033, %v1065
        %v1098 = vmul.f32 %v1031, %v1066
        %v1099 = vmul.f32 %v1029, %v1067
        %v1100 = vmul.f32 %v1027, %v1068
        %v1101 = vmul.f32 %v1025, %v1069
        %v1102 = vmul.f32 %v1023, %v1070
        %v1103 = vmul.f32 %v1021, %v1071
        %v1104 = vmul.f32 %v1019, %v1072
        %v1105 = vmul.f32 %v1017, %v1073
        %v1106 = vmul.f32 %v1048, %v1058
        %v1107 = vmul.f32 %v1046, %v1059
        %v1108 = vmul.f32 %v1044, %v1060
        %v1109 = vmul.f32 %v1042, %v1061
        %v1110 = vmul.f32 %v1040, %v1062
        %v1111 = vmul.f32 %v1038, %v1063
        %v1112 = vmul.f32 %v1036, %v1064
        %v1113 = vmul.f32 %v1034, %v1065
        %v1114 = vmul.f32 %v1032, %v1066
        %v1115 = vmul.f32 %v1030, %v1067
        %v1116 = vmul.f32 %v1028, %v1068
        %v1117 = vmul.f32 %v1026, %v1069
        %v1118 = vmul.f32 %v1024, %v1070
        %v1119 = vmul.f32 %v1022, %v1071
        %v1120 = vmul.f32 %v1020, %v1072
        %v1121 = vmul.f32 %v1018, %v1073
        %v1122 = vpack.c.bf16 %v1091, %v1090
        %v1123 = vpack.c.bf16 %v1093, %v1092
        %v1124 = vpack.c.bf16 %v1095, %v1094
        %v1125 = vpack.c.bf16 %v1097, %v1096
        %v1126 = vpack.c.bf16 %v1099, %v1098
        %v1127 = vpack.c.bf16 %v1101, %v1100
        %v1128 = vpack.c.bf16 %v1103, %v1102
        %v1129 = vpack.c.bf16 %v1105, %v1104
        %v1130 = vpack.c.bf16 %v1107, %v1106
        %v1131 = vpack.c.bf16 %v1109, %v1108
        %v1132 = vpack.c.bf16 %v1111, %v1110
        %v1133 = vpack.c.bf16 %v1113, %v1112
        %v1134 = vpack.c.bf16 %v1115, %v1114
        %v1135 = vpack.c.bf16 %v1117, %v1116
        %v1136 = vpack.c.bf16 %v1119, %v1118
        %v1137 = vpack.c.bf16 %v1121, %v1120
        %1138 = vrot.lane.b32.xlu0 %v918, 16
        %v1139 = vpop.permute.xlu0 %1138
        %1140 = vrot.lane.b32.xlu0 %v934, 16
        %v1141 = vpop.permute.xlu0 %1140
        %1142 = vrot.lane.b32.xlu0 %v919, 16
        %v1143 = vpop.permute.xlu0 %1142
        %1144 = vrot.lane.b32.xlu0 %v935, 16
        %v1145 = vpop.permute.xlu0 %1144
        %1146 = vrot.lane.b32.xlu0 %v920, 16
        %v1147 = vpop.permute.xlu0 %1146
        %1148 = vrot.lane.b32.xlu0 %v936, 16
        %v1149 = vpop.permute.xlu0 %1148
        %1150 = vrot.lane.b32.xlu0 %v921, 16
        %v1151 = vpop.permute.xlu0 %1150
        %1152 = vrot.lane.b32.xlu0 %v937, 16
        %v1153 = vpop.permute.xlu0 %1152
        %1154 = vrot.lane.b32.xlu0 %v922, 16
        %v1155 = vpop.permute.xlu0 %1154
        %1156 = vrot.lane.b32.xlu0 %v938, 16
        %v1157 = vpop.permute.xlu0 %1156
        %1158 = vrot.lane.b32.xlu0 %v923, 16
        %v1159 = vpop.permute.xlu0 %1158
        %1160 = vrot.lane.b32.xlu0 %v939, 16
        %v1161 = vpop.permute.xlu0 %1160
        %1162 = vrot.lane.b32.xlu0 %v924, 16
        %v1163 = vpop.permute.xlu0 %1162
        %1164 = vrot.lane.b32.xlu0 %v940, 16
        %v1165 = vpop.permute.xlu0 %1164
        %1166 = vrot.lane.b32.xlu0 %v925, 16
        %v1167 = vpop.permute.xlu0 %1166
        %1168 = vrot.lane.b32.xlu0 %v941, 16
        %v1169 = vpop.permute.xlu0 %1168
        %1170 = vrot.lane.b32.xlu0 %v926, 16
        %v1171 = vpop.permute.xlu0 %1170
        %1172 = vrot.lane.b32.xlu0 %v942, 16
        %v1173 = vpop.permute.xlu0 %1172
        %1174 = vrot.lane.b32.xlu0 %v927, 16
        %v1175 = vpop.permute.xlu0 %1174
        %1176 = vrot.lane.b32.xlu0 %v943, 16
        %v1177 = vpop.permute.xlu0 %1176
        %1178 = vrot.lane.b32.xlu0 %v928, 16
        %v1179 = vpop.permute.xlu0 %1178
        %1180 = vrot.lane.b32.xlu0 %v944, 16
        %v1181 = vpop.permute.xlu0 %1180
        %1182 = vrot.lane.b32.xlu0 %v929, 16
        %v1183 = vpop.permute.xlu0 %1182
        %1184 = vrot.lane.b32.xlu0 %v945, 16
        %v1185 = vpop.permute.xlu0 %1184
        %1186 = vrot.lane.b32.xlu0 %v930, 16
        %v1187 = vpop.permute.xlu0 %1186
        %1188 = vrot.lane.b32.xlu0 %v946, 16
        %v1189 = vpop.permute.xlu0 %1188
        %1190 = vrot.lane.b32.xlu0 %v931, 16
        %v1191 = vpop.permute.xlu0 %1190
        %1192 = vrot.lane.b32.xlu0 %v947, 16
        %v1193 = vpop.permute.xlu0 %1192
        %1194 = vrot.lane.b32.xlu0 %v932, 16
        %v1195 = vpop.permute.xlu0 %1194
        %1196 = vrot.lane.b32.xlu0 %v948, 16
        %v1197 = vpop.permute.xlu0 %1196
        %1198 = vrot.lane.b32.xlu0 %v933, 16
        %v1199 = vpop.permute.xlu0 %1198
        %1200 = vrot.lane.b32.xlu0 %v949, 16
        %v1201 = vpop.permute.xlu0 %1200
        %vm1202 = vcmp.lt.s32.totalorder %v1015, 16
        %v1203 = vsel %vm1202, %v1195, %v1199
        %v1204 = vsel %vm1202, %v1197, %v1201
        %v1205 = vsel %vm1202, %v1191, %v1195
        %v1206 = vsel %vm1202, %v1193, %v1197
        %v1207 = vsel %vm1202, %v1187, %v1191
        %v1208 = vsel %vm1202, %v1189, %v1193
        %v1209 = vsel %vm1202, %v1183, %v1187
        %v1210 = vsel %vm1202, %v1185, %v1189
        %v1211 = vsel %vm1202, %v1179, %v1183
        %v1212 = vsel %vm1202, %v1181, %v1185
        %v1213 = vsel %vm1202, %v1175, %v1179
        %v1214 = vsel %vm1202, %v1177, %v1181
        %v1215 = vsel %vm1202, %v1171, %v1175
        %v1216 = vsel %vm1202, %v1173, %v1177
        %v1217 = vsel %vm1202, %v1167, %v1171
        %v1218 = vsel %vm1202, %v1169, %v1173
        %v1219 = vsel %vm1202, %v1163, %v1167
        %v1220 = vsel %vm1202, %v1165, %v1169
        %v1221 = vsel %vm1202, %v1159, %v1163
        %v1222 = vsel %vm1202, %v1161, %v1165
        %v1223 = vsel %vm1202, %v1155, %v1159
        %v1224 = vsel %vm1202, %v1157, %v1161
        %v1225 = vsel %vm1202, %v1151, %v1155
        %v1226 = vsel %vm1202, %v1153, %v1157
        %v1227 = vsel %vm1202, %v1147, %v1151
        %v1228 = vsel %vm1202, %v1149, %v1153
        %v1229 = vsel %vm1202, %v1143, %v1147
        %v1230 = vsel %vm1202, %v1145, %v1149
        %v1231 = vsel %vm1202, %v1139, %v1143
        %v1232 = vsel %vm1202, %v1141, %v1145
        %v1233 = vsel %vm1202, %v1199, %v1139
        %v1234 = vsel %vm1202, %v1201, %v1141
        %s1235 = scalar_lea.vmem [#allocation5], 1
        %v1236 = vld [vmem:[%s1235] ss:$8 sm:$0xf]
        %v1237 = vld [vmem:[%s1235] ss:$8 sm:$0xf0]
        %v1238 = vor.u32 %v1236, %v1237
        %s1239 = scalar_lea.vmem [#allocation5], 65
        %v1240 = vld [vmem:[%s1239] ss:$8 sm:$0xf]
        %v1241 = vld [vmem:[%s1239] ss:$8 sm:$0xf0]
        %v1242 = vor.u32 %v1240, %v1241
        %v1245 = vperm.slane %v1238, 0
        %v1246 = vperm.slane %v1238, 1
        %v1247 = vperm.slane %v1238, 2
        %v1248 = vperm.slane %v1238, 3
        %v1249 = vperm.slane %v1238, 4
        %v1250 = vperm.slane %v1238, 5
        %v1251 = vperm.slane %v1238, 6
        %v1252 = vperm.slane %v1238, 7
        %v1253 = vperm.slane %v1242, 0
        %v1254 = vperm.slane %v1242, 1
        %v1255 = vperm.slane %v1242, 2
        %v1256 = vperm.slane %v1242, 3
        %v1257 = vperm.slane %v1242, 4
        %v1258 = vperm.slane %v1242, 5
        %v1259 = vperm.slane %v1242, 6
        %v1260 = vperm.slane %v1242, 7
        %v1277 = vmul.f32 %v1233, %v1245
        %v1278 = vmul.f32 %v1231, %v1246
        %v1279 = vmul.f32 %v1229, %v1247
        %v1280 = vmul.f32 %v1227, %v1248
        %v1281 = vmul.f32 %v1225, %v1249
        %v1282 = vmul.f32 %v1223, %v1250
        %v1283 = vmul.f32 %v1221, %v1251
        %v1284 = vmul.f32 %v1219, %v1252
        %v1285 = vmul.f32 %v1217, %v1253
        %v1286 = vmul.f32 %v1215, %v1254
        %v1287 = vmul.f32 %v1213, %v1255
        %v1288 = vmul.f32 %v1211, %v1256
        %v1289 = vmul.f32 %v1209, %v1257
        %v1290 = vmul.f32 %v1207, %v1258
        %v1291 = vmul.f32 %v1205, %v1259
        %v1292 = vmul.f32 %v1203, %v1260
        %v1293 = vmul.f32 %v1234, %v1245
        %v1294 = vmul.f32 %v1232, %v1246
        %v1295 = vmul.f32 %v1230, %v1247
        %v1296 = vmul.f32 %v1228, %v1248
        %v1297 = vmul.f32 %v1226, %v1249
        %v1298 = vmul.f32 %v1224, %v1250
        %v1299 = vmul.f32 %v1222, %v1251
        %v1300 = vmul.f32 %v1220, %v1252
        %v1301 = vmul.f32 %v1218, %v1253
        %v1302 = vmul.f32 %v1216, %v1254
        %v1303 = vmul.f32 %v1214, %v1255
        %v1304 = vmul.f32 %v1212, %v1256
        %v1305 = vmul.f32 %v1210, %v1257
        %v1306 = vmul.f32 %v1208, %v1258
        %v1307 = vmul.f32 %v1206, %v1259
        %v1308 = vmul.f32 %v1204, %v1260
        %v1309 = vpack.c.bf16 %v1278, %v1277
        %v1310 = vpack.c.bf16 %v1280, %v1279
        %v1311 = vpack.c.bf16 %v1282, %v1281
        %v1312 = vpack.c.bf16 %v1284, %v1283
        %v1313 = vpack.c.bf16 %v1286, %v1285
        %v1314 = vpack.c.bf16 %v1288, %v1287
        %v1315 = vpack.c.bf16 %v1290, %v1289
        %v1316 = vpack.c.bf16 %v1292, %v1291
        %v1317 = vpack.c.bf16 %v1294, %v1293
        %v1318 = vpack.c.bf16 %v1296, %v1295
        %v1319 = vpack.c.bf16 %v1298, %v1297
        %v1320 = vpack.c.bf16 %v1300, %v1299
        %v1321 = vpack.c.bf16 %v1302, %v1301
        %v1322 = vpack.c.bf16 %v1304, %v1303
        %v1323 = vpack.c.bf16 %v1306, %v1305
        %v1324 = vpack.c.bf16 %v1308, %v1307
        %1325 = vrot.lane.b32.xlu0 %v918, 15
        %v1326 = vpop.permute.xlu0 %1325
        %1327 = vrot.lane.b32.xlu0 %v934, 15
        %v1328 = vpop.permute.xlu0 %1327
        %1329 = vrot.lane.b32.xlu0 %v919, 15
        %v1330 = vpop.permute.xlu0 %1329
        %1331 = vrot.lane.b32.xlu0 %v935, 15
        %v1332 = vpop.permute.xlu0 %1331
        %1333 = vrot.lane.b32.xlu0 %v920, 15
        %v1334 = vpop.permute.xlu0 %1333
        %1335 = vrot.lane.b32.xlu0 %v936, 15
        %v1336 = vpop.permute.xlu0 %1335
        %1337 = vrot.lane.b32.xlu0 %v921, 15
        %v1338 = vpop.permute.xlu0 %1337
        %1339 = vrot.lane.b32.xlu0 %v937, 15
        %v1340 = vpop.permute.xlu0 %1339
        %1341 = vrot.lane.b32.xlu0 %v922, 15
        %v1342 = vpop.permute.xlu0 %1341
        %1343 = vrot.lane.b32.xlu0 %v938, 15
        %v1344 = vpop.permute.xlu0 %1343
        %1345 = vrot.lane.b32.xlu0 %v923, 15
        %v1346 = vpop.permute.xlu0 %1345
        %1347 = vrot.lane.b32.xlu0 %v939, 15
        %v1348 = vpop.permute.xlu0 %1347
        %1349 = vrot.lane.b32.xlu0 %v924, 15
        %v1350 = vpop.permute.xlu0 %1349
        %1351 = vrot.lane.b32.xlu0 %v940, 15
        %v1352 = vpop.permute.xlu0 %1351
        %1353 = vrot.lane.b32.xlu0 %v925, 15
        %v1354 = vpop.permute.xlu0 %1353
        %1355 = vrot.lane.b32.xlu0 %v941, 15
        %v1356 = vpop.permute.xlu0 %1355
        %1357 = vrot.lane.b32.xlu0 %v926, 15
        %v1358 = vpop.permute.xlu0 %1357
        %1359 = vrot.lane.b32.xlu0 %v942, 15
        %v1360 = vpop.permute.xlu0 %1359
        %1361 = vrot.lane.b32.xlu0 %v927, 15
        %v1362 = vpop.permute.xlu0 %1361
        %1363 = vrot.lane.b32.xlu0 %v943, 15
        %v1364 = vpop.permute.xlu0 %1363
        %1365 = vrot.lane.b32.xlu0 %v928, 15
        %v1366 = vpop.permute.xlu0 %1365
        %1367 = vrot.lane.b32.xlu0 %v944, 15
        %v1368 = vpop.permute.xlu0 %1367
        %1369 = vrot.lane.b32.xlu0 %v929, 15
        %v1370 = vpop.permute.xlu0 %1369
        %1371 = vrot.lane.b32.xlu0 %v945, 15
        %v1372 = vpop.permute.xlu0 %1371
        %1373 = vrot.lane.b32.xlu0 %v930, 15
        %v1374 = vpop.permute.xlu0 %1373
        %1375 = vrot.lane.b32.xlu0 %v946, 15
        %v1376 = vpop.permute.xlu0 %1375
        %1377 = vrot.lane.b32.xlu0 %v931, 15
        %v1378 = vpop.permute.xlu0 %1377
        %1379 = vrot.lane.b32.xlu0 %v947, 15
        %v1380 = vpop.permute.xlu0 %1379
        %1381 = vrot.lane.b32.xlu0 %v932, 15
        %v1382 = vpop.permute.xlu0 %1381
        %1383 = vrot.lane.b32.xlu0 %v948, 15
        %v1384 = vpop.permute.xlu0 %1383
        %1385 = vrot.lane.b32.xlu0 %v933, 15
        %v1386 = vpop.permute.xlu0 %1385
        %1387 = vrot.lane.b32.xlu0 %v949, 15
        %v1388 = vpop.permute.xlu0 %1387
        %vm1389 = vcmp.lt.s32.totalorder %v1015, 15
        %v1390 = vsel %vm1389, %v1382, %v1386
        %v1391 = vsel %vm1389, %v1384, %v1388
        %v1392 = vsel %vm1389, %v1378, %v1382
        %v1393 = vsel %vm1389, %v1380, %v1384
        %v1394 = vsel %vm1389, %v1374, %v1378
        %v1395 = vsel %vm1389, %v1376, %v1380
        %v1396 = vsel %vm1389, %v1370, %v1374
        %v1397 = vsel %vm1389, %v1372, %v1376
        %v1398 = vsel %vm1389, %v1366, %v1370
        %v1399 = vsel %vm1389, %v1368, %v1372
        %v1400 = vsel %vm1389, %v1362, %v1366
        %v1401 = vsel %vm1389, %v1364, %v1368
        %v1402 = vsel %vm1389, %v1358, %v1362
        %v1403 = vsel %vm1389, %v1360, %v1364
        %v1404 = vsel %vm1389, %v1354, %v1358
        %v1405 = vsel %vm1389, %v1356, %v1360
        %v1406 = vsel %vm1389, %v1350, %v1354
        %v1407 = vsel %vm1389, %v1352, %v1356
        %v1408 = vsel %vm1389, %v1346, %v1350
        %v1409 = vsel %vm1389, %v1348, %v1352
        %v1410 = vsel %vm1389, %v1342, %v1346
        %v1411 = vsel %vm1389, %v1344, %v1348
        %v1412 = vsel %vm1389, %v1338, %v1342
        %v1413 = vsel %vm1389, %v1340, %v1344
        %v1414 = vsel %vm1389, %v1334, %v1338
        %v1415 = vsel %vm1389, %v1336, %v1340
        %v1416 = vsel %vm1389, %v1330, %v1334
        %v1417 = vsel %vm1389, %v1332, %v1336
        %v1418 = vsel %vm1389, %v1326, %v1330
        %v1419 = vsel %vm1389, %v1328, %v1332
        %v1420 = vsel %vm1389, %v1386, %v1326
        %v1421 = vsel %vm1389, %v1388, %v1328
        %s1422 = scalar_lea.vmem [#allocation5], 2
        %v1423 = vld [vmem:[%s1422] ss:$8 sm:$0xf]
        %v1424 = vld [vmem:[%s1422] ss:$8 sm:$0xf0]
        %v1425 = vor.u32 %v1423, %v1424
        %s1426 = scalar_lea.vmem [#allocation5], 66
        %v1427 = vld [vmem:[%s1426] ss:$8 sm:$0xf]
        %v1428 = vld [vmem:[%s1426] ss:$8 sm:$0xf0]
        %v1429 = vor.u32 %v1427, %v1428
        %v1432 = vperm.slane %v1425, 0
        %v1433 = vperm.slane %v1425, 1
        %v1434 = vperm.slane %v1425, 2
        %v1435 = vperm.slane %v1425, 3
        %v1436 = vperm.slane %v1425, 4
        %v1437 = vperm.slane %v1425, 5
        %v1438 = vperm.slane %v1425, 6
        %v1439 = vperm.slane %v1425, 7
        %v1440 = vperm.slane %v1429, 0
        %v1441 = vperm.slane %v1429, 1
        %v1442 = vperm.slane %v1429, 2
        %v1443 = vperm.slane %v1429, 3
        %v1444 = vperm.slane %v1429, 4
        %v1445 = vperm.slane %v1429, 5
        %v1446 = vperm.slane %v1429, 6
        %v1447 = vperm.slane %v1429, 7
        %v1464 = vmul.f32 %v1420, %v1432
        %v1465 = vmul.f32 %v1418, %v1433
        %v1466 = vmul.f32 %v1416, %v1434
        %v1467 = vmul.f32 %v1414, %v1435
        %v1468 = vmul.f32 %v1412, %v1436
        %v1469 = vmul.f32 %v1410, %v1437
        %v1470 = vmul.f32 %v1408, %v1438
        %v1471 = vmul.f32 %v1406, %v1439
        %v1472 = vmul.f32 %v1404, %v1440
        %v1473 = vmul.f32 %v1402, %v1441
        %v1474 = vmul.f32 %v1400, %v1442
        %v1475 = vmul.f32 %v1398, %v1443
        %v1476 = vmul.f32 %v1396, %v1444
        %v1477 = vmul.f32 %v1394, %v1445
        %v1478 = vmul.f32 %v1392, %v1446
        %v1479 = vmul.f32 %v1390, %v1447
        %v1480 = vmul.f32 %v1421, %v1432
        %v1481 = vmul.f32 %v1419, %v1433
        %v1482 = vmul.f32 %v1417, %v1434
        %v1483 = vmul.f32 %v1415, %v1435
        %v1484 = vmul.f32 %v1413, %v1436
        %v1485 = vmul.f32 %v1411, %v1437
        %v1486 = vmul.f32 %v1409, %v1438
        %v1487 = vmul.f32 %v1407, %v1439
        %v1488 = vmul.f32 %v1405, %v1440
        %v1489 = vmul.f32 %v1403, %v1441
        %v1490 = vmul.f32 %v1401, %v1442
        %v1491 = vmul.f32 %v1399, %v1443
        %v1492 = vmul.f32 %v1397, %v1444
        %v1493 = vmul.f32 %v1395, %v1445
        %v1494 = vmul.f32 %v1393, %v1446
        %v1495 = vmul.f32 %v1391, %v1447
        %v1496 = vpack.c.bf16 %v1465, %v1464
        %v1497 = vpack.c.bf16 %v1467, %v1466
        %v1498 = vpack.c.bf16 %v1469, %v1468
        %v1499 = vpack.c.bf16 %v1471, %v1470
        %v1500 = vpack.c.bf16 %v1473, %v1472
        %v1501 = vpack.c.bf16 %v1475, %v1474
        %v1502 = vpack.c.bf16 %v1477, %v1476
        %v1503 = vpack.c.bf16 %v1479, %v1478
        %v1504 = vpack.c.bf16 %v1481, %v1480
        %v1505 = vpack.c.bf16 %v1483, %v1482
        %v1506 = vpack.c.bf16 %v1485, %v1484
        %v1507 = vpack.c.bf16 %v1487, %v1486
        %v1508 = vpack.c.bf16 %v1489, %v1488
        %v1509 = vpack.c.bf16 %v1491, %v1490
        %v1510 = vpack.c.bf16 %v1493, %v1492
        %v1511 = vpack.c.bf16 %v1495, %v1494
        %1512 = vrot.lane.b32.xlu0 %v918, 1
        %v1513 = vpop.permute.xlu0 %1512
        %1514 = vrot.lane.b32.xlu0 %v934, 1
        %v1515 = vpop.permute.xlu0 %1514
        %1516 = vrot.lane.b32.xlu0 %v919, 1
        %v1517 = vpop.permute.xlu0 %1516
        %1518 = vrot.lane.b32.xlu0 %v935, 1
        %v1519 = vpop.permute.xlu0 %1518
        %1520 = vrot.lane.b32.xlu0 %v920, 1
        %v1521 = vpop.permute.xlu0 %1520
        %1522 = vrot.lane.b32.xlu0 %v936, 1
        %v1523 = vpop.permute.xlu0 %1522
        %1524 = vrot.lane.b32.xlu0 %v921, 1
        %v1525 = vpop.permute.xlu0 %1524
        %1526 = vrot.lane.b32.xlu0 %v937, 1
        %v1527 = vpop.permute.xlu0 %1526
        %1528 = vrot.lane.b32.xlu0 %v922, 1
        %v1529 = vpop.permute.xlu0 %1528
        %1530 = vrot.lane.b32.xlu0 %v938, 1
        %v1531 = vpop.permute.xlu0 %1530
        %1532 = vrot.lane.b32.xlu0 %v923, 1
        %v1533 = vpop.permute.xlu0 %1532
        %1534 = vrot.lane.b32.xlu0 %v939, 1
        %v1535 = vpop.permute.xlu0 %1534
        %1536 = vrot.lane.b32.xlu0 %v924, 1
        %v1537 = vpop.permute.xlu0 %1536
        %1538 = vrot.lane.b32.xlu0 %v940, 1
        %v1539 = vpop.permute.xlu0 %1538
        %1540 = vrot.lane.b32.xlu0 %v925, 1
        %v1541 = vpop.permute.xlu0 %1540
        %1542 = vrot.lane.b32.xlu0 %v941, 1
        %v1543 = vpop.permute.xlu0 %1542
        %1544 = vrot.lane.b32.xlu0 %v926, 1
        %v1545 = vpop.permute.xlu0 %1544
        %1546 = vrot.lane.b32.xlu0 %v942, 1
        %v1547 = vpop.permute.xlu0 %1546
        %1548 = vrot.lane.b32.xlu0 %v927, 1
        %v1549 = vpop.permute.xlu0 %1548
        %1550 = vrot.lane.b32.xlu0 %v943, 1
        %v1551 = vpop.permute.xlu0 %1550
        %1552 = vrot.lane.b32.xlu0 %v928, 1
        %v1553 = vpop.permute.xlu0 %1552
        %1554 = vrot.lane.b32.xlu0 %v944, 1
        %v1555 = vpop.permute.xlu0 %1554
        %1556 = vrot.lane.b32.xlu0 %v929, 1
        %v1557 = vpop.permute.xlu0 %1556
        %1558 = vrot.lane.b32.xlu0 %v945, 1
        %v1559 = vpop.permute.xlu0 %1558
        %1560 = vrot.lane.b32.xlu0 %v930, 1
        %v1561 = vpop.permute.xlu0 %1560
        %1562 = vrot.lane.b32.xlu0 %v946, 1
        %v1563 = vpop.permute.xlu0 %1562
        %1564 = vrot.lane.b32.xlu0 %v931, 1
        %v1565 = vpop.permute.xlu0 %1564
        %1566 = vrot.lane.b32.xlu0 %v947, 1
        %v1567 = vpop.permute.xlu0 %1566
        %1568 = vrot.lane.b32.xlu0 %v932, 1
        %v1569 = vpop.permute.xlu0 %1568
        %1570 = vrot.lane.b32.xlu0 %v948, 1
        %v1571 = vpop.permute.xlu0 %1570
        %1572 = vrot.lane.b32.xlu0 %v933, 1
        %v1573 = vpop.permute.xlu0 %1572
        %1574 = vrot.lane.b32.xlu0 %v949, 1
        %v1575 = vpop.permute.xlu0 %1574
        %vm1576 = vcmp.lt.s32.totalorder %v1015, 1
        %v1577 = vsel %vm1576, %v1569, %v1573
        %v1578 = vsel %vm1576, %v1571, %v1575
        %v1579 = vsel %vm1576, %v1565, %v1569
        %v1580 = vsel %vm1576, %v1567, %v1571
        %v1581 = vsel %vm1576, %v1561, %v1565
        %v1582 = vsel %vm1576, %v1563, %v1567
        %v1583 = vsel %vm1576, %v1557, %v1561
        %v1584 = vsel %vm1576, %v1559, %v1563
        %v1585 = vsel %vm1576, %v1553, %v1557
        %v1586 = vsel %vm1576, %v1555, %v1559
        %v1587 = vsel %vm1576, %v1549, %v1553
        %v1588 = vsel %vm1576, %v1551, %v1555
        %v1589 = vsel %vm1576, %v1545, %v1549
        %v1590 = vsel %vm1576, %v1547, %v1551
        %v1591 = vsel %vm1576, %v1541, %v1545
        %v1592 = vsel %vm1576, %v1543, %v1547
        %v1593 = vsel %vm1576, %v1537, %v1541
        %v1594 = vsel %vm1576, %v1539, %v1543
        %v1595 = vsel %vm1576, %v1533, %v1537
        %v1596 = vsel %vm1576, %v1535, %v1539
        %v1597 = vsel %vm1576, %v1529, %v1533
        %v1598 = vsel %vm1576, %v1531, %v1535
        %v1599 = vsel %vm1576, %v1525, %v1529
        %v1600 = vsel %vm1576, %v1527, %v1531
        %v1601 = vsel %vm1576, %v1521, %v1525
        %v1602 = vsel %vm1576, %v1523, %v1527
        %v1603 = vsel %vm1576, %v1517, %v1521
        %v1604 = vsel %vm1576, %v1519, %v1523
        %v1605 = vsel %vm1576, %v1513, %v1517
        %v1606 = vsel %vm1576, %v1515, %v1519
        %v1607 = vsel %vm1576, %v1573, %v1513
        %v1608 = vsel %vm1576, %v1575, %v1515
        %s1609 = scalar_lea.vmem [#allocation5], 3
        %v1610 = vld [vmem:[%s1609] ss:$8 sm:$0xf]
        %v1611 = vld [vmem:[%s1609] ss:$8 sm:$0xf0]
        %v1612 = vor.u32 %v1610, %v1611
        %s1613 = scalar_lea.vmem [#allocation5], 67
        %v1614 = vld [vmem:[%s1613] ss:$8 sm:$0xf]
        %v1615 = vld [vmem:[%s1613] ss:$8 sm:$0xf0]
        %v1616 = vor.u32 %v1614, %v1615
        %v1619 = vperm.slane %v1612, 0
        %v1620 = vperm.slane %v1612, 1
        %v1621 = vperm.slane %v1612, 2
        %v1622 = vperm.slane %v1612, 3
        %v1623 = vperm.slane %v1612, 4
        %v1624 = vperm.slane %v1612, 5
        %v1625 = vperm.slane %v1612, 6
        %v1626 = vperm.slane %v1612, 7
        %v1627 = vperm.slane %v1616, 0
        %v1628 = vperm.slane %v1616, 1
        %v1629 = vperm.slane %v1616, 2
        %v1630 = vperm.slane %v1616, 3
        %v1631 = vperm.slane %v1616, 4
        %v1632 = vperm.slane %v1616, 5
        %v1633 = vperm.slane %v1616, 6
        %v1634 = vperm.slane %v1616, 7
        %v1651 = vmul.f32 %v1607, %v1619
        %v1652 = vmul.f32 %v1605, %v1620
        %v1653 = vmul.f32 %v1603, %v1621
        %v1654 = vmul.f32 %v1601, %v1622
        %v1655 = vmul.f32 %v1599, %v1623
        %v1656 = vmul.f32 %v1597, %v1624
        %v1657 = vmul.f32 %v1595, %v1625
        %v1658 = vmul.f32 %v1593, %v1626
        %v1659 = vmul.f32 %v1591, %v1627
        %v1660 = vmul.f32 %v1589, %v1628
        %v1661 = vmul.f32 %v1587, %v1629
        %v1662 = vmul.f32 %v1585, %v1630
        %v1663 = vmul.f32 %v1583, %v1631
        %v1664 = vmul.f32 %v1581, %v1632
        %v1665 = vmul.f32 %v1579, %v1633
        %v1666 = vmul.f32 %v1577, %v1634
        %v1667 = vmul.f32 %v1608, %v1619
        %v1668 = vmul.f32 %v1606, %v1620
        %v1669 = vmul.f32 %v1604, %v1621
        %v1670 = vmul.f32 %v1602, %v1622
        %v1671 = vmul.f32 %v1600, %v1623
        %v1672 = vmul.f32 %v1598, %v1624
        %v1673 = vmul.f32 %v1596, %v1625
        %v1674 = vmul.f32 %v1594, %v1626
        %v1675 = vmul.f32 %v1592, %v1627
        %v1676 = vmul.f32 %v1590, %v1628
        %v1677 = vmul.f32 %v1588, %v1629
        %v1678 = vmul.f32 %v1586, %v1630
        %v1679 = vmul.f32 %v1584, %v1631
        %v1680 = vmul.f32 %v1582, %v1632
        %v1681 = vmul.f32 %v1580, %v1633
        %v1682 = vmul.f32 %v1578, %v1634
        %v1683 = vpack.c.bf16 %v1652, %v1651
        %v1684 = vpack.c.bf16 %v1654, %v1653
        %v1685 = vpack.c.bf16 %v1656, %v1655
        %v1686 = vpack.c.bf16 %v1658, %v1657
        %v1687 = vpack.c.bf16 %v1660, %v1659
        %v1688 = vpack.c.bf16 %v1662, %v1661
        %v1689 = vpack.c.bf16 %v1664, %v1663
        %v1690 = vpack.c.bf16 %v1666, %v1665
        %v1691 = vpack.c.bf16 %v1668, %v1667
        %v1692 = vpack.c.bf16 %v1670, %v1669
        %v1693 = vpack.c.bf16 %v1672, %v1671
        %v1694 = vpack.c.bf16 %v1674, %v1673
        %v1695 = vpack.c.bf16 %v1676, %v1675
        %v1696 = vpack.c.bf16 %v1678, %v1677
        %v1697 = vpack.c.bf16 %v1680, %v1679
        %v1698 = vpack.c.bf16 %v1682, %v1681
        %v1699 = vpack.c.bf16 %v919, %v918
        %v1700 = vpack.c.bf16 %v921, %v920
        %v1701 = vpack.c.bf16 %v923, %v922
        %v1702 = vpack.c.bf16 %v925, %v924
        %v1703 = vpack.c.bf16 %v927, %v926
        %v1704 = vpack.c.bf16 %v929, %v928
        %v1705 = vpack.c.bf16 %v931, %v930
        %v1706 = vpack.c.bf16 %v933, %v932
        %v1707 = vpack.c.bf16 %v935, %v934
        %v1708 = vpack.c.bf16 %v937, %v936
        %v1709 = vpack.c.bf16 %v939, %v938
        %v1710 = vpack.c.bf16 %v941, %v940
        %v1711 = vpack.c.bf16 %v943, %v942
        %v1712 = vpack.c.bf16 %v945, %v944
        %v1713 = vpack.c.bf16 %v947, %v946
        %v1714 = vpack.c.bf16 %v949, %v948
        %1715 = vrot.lane.b32.xlu0 %v918, 127
        %v1716 = vpop.permute.xlu0 %1715
        %1717 = vrot.lane.b32.xlu0 %v934, 127
        %v1718 = vpop.permute.xlu0 %1717
        %1719 = vrot.lane.b32.xlu0 %v919, 127
        %v1720 = vpop.permute.xlu0 %1719
        %1721 = vrot.lane.b32.xlu0 %v935, 127
        %v1722 = vpop.permute.xlu0 %1721
        %1723 = vrot.lane.b32.xlu0 %v920, 127
        %v1724 = vpop.permute.xlu0 %1723
        %1725 = vrot.lane.b32.xlu0 %v936, 127
        %v1726 = vpop.permute.xlu0 %1725
        %1727 = vrot.lane.b32.xlu0 %v921, 127
        %v1728 = vpop.permute.xlu0 %1727
        %1729 = vrot.lane.b32.xlu0 %v937, 127
        %v1730 = vpop.permute.xlu0 %1729
        %1731 = vrot.lane.b32.xlu0 %v922, 127
        %v1732 = vpop.permute.xlu0 %1731
        %1733 = vrot.lane.b32.xlu0 %v938, 127
        %v1734 = vpop.permute.xlu0 %1733
        %1735 = vrot.lane.b32.xlu0 %v923, 127
        %v1736 = vpop.permute.xlu0 %1735
        %1737 = vrot.lane.b32.xlu0 %v939, 127
        %v1738 = vpop.permute.xlu0 %1737
        %1739 = vrot.lane.b32.xlu0 %v924, 127
        %v1740 = vpop.permute.xlu0 %1739
        %1741 = vrot.lane.b32.xlu0 %v940, 127
        %v1742 = vpop.permute.xlu0 %1741
        %1743 = vrot.lane.b32.xlu0 %v925, 127
        %v1744 = vpop.permute.xlu0 %1743
        %1745 = vrot.lane.b32.xlu0 %v941, 127
        %v1746 = vpop.permute.xlu0 %1745
        %1747 = vrot.lane.b32.xlu0 %v926, 127
        %v1748 = vpop.permute.xlu0 %1747
        %1749 = vrot.lane.b32.xlu0 %v942, 127
        %v1750 = vpop.permute.xlu0 %1749
        %1751 = vrot.lane.b32.xlu0 %v927, 127
        %v1752 = vpop.permute.xlu0 %1751
        %1753 = vrot.lane.b32.xlu0 %v943, 127
        %v1754 = vpop.permute.xlu0 %1753
        %1755 = vrot.lane.b32.xlu0 %v928, 127
        %v1756 = vpop.permute.xlu0 %1755
        %1757 = vrot.lane.b32.xlu0 %v944, 127
        %v1758 = vpop.permute.xlu0 %1757
        %1759 = vrot.lane.b32.xlu0 %v929, 127
        %v1760 = vpop.permute.xlu0 %1759
        %1761 = vrot.lane.b32.xlu0 %v945, 127
        %v1762 = vpop.permute.xlu0 %1761
        %1763 = vrot.lane.b32.xlu0 %v930, 127
        %v1764 = vpop.permute.xlu0 %1763
        %1765 = vrot.lane.b32.xlu0 %v946, 127
        %v1766 = vpop.permute.xlu0 %1765
        %1767 = vrot.lane.b32.xlu0 %v931, 127
        %v1768 = vpop.permute.xlu0 %1767
        %1769 = vrot.lane.b32.xlu0 %v947, 127
        %v1770 = vpop.permute.xlu0 %1769
        %1771 = vrot.lane.b32.xlu0 %v932, 127
        %v1772 = vpop.permute.xlu0 %1771
        %1773 = vrot.lane.b32.xlu0 %v948, 127
        %v1774 = vpop.permute.xlu0 %1773
        %1775 = vrot.lane.b32.xlu0 %v933, 127
        %v1776 = vpop.permute.xlu0 %1775
        %1777 = vrot.lane.b32.xlu0 %v949, 127
        %v1778 = vpop.permute.xlu0 %1777
        %vm1779 = vcmp.lt.s32.totalorder %v1015, 127
        %v1780 = vsel %vm1779, %v1772, %v1776
        %v1781 = vsel %vm1779, %v1774, %v1778
        %v1782 = vsel %vm1779, %v1768, %v1772
        %v1783 = vsel %vm1779, %v1770, %v1774
        %v1784 = vsel %vm1779, %v1764, %v1768
        %v1785 = vsel %vm1779, %v1766, %v1770
        %v1786 = vsel %vm1779, %v1760, %v1764
        %v1787 = vsel %vm1779, %v1762, %v1766
        %v1788 = vsel %vm1779, %v1756, %v1760
        %v1789 = vsel %vm1779, %v1758, %v1762
        %v1790 = vsel %vm1779, %v1752, %v1756
        %v1791 = vsel %vm1779, %v1754, %v1758
        %v1792 = vsel %vm1779, %v1748, %v1752
        %v1793 = vsel %vm1779, %v1750, %v1754
        %v1794 = vsel %vm1779, %v1744, %v1748
        %v1795 = vsel %vm1779, %v1746, %v1750
        %v1796 = vsel %vm1779, %v1740, %v1744
        %v1797 = vsel %vm1779, %v1742, %v1746
        %v1798 = vsel %vm1779, %v1736, %v1740
        %v1799 = vsel %vm1779, %v1738, %v1742
        %v1800 = vsel %vm1779, %v1732, %v1736
        %v1801 = vsel %vm1779, %v1734, %v1738
        %v1802 = vsel %vm1779, %v1728, %v1732
        %v1803 = vsel %vm1779, %v1730, %v1734
        %v1804 = vsel %vm1779, %v1724, %v1728
        %v1805 = vsel %vm1779, %v1726, %v1730
        %v1806 = vsel %vm1779, %v1720, %v1724
        %v1807 = vsel %vm1779, %v1722, %v1726
        %v1808 = vsel %vm1779, %v1716, %v1720
        %v1809 = vsel %vm1779, %v1718, %v1722
        %v1810 = vsel %vm1779, %v1776, %v1716
        %v1811 = vsel %vm1779, %v1778, %v1718
        %s1812 = scalar_lea.vmem [#allocation5], 5
        %v1813 = vld [vmem:[%s1812] ss:$8 sm:$0xf]
        %v1814 = vld [vmem:[%s1812] ss:$8 sm:$0xf0]
        %v1815 = vor.u32 %v1813, %v1814
        %s1816 = scalar_lea.vmem [#allocation5], 69
        %v1817 = vld [vmem:[%s1816] ss:$8 sm:$0xf]
        %v1818 = vld [vmem:[%s1816] ss:$8 sm:$0xf0]
        %v1819 = vor.u32 %v1817, %v1818
        %v1822 = vperm.slane %v1815, 0
        %v1823 = vperm.slane %v1815, 1
        %v1824 = vperm.slane %v1815, 2
        %v1825 = vperm.slane %v1815, 3
        %v1826 = vperm.slane %v1815, 4
        %v1827 = vperm.slane %v1815, 5
        %v1828 = vperm.slane %v1815, 6
        %v1829 = vperm.slane %v1815, 7
        %v1830 = vperm.slane %v1819, 0
        %v1831 = vperm.slane %v1819, 1
        %v1832 = vperm.slane %v1819, 2
        %v1833 = vperm.slane %v1819, 3
        %v1834 = vperm.slane %v1819, 4
        %v1835 = vperm.slane %v1819, 5
        %v1836 = vperm.slane %v1819, 6
        %v1837 = vperm.slane %v1819, 7
        %v1854 = vmul.f32 %v1808, %v1822
        %v1855 = vmul.f32 %v1806, %v1823
        %v1856 = vmul.f32 %v1804, %v1824
        %v1857 = vmul.f32 %v1802, %v1825
        %v1858 = vmul.f32 %v1800, %v1826
        %v1859 = vmul.f32 %v1798, %v1827
        %v1860 = vmul.f32 %v1796, %v1828
        %v1861 = vmul.f32 %v1794, %v1829
        %v1862 = vmul.f32 %v1792, %v1830
        %v1863 = vmul.f32 %v1790, %v1831
        %v1864 = vmul.f32 %v1788, %v1832
        %v1865 = vmul.f32 %v1786, %v1833
        %v1866 = vmul.f32 %v1784, %v1834
        %v1867 = vmul.f32 %v1782, %v1835
        %v1868 = vmul.f32 %v1780, %v1836
        %v1869 = vmul.f32 %v1810, %v1837
        %v1870 = vmul.f32 %v1809, %v1822
        %v1871 = vmul.f32 %v1807, %v1823
        %v1872 = vmul.f32 %v1805, %v1824
        %v1873 = vmul.f32 %v1803, %v1825
        %v1874 = vmul.f32 %v1801, %v1826
        %v1875 = vmul.f32 %v1799, %v1827
        %v1876 = vmul.f32 %v1797, %v1828
        %v1877 = vmul.f32 %v1795, %v1829
        %v1878 = vmul.f32 %v1793, %v1830
        %v1879 = vmul.f32 %v1791, %v1831
        %v1880 = vmul.f32 %v1789, %v1832
        %v1881 = vmul.f32 %v1787, %v1833
        %v1882 = vmul.f32 %v1785, %v1834
        %v1883 = vmul.f32 %v1783, %v1835
        %v1884 = vmul.f32 %v1781, %v1836
        %v1885 = vmul.f32 %v1811, %v1837
        %v1886 = vpack.c.bf16 %v1855, %v1854
        %v1887 = vpack.c.bf16 %v1857, %v1856
        %v1888 = vpack.c.bf16 %v1859, %v1858
        %v1889 = vpack.c.bf16 %v1861, %v1860
        %v1890 = vpack.c.bf16 %v1863, %v1862
        %v1891 = vpack.c.bf16 %v1865, %v1864
        %v1892 = vpack.c.bf16 %v1867, %v1866
        %v1893 = vpack.c.bf16 %v1869, %v1868
        %v1894 = vpack.c.bf16 %v1871, %v1870
        %v1895 = vpack.c.bf16 %v1873, %v1872
        %v1896 = vpack.c.bf16 %v1875, %v1874
        %v1897 = vpack.c.bf16 %v1877, %v1876
        %v1898 = vpack.c.bf16 %v1879, %v1878
        %v1899 = vpack.c.bf16 %v1881, %v1880
        %v1900 = vpack.c.bf16 %v1883, %v1882
        %v1901 = vpack.c.bf16 %v1885, %v1884
        %1902 = vrot.lane.b32.xlu0 %v918, 113
        %v1903 = vpop.permute.xlu0 %1902
        %1904 = vrot.lane.b32.xlu0 %v934, 113
        %v1905 = vpop.permute.xlu0 %1904
        %1906 = vrot.lane.b32.xlu0 %v919, 113
        %v1907 = vpop.permute.xlu0 %1906
        %1908 = vrot.lane.b32.xlu0 %v935, 113
        %v1909 = vpop.permute.xlu0 %1908
        %1910 = vrot.lane.b32.xlu0 %v920, 113
        %v1911 = vpop.permute.xlu0 %1910
        %1912 = vrot.lane.b32.xlu0 %v936, 113
        %v1913 = vpop.permute.xlu0 %1912
        %1914 = vrot.lane.b32.xlu0 %v921, 113
        %v1915 = vpop.permute.xlu0 %1914
        %1916 = vrot.lane.b32.xlu0 %v937, 113
        %v1917 = vpop.permute.xlu0 %1916
        %1918 = vrot.lane.b32.xlu0 %v922, 113
        %v1919 = vpop.permute.xlu0 %1918
        %1920 = vrot.lane.b32.xlu0 %v938, 113
        %v1921 = vpop.permute.xlu0 %1920
        %1922 = vrot.lane.b32.xlu0 %v923, 113
        %v1923 = vpop.permute.xlu0 %1922
        %1924 = vrot.lane.b32.xlu0 %v939, 113
        %v1925 = vpop.permute.xlu0 %1924
        %1926 = vrot.lane.b32.xlu0 %v924, 113
        %v1927 = vpop.permute.xlu0 %1926
        %1928 = vrot.lane.b32.xlu0 %v940, 113
        %v1929 = vpop.permute.xlu0 %1928
        %1930 = vrot.lane.b32.xlu0 %v925, 113
        %v1931 = vpop.permute.xlu0 %1930
        %1932 = vrot.lane.b32.xlu0 %v941, 113
        %v1933 = vpop.permute.xlu0 %1932
        %1934 = vrot.lane.b32.xlu0 %v926, 113
        %v1935 = vpop.permute.xlu0 %1934
        %1936 = vrot.lane.b32.xlu0 %v942, 113
        %v1937 = vpop.permute.xlu0 %1936
        %1938 = vrot.lane.b32.xlu0 %v927, 113
        %v1939 = vpop.permute.xlu0 %1938
        %1940 = vrot.lane.b32.xlu0 %v943, 113
        %v1941 = vpop.permute.xlu0 %1940
        %1942 = vrot.lane.b32.xlu0 %v928, 113
        %v1943 = vpop.permute.xlu0 %1942
        %1944 = vrot.lane.b32.xlu0 %v944, 113
        %v1945 = vpop.permute.xlu0 %1944
        %1946 = vrot.lane.b32.xlu0 %v929, 113
        %v1947 = vpop.permute.xlu0 %1946
        %1948 = vrot.lane.b32.xlu0 %v945, 113
        %v1949 = vpop.permute.xlu0 %1948
        %1950 = vrot.lane.b32.xlu0 %v930, 113
        %v1951 = vpop.permute.xlu0 %1950
        %1952 = vrot.lane.b32.xlu0 %v946, 113
        %v1953 = vpop.permute.xlu0 %1952
        %1954 = vrot.lane.b32.xlu0 %v931, 113
        %v1955 = vpop.permute.xlu0 %1954
        %1956 = vrot.lane.b32.xlu0 %v947, 113
        %v1957 = vpop.permute.xlu0 %1956
        %1958 = vrot.lane.b32.xlu0 %v932, 113
        %v1959 = vpop.permute.xlu0 %1958
        %1960 = vrot.lane.b32.xlu0 %v948, 113
        %v1961 = vpop.permute.xlu0 %1960
        %1962 = vrot.lane.b32.xlu0 %v933, 113
        %v1963 = vpop.permute.xlu0 %1962
        %1964 = vrot.lane.b32.xlu0 %v949, 113
        %v1965 = vpop.permute.xlu0 %1964
        %vm1966 = vcmp.lt.s32.totalorder %v1015, 113
        %v1967 = vsel %vm1966, %v1959, %v1963
        %v1968 = vsel %vm1966, %v1961, %v1965
        %v1969 = vsel %vm1966, %v1955, %v1959
        %v1970 = vsel %vm1966, %v1957, %v1961
        %v1971 = vsel %vm1966, %v1951, %v1955
        %v1972 = vsel %vm1966, %v1953, %v1957
        %v1973 = vsel %vm1966, %v1947, %v1951
        %v1974 = vsel %vm1966, %v1949, %v1953
        %v1975 = vsel %vm1966, %v1943, %v1947
        %v1976 = vsel %vm1966, %v1945, %v1949
        %v1977 = vsel %vm1966, %v1939, %v1943
        %v1978 = vsel %vm1966, %v1941, %v1945
        %v1979 = vsel %vm1966, %v1935, %v1939
        %v1980 = vsel %vm1966, %v1937, %v1941
        %v1981 = vsel %vm1966, %v1931, %v1935
        %v1982 = vsel %vm1966, %v1933, %v1937
        %v1983 = vsel %vm1966, %v1927, %v1931
        %v1984 = vsel %vm1966, %v1929, %v1933
        %v1985 = vsel %vm1966, %v1923, %v1927
        %v1986 = vsel %vm1966, %v1925, %v1929
        %v1987 = vsel %vm1966, %v1919, %v1923
        %v1988 = vsel %vm1966, %v1921, %v1925
        %v1989 = vsel %vm1966, %v1915, %v1919
        %v1990 = vsel %vm1966, %v1917, %v1921
        %v1991 = vsel %vm1966, %v1911, %v1915
        %v1992 = vsel %vm1966, %v1913, %v1917
        %v1993 = vsel %vm1966, %v1907, %v1911
        %v1994 = vsel %vm1966, %v1909, %v1913
        %v1995 = vsel %vm1966, %v1903, %v1907
        %v1996 = vsel %vm1966, %v1905, %v1909
        %v1997 = vsel %vm1966, %v1963, %v1903
        %v1998 = vsel %vm1966, %v1965, %v1905
        %s1999 = scalar_lea.vmem [#allocation5], 6
        %v2000 = vld [vmem:[%s1999] ss:$8 sm:$0xf]
        %v2001 = vld [vmem:[%s1999] ss:$8 sm:$0xf0]
        %v2002 = vor.u32 %v2000, %v2001
        %s2003 = scalar_lea.vmem [#allocation5], 70
        %v2004 = vld [vmem:[%s2003] ss:$8 sm:$0xf]
        %v2005 = vld [vmem:[%s2003] ss:$8 sm:$0xf0]
        %v2006 = vor.u32 %v2004, %v2005
        %v2009 = vperm.slane %v2002, 0
        %v2010 = vperm.slane %v2002, 1
        %v2011 = vperm.slane %v2002, 2
        %v2012 = vperm.slane %v2002, 3
        %v2013 = vperm.slane %v2002, 4
        %v2014 = vperm.slane %v2002, 5
        %v2015 = vperm.slane %v2002, 6
        %v2016 = vperm.slane %v2002, 7
        %v2017 = vperm.slane %v2006, 0
        %v2018 = vperm.slane %v2006, 1
        %v2019 = vperm.slane %v2006, 2
        %v2020 = vperm.slane %v2006, 3
        %v2021 = vperm.slane %v2006, 4
        %v2022 = vperm.slane %v2006, 5
        %v2023 = vperm.slane %v2006, 6
        %v2024 = vperm.slane %v2006, 7
        %v2041 = vmul.f32 %v1995, %v2009
        %v2042 = vmul.f32 %v1993, %v2010
        %v2043 = vmul.f32 %v1991, %v2011
        %v2044 = vmul.f32 %v1989, %v2012
        %v2045 = vmul.f32 %v1987, %v2013
        %v2046 = vmul.f32 %v1985, %v2014
        %v2047 = vmul.f32 %v1983, %v2015
        %v2048 = vmul.f32 %v1981, %v2016
        %v2049 = vmul.f32 %v1979, %v2017
        %v2050 = vmul.f32 %v1977, %v2018
        %v2051 = vmul.f32 %v1975, %v2019
        %v2052 = vmul.f32 %v1973, %v2020
        %v2053 = vmul.f32 %v1971, %v2021
        %v2054 = vmul.f32 %v1969, %v2022
        %v2055 = vmul.f32 %v1967, %v2023
        %v2056 = vmul.f32 %v1997, %v2024
        %v2057 = vmul.f32 %v1996, %v2009
        %v2058 = vmul.f32 %v1994, %v2010
        %v2059 = vmul.f32 %v1992, %v2011
        %v2060 = vmul.f32 %v1990, %v2012
        %v2061 = vmul.f32 %v1988, %v2013
        %v2062 = vmul.f32 %v1986, %v2014
        %v2063 = vmul.f32 %v1984, %v2015
        %v2064 = vmul.f32 %v1982, %v2016
        %v2065 = vmul.f32 %v1980, %v2017
        %v2066 = vmul.f32 %v1978, %v2018
        %v2067 = vmul.f32 %v1976, %v2019
        %v2068 = vmul.f32 %v1974, %v2020
        %v2069 = vmul.f32 %v1972, %v2021
        %v2070 = vmul.f32 %v1970, %v2022
        %v2071 = vmul.f32 %v1968, %v2023
        %v2072 = vmul.f32 %v1998, %v2024
        %v2073 = vpack.c.bf16 %v2042, %v2041
        %v2074 = vpack.c.bf16 %v2044, %v2043
        %v2075 = vpack.c.bf16 %v2046, %v2045
        %v2076 = vpack.c.bf16 %v2048, %v2047
        %v2077 = vpack.c.bf16 %v2050, %v2049
        %v2078 = vpack.c.bf16 %v2052, %v2051
        %v2079 = vpack.c.bf16 %v2054, %v2053
        %v2080 = vpack.c.bf16 %v2056, %v2055
        %v2081 = vpack.c.bf16 %v2058, %v2057
        %v2082 = vpack.c.bf16 %v2060, %v2059
        %v2083 = vpack.c.bf16 %v2062, %v2061
        %v2084 = vpack.c.bf16 %v2064, %v2063
        %v2085 = vpack.c.bf16 %v2066, %v2065
        %v2086 = vpack.c.bf16 %v2068, %v2067
        %v2087 = vpack.c.bf16 %v2070, %v2069
        %v2088 = vpack.c.bf16 %v2072, %v2071
        %2089 = vrot.lane.b32.xlu0 %v918, 112
        %v2090 = vpop.permute.xlu0 %2089
        %2091 = vrot.lane.b32.xlu0 %v934, 112
        %v2092 = vpop.permute.xlu0 %2091
        %2093 = vrot.lane.b32.xlu0 %v919, 112
        %v2094 = vpop.permute.xlu0 %2093
        %2095 = vrot.lane.b32.xlu0 %v935, 112
        %v2096 = vpop.permute.xlu0 %2095
        %2097 = vrot.lane.b32.xlu0 %v920, 112
        %v2098 = vpop.permute.xlu0 %2097
        %2099 = vrot.lane.b32.xlu0 %v936, 112
        %v2100 = vpop.permute.xlu0 %2099
        %2101 = vrot.lane.b32.xlu0 %v921, 112
        %v2102 = vpop.permute.xlu0 %2101
        %2103 = vrot.lane.b32.xlu0 %v937, 112
        %v2104 = vpop.permute.xlu0 %2103
        %2105 = vrot.lane.b32.xlu0 %v922, 112
        %v2106 = vpop.permute.xlu0 %2105
        %2107 = vrot.lane.b32.xlu0 %v938, 112
        %v2108 = vpop.permute.xlu0 %2107
        %2109 = vrot.lane.b32.xlu0 %v923, 112
        %v2110 = vpop.permute.xlu0 %2109
        %2111 = vrot.lane.b32.xlu0 %v939, 112
        %v2112 = vpop.permute.xlu0 %2111
        %2113 = vrot.lane.b32.xlu0 %v924, 112
        %v2114 = vpop.permute.xlu0 %2113
        %2115 = vrot.lane.b32.xlu0 %v940, 112
        %v2116 = vpop.permute.xlu0 %2115
        %2117 = vrot.lane.b32.xlu0 %v925, 112
        %v2118 = vpop.permute.xlu0 %2117
        %2119 = vrot.lane.b32.xlu0 %v941, 112
        %v2120 = vpop.permute.xlu0 %2119
        %2121 = vrot.lane.b32.xlu0 %v926, 112
        %v2122 = vpop.permute.xlu0 %2121
        %2123 = vrot.lane.b32.xlu0 %v942, 112
        %v2124 = vpop.permute.xlu0 %2123
        %2125 = vrot.lane.b32.xlu0 %v927, 112
        %v2126 = vpop.permute.xlu0 %2125
        %2127 = vrot.lane.b32.xlu0 %v943, 112
        %v2128 = vpop.permute.xlu0 %2127
        %2129 = vrot.lane.b32.xlu0 %v928, 112
        %v2130 = vpop.permute.xlu0 %2129
        %2131 = vrot.lane.b32.xlu0 %v944, 112
        %v2132 = vpop.permute.xlu0 %2131
        %2133 = vrot.lane.b32.xlu0 %v929, 112
        %v2134 = vpop.permute.xlu0 %2133
        %2135 = vrot.lane.b32.xlu0 %v945, 112
        %v2136 = vpop.permute.xlu0 %2135
        %2137 = vrot.lane.b32.xlu0 %v930, 112
        %v2138 = vpop.permute.xlu0 %2137
        %2139 = vrot.lane.b32.xlu0 %v946, 112
        %v2140 = vpop.permute.xlu0 %2139
        %2141 = vrot.lane.b32.xlu0 %v931, 112
        %v2142 = vpop.permute.xlu0 %2141
        %2143 = vrot.lane.b32.xlu0 %v947, 112
        %v2144 = vpop.permute.xlu0 %2143
        %2145 = vrot.lane.b32.xlu0 %v932, 112
        %v2146 = vpop.permute.xlu0 %2145
        %2147 = vrot.lane.b32.xlu0 %v948, 112
        %v2148 = vpop.permute.xlu0 %2147
        %2149 = vrot.lane.b32.xlu0 %v933, 112
        %v2150 = vpop.permute.xlu0 %2149
        %2151 = vrot.lane.b32.xlu0 %v949, 112
        %v2152 = vpop.permute.xlu0 %2151
        %vm2153 = vcmp.lt.s32.totalorder %v1015, 112
        %v2154 = vsel %vm2153, %v2146, %v2150
        %v2155 = vsel %vm2153, %v2148, %v2152
        %v2156 = vsel %vm2153, %v2142, %v2146
        %v2157 = vsel %vm2153, %v2144, %v2148
        %v2158 = vsel %vm2153, %v2138, %v2142
        %v2159 = vsel %vm2153, %v2140, %v2144
        %v2160 = vsel %vm2153, %v2134, %v2138
        %v2161 = vsel %vm2153, %v2136, %v2140
        %v2162 = vsel %vm2153, %v2130, %v2134
        %v2163 = vsel %vm2153, %v2132, %v2136
        %v2164 = vsel %vm2153, %v2126, %v2130
        %v2165 = vsel %vm2153, %v2128, %v2132
        %v2166 = vsel %vm2153, %v2122, %v2126
        %v2167 = vsel %vm2153, %v2124, %v2128
        %v2168 = vsel %vm2153, %v2118, %v2122
        %v2169 = vsel %vm2153, %v2120, %v2124
        %v2170 = vsel %vm2153, %v2114, %v2118
        %v2171 = vsel %vm2153, %v2116, %v2120
        %v2172 = vsel %vm2153, %v2110, %v2114
        %v2173 = vsel %vm2153, %v2112, %v2116
        %v2174 = vsel %vm2153, %v2106, %v2110
        %v2175 = vsel %vm2153, %v2108, %v2112
        %v2176 = vsel %vm2153, %v2102, %v2106
        %v2177 = vsel %vm2153, %v2104, %v2108
        %v2178 = vsel %vm2153, %v2098, %v2102
        %v2179 = vsel %vm2153, %v2100, %v2104
        %v2180 = vsel %vm2153, %v2094, %v2098
        %v2181 = vsel %vm2153, %v2096, %v2100
        %v2182 = vsel %vm2153, %v2090, %v2094
        %v2183 = vsel %vm2153, %v2092, %v2096
        %v2184 = vsel %vm2153, %v2150, %v2090
        %v2185 = vsel %vm2153, %v2152, %v2092
        %s2186 = scalar_lea.vmem [#allocation5], 7
        %v2187 = vld [vmem:[%s2186] ss:$8 sm:$0xf]
        %v2188 = vld [vmem:[%s2186] ss:$8 sm:$0xf0]
        %v2189 = vor.u32 %v2187, %v2188
        %s2190 = scalar_lea.vmem [#allocation5], 71
        %v2191 = vld [vmem:[%s2190] ss:$8 sm:$0xf]
        %v2192 = vld [vmem:[%s2190] ss:$8 sm:$0xf0]
        %v2193 = vor.u32 %v2191, %v2192
        %v2196 = vperm.slane %v2189, 0
        %v2197 = vperm.slane %v2189, 1
        %v2198 = vperm.slane %v2189, 2
        %v2199 = vperm.slane %v2189, 3
        %v2200 = vperm.slane %v2189, 4
        %v2201 = vperm.slane %v2189, 5
        %v2202 = vperm.slane %v2189, 6
        %v2203 = vperm.slane %v2189, 7
        %v2204 = vperm.slane %v2193, 0
        %v2205 = vperm.slane %v2193, 1
        %v2206 = vperm.slane %v2193, 2
        %v2207 = vperm.slane %v2193, 3
        %v2208 = vperm.slane %v2193, 4
        %v2209 = vperm.slane %v2193, 5
        %v2210 = vperm.slane %v2193, 6
        %v2211 = vperm.slane %v2193, 7
        %v2228 = vmul.f32 %v2182, %v2196
        %v2229 = vmul.f32 %v2180, %v2197
        %v2230 = vmul.f32 %v2178, %v2198
        %v2231 = vmul.f32 %v2176, %v2199
        %v2232 = vmul.f32 %v2174, %v2200
        %v2233 = vmul.f32 %v2172, %v2201
        %v2234 = vmul.f32 %v2170, %v2202
        %v2235 = vmul.f32 %v2168, %v2203
        %v2236 = vmul.f32 %v2166, %v2204
        %v2237 = vmul.f32 %v2164, %v2205
        %v2238 = vmul.f32 %v2162, %v2206
        %v2239 = vmul.f32 %v2160, %v2207
        %v2240 = vmul.f32 %v2158, %v2208
        %v2241 = vmul.f32 %v2156, %v2209
        %v2242 = vmul.f32 %v2154, %v2210
        %v2243 = vmul.f32 %v2184, %v2211
        %v2244 = vmul.f32 %v2183, %v2196
        %v2245 = vmul.f32 %v2181, %v2197
        %v2246 = vmul.f32 %v2179, %v2198
        %v2247 = vmul.f32 %v2177, %v2199
        %v2248 = vmul.f32 %v2175, %v2200
        %v2249 = vmul.f32 %v2173, %v2201
        %v2250 = vmul.f32 %v2171, %v2202
        %v2251 = vmul.f32 %v2169, %v2203
        %v2252 = vmul.f32 %v2167, %v2204
        %v2253 = vmul.f32 %v2165, %v2205
        %v2254 = vmul.f32 %v2163, %v2206
        %v2255 = vmul.f32 %v2161, %v2207
        %v2256 = vmul.f32 %v2159, %v2208
        %v2257 = vmul.f32 %v2157, %v2209
        %v2258 = vmul.f32 %v2155, %v2210
        %v2259 = vmul.f32 %v2185, %v2211
        %v2260 = vpack.c.bf16 %v2229, %v2228
        %v2261 = vpack.c.bf16 %v2231, %v2230
        %v2262 = vpack.c.bf16 %v2233, %v2232
        %v2263 = vpack.c.bf16 %v2235, %v2234
        %v2264 = vpack.c.bf16 %v2237, %v2236
        %v2265 = vpack.c.bf16 %v2239, %v2238
        %v2266 = vpack.c.bf16 %v2241, %v2240
        %v2267 = vpack.c.bf16 %v2243, %v2242
        %v2268 = vpack.c.bf16 %v2245, %v2244
        %v2269 = vpack.c.bf16 %v2247, %v2246
        %v2270 = vpack.c.bf16 %v2249, %v2248
        %v2271 = vpack.c.bf16 %v2251, %v2250
        %v2272 = vpack.c.bf16 %v2253, %v2252
        %v2273 = vpack.c.bf16 %v2255, %v2254
        %v2274 = vpack.c.bf16 %v2257, %v2256
        %v2275 = vpack.c.bf16 %v2259, %v2258
        %2276 = vrot.lane.b32.xlu0 %v918, 111
        %v2277 = vpop.permute.xlu0 %2276
        %2278 = vrot.lane.b32.xlu0 %v934, 111
        %v2279 = vpop.permute.xlu0 %2278
        %2280 = vrot.lane.b32.xlu0 %v919, 111
        %v2281 = vpop.permute.xlu0 %2280
        %2282 = vrot.lane.b32.xlu0 %v935, 111
        %v2283 = vpop.permute.xlu0 %2282
        %2284 = vrot.lane.b32.xlu0 %v920, 111
        %v2285 = vpop.permute.xlu0 %2284
        %2286 = vrot.lane.b32.xlu0 %v936, 111
        %v2287 = vpop.permute.xlu0 %2286
        %2288 = vrot.lane.b32.xlu0 %v921, 111
        %v2289 = vpop.permute.xlu0 %2288
        %2290 = vrot.lane.b32.xlu0 %v937, 111
        %v2291 = vpop.permute.xlu0 %2290
        %2292 = vrot.lane.b32.xlu0 %v922, 111
        %v2293 = vpop.permute.xlu0 %2292
        %2294 = vrot.lane.b32.xlu0 %v938, 111
        %v2295 = vpop.permute.xlu0 %2294
        %2296 = vrot.lane.b32.xlu0 %v923, 111
        %v2297 = vpop.permute.xlu0 %2296
        %2298 = vrot.lane.b32.xlu0 %v939, 111
        %v2299 = vpop.permute.xlu0 %2298
        %2300 = vrot.lane.b32.xlu0 %v924, 111
        %v2301 = vpop.permute.xlu0 %2300
        %2302 = vrot.lane.b32.xlu0 %v940, 111
        %v2303 = vpop.permute.xlu0 %2302
        %2304 = vrot.lane.b32.xlu0 %v925, 111
        %v2305 = vpop.permute.xlu0 %2304
        %2306 = vrot.lane.b32.xlu0 %v941, 111
        %v2307 = vpop.permute.xlu0 %2306
        %2308 = vrot.lane.b32.xlu0 %v926, 111
        %v2309 = vpop.permute.xlu0 %2308
        %2310 = vrot.lane.b32.xlu0 %v942, 111
        %v2311 = vpop.permute.xlu0 %2310
        %2312 = vrot.lane.b32.xlu0 %v927, 111
        %v2313 = vpop.permute.xlu0 %2312
        %2314 = vrot.lane.b32.xlu0 %v943, 111
        %v2315 = vpop.permute.xlu0 %2314
        %2316 = vrot.lane.b32.xlu0 %v928, 111
        %v2317 = vpop.permute.xlu0 %2316
        %2318 = vrot.lane.b32.xlu0 %v944, 111
        %v2319 = vpop.permute.xlu0 %2318
        %2320 = vrot.lane.b32.xlu0 %v929, 111
        %v2321 = vpop.permute.xlu0 %2320
        %2322 = vrot.lane.b32.xlu0 %v945, 111
        %v2323 = vpop.permute.xlu0 %2322
        %2324 = vrot.lane.b32.xlu0 %v930, 111
        %v2325 = vpop.permute.xlu0 %2324
        %2326 = vrot.lane.b32.xlu0 %v946, 111
        %v2327 = vpop.permute.xlu0 %2326
        %2328 = vrot.lane.b32.xlu0 %v931, 111
        %v2329 = vpop.permute.xlu0 %2328
        %2330 = vrot.lane.b32.xlu0 %v947, 111
        %v2331 = vpop.permute.xlu0 %2330
        %2332 = vrot.lane.b32.xlu0 %v932, 111
        %v2333 = vpop.permute.xlu0 %2332
        %2334 = vrot.lane.b32.xlu0 %v948, 111
        %v2335 = vpop.permute.xlu0 %2334
        %2336 = vrot.lane.b32.xlu0 %v933, 111
        %v2337 = vpop.permute.xlu0 %2336
        %2338 = vrot.lane.b32.xlu0 %v949, 111
        %v2339 = vpop.permute.xlu0 %2338
        %vm2340 = vcmp.lt.s32.totalorder %v1015, 111
        %v2341 = vsel %vm2340, %v2333, %v2337
        %v2342 = vsel %vm2340, %v2335, %v2339
        %v2343 = vsel %vm2340, %v2329, %v2333
        %v2344 = vsel %vm2340, %v2331, %v2335
        %v2345 = vsel %vm2340, %v2325, %v2329
        %v2346 = vsel %vm2340, %v2327, %v2331
        %v2347 = vsel %vm2340, %v2321, %v2325
        %v2348 = vsel %vm2340, %v2323, %v2327
        %v2349 = vsel %vm2340, %v2317, %v2321
        %v2350 = vsel %vm2340, %v2319, %v2323
        %v2351 = vsel %vm2340, %v2313, %v2317
        %v2352 = vsel %vm2340, %v2315, %v2319
        %v2353 = vsel %vm2340, %v2309, %v2313
        %v2354 = vsel %vm2340, %v2311, %v2315
        %v2355 = vsel %vm2340, %v2305, %v2309
        %v2356 = vsel %vm2340, %v2307, %v2311
        %v2357 = vsel %vm2340, %v2301, %v2305
        %v2358 = vsel %vm2340, %v2303, %v2307
        %v2359 = vsel %vm2340, %v2297, %v2301
        %v2360 = vsel %vm2340, %v2299, %v2303
        %v2361 = vsel %vm2340, %v2293, %v2297
        %v2362 = vsel %vm2340, %v2295, %v2299
        %v2363 = vsel %vm2340, %v2289, %v2293
        %v2364 = vsel %vm2340, %v2291, %v2295
        %v2365 = vsel %vm2340, %v2285, %v2289
        %v2366 = vsel %vm2340, %v2287, %v2291
        %v2367 = vsel %vm2340, %v2281, %v2285
        %v2368 = vsel %vm2340, %v2283, %v2287
        %v2369 = vsel %vm2340, %v2277, %v2281
        %v2370 = vsel %vm2340, %v2279, %v2283
        %v2371 = vsel %vm2340, %v2337, %v2277
        %v2372 = vsel %vm2340, %v2339, %v2279
        %s2373 = scalar_lea.vmem [#allocation5], 128
        %v2374 = vld [vmem:[%s2373] ss:$8 sm:$0xf]
        %v2375 = vld [vmem:[%s2373] ss:$8 sm:$0xf0]
        %v2376 = vor.u32 %v2374, %v2375
        %s2377 = scalar_lea.vmem [#allocation5], 192
        %v2378 = vld [vmem:[%s2377] ss:$8 sm:$0xf]
        %v2379 = vld [vmem:[%s2377] ss:$8 sm:$0xf0]
        %v2380 = vor.u32 %v2378, %v2379
        %v2383 = vperm.slane %v2376, 0
        %v2384 = vperm.slane %v2376, 1
        %v2385 = vperm.slane %v2376, 2
        %v2386 = vperm.slane %v2376, 3
        %v2387 = vperm.slane %v2376, 4
        %v2388 = vperm.slane %v2376, 5
        %v2389 = vperm.slane %v2376, 6
        %v2390 = vperm.slane %v2376, 7
        %v2391 = vperm.slane %v2380, 0
        %v2392 = vperm.slane %v2380, 1
        %v2393 = vperm.slane %v2380, 2
        %v2394 = vperm.slane %v2380, 3
        %v2395 = vperm.slane %v2380, 4
        %v2396 = vperm.slane %v2380, 5
        %v2397 = vperm.slane %v2380, 6
        %v2398 = vperm.slane %v2380, 7
        %v2415 = vmul.f32 %v2369, %v2383
        %v2416 = vmul.f32 %v2367, %v2384
        %v2417 = vmul.f32 %v2365, %v2385
        %v2418 = vmul.f32 %v2363, %v2386
        %v2419 = vmul.f32 %v2361, %v2387
        %v2420 = vmul.f32 %v2359, %v2388
        %v2421 = vmul.f32 %v2357, %v2389
        %v2422 = vmul.f32 %v2355, %v2390
        %v2423 = vmul.f32 %v2353, %v2391
        %v2424 = vmul.f32 %v2351, %v2392
        %v2425 = vmul.f32 %v2349, %v2393
        %v2426 = vmul.f32 %v2347, %v2394
        %v2427 = vmul.f32 %v2345, %v2395
        %v2428 = vmul.f32 %v2343, %v2396
        %v2429 = vmul.f32 %v2341, %v2397
        %v2430 = vmul.f32 %v2371, %v2398
        %v2431 = vmul.f32 %v2370, %v2383
        %v2432 = vmul.f32 %v2368, %v2384
        %v2433 = vmul.f32 %v2366, %v2385
        %v2434 = vmul.f32 %v2364, %v2386
        %v2435 = vmul.f32 %v2362, %v2387
        %v2436 = vmul.f32 %v2360, %v2388
        %v2437 = vmul.f32 %v2358, %v2389
        %v2438 = vmul.f32 %v2356, %v2390
        %v2439 = vmul.f32 %v2354, %v2391
        %v2440 = vmul.f32 %v2352, %v2392
        %v2441 = vmul.f32 %v2350, %v2393
        %v2442 = vmul.f32 %v2348, %v2394
        %v2443 = vmul.f32 %v2346, %v2395
        %v2444 = vmul.f32 %v2344, %v2396
        %v2445 = vmul.f32 %v2342, %v2397
        %v2446 = vmul.f32 %v2372, %v2398
        %v2447 = vpack.c.bf16 %v2416, %v2415
        %v2448 = vpack.c.bf16 %v2418, %v2417
        %v2449 = vpack.c.bf16 %v2420, %v2419
        %v2450 = vpack.c.bf16 %v2422, %v2421
        %v2451 = vpack.c.bf16 %v2424, %v2423
        %v2452 = vpack.c.bf16 %v2426, %v2425
        %v2453 = vpack.c.bf16 %v2428, %v2427
        %v2454 = vpack.c.bf16 %v2430, %v2429
        %v2455 = vpack.c.bf16 %v2432, %v2431
        %v2456 = vpack.c.bf16 %v2434, %v2433
        %v2457 = vpack.c.bf16 %v2436, %v2435
        %v2458 = vpack.c.bf16 %v2438, %v2437
        %v2459 = vpack.c.bf16 %v2440, %v2439
        %v2460 = vpack.c.bf16 %v2442, %v2441
        %v2461 = vpack.c.bf16 %v2444, %v2443
        %v2462 = vpack.c.bf16 %v2446, %v2445
        %v2479 = vunpack.c.l.b16 %v1122
        %v2480 = vunpack.c.h.b16 %v1122
        %v2481 = vunpack.c.l.b16 %v1123
        %v2482 = vunpack.c.h.b16 %v1123
        %v2483 = vunpack.c.l.b16 %v1124
        %v2484 = vunpack.c.h.b16 %v1124
        %v2485 = vunpack.c.l.b16 %v1125
        %v2486 = vunpack.c.h.b16 %v1125
        %v2487 = vunpack.c.l.b16 %v1126
        %v2488 = vunpack.c.h.b16 %v1126
        %v2489 = vunpack.c.l.b16 %v1127
        %v2490 = vunpack.c.h.b16 %v1127
        %v2491 = vunpack.c.l.b16 %v1128
        %v2492 = vunpack.c.h.b16 %v1128
        %v2493 = vunpack.c.l.b16 %v1129
        %v2494 = vunpack.c.h.b16 %v1129
        %v2495 = vunpack.c.l.b16 %v1130
        %v2496 = vunpack.c.h.b16 %v1130
        %v2497 = vunpack.c.l.b16 %v1131
        %v2498 = vunpack.c.h.b16 %v1131
        %v2499 = vunpack.c.l.b16 %v1132
        %v2500 = vunpack.c.h.b16 %v1132
        %v2501 = vunpack.c.l.b16 %v1133
        %v2502 = vunpack.c.h.b16 %v1133
        %v2503 = vunpack.c.l.b16 %v1134
        %v2504 = vunpack.c.h.b16 %v1134
        %v2505 = vunpack.c.l.b16 %v1135
        %v2506 = vunpack.c.h.b16 %v1135
        %v2507 = vunpack.c.l.b16 %v1136
        %v2508 = vunpack.c.h.b16 %v1136
        %v2509 = vunpack.c.l.b16 %v1137
        %v2510 = vunpack.c.h.b16 %v1137
        %v2511 = vpack.c.b16 %v2495, %v2479
        %v2512 = vpack.c.b16 %v2496, %v2480
        %v2513 = vpack.c.b16 %v2497, %v2481
        %v2514 = vpack.c.b16 %v2498, %v2482
        %v2515 = vpack.c.b16 %v2499, %v2483
        %v2516 = vpack.c.b16 %v2500, %v2484
        %v2517 = vpack.c.b16 %v2501, %v2485
        %v2518 = vpack.c.b16 %v2502, %v2486
        %v2519 = vpack.c.b16 %v2503, %v2487
        %v2520 = vpack.c.b16 %v2504, %v2488
        %v2521 = vpack.c.b16 %v2505, %v2489
        %v2522 = vpack.c.b16 %v2506, %v2490
        %v2523 = vpack.c.b16 %v2507, %v2491
        %v2524 = vpack.c.b16 %v2508, %v2492
        %v2525 = vpack.c.b16 %v2509, %v2493
        %v2526 = vpack.c.b16 %v2510, %v2494
        %v2559 = vunpack.c.l.b16 %v1309
        %v2560 = vunpack.c.h.b16 %v1309
        %v2561 = vunpack.c.l.b16 %v1310
        %v2562 = vunpack.c.h.b16 %v1310
        %v2563 = vunpack.c.l.b16 %v1311
        %v2564 = vunpack.c.h.b16 %v1311
        %v2565 = vunpack.c.l.b16 %v1312
        %v2566 = vunpack.c.h.b16 %v1312
        %v2567 = vunpack.c.l.b16 %v1313
        %v2568 = vunpack.c.h.b16 %v1313
        %v2569 = vunpack.c.l.b16 %v1314
        %v2570 = vunpack.c.h.b16 %v1314
        %v2571 = vunpack.c.l.b16 %v1315
        %v2572 = vunpack.c.h.b16 %v1315
        %v2573 = vunpack.c.l.b16 %v1316
        %v2574 = vunpack.c.h.b16 %v1316
        %v2575 = vunpack.c.l.b16 %v1317
        %v2576 = vunpack.c.h.b16 %v1317
        %v2577 = vunpack.c.l.b16 %v1318
        %v2578 = vunpack.c.h.b16 %v1318
        %v2579 = vunpack.c.l.b16 %v1319
        %v2580 = vunpack.c.h.b16 %v1319
        %v2581 = vunpack.c.l.b16 %v1320
        %v2582 = vunpack.c.h.b16 %v1320
        %v2583 = vunpack.c.l.b16 %v1321
        %v2584 = vunpack.c.h.b16 %v1321
        %v2585 = vunpack.c.l.b16 %v1322
        %v2586 = vunpack.c.h.b16 %v1322
        %v2587 = vunpack.c.l.b16 %v1323
        %v2588 = vunpack.c.h.b16 %v1323
        %v2589 = vunpack.c.l.b16 %v1324
        %v2590 = vunpack.c.h.b16 %v1324
        %v2591 = vpack.c.b16 %v2575, %v2559
        %v2592 = vpack.c.b16 %v2576, %v2560
        %v2593 = vpack.c.b16 %v2577, %v2561
        %v2594 = vpack.c.b16 %v2578, %v2562
        %v2595 = vpack.c.b16 %v2579, %v2563
        %v2596 = vpack.c.b16 %v2580, %v2564
        %v2597 = vpack.c.b16 %v2581, %v2565
        %v2598 = vpack.c.b16 %v2582, %v2566
        %v2599 = vpack.c.b16 %v2583, %v2567
        %v2600 = vpack.c.b16 %v2584, %v2568
        %v2601 = vpack.c.b16 %v2585, %v2569
        %v2602 = vpack.c.b16 %v2586, %v2570
        %v2603 = vpack.c.b16 %v2587, %v2571
        %v2604 = vpack.c.b16 %v2588, %v2572
        %v2605 = vpack.c.b16 %v2589, %v2573
        %v2606 = vpack.c.b16 %v2590, %v2574
        %v2639 = vunpack.c.l.b16 %v1496
        %v2640 = vunpack.c.h.b16 %v1496
        %v2641 = vunpack.c.l.b16 %v1497
        %v2642 = vunpack.c.h.b16 %v1497
        %v2643 = vunpack.c.l.b16 %v1498
        %v2644 = vunpack.c.h.b16 %v1498
        %v2645 = vunpack.c.l.b16 %v1499
        %v2646 = vunpack.c.h.b16 %v1499
        %v2647 = vunpack.c.l.b16 %v1500
        %v2648 = vunpack.c.h.b16 %v1500
        %v2649 = vunpack.c.l.b16 %v1501
        %v2650 = vunpack.c.h.b16 %v1501
        %v2651 = vunpack.c.l.b16 %v1502
        %v2652 = vunpack.c.h.b16 %v1502
        %v2653 = vunpack.c.l.b16 %v1503
        %v2654 = vunpack.c.h.b16 %v1503
        %v2655 = vunpack.c.l.b16 %v1504
        %v2656 = vunpack.c.h.b16 %v1504
        %v2657 = vunpack.c.l.b16 %v1505
        %v2658 = vunpack.c.h.b16 %v1505
        %v2659 = vunpack.c.l.b16 %v1506
        %v2660 = vunpack.c.h.b16 %v1506
        %v2661 = vunpack.c.l.b16 %v1507
        %v2662 = vunpack.c.h.b16 %v1507
        %v2663 = vunpack.c.l.b16 %v1508
        %v2664 = vunpack.c.h.b16 %v1508
        %v2665 = vunpack.c.l.b16 %v1509
        %v2666 = vunpack.c.h.b16 %v1509
        %v2667 = vunpack.c.l.b16 %v1510
        %v2668 = vunpack.c.h.b16 %v1510
        %v2669 = vunpack.c.l.b16 %v1511
        %v2670 = vunpack.c.h.b16 %v1511
        %v2671 = vpack.c.b16 %v2655, %v2639
        %v2672 = vpack.c.b16 %v2656, %v2640
        %v2673 = vpack.c.b16 %v2657, %v2641
        %v2674 = vpack.c.b16 %v2658, %v2642
        %v2675 = vpack.c.b16 %v2659, %v2643
        %v2676 = vpack.c.b16 %v2660, %v2644
        %v2677 = vpack.c.b16 %v2661, %v2645
        %v2678 = vpack.c.b16 %v2662, %v2646
        %v2679 = vpack.c.b16 %v2663, %v2647
        %v2680 = vpack.c.b16 %v2664, %v2648
        %v2681 = vpack.c.b16 %v2665, %v2649
        %v2682 = vpack.c.b16 %v2666, %v2650
        %v2683 = vpack.c.b16 %v2667, %v2651
        %v2684 = vpack.c.b16 %v2668, %v2652
        %v2685 = vpack.c.b16 %v2669, %v2653
        %v2686 = vpack.c.b16 %v2670, %v2654
        %v2719 = vunpack.c.l.b16 %v1683
        %v2720 = vunpack.c.h.b16 %v1683
        %v2721 = vunpack.c.l.b16 %v1684
        %v2722 = vunpack.c.h.b16 %v1684
        %v2723 = vunpack.c.l.b16 %v1685
        %v2724 = vunpack.c.h.b16 %v1685
        %v2725 = vunpack.c.l.b16 %v1686
        %v2726 = vunpack.c.h.b16 %v1686
        %v2727 = vunpack.c.l.b16 %v1687
        %v2728 = vunpack.c.h.b16 %v1687
        %v2729 = vunpack.c.l.b16 %v1688
        %v2730 = vunpack.c.h.b16 %v1688
        %v2731 = vunpack.c.l.b16 %v1689
        %v2732 = vunpack.c.h.b16 %v1689
        %v2733 = vunpack.c.l.b16 %v1690
        %v2734 = vunpack.c.h.b16 %v1690
        %v2735 = vunpack.c.l.b16 %v1691
        %v2736 = vunpack.c.h.b16 %v1691
        %v2737 = vunpack.c.l.b16 %v1692
        %v2738 = vunpack.c.h.b16 %v1692
        %v2739 = vunpack.c.l.b16 %v1693
        %v2740 = vunpack.c.h.b16 %v1693
        %v2741 = vunpack.c.l.b16 %v1694
        %v2742 = vunpack.c.h.b16 %v1694
        %v2743 = vunpack.c.l.b16 %v1695
        %v2744 = vunpack.c.h.b16 %v1695
        %v2745 = vunpack.c.l.b16 %v1696
        %v2746 = vunpack.c.h.b16 %v1696
        %v2747 = vunpack.c.l.b16 %v1697
        %v2748 = vunpack.c.h.b16 %v1697
        %v2749 = vunpack.c.l.b16 %v1698
        %v2750 = vunpack.c.h.b16 %v1698
        %v2751 = vpack.c.b16 %v2735, %v2719
        %v2752 = vpack.c.b16 %v2736, %v2720
        %v2753 = vpack.c.b16 %v2737, %v2721
        %v2754 = vpack.c.b16 %v2738, %v2722
        %v2755 = vpack.c.b16 %v2739, %v2723
        %v2756 = vpack.c.b16 %v2740, %v2724
        %v2757 = vpack.c.b16 %v2741, %v2725
        %v2758 = vpack.c.b16 %v2742, %v2726
        %v2759 = vpack.c.b16 %v2743, %v2727
        %v2760 = vpack.c.b16 %v2744, %v2728
        %v2761 = vpack.c.b16 %v2745, %v2729
        %v2762 = vpack.c.b16 %v2746, %v2730
        %v2763 = vpack.c.b16 %v2747, %v2731
        %v2764 = vpack.c.b16 %v2748, %v2732
        %v2765 = vpack.c.b16 %v2749, %v2733
        %v2766 = vpack.c.b16 %v2750, %v2734
        %v2799 = vunpack.c.l.b16 %v1699
        %v2800 = vunpack.c.h.b16 %v1699
        %v2801 = vunpack.c.l.b16 %v1700
        %v2802 = vunpack.c.h.b16 %v1700
        %v2803 = vunpack.c.l.b16 %v1701
        %v2804 = vunpack.c.h.b16 %v1701
        %v2805 = vunpack.c.l.b16 %v1702
        %v2806 = vunpack.c.h.b16 %v1702
        %v2807 = vunpack.c.l.b16 %v1703
        %v2808 = vunpack.c.h.b16 %v1703
        %v2809 = vunpack.c.l.b16 %v1704
        %v2810 = vunpack.c.h.b16 %v1704
        %v2811 = vunpack.c.l.b16 %v1705
        %v2812 = vunpack.c.h.b16 %v1705
        %v2813 = vunpack.c.l.b16 %v1706
        %v2814 = vunpack.c.h.b16 %v1706
        %v2815 = vunpack.c.l.b16 %v1707
        %v2816 = vunpack.c.h.b16 %v1707
        %v2817 = vunpack.c.l.b16 %v1708
        %v2818 = vunpack.c.h.b16 %v1708
        %v2819 = vunpack.c.l.b16 %v1709
        %v2820 = vunpack.c.h.b16 %v1709
        %v2821 = vunpack.c.l.b16 %v1710
        %v2822 = vunpack.c.h.b16 %v1710
        %v2823 = vunpack.c.l.b16 %v1711
        %v2824 = vunpack.c.h.b16 %v1711
        %v2825 = vunpack.c.l.b16 %v1712
        %v2826 = vunpack.c.h.b16 %v1712
        %v2827 = vunpack.c.l.b16 %v1713
        %v2828 = vunpack.c.h.b16 %v1713
        %v2829 = vunpack.c.l.b16 %v1714
        %v2830 = vunpack.c.h.b16 %v1714
        %v2831 = vpack.c.b16 %v2815, %v2799
        %v2832 = vpack.c.b16 %v2816, %v2800
        %v2833 = vpack.c.b16 %v2817, %v2801
        %v2834 = vpack.c.b16 %v2818, %v2802
        %v2835 = vpack.c.b16 %v2819, %v2803
        %v2836 = vpack.c.b16 %v2820, %v2804
        %v2837 = vpack.c.b16 %v2821, %v2805
        %v2838 = vpack.c.b16 %v2822, %v2806
        %v2839 = vpack.c.b16 %v2823, %v2807
        %v2840 = vpack.c.b16 %v2824, %v2808
        %v2841 = vpack.c.b16 %v2825, %v2809
        %v2842 = vpack.c.b16 %v2826, %v2810
        %v2843 = vpack.c.b16 %v2827, %v2811
        %v2844 = vpack.c.b16 %v2828, %v2812
        %v2845 = vpack.c.b16 %v2829, %v2813
        %v2846 = vpack.c.b16 %v2830, %v2814
        %v2879 = vunpack.c.l.b16 %v1886
        %v2880 = vunpack.c.h.b16 %v1886
        %v2881 = vunpack.c.l.b16 %v1887
        %v2882 = vunpack.c.h.b16 %v1887
        %v2883 = vunpack.c.l.b16 %v1888
        %v2884 = vunpack.c.h.b16 %v1888
        %v2885 = vunpack.c.l.b16 %v1889
        %v2886 = vunpack.c.h.b16 %v1889
        %v2887 = vunpack.c.l.b16 %v1890
        %v2888 = vunpack.c.h.b16 %v1890
        %v2889 = vunpack.c.l.b16 %v1891
        %v2890 = vunpack.c.h.b16 %v1891
        %v2891 = vunpack.c.l.b16 %v1892
        %v2892 = vunpack.c.h.b16 %v1892
        %v2893 = vunpack.c.l.b16 %v1893
        %v2894 = vunpack.c.h.b16 %v1893
        %v2895 = vunpack.c.l.b16 %v1894
        %v2896 = vunpack.c.h.b16 %v1894
        %v2897 = vunpack.c.l.b16 %v1895
        %v2898 = vunpack.c.h.b16 %v1895
        %v2899 = vunpack.c.l.b16 %v1896
        %v2900 = vunpack.c.h.b16 %v1896
        %v2901 = vunpack.c.l.b16 %v1897
        %v2902 = vunpack.c.h.b16 %v1897
        %v2903 = vunpack.c.l.b16 %v1898
        %v2904 = vunpack.c.h.b16 %v1898
        %v2905 = vunpack.c.l.b16 %v1899
        %v2906 = vunpack.c.h.b16 %v1899
        %v2907 = vunpack.c.l.b16 %v1900
        %v2908 = vunpack.c.h.b16 %v1900
        %v2909 = vunpack.c.l.b16 %v1901
        %v2910 = vunpack.c.h.b16 %v1901
        %v2911 = vpack.c.b16 %v2895, %v2879
        %v2912 = vpack.c.b16 %v2896, %v2880
        %v2913 = vpack.c.b16 %v2897, %v2881
        %v2914 = vpack.c.b16 %v2898, %v2882
        %v2915 = vpack.c.b16 %v2899, %v2883
        %v2916 = vpack.c.b16 %v2900, %v2884
        %v2917 = vpack.c.b16 %v2901, %v2885
        %v2918 = vpack.c.b16 %v2902, %v2886
        %v2919 = vpack.c.b16 %v2903, %v2887
        %v2920 = vpack.c.b16 %v2904, %v2888
        %v2921 = vpack.c.b16 %v2905, %v2889
        %v2922 = vpack.c.b16 %v2906, %v2890
        %v2923 = vpack.c.b16 %v2907, %v2891
        %v2924 = vpack.c.b16 %v2908, %v2892
        %v2925 = vpack.c.b16 %v2909, %v2893
        %v2926 = vpack.c.b16 %v2910, %v2894
        %v2959 = vunpack.c.l.b16 %v2073
        %v2960 = vunpack.c.h.b16 %v2073
        %v2961 = vunpack.c.l.b16 %v2074
        %v2962 = vunpack.c.h.b16 %v2074
        %v2963 = vunpack.c.l.b16 %v2075
        %v2964 = vunpack.c.h.b16 %v2075
        %v2965 = vunpack.c.l.b16 %v2076
        %v2966 = vunpack.c.h.b16 %v2076
        %v2967 = vunpack.c.l.b16 %v2077
        %v2968 = vunpack.c.h.b16 %v2077
        %v2969 = vunpack.c.l.b16 %v2078
        %v2970 = vunpack.c.h.b16 %v2078
        %v2971 = vunpack.c.l.b16 %v2079
        %v2972 = vunpack.c.h.b16 %v2079
        %v2973 = vunpack.c.l.b16 %v2080
        %v2974 = vunpack.c.h.b16 %v2080
        %v2975 = vunpack.c.l.b16 %v2081
        %v2976 = vunpack.c.h.b16 %v2081
        %v2977 = vunpack.c.l.b16 %v2082
        %v2978 = vunpack.c.h.b16 %v2082
        %v2979 = vunpack.c.l.b16 %v2083
        %v2980 = vunpack.c.h.b16 %v2083
        %v2981 = vunpack.c.l.b16 %v2084
        %v2982 = vunpack.c.h.b16 %v2084
        %v2983 = vunpack.c.l.b16 %v2085
        %v2984 = vunpack.c.h.b16 %v2085
        %v2985 = vunpack.c.l.b16 %v2086
        %v2986 = vunpack.c.h.b16 %v2086
        %v2987 = vunpack.c.l.b16 %v2087
        %v2988 = vunpack.c.h.b16 %v2087
        %v2989 = vunpack.c.l.b16 %v2088
        %v2990 = vunpack.c.h.b16 %v2088
        %v2991 = vpack.c.b16 %v2975, %v2959
        %v2992 = vpack.c.b16 %v2976, %v2960
        %v2993 = vpack.c.b16 %v2977, %v2961
        %v2994 = vpack.c.b16 %v2978, %v2962
        %v2995 = vpack.c.b16 %v2979, %v2963
        %v2996 = vpack.c.b16 %v2980, %v2964
        %v2997 = vpack.c.b16 %v2981, %v2965
        %v2998 = vpack.c.b16 %v2982, %v2966
        %v2999 = vpack.c.b16 %v2983, %v2967
        %v3000 = vpack.c.b16 %v2984, %v2968
        %v3001 = vpack.c.b16 %v2985, %v2969
        %v3002 = vpack.c.b16 %v2986, %v2970
        %v3003 = vpack.c.b16 %v2987, %v2971
        %v3004 = vpack.c.b16 %v2988, %v2972
        %v3005 = vpack.c.b16 %v2989, %v2973
        %v3006 = vpack.c.b16 %v2990, %v2974
        %v3039 = vunpack.c.l.b16 %v2260
        %v3040 = vunpack.c.h.b16 %v2260
        %v3041 = vunpack.c.l.b16 %v2261
        %v3042 = vunpack.c.h.b16 %v2261
        %v3043 = vunpack.c.l.b16 %v2262
        %v3044 = vunpack.c.h.b16 %v2262
        %v3045 = vunpack.c.l.b16 %v2263
        %v3046 = vunpack.c.h.b16 %v2263
        %v3047 = vunpack.c.l.b16 %v2264
        %v3048 = vunpack.c.h.b16 %v2264
        %v3049 = vunpack.c.l.b16 %v2265
        %v3050 = vunpack.c.h.b16 %v2265
        %v3051 = vunpack.c.l.b16 %v2266
        %v3052 = vunpack.c.h.b16 %v2266
        %v3053 = vunpack.c.l.b16 %v2267
        %v3054 = vunpack.c.h.b16 %v2267
        %v3055 = vunpack.c.l.b16 %v2268
        %v3056 = vunpack.c.h.b16 %v2268
        %v3057 = vunpack.c.l.b16 %v2269
        %v3058 = vunpack.c.h.b16 %v2269
        %v3059 = vunpack.c.l.b16 %v2270
        %v3060 = vunpack.c.h.b16 %v2270
        %v3061 = vunpack.c.l.b16 %v2271
        %v3062 = vunpack.c.h.b16 %v2271
        %v3063 = vunpack.c.l.b16 %v2272
        %v3064 = vunpack.c.h.b16 %v2272
        %v3065 = vunpack.c.l.b16 %v2273
        %v3066 = vunpack.c.h.b16 %v2273
        %v3067 = vunpack.c.l.b16 %v2274
        %v3068 = vunpack.c.h.b16 %v2274
        %v3069 = vunpack.c.l.b16 %v2275
        %v3070 = vunpack.c.h.b16 %v2275
        %v3071 = vpack.c.b16 %v3055, %v3039
        %v3072 = vpack.c.b16 %v3056, %v3040
        %v3073 = vpack.c.b16 %v3057, %v3041
        %v3074 = vpack.c.b16 %v3058, %v3042
        %v3075 = vpack.c.b16 %v3059, %v3043
        %v3076 = vpack.c.b16 %v3060, %v3044
        %v3077 = vpack.c.b16 %v3061, %v3045
        %v3078 = vpack.c.b16 %v3062, %v3046
        %v3079 = vpack.c.b16 %v3063, %v3047
        %v3080 = vpack.c.b16 %v3064, %v3048
        %v3081 = vpack.c.b16 %v3065, %v3049
        %v3082 = vpack.c.b16 %v3066, %v3050
        %v3083 = vpack.c.b16 %v3067, %v3051
        %v3084 = vpack.c.b16 %v3068, %v3052
        %v3085 = vpack.c.b16 %v3069, %v3053
        %v3086 = vpack.c.b16 %v3070, %v3054
        %v3119 = vunpack.c.l.b16 %v2447
        %v3120 = vunpack.c.h.b16 %v2447
        %v3121 = vunpack.c.l.b16 %v2448
        %v3122 = vunpack.c.h.b16 %v2448
        %v3123 = vunpack.c.l.b16 %v2449
        %v3124 = vunpack.c.h.b16 %v2449
        %v3125 = vunpack.c.l.b16 %v2450
        %v3126 = vunpack.c.h.b16 %v2450
        %v3127 = vunpack.c.l.b16 %v2451
        %v3128 = vunpack.c.h.b16 %v2451
        %v3129 = vunpack.c.l.b16 %v2452
        %v3130 = vunpack.c.h.b16 %v2452
        %v3131 = vunpack.c.l.b16 %v2453
        %v3132 = vunpack.c.h.b16 %v2453
        %v3133 = vunpack.c.l.b16 %v2454
        %v3134 = vunpack.c.h.b16 %v2454
        %v3135 = vunpack.c.l.b16 %v2455
        %v3136 = vunpack.c.h.b16 %v2455
        %v3137 = vunpack.c.l.b16 %v2456
        %v3138 = vunpack.c.h.b16 %v2456
        %v3139 = vunpack.c.l.b16 %v2457
        %v3140 = vunpack.c.h.b16 %v2457
        %v3141 = vunpack.c.l.b16 %v2458
        %v3142 = vunpack.c.h.b16 %v2458
        %v3143 = vunpack.c.l.b16 %v2459
        %v3144 = vunpack.c.h.b16 %v2459
        %v3145 = vunpack.c.l.b16 %v2460
        %v3146 = vunpack.c.h.b16 %v2460
        %v3147 = vunpack.c.l.b16 %v2461
        %v3148 = vunpack.c.h.b16 %v2461
        %v3149 = vunpack.c.l.b16 %v2462
        %v3150 = vunpack.c.h.b16 %v2462
        %v3151 = vpack.c.b16 %v3135, %v3119
        %v3152 = vpack.c.b16 %v3136, %v3120
        %v3153 = vpack.c.b16 %v3137, %v3121
        %v3154 = vpack.c.b16 %v3138, %v3122
        %v3155 = vpack.c.b16 %v3139, %v3123
        %v3156 = vpack.c.b16 %v3140, %v3124
        %v3157 = vpack.c.b16 %v3141, %v3125
        %v3158 = vpack.c.b16 %v3142, %v3126
        %v3159 = vpack.c.b16 %v3143, %v3127
        %v3160 = vpack.c.b16 %v3144, %v3128
        %v3161 = vpack.c.b16 %v3145, %v3129
        %v3162 = vpack.c.b16 %v3146, %v3130
        %v3163 = vpack.c.b16 %v3147, %v3131
        %v3164 = vpack.c.b16 %v3148, %v3132
        %v3165 = vpack.c.b16 %v3149, %v3133
        %v3166 = vpack.c.b16 %v3150, %v3134
        %v3183 = vld [vmem:[%s7] sm:$0xff]
        %v3185 = vunpack.c.l.b16 %v3183
        %v3186 = vunpack.c.h.b16 %v3183
        %v3187 = vpack.c.b16 %v3185, %v3185
        %v3188 = vpack.c.b16 %v3186, %v3186
        %v3191 = vsel %vm602, %v3188, 0
        %3193 = vmatpush.bf16.msra.mxu0 %v3071
        %3194 = vmatpush.bf16.msra.mxu0 %v2991
        %3195 = vmatpush.bf16.msra.mxu0 %v2911
        %3196 = vmatpush.bf16.msra.mxu0 %v2831
        %3197 = vmatpush.bf16.msra.mxu0 %v2751
        %3198 = vmatpush.bf16.msra.mxu0 %v2671
        %3199 = vmatpush.bf16.msra.mxu0 %v2591
        %3200 = vmatpush.bf16.msra.mxu0 %v2511
        %3201 = vmatmul.bf16.gmra.mxu0 %v3187
        %v3202 = vpop.f32.mrf.mxu0
        %v3203 = vadd.f32 0.0, %v3202
        %v3204 = vpop.f32.mrf.mxu0
        %3205 = vdwg.mxu0
        %3206 = vmatpush.bf16.msra.mxu0 0
        %3207 = vmatpush.bf16.msra.mxu0 0
        %3208 = vmatpush.bf16.msra.mxu0 0
        %3209 = vmatpush.bf16.msra.mxu0 0
        %3210 = vmatpush.bf16.msra.mxu0 0
        %3211 = vmatpush.bf16.msra.mxu0 0
        %3212 = vmatpush.bf16.msra.mxu0 0
        %3213 = vmatpush.bf16.msra.mxu0 %v3151
        %3214 = vmatmul.bf16.gmra.mxu0 %v3191
        %v3215 = vpop.f32.mrf.mxu0
        %v3216 = vadd.f32 %v3203, %v3215
        %v3217 = vpop.f32.mrf.mxu0
        %3218 = vdwg.mxu0
        %3219 = vmatpush.bf16.msra.mxu0 %v3072
        %3220 = vmatpush.bf16.msra.mxu0 %v2992
        %3221 = vmatpush.bf16.msra.mxu0 %v2912
        %3222 = vmatpush.bf16.msra.mxu0 %v2832
        %3223 = vmatpush.bf16.msra.mxu0 %v2752
        %3224 = vmatpush.bf16.msra.mxu0 %v2672
        %3225 = vmatpush.bf16.msra.mxu0 %v2592
        %3226 = vmatpush.bf16.msra.mxu0 %v2512
        %3227 = vmatmul.bf16.gmra.mxu0 %v3187
        %v3228 = vpop.f32.mrf.mxu0
        %v3229 = vadd.f32 0.0, %v3228
        %v3230 = vpop.f32.mrf.mxu0
        %3231 = vdwg.mxu0
        %3232 = vmatpush.bf16.msra.mxu0 0
        %3233 = vmatpush.bf16.msra.mxu0 0
        %3234 = vmatpush.bf16.msra.mxu0 0
        %3235 = vmatpush.bf16.msra.mxu0 0
        %3236 = vmatpush.bf16.msra.mxu0 0
        %3237 = vmatpush.bf16.msra.mxu0 0
        %3238 = vmatpush.bf16.msra.mxu0 0
        %3239 = vmatpush.bf16.msra.mxu0 %v3152
        %3240 = vmatmul.bf16.gmra.mxu0 %v3191
        %v3241 = vpop.f32.mrf.mxu0
        %v3242 = vadd.f32 %v3229, %v3241
        %v3243 = vpop.f32.mrf.mxu0
        %3244 = vdwg.mxu0
        %3245 = vmatpush.bf16.msra.mxu0 %v3073
        %3246 = vmatpush.bf16.msra.mxu0 %v2993
        %3247 = vmatpush.bf16.msra.mxu0 %v2913
        %3248 = vmatpush.bf16.msra.mxu0 %v2833
        %3249 = vmatpush.bf16.msra.mxu0 %v2753
        %3250 = vmatpush.bf16.msra.mxu0 %v2673
        %3251 = vmatpush.bf16.msra.mxu0 %v2593
        %3252 = vmatpush.bf16.msra.mxu0 %v2513
        %3253 = vmatmul.bf16.gmra.mxu0 %v3187
        %v3254 = vpop.f32.mrf.mxu0
        %v3255 = vadd.f32 0.0, %v3254
        %v3256 = vpop.f32.mrf.mxu0
        %3257 = vdwg.mxu0
        %3258 = vmatpush.bf16.msra.mxu0 0
        %3259 = vmatpush.bf16.msra.mxu0 0
        %3260 = vmatpush.bf16.msra.mxu0 0
        %3261 = vmatpush.bf16.msra.mxu0 0
        %3262 = vmatpush.bf16.msra.mxu0 0
        %3263 = vmatpush.bf16.msra.mxu0 0
        %3264 = vmatpush.bf16.msra.mxu0 0
        %3265 = vmatpush.bf16.msra.mxu0 %v3153
        %3266 = vmatmul.bf16.gmra.mxu0 %v3191
        %v3267 = vpop.f32.mrf.mxu0
        %v3268 = vadd.f32 %v3255, %v3267
        %v3269 = vpop.f32.mrf.mxu0
        %3270 = vdwg.mxu0
        %3271 = vmatpush.bf16.msra.mxu0 %v3074
        %3272 = vmatpush.bf16.msra.mxu0 %v2994
        %3273 = vmatpush.bf16.msra.mxu0 %v2914
        %3274 = vmatpush.bf16.msra.mxu0 %v2834
        %3275 = vmatpush.bf16.msra.mxu0 %v2754
        %3276 = vmatpush.bf16.msra.mxu0 %v2674
        %3277 = vmatpush.bf16.msra.mxu0 %v2594
        %3278 = vmatpush.bf16.msra.mxu0 %v2514
        %3279 = vmatmul.bf16.gmra.mxu0 %v3187
        %v3280 = vpop.f32.mrf.mxu0
        %v3281 = vadd.f32 0.0, %v3280
        %v3282 = vpop.f32.mrf.mxu0
        %3283 = vdwg.mxu0
        %3284 = vmatpush.bf16.msra.mxu0 0
        %3285 = vmatpush.bf16.msra.mxu0 0
        %3286 = vmatpush.bf16.msra.mxu0 0
        %3287 = vmatpush.bf16.msra.mxu0 0
        %3288 = vmatpush.bf16.msra.mxu0 0
        %3289 = vmatpush.bf16.msra.mxu0 0
        %3290 = vmatpush.bf16.msra.mxu0 0
        %3291 = vmatpush.bf16.msra.mxu0 %v3154
        %3292 = vmatmul.bf16.gmra.mxu0 %v3191
        %v3293 = vpop.f32.mrf.mxu0
        %v3294 = vadd.f32 %v3281, %v3293
        %v3295 = vpop.f32.mrf.mxu0
        %3296 = vdwg.mxu0
        %3297 = vmatpush.bf16.msra.mxu0 %v3075
        %3298 = vmatpush.bf16.msra.mxu0 %v2995
        %3299 = vmatpush.bf16.msra.mxu0 %v2915
        %3300 = vmatpush.bf16.msra.mxu0 %v2835
        %3301 = vmatpush.bf16.msra.mxu0 %v2755
        %3302 = vmatpush.bf16.msra.mxu0 %v2675
        %3303 = vmatpush.bf16.msra.mxu0 %v2595
        %3304 = vmatpush.bf16.msra.mxu0 %v2515
        %3305 = vmatmul.bf16.gmra.mxu0 %v3187
        %v3306 = vpop.f32.mrf.mxu0
        %v3307 = vadd.f32 0.0, %v3306
        %v3308 = vpop.f32.mrf.mxu0
        %3309 = vdwg.mxu0
        %3310 = vmatpush.bf16.msra.mxu0 0
        %3311 = vmatpush.bf16.msra.mxu0 0
        %3312 = vmatpush.bf16.msra.mxu0 0
        %3313 = vmatpush.bf16.msra.mxu0 0
        %3314 = vmatpush.bf16.msra.mxu0 0
        %3315 = vmatpush.bf16.msra.mxu0 0
        %3316 = vmatpush.bf16.msra.mxu0 0
        %3317 = vmatpush.bf16.msra.mxu0 %v3155
        %3318 = vmatmul.bf16.gmra.mxu0 %v3191
        %v3319 = vpop.f32.mrf.mxu0
        %v3320 = vadd.f32 %v3307, %v3319
        %v3321 = vpop.f32.mrf.mxu0
        %3322 = vdwg.mxu0
        %3323 = vmatpush.bf16.msra.mxu0 %v3076
        %3324 = vmatpush.bf16.msra.mxu0 %v2996
        %3325 = vmatpush.bf16.msra.mxu0 %v2916
        %3326 = vmatpush.bf16.msra.mxu0 %v2836
        %3327 = vmatpush.bf16.msra.mxu0 %v2756
        %3328 = vmatpush.bf16.msra.mxu0 %v2676
        %3329 = vmatpush.bf16.msra.mxu0 %v2596
        %3330 = vmatpush.bf16.msra.mxu0 %v2516
        %3331 = vmatmul.bf16.gmra.mxu0 %v3187
        %v3332 = vpop.f32.mrf.mxu0
        %v3333 = vadd.f32 0.0, %v3332
        %v3334 = vpop.f32.mrf.mxu0
        %3335 = vdwg.mxu0
        %3336 = vmatpush.bf16.msra.mxu0 0
        %3337 = vmatpush.bf16.msra.mxu0 0
        %3338 = vmatpush.bf16.msra.mxu0 0
        %3339 = vmatpush.bf16.msra.mxu0 0
        %3340 = vmatpush.bf16.msra.mxu0 0
        %3341 = vmatpush.bf16.msra.mxu0 0
        %3342 = vmatpush.bf16.msra.mxu0 0
        %3343 = vmatpush.bf16.msra.mxu0 %v3156
        %3344 = vmatmul.bf16.gmra.mxu0 %v3191
        %v3345 = vpop.f32.mrf.mxu0
        %v3346 = vadd.f32 %v3333, %v3345
        %v3347 = vpop.f32.mrf.mxu0
        %3348 = vdwg.mxu0
        %3349 = vmatpush.bf16.msra.mxu0 %v3077
        %3350 = vmatpush.bf16.msra.mxu0 %v2997
        %3351 = vmatpush.bf16.msra.mxu0 %v2917
        %3352 = vmatpush.bf16.msra.mxu0 %v2837
        %3353 = vmatpush.bf16.msra.mxu0 %v2757
        %3354 = vmatpush.bf16.msra.mxu0 %v2677
        %3355 = vmatpush.bf16.msra.mxu0 %v2597
        %3356 = vmatpush.bf16.msra.mxu0 %v2517
        %3357 = vmatmul.bf16.gmra.mxu0 %v3187
        %v3358 = vpop.f32.mrf.mxu0
        %v3359 = vadd.f32 0.0, %v3358
        %v3360 = vpop.f32.mrf.mxu0
        %3361 = vdwg.mxu0
        %3362 = vmatpush.bf16.msra.mxu0 0
        %3363 = vmatpush.bf16.msra.mxu0 0
        %3364 = vmatpush.bf16.msra.mxu0 0
        %3365 = vmatpush.bf16.msra.mxu0 0
        %3366 = vmatpush.bf16.msra.mxu0 0
        %3367 = vmatpush.bf16.msra.mxu0 0
        %3368 = vmatpush.bf16.msra.mxu0 0
        %3369 = vmatpush.bf16.msra.mxu0 %v3157
        %3370 = vmatmul.bf16.gmra.mxu0 %v3191
        %v3371 = vpop.f32.mrf.mxu0
        %v3372 = vadd.f32 %v3359, %v3371
        %v3373 = vpop.f32.mrf.mxu0
        %3374 = vdwg.mxu0
        %3375 = vmatpush.bf16.msra.mxu0 %v3078
        %3376 = vmatpush.bf16.msra.mxu0 %v2998
        %3377 = vmatpush.bf16.msra.mxu0 %v2918
        %3378 = vmatpush.bf16.msra.mxu0 %v2838
        %3379 = vmatpush.bf16.msra.mxu0 %v2758
        %3380 = vmatpush.bf16.msra.mxu0 %v2678
        %3381 = vmatpush.bf16.msra.mxu0 %v2598
        %3382 = vmatpush.bf16.msra.mxu0 %v2518
        %3383 = vmatmul.bf16.gmra.mxu0 %v3187
        %v3384 = vpop.f32.mrf.mxu0
        %v3385 = vadd.f32 0.0, %v3384
        %v3386 = vpop.f32.mrf.mxu0
        %3387 = vdwg.mxu0
        %3388 = vmatpush.bf16.msra.mxu0 0
        %3389 = vmatpush.bf16.msra.mxu0 0
        %3390 = vmatpush.bf16.msra.mxu0 0
        %3391 = vmatpush.bf16.msra.mxu0 0
        %3392 = vmatpush.bf16.msra.mxu0 0
        %3393 = vmatpush.bf16.msra.mxu0 0
        %3394 = vmatpush.bf16.msra.mxu0 0
        %3395 = vmatpush.bf16.msra.mxu0 %v3158
        %3396 = vmatmul.bf16.gmra.mxu0 %v3191
        %v3397 = vpop.f32.mrf.mxu0
        %v3398 = vadd.f32 %v3385, %v3397
        %v3399 = vpop.f32.mrf.mxu0
        %3400 = vdwg.mxu0
        %3401 = vmatpush.bf16.msra.mxu0 %v3079
        %3402 = vmatpush.bf16.msra.mxu0 %v2999
        %3403 = vmatpush.bf16.msra.mxu0 %v2919
        %3404 = vmatpush.bf16.msra.mxu0 %v2839
        %3405 = vmatpush.bf16.msra.mxu0 %v2759
        %3406 = vmatpush.bf16.msra.mxu0 %v2679
        %3407 = vmatpush.bf16.msra.mxu0 %v2599
        %3408 = vmatpush.bf16.msra.mxu0 %v2519
        %3409 = vmatmul.bf16.gmra.mxu0 %v3187
        %v3410 = vpop.f32.mrf.mxu0
        %v3411 = vadd.f32 0.0, %v3410
        %v3412 = vpop.f32.mrf.mxu0
        %3413 = vdwg.mxu0
        %3414 = vmatpush.bf16.msra.mxu0 0
        %3415 = vmatpush.bf16.msra.mxu0 0
        %3416 = vmatpush.bf16.msra.mxu0 0
        %3417 = vmatpush.bf16.msra.mxu0 0
        %3418 = vmatpush.bf16.msra.mxu0 0
        %3419 = vmatpush.bf16.msra.mxu0 0
        %3420 = vmatpush.bf16.msra.mxu0 0
        %3421 = vmatpush.bf16.msra.mxu0 %v3159
        %3422 = vmatmul.bf16.gmra.mxu0 %v3191
        %v3423 = vpop.f32.mrf.mxu0
        %v3424 = vadd.f32 %v3411, %v3423
        %v3425 = vpop.f32.mrf.mxu0
        %3426 = vdwg.mxu0
        %3427 = vmatpush.bf16.msra.mxu0 %v3080
        %3428 = vmatpush.bf16.msra.mxu0 %v3000
        %3429 = vmatpush.bf16.msra.mxu0 %v2920
        %3430 = vmatpush.bf16.msra.mxu0 %v2840
        %3431 = vmatpush.bf16.msra.mxu0 %v2760
        %3432 = vmatpush.bf16.msra.mxu0 %v2680
        %3433 = vmatpush.bf16.msra.mxu0 %v2600
        %3434 = vmatpush.bf16.msra.mxu0 %v2520
        %3435 = vmatmul.bf16.gmra.mxu0 %v3187
        %v3436 = vpop.f32.mrf.mxu0
        %v3437 = vadd.f32 0.0, %v3436
        %v3438 = vpop.f32.mrf.mxu0
        %3439 = vdwg.mxu0
        %3440 = vmatpush.bf16.msra.mxu0 0
        %3441 = vmatpush.bf16.msra.mxu0 0
        %3442 = vmatpush.bf16.msra.mxu0 0
        %3443 = vmatpush.bf16.msra.mxu0 0
        %3444 = vmatpush.bf16.msra.mxu0 0
        %3445 = vmatpush.bf16.msra.mxu0 0
        %3446 = vmatpush.bf16.msra.mxu0 0
        %3447 = vmatpush.bf16.msra.mxu0 %v3160
        %3448 = vmatmul.bf16.gmra.mxu0 %v3191
        %v3449 = vpop.f32.mrf.mxu0
        %v3450 = vadd.f32 %v3437, %v3449
        %v3451 = vpop.f32.mrf.mxu0
        %3452 = vdwg.mxu0
        %3453 = vmatpush.bf16.msra.mxu0 %v3081
        %3454 = vmatpush.bf16.msra.mxu0 %v3001
        %3455 = vmatpush.bf16.msra.mxu0 %v2921
        %3456 = vmatpush.bf16.msra.mxu0 %v2841
        %3457 = vmatpush.bf16.msra.mxu0 %v2761
        %3458 = vmatpush.bf16.msra.mxu0 %v2681
        %3459 = vmatpush.bf16.msra.mxu0 %v2601
        %3460 = vmatpush.bf16.msra.mxu0 %v2521
        %3461 = vmatmul.bf16.gmra.mxu0 %v3187
        %v3462 = vpop.f32.mrf.mxu0
        %v3463 = vadd.f32 0.0, %v3462
        %v3464 = vpop.f32.mrf.mxu0
        %3465 = vdwg.mxu0
        %3466 = vmatpush.bf16.msra.mxu0 0
        %3467 = vmatpush.bf16.msra.mxu0 0
        %3468 = vmatpush.bf16.msra.mxu0 0
        %3469 = vmatpush.bf16.msra.mxu0 0
        %3470 = vmatpush.bf16.msra.mxu0 0
        %3471 = vmatpush.bf16.msra.mxu0 0
        %3472 = vmatpush.bf16.msra.mxu0 0
        %3473 = vmatpush.bf16.msra.mxu0 %v3161
        %3474 = vmatmul.bf16.gmra.mxu0 %v3191
        %v3475 = vpop.f32.mrf.mxu0
        %v3476 = vadd.f32 %v3463, %v3475
        %v3477 = vpop.f32.mrf.mxu0
        %3478 = vdwg.mxu0
        %3479 = vmatpush.bf16.msra.mxu0 %v3082
        %3480 = vmatpush.bf16.msra.mxu0 %v3002
        %3481 = vmatpush.bf16.msra.mxu0 %v2922
        %3482 = vmatpush.bf16.msra.mxu0 %v2842
        %3483 = vmatpush.bf16.msra.mxu0 %v2762
        %3484 = vmatpush.bf16.msra.mxu0 %v2682
        %3485 = vmatpush.bf16.msra.mxu0 %v2602
        %3486 = vmatpush.bf16.msra.mxu0 %v2522
        %3487 = vmatmul.bf16.gmra.mxu0 %v3187
        %v3488 = vpop.f32.mrf.mxu0
        %v3489 = vadd.f32 0.0, %v3488
        %v3490 = vpop.f32.mrf.mxu0
        %3491 = vdwg.mxu0
        %3492 = vmatpush.bf16.msra.mxu0 0
        %3493 = vmatpush.bf16.msra.mxu0 0
        %3494 = vmatpush.bf16.msra.mxu0 0
        %3495 = vmatpush.bf16.msra.mxu0 0
        %3496 = vmatpush.bf16.msra.mxu0 0
        %3497 = vmatpush.bf16.msra.mxu0 0
        %3498 = vmatpush.bf16.msra.mxu0 0
        %3499 = vmatpush.bf16.msra.mxu0 %v3162
        %3500 = vmatmul.bf16.gmra.mxu0 %v3191
        %v3501 = vpop.f32.mrf.mxu0
        %v3502 = vadd.f32 %v3489, %v3501
        %v3503 = vpop.f32.mrf.mxu0
        %3504 = vdwg.mxu0
        %3505 = vmatpush.bf16.msra.mxu0 %v3083
        %3506 = vmatpush.bf16.msra.mxu0 %v3003
        %3507 = vmatpush.bf16.msra.mxu0 %v2923
        %3508 = vmatpush.bf16.msra.mxu0 %v2843
        %3509 = vmatpush.bf16.msra.mxu0 %v2763
        %3510 = vmatpush.bf16.msra.mxu0 %v2683
        %3511 = vmatpush.bf16.msra.mxu0 %v2603
        %3512 = vmatpush.bf16.msra.mxu0 %v2523
        %3513 = vmatmul.bf16.gmra.mxu0 %v3187
        %v3514 = vpop.f32.mrf.mxu0
        %v3515 = vadd.f32 0.0, %v3514
        %v3516 = vpop.f32.mrf.mxu0
        %3517 = vdwg.mxu0
        %3518 = vmatpush.bf16.msra.mxu0 0
        %3519 = vmatpush.bf16.msra.mxu0 0
        %3520 = vmatpush.bf16.msra.mxu0 0
        %3521 = vmatpush.bf16.msra.mxu0 0
        %3522 = vmatpush.bf16.msra.mxu0 0
        %3523 = vmatpush.bf16.msra.mxu0 0
        %3524 = vmatpush.bf16.msra.mxu0 0
        %3525 = vmatpush.bf16.msra.mxu0 %v3163
        %3526 = vmatmul.bf16.gmra.mxu0 %v3191
        %v3527 = vpop.f32.mrf.mxu0
        %v3528 = vadd.f32 %v3515, %v3527
        %v3529 = vpop.f32.mrf.mxu0
        %3530 = vdwg.mxu0
        %3531 = vmatpush.bf16.msra.mxu0 %v3084
        %3532 = vmatpush.bf16.msra.mxu0 %v3004
        %3533 = vmatpush.bf16.msra.mxu0 %v2924
        %3534 = vmatpush.bf16.msra.mxu0 %v2844
        %3535 = vmatpush.bf16.msra.mxu0 %v2764
        %3536 = vmatpush.bf16.msra.mxu0 %v2684
        %3537 = vmatpush.bf16.msra.mxu0 %v2604
        %3538 = vmatpush.bf16.msra.mxu0 %v2524
        %3539 = vmatmul.bf16.gmra.mxu0 %v3187
        %v3540 = vpop.f32.mrf.mxu0
        %v3541 = vadd.f32 0.0, %v3540
        %v3542 = vpop.f32.mrf.mxu0
        %3543 = vdwg.mxu0
        %3544 = vmatpush.bf16.msra.mxu0 0
        %3545 = vmatpush.bf16.msra.mxu0 0
        %3546 = vmatpush.bf16.msra.mxu0 0
        %3547 = vmatpush.bf16.msra.mxu0 0
        %3548 = vmatpush.bf16.msra.mxu0 0
        %3549 = vmatpush.bf16.msra.mxu0 0
        %3550 = vmatpush.bf16.msra.mxu0 0
        %3551 = vmatpush.bf16.msra.mxu0 %v3164
        %3552 = vmatmul.bf16.gmra.mxu0 %v3191
        %v3553 = vpop.f32.mrf.mxu0
        %v3554 = vadd.f32 %v3541, %v3553
        %v3555 = vpop.f32.mrf.mxu0
        %3556 = vdwg.mxu0
        %3557 = vmatpush.bf16.msra.mxu0 %v3085
        %3558 = vmatpush.bf16.msra.mxu0 %v3005
        %3559 = vmatpush.bf16.msra.mxu0 %v2925
        %3560 = vmatpush.bf16.msra.mxu0 %v2845
        %3561 = vmatpush.bf16.msra.mxu0 %v2765
        %3562 = vmatpush.bf16.msra.mxu0 %v2685
        %3563 = vmatpush.bf16.msra.mxu0 %v2605
        %3564 = vmatpush.bf16.msra.mxu0 %v2525
        %3565 = vmatmul.bf16.gmra.mxu0 %v3187
        %v3566 = vpop.f32.mrf.mxu0
        %v3567 = vadd.f32 0.0, %v3566
        %v3568 = vpop.f32.mrf.mxu0
        %3569 = vdwg.mxu0
        %3570 = vmatpush.bf16.msra.mxu0 0
        %3571 = vmatpush.bf16.msra.mxu0 0
        %3572 = vmatpush.bf16.msra.mxu0 0
        %3573 = vmatpush.bf16.msra.mxu0 0
        %3574 = vmatpush.bf16.msra.mxu0 0
        %3575 = vmatpush.bf16.msra.mxu0 0
        %3576 = vmatpush.bf16.msra.mxu0 0
        %3577 = vmatpush.bf16.msra.mxu0 %v3165
        %3578 = vmatmul.bf16.gmra.mxu0 %v3191
        %v3579 = vpop.f32.mrf.mxu0
        %v3580 = vadd.f32 %v3567, %v3579
        %v3581 = vpop.f32.mrf.mxu0
        %3582 = vdwg.mxu0
        %3583 = vmatpush.bf16.msra.mxu0 %v3086
        %3584 = vmatpush.bf16.msra.mxu0 %v3006
        %3585 = vmatpush.bf16.msra.mxu0 %v2926
        %3586 = vmatpush.bf16.msra.mxu0 %v2846
        %3587 = vmatpush.bf16.msra.mxu0 %v2766
        %3588 = vmatpush.bf16.msra.mxu0 %v2686
        %3589 = vmatpush.bf16.msra.mxu0 %v2606
        %3590 = vmatpush.bf16.msra.mxu0 %v2526
        %3591 = vmatmul.bf16.gmra.mxu0 %v3187
        %v3592 = vpop.f32.mrf.mxu0
        %v3593 = vadd.f32 0.0, %v3592
        %v3594 = vpop.f32.mrf.mxu0
        %3595 = vdwg.mxu0
        %3596 = vmatpush.bf16.msra.mxu0 0
        %3597 = vmatpush.bf16.msra.mxu0 0
        %3598 = vmatpush.bf16.msra.mxu0 0
        %3599 = vmatpush.bf16.msra.mxu0 0
        %3600 = vmatpush.bf16.msra.mxu0 0
        %3601 = vmatpush.bf16.msra.mxu0 0
        %3602 = vmatpush.bf16.msra.mxu0 0
        %3603 = vmatpush.bf16.msra.mxu0 %v3166
        %3604 = vmatmul.bf16.gmra.mxu0 %v3191
        %v3605 = vpop.f32.mrf.mxu0
        %v3606 = vadd.f32 %v3593, %v3605
        %v3607 = vpop.f32.mrf.mxu0
        %3608 = vdwg.mxu0
        %v3609 = vld [vmem:[%s8] sm:$0xff]
        %3611 = vset.pattern.permute.xlu0 0
        %3612 = vperm.xlu0 %3611, %v3609
        %v3613 = vpop.permute.xlu0 %3612
        %v3615 = vmul.f32 %v3216, %v3613
        %v3616 = vmul.f32 %v3242, %v3613
        %v3617 = vmul.f32 %v3268, %v3613
        %v3618 = vmul.f32 %v3294, %v3613
        %v3619 = vmul.f32 %v3320, %v3613
        %v3620 = vmul.f32 %v3346, %v3613
        %v3621 = vmul.f32 %v3372, %v3613
        %v3622 = vmul.f32 %v3398, %v3613
        %v3623 = vmul.f32 %v3424, %v3613
        %v3624 = vmul.f32 %v3450, %v3613
        %v3625 = vmul.f32 %v3476, %v3613
        %v3626 = vmul.f32 %v3502, %v3613
        %v3627 = vmul.f32 %v3528, %v3613
        %v3628 = vmul.f32 %v3554, %v3613
        %v3629 = vmul.f32 %v3580, %v3613
        %v3630 = vmul.f32 %v3606, %v3613
        %v3631 = vld [vmem:[%s9] sm:$0xff]
        %3633 = vset.pattern.permute.xlu0 0
        %3634 = vperm.xlu0 %3633, %v3631
        %v3635 = vpop.permute.xlu0 %3634
        %v3637 = vadd.f32 %v3615, %v3635
        %v3638 = vadd.f32 %v3616, %v3635
        %v3639 = vadd.f32 %v3617, %v3635
        %v3640 = vadd.f32 %v3618, %v3635
        %v3641 = vadd.f32 %v3619, %v3635
        %v3642 = vadd.f32 %v3620, %v3635
        %v3643 = vadd.f32 %v3621, %v3635
        %v3644 = vadd.f32 %v3622, %v3635
        %v3645 = vadd.f32 %v3623, %v3635
        %v3646 = vadd.f32 %v3624, %v3635
        %v3647 = vadd.f32 %v3625, %v3635
        %v3648 = vadd.f32 %v3626, %v3635
        %v3649 = vadd.f32 %v3627, %v3635
        %v3650 = vadd.f32 %v3628, %v3635
        %v3651 = vadd.f32 %v3629, %v3635
        %v3652 = vadd.f32 %v3630, %v3635
        %v3653 = vmax.f32 %v3637, 0.0
        %v3654 = vmax.f32 %v3638, 0.0
        %v3655 = vmax.f32 %v3639, 0.0
        %v3656 = vmax.f32 %v3640, 0.0
        %v3657 = vmax.f32 %v3641, 0.0
        %v3658 = vmax.f32 %v3642, 0.0
        %v3659 = vmax.f32 %v3643, 0.0
        %v3660 = vmax.f32 %v3644, 0.0
        %v3661 = vmax.f32 %v3645, 0.0
        %v3662 = vmax.f32 %v3646, 0.0
        %v3663 = vmax.f32 %v3647, 0.0
        %v3664 = vmax.f32 %v3648, 0.0
        %v3665 = vmax.f32 %v3649, 0.0
        %v3666 = vmax.f32 %v3650, 0.0
        %v3667 = vmax.f32 %v3651, 0.0
        %v3668 = vmax.f32 %v3652, 0.0
        %3669 = vrot.lane.b32.xlu0 %v3653, 17
        %v3670 = vpop.permute.xlu0 %3669
        %3671 = vrot.lane.b32.xlu0 %v3654, 17
        %v3672 = vpop.permute.xlu0 %3671
        %3673 = vrot.lane.b32.xlu0 %v3655, 17
        %v3674 = vpop.permute.xlu0 %3673
        %3675 = vrot.lane.b32.xlu0 %v3656, 17
        %v3676 = vpop.permute.xlu0 %3675
        %3677 = vrot.lane.b32.xlu0 %v3657, 17
        %v3678 = vpop.permute.xlu0 %3677
        %3679 = vrot.lane.b32.xlu0 %v3658, 17
        %v3680 = vpop.permute.xlu0 %3679
        %3681 = vrot.lane.b32.xlu0 %v3659, 17
        %v3682 = vpop.permute.xlu0 %3681
        %3683 = vrot.lane.b32.xlu0 %v3660, 17
        %v3684 = vpop.permute.xlu0 %3683
        %3685 = vrot.lane.b32.xlu0 %v3661, 17
        %v3686 = vpop.permute.xlu0 %3685
        %3687 = vrot.lane.b32.xlu0 %v3662, 17
        %v3688 = vpop.permute.xlu0 %3687
        %3689 = vrot.lane.b32.xlu0 %v3663, 17
        %v3690 = vpop.permute.xlu0 %3689
        %3691 = vrot.lane.b32.xlu0 %v3664, 17
        %v3692 = vpop.permute.xlu0 %3691
        %3693 = vrot.lane.b32.xlu0 %v3665, 17
        %v3694 = vpop.permute.xlu0 %3693
        %3695 = vrot.lane.b32.xlu0 %v3666, 17
        %v3696 = vpop.permute.xlu0 %3695
        %3697 = vrot.lane.b32.xlu0 %v3667, 17
        %v3698 = vpop.permute.xlu0 %3697
        %3699 = vrot.lane.b32.xlu0 %v3668, 17
        %v3700 = vpop.permute.xlu0 %3699
        %v3701 = vsel %vm1016, %v3698, %v3700
        %v3702 = vsel %vm1016, %v3696, %v3698
        %v3703 = vsel %vm1016, %v3694, %v3696
        %v3704 = vsel %vm1016, %v3692, %v3694
        %v3705 = vsel %vm1016, %v3690, %v3692
        %v3706 = vsel %vm1016, %v3688, %v3690
        %v3707 = vsel %vm1016, %v3686, %v3688
        %v3708 = vsel %vm1016, %v3684, %v3686
        %v3709 = vsel %vm1016, %v3682, %v3684
        %v3710 = vsel %vm1016, %v3680, %v3682
        %v3711 = vsel %vm1016, %v3678, %v3680
        %v3712 = vsel %vm1016, %v3676, %v3678
        %v3713 = vsel %vm1016, %v3674, %v3676
        %v3714 = vsel %vm1016, %v3672, %v3674
        %v3715 = vsel %vm1016, %v3670, %v3672
        %v3716 = vsel %vm1016, %v3700, %v3670
        %v3717 = vmul.f32 %v3716, %v1058
        %v3718 = vmul.f32 %v3715, %v1059
        %v3719 = vmul.f32 %v3714, %v1060
        %v3720 = vmul.f32 %v3713, %v1061
        %v3721 = vmul.f32 %v3712, %v1062
        %v3722 = vmul.f32 %v3711, %v1063
        %v3723 = vmul.f32 %v3710, %v1064
        %v3724 = vmul.f32 %v3709, %v1065
        %v3725 = vmul.f32 %v3708, %v1066
        %v3726 = vmul.f32 %v3707, %v1067
        %v3727 = vmul.f32 %v3706, %v1068
        %v3728 = vmul.f32 %v3705, %v1069
        %v3729 = vmul.f32 %v3704, %v1070
        %v3730 = vmul.f32 %v3703, %v1071
        %v3731 = vmul.f32 %v3702, %v1072
        %v3732 = vmul.f32 %v3701, %v1073
        %v3733 = vpack.c.bf16 %v3717, %v3717
        %v3734 = vpack.c.bf16 %v3718, %v3718
        %v3735 = vpack.c.bf16 %v3719, %v3719
        %v3736 = vpack.c.bf16 %v3720, %v3720
        %v3737 = vpack.c.bf16 %v3721, %v3721
        %v3738 = vpack.c.bf16 %v3722, %v3722
        %v3739 = vpack.c.bf16 %v3723, %v3723
        %v3740 = vpack.c.bf16 %v3724, %v3724
        %v3741 = vpack.c.bf16 %v3725, %v3725
        %v3742 = vpack.c.bf16 %v3726, %v3726
        %v3743 = vpack.c.bf16 %v3727, %v3727
        %v3744 = vpack.c.bf16 %v3728, %v3728
        %v3745 = vpack.c.bf16 %v3729, %v3729
        %v3746 = vpack.c.bf16 %v3730, %v3730
        %v3747 = vpack.c.bf16 %v3731, %v3731
        %v3748 = vpack.c.bf16 %v3732, %v3732
        %v3749 = vld [vmem:[%s10] sm:$0xf]
        %v3750 = vld [vmem:[%s10 + $0x4] sm:$0xf]
        %3751 = vrot.lane.b32.xlu0 %v3653, 16
        %v3752 = vpop.permute.xlu0 %3751
        %3753 = vrot.lane.b32.xlu0 %v3654, 16
        %v3754 = vpop.permute.xlu0 %3753
        %3755 = vrot.lane.b32.xlu0 %v3655, 16
        %v3756 = vpop.permute.xlu0 %3755
        %3757 = vrot.lane.b32.xlu0 %v3656, 16
        %v3758 = vpop.permute.xlu0 %3757
        %3759 = vrot.lane.b32.xlu0 %v3657, 16
        %v3760 = vpop.permute.xlu0 %3759
        %3761 = vrot.lane.b32.xlu0 %v3658, 16
        %v3762 = vpop.permute.xlu0 %3761
        %3763 = vrot.lane.b32.xlu0 %v3659, 16
        %v3764 = vpop.permute.xlu0 %3763
        %3765 = vrot.lane.b32.xlu0 %v3660, 16
        %v3766 = vpop.permute.xlu0 %3765
        %3767 = vrot.lane.b32.xlu0 %v3661, 16
        %v3768 = vpop.permute.xlu0 %3767
        %3769 = vrot.lane.b32.xlu0 %v3662, 16
        %v3770 = vpop.permute.xlu0 %3769
        %3771 = vrot.lane.b32.xlu0 %v3663, 16
        %v3772 = vpop.permute.xlu0 %3771
        %3773 = vrot.lane.b32.xlu0 %v3664, 16
        %v3774 = vpop.permute.xlu0 %3773
        %3775 = vrot.lane.b32.xlu0 %v3665, 16
        %v3776 = vpop.permute.xlu0 %3775
        %3777 = vrot.lane.b32.xlu0 %v3666, 16
        %v3778 = vpop.permute.xlu0 %3777
        %3779 = vrot.lane.b32.xlu0 %v3667, 16
        %v3780 = vpop.permute.xlu0 %3779
        %3781 = vrot.lane.b32.xlu0 %v3668, 16
        %v3782 = vpop.permute.xlu0 %3781
        %v3783 = vsel %vm1202, %v3780, %v3782
        %v3784 = vsel %vm1202, %v3778, %v3780
        %v3785 = vsel %vm1202, %v3776, %v3778
        %v3786 = vsel %vm1202, %v3774, %v3776
        %v3787 = vsel %vm1202, %v3772, %v3774
        %v3788 = vsel %vm1202, %v3770, %v3772
        %v3789 = vsel %vm1202, %v3768, %v3770
        %v3790 = vsel %vm1202, %v3766, %v3768
        %v3791 = vsel %vm1202, %v3764, %v3766
        %v3792 = vsel %vm1202, %v3762, %v3764
        %v3793 = vsel %vm1202, %v3760, %v3762
        %v3794 = vsel %vm1202, %v3758, %v3760
        %v3795 = vsel %vm1202, %v3756, %v3758
        %v3796 = vsel %vm1202, %v3754, %v3756
        %v3797 = vsel %vm1202, %v3752, %v3754
        %v3798 = vsel %vm1202, %v3782, %v3752
        %v3799 = vmul.f32 %v3798, %v1245
        %v3800 = vmul.f32 %v3797, %v1246
        %v3801 = vmul.f32 %v3796, %v1247
        %v3802 = vmul.f32 %v3795, %v1248
        %v3803 = vmul.f32 %v3794, %v1249
        %v3804 = vmul.f32 %v3793, %v1250
        %v3805 = vmul.f32 %v3792, %v1251
        %v3806 = vmul.f32 %v3791, %v1252
        %v3807 = vmul.f32 %v3790, %v1253
        %v3808 = vmul.f32 %v3789, %v1254
        %v3809 = vmul.f32 %v3788, %v1255
        %v3810 = vmul.f32 %v3787, %v1256
        %v3811 = vmul.f32 %v3786, %v1257
        %v3812 = vmul.f32 %v3785, %v1258
        %v3813 = vmul.f32 %v3784, %v1259
        %v3814 = vmul.f32 %v3783, %v1260
        %v3815 = vpack.c.bf16 %v3799, %v3799
        %v3816 = vpack.c.bf16 %v3800, %v3800
        %v3817 = vpack.c.bf16 %v3801, %v3801
        %v3818 = vpack.c.bf16 %v3802, %v3802
        %v3819 = vpack.c.bf16 %v3803, %v3803
        %v3820 = vpack.c.bf16 %v3804, %v3804
        %v3821 = vpack.c.bf16 %v3805, %v3805
        %v3822 = vpack.c.bf16 %v3806, %v3806
        %v3823 = vpack.c.bf16 %v3807, %v3807
        %v3824 = vpack.c.bf16 %v3808, %v3808
        %v3825 = vpack.c.bf16 %v3809, %v3809
        %v3826 = vpack.c.bf16 %v3810, %v3810
        %v3827 = vpack.c.bf16 %v3811, %v3811
        %v3828 = vpack.c.bf16 %v3812, %v3812
        %v3829 = vpack.c.bf16 %v3813, %v3813
        %v3830 = vpack.c.bf16 %v3814, %v3814
        %s3831 = scalar_lea.vmem %s10, 8
        %v3832 = vld [vmem:[%s3831] sm:$0xf]
        %v3833 = vld [vmem:[%s3831 + $0x4] sm:$0xf]
        %v3836 = vunpack.c.l.b16 %v3832
        %v3837 = vunpack.c.l.b16 %v3833
        %v3838 = vpack.c.b16 %v3837, %v3836
        %vm3839 = vcmask 64512
        %v3841 = vsel %vm3839, %v3838, 0
        %vm3843 = vcmask 1043456
        %v3845 = vsel %vm3843, %v3815, 0
        %v3848 = vsel %vm3843, %v3816, 0
        %v3851 = vsel %vm3843, %v3817, 0
        %v3854 = vsel %vm3843, %v3818, 0
        %v3857 = vsel %vm3843, %v3819, 0
        %v3860 = vsel %vm3843, %v3820, 0
        %v3863 = vsel %vm3843, %v3821, 0
        %v3866 = vsel %vm3843, %v3822, 0
        %v3869 = vsel %vm3843, %v3823, 0
        %v3872 = vsel %vm3843, %v3824, 0
        %v3875 = vsel %vm3843, %v3825, 0
        %v3878 = vsel %vm3843, %v3826, 0
        %v3881 = vsel %vm3843, %v3827, 0
        %v3884 = vsel %vm3843, %v3828, 0
        %v3887 = vsel %vm3843, %v3829, 0
        %v3890 = vsel %vm3843, %v3830, 0
        %3892 = vmatpush.bf16.msra.mxu0 0
        %3893 = vmatpush.bf16.msra.mxu0 0
        %3894 = vmatpush.bf16.msra.mxu0 0
        %3895 = vmatpush.bf16.msra.mxu0 0
        %3896 = vmatpush.bf16.msra.mxu0 0
        %3897 = vmatpush.bf16.msra.mxu0 0
        %3898 = vmatpush.bf16.msra.mxu0 0
        %3899 = vmatpush.bf16.msra.mxu0 %v3845
        %3900 = vmatmul.bf16.gmra.mxu0 %v3841
        %v3901 = vpop.f32.mrf.mxu0
        %v3902 = vadd.f32 0.0, %v3901
        %v3903 = vpop.f32.mrf.mxu0
        %v3904 = vadd.f32 0.0, %v3903
        %3905 = vdwg.mxu0
        %3906 = vmatpush.bf16.msra.mxu0 0
        %3907 = vmatpush.bf16.msra.mxu0 0
        %3908 = vmatpush.bf16.msra.mxu0 0
        %3909 = vmatpush.bf16.msra.mxu0 0
        %3910 = vmatpush.bf16.msra.mxu0 0
        %3911 = vmatpush.bf16.msra.mxu0 0
        %3912 = vmatpush.bf16.msra.mxu0 0
        %3913 = vmatpush.bf16.msra.mxu0 %v3848
        %3914 = vmatmul.bf16.gmra.mxu0 %v3841
        %v3915 = vpop.f32.mrf.mxu0
        %v3916 = vadd.f32 0.0, %v3915
        %v3917 = vpop.f32.mrf.mxu0
        %v3918 = vadd.f32 0.0, %v3917
        %3919 = vdwg.mxu0
        %3920 = vmatpush.bf16.msra.mxu0 0
        %3921 = vmatpush.bf16.msra.mxu0 0
        %3922 = vmatpush.bf16.msra.mxu0 0
        %3923 = vmatpush.bf16.msra.mxu0 0
        %3924 = vmatpush.bf16.msra.mxu0 0
        %3925 = vmatpush.bf16.msra.mxu0 0
        %3926 = vmatpush.bf16.msra.mxu0 0
        %3927 = vmatpush.bf16.msra.mxu0 %v3851
        %3928 = vmatmul.bf16.gmra.mxu0 %v3841
        %v3929 = vpop.f32.mrf.mxu0
        %v3930 = vadd.f32 0.0, %v3929
        %v3931 = vpop.f32.mrf.mxu0
        %v3932 = vadd.f32 0.0, %v3931
        %3933 = vdwg.mxu0
        %3934 = vmatpush.bf16.msra.mxu0 0
        %3935 = vmatpush.bf16.msra.mxu0 0
        %3936 = vmatpush.bf16.msra.mxu0 0
        %3937 = vmatpush.bf16.msra.mxu0 0
        %3938 = vmatpush.bf16.msra.mxu0 0
        %3939 = vmatpush.bf16.msra.mxu0 0
        %3940 = vmatpush.bf16.msra.mxu0 0
        %3941 = vmatpush.bf16.msra.mxu0 %v3854
        %3942 = vmatmul.bf16.gmra.mxu0 %v3841
        %v3943 = vpop.f32.mrf.mxu0
        %v3944 = vadd.f32 0.0, %v3943
        %v3945 = vpop.f32.mrf.mxu0
        %v3946 = vadd.f32 0.0, %v3945
        %3947 = vdwg.mxu0
        %3948 = vmatpush.bf16.msra.mxu0 0
        %3949 = vmatpush.bf16.msra.mxu0 0
        %3950 = vmatpush.bf16.msra.mxu0 0
        %3951 = vmatpush.bf16.msra.mxu0 0
        %3952 = vmatpush.bf16.msra.mxu0 0
        %3953 = vmatpush.bf16.msra.mxu0 0
        %3954 = vmatpush.bf16.msra.mxu0 0
        %3955 = vmatpush.bf16.msra.mxu0 %v3857
        %3956 = vmatmul.bf16.gmra.mxu0 %v3841
        %v3957 = vpop.f32.mrf.mxu0
        %v3958 = vadd.f32 0.0, %v3957
        %v3959 = vpop.f32.mrf.mxu0
        %v3960 = vadd.f32 0.0, %v3959
        %3961 = vdwg.mxu0
        %3962 = vmatpush.bf16.msra.mxu0 0
        %3963 = vmatpush.bf16.msra.mxu0 0
        %3964 = vmatpush.bf16.msra.mxu0 0
        %3965 = vmatpush.bf16.msra.mxu0 0
        %3966 = vmatpush.bf16.msra.mxu0 0
        %3967 = vmatpush.bf16.msra.mxu0 0
        %3968 = vmatpush.bf16.msra.mxu0 0
        %3969 = vmatpush.bf16.msra.mxu0 %v3860
        %3970 = vmatmul.bf16.gmra.mxu0 %v3841
        %v3971 = vpop.f32.mrf.mxu0
        %v3972 = vadd.f32 0.0, %v3971
        %v3973 = vpop.f32.mrf.mxu0
        %v3974 = vadd.f32 0.0, %v3973
        %3975 = vdwg.mxu0
        %3976 = vmatpush.bf16.msra.mxu0 0
        %3977 = vmatpush.bf16.msra.mxu0 0
        %3978 = vmatpush.bf16.msra.mxu0 0
        %3979 = vmatpush.bf16.msra.mxu0 0
        %3980 = vmatpush.bf16.msra.mxu0 0
        %3981 = vmatpush.bf16.msra.mxu0 0
        %3982 = vmatpush.bf16.msra.mxu0 0
        %3983 = vmatpush.bf16.msra.mxu0 %v3863
        %3984 = vmatmul.bf16.gmra.mxu0 %v3841
        %v3985 = vpop.f32.mrf.mxu0
        %v3986 = vadd.f32 0.0, %v3985
        %v3987 = vpop.f32.mrf.mxu0
        %v3988 = vadd.f32 0.0, %v3987
        %3989 = vdwg.mxu0
        %3990 = vmatpush.bf16.msra.mxu0 0
        %3991 = vmatpush.bf16.msra.mxu0 0
        %3992 = vmatpush.bf16.msra.mxu0 0
        %3993 = vmatpush.bf16.msra.mxu0 0
        %3994 = vmatpush.bf16.msra.mxu0 0
        %3995 = vmatpush.bf16.msra.mxu0 0
        %3996 = vmatpush.bf16.msra.mxu0 0
        %3997 = vmatpush.bf16.msra.mxu0 %v3866
        %3998 = vmatmul.bf16.gmra.mxu0 %v3841
        %v3999 = vpop.f32.mrf.mxu0
        %v4000 = vadd.f32 0.0, %v3999
        %v4001 = vpop.f32.mrf.mxu0
        %v4002 = vadd.f32 0.0, %v4001
        %4003 = vdwg.mxu0
        %4004 = vmatpush.bf16.msra.mxu0 0
        %4005 = vmatpush.bf16.msra.mxu0 0
        %4006 = vmatpush.bf16.msra.mxu0 0
        %4007 = vmatpush.bf16.msra.mxu0 0
        %4008 = vmatpush.bf16.msra.mxu0 0
        %4009 = vmatpush.bf16.msra.mxu0 0
        %4010 = vmatpush.bf16.msra.mxu0 0
        %4011 = vmatpush.bf16.msra.mxu0 %v3869
        %4012 = vmatmul.bf16.gmra.mxu0 %v3841
        %v4013 = vpop.f32.mrf.mxu0
        %v4014 = vadd.f32 0.0, %v4013
        %v4015 = vpop.f32.mrf.mxu0
        %v4016 = vadd.f32 0.0, %v4015
        %4017 = vdwg.mxu0
        %4018 = vmatpush.bf16.msra.mxu0 0
        %4019 = vmatpush.bf16.msra.mxu0 0
        %4020 = vmatpush.bf16.msra.mxu0 0
        %4021 = vmatpush.bf16.msra.mxu0 0
        %4022 = vmatpush.bf16.msra.mxu0 0
        %4023 = vmatpush.bf16.msra.mxu0 0
        %4024 = vmatpush.bf16.msra.mxu0 0
        %4025 = vmatpush.bf16.msra.mxu0 %v3872
        %4026 = vmatmul.bf16.gmra.mxu0 %v3841
        %v4027 = vpop.f32.mrf.mxu0
        %v4028 = vadd.f32 0.0, %v4027
        %v4029 = vpop.f32.mrf.mxu0
        %v4030 = vadd.f32 0.0, %v4029
        %4031 = vdwg.mxu0
        %4032 = vmatpush.bf16.msra.mxu0 0
        %4033 = vmatpush.bf16.msra.mxu0 0
        %4034 = vmatpush.bf16.msra.mxu0 0
        %4035 = vmatpush.bf16.msra.mxu0 0
        %4036 = vmatpush.bf16.msra.mxu0 0
        %4037 = vmatpush.bf16.msra.mxu0 0
        %4038 = vmatpush.bf16.msra.mxu0 0
        %4039 = vmatpush.bf16.msra.mxu0 %v3875
        %4040 = vmatmul.bf16.gmra.mxu0 %v3841
        %v4041 = vpop.f32.mrf.mxu0
        %v4042 = vadd.f32 0.0, %v4041
        %v4043 = vpop.f32.mrf.mxu0
        %v4044 = vadd.f32 0.0, %v4043
        %4045 = vdwg.mxu0
        %4046 = vmatpush.bf16.msra.mxu0 0
        %4047 = vmatpush.bf16.msra.mxu0 0
        %4048 = vmatpush.bf16.msra.mxu0 0
        %4049 = vmatpush.bf16.msra.mxu0 0
        %4050 = vmatpush.bf16.msra.mxu0 0
        %4051 = vmatpush.bf16.msra.mxu0 0
        %4052 = vmatpush.bf16.msra.mxu0 0
        %4053 = vmatpush.bf16.msra.mxu0 %v3878
        %4054 = vmatmul.bf16.gmra.mxu0 %v3841
        %v4055 = vpop.f32.mrf.mxu0
        %v4056 = vadd.f32 0.0, %v4055
        %v4057 = vpop.f32.mrf.mxu0
        %v4058 = vadd.f32 0.0, %v4057
        %4059 = vdwg.mxu0
        %4060 = vmatpush.bf16.msra.mxu0 0
        %4061 = vmatpush.bf16.msra.mxu0 0
        %4062 = vmatpush.bf16.msra.mxu0 0
        %4063 = vmatpush.bf16.msra.mxu0 0
        %4064 = vmatpush.bf16.msra.mxu0 0
        %4065 = vmatpush.bf16.msra.mxu0 0
        %4066 = vmatpush.bf16.msra.mxu0 0
        %4067 = vmatpush.bf16.msra.mxu0 %v3881
        %4068 = vmatmul.bf16.gmra.mxu0 %v3841
        %v4069 = vpop.f32.mrf.mxu0
        %v4070 = vadd.f32 0.0, %v4069
        %v4071 = vpop.f32.mrf.mxu0
        %v4072 = vadd.f32 0.0, %v4071
        %4073 = vdwg.mxu0
        %4074 = vmatpush.bf16.msra.mxu0 0
        %4075 = vmatpush.bf16.msra.mxu0 0
        %4076 = vmatpush.bf16.msra.mxu0 0
        %4077 = vmatpush.bf16.msra.mxu0 0
        %4078 = vmatpush.bf16.msra.mxu0 0
        %4079 = vmatpush.bf16.msra.mxu0 0
        %4080 = vmatpush.bf16.msra.mxu0 0
        %4081 = vmatpush.bf16.msra.mxu0 %v3884
        %4082 = vmatmul.bf16.gmra.mxu0 %v3841
        %v4083 = vpop.f32.mrf.mxu0
        %v4084 = vadd.f32 0.0, %v4083
        %v4085 = vpop.f32.mrf.mxu0
        %v4086 = vadd.f32 0.0, %v4085
        %4087 = vdwg.mxu0
        %4088 = vmatpush.bf16.msra.mxu0 0
        %4089 = vmatpush.bf16.msra.mxu0 0
        %4090 = vmatpush.bf16.msra.mxu0 0
        %4091 = vmatpush.bf16.msra.mxu0 0
        %4092 = vmatpush.bf16.msra.mxu0 0
        %4093 = vmatpush.bf16.msra.mxu0 0
        %4094 = vmatpush.bf16.msra.mxu0 0
        %4095 = vmatpush.bf16.msra.mxu0 %v3887
        %4096 = vmatmul.bf16.gmra.mxu0 %v3841
        %v4097 = vpop.f32.mrf.mxu0
        %v4098 = vadd.f32 0.0, %v4097
        %v4099 = vpop.f32.mrf.mxu0
        %v4100 = vadd.f32 0.0, %v4099
        %4101 = vdwg.mxu0
        %4102 = vmatpush.bf16.msra.mxu0 0
        %4103 = vmatpush.bf16.msra.mxu0 0
        %4104 = vmatpush.bf16.msra.mxu0 0
        %4105 = vmatpush.bf16.msra.mxu0 0
        %4106 = vmatpush.bf16.msra.mxu0 0
        %4107 = vmatpush.bf16.msra.mxu0 0
        %4108 = vmatpush.bf16.msra.mxu0 0
        %4109 = vmatpush.bf16.msra.mxu0 %v3890
        %4110 = vmatmul.bf16.gmra.mxu0 %v3841
        %v4111 = vpop.f32.mrf.mxu0
        %v4112 = vadd.f32 0.0, %v4111
        %v4113 = vpop.f32.mrf.mxu0
        %v4114 = vadd.f32 0.0, %v4113
        %4115 = vdwg.mxu0
        %v4118 = vunpack.c.l.b16 %v3749
        %v4119 = vunpack.c.l.b16 %v3750
        %v4120 = vpack.c.b16 %v4119, %v4118
        %v4122 = vsel %vm3839, %v4120, 0
        %v4125 = vsel %vm3843, %v3733, 0
        %v4128 = vsel %vm3843, %v3734, 0
        %v4131 = vsel %vm3843, %v3735, 0
        %v4134 = vsel %vm3843, %v3736, 0
        %v4137 = vsel %vm3843, %v3737, 0
        %v4140 = vsel %vm3843, %v3738, 0
        %v4143 = vsel %vm3843, %v3739, 0
        %v4146 = vsel %vm3843, %v3740, 0
        %v4149 = vsel %vm3843, %v3741, 0
        %v4152 = vsel %vm3843, %v3742, 0
        %v4155 = vsel %vm3843, %v3743, 0
        %v4158 = vsel %vm3843, %v3744, 0
        %v4161 = vsel %vm3843, %v3745, 0
        %v4164 = vsel %vm3843, %v3746, 0
        %v4167 = vsel %vm3843, %v3747, 0
        %v4170 = vsel %vm3843, %v3748, 0
        %4172 = vmatpush.bf16.msra.mxu0 0
        %4173 = vmatpush.bf16.msra.mxu0 0
        %4174 = vmatpush.bf16.msra.mxu0 0
        %4175 = vmatpush.bf16.msra.mxu0 0
        %4176 = vmatpush.bf16.msra.mxu0 0
        %4177 = vmatpush.bf16.msra.mxu0 0
        %4178 = vmatpush.bf16.msra.mxu0 0
        %4179 = vmatpush.bf16.msra.mxu0 %v4125
        %4180 = vmatmul.bf16.gmra.mxu0 %v4122
        %v4181 = vpop.f32.mrf.mxu0
        %v4182 = vadd.f32 %v3902, %v4181
        %v4183 = vpop.f32.mrf.mxu0
        %v4184 = vadd.f32 %v3904, %v4183
        %4185 = vdwg.mxu0
        %4186 = vmatpush.bf16.msra.mxu0 0
        %4187 = vmatpush.bf16.msra.mxu0 0
        %4188 = vmatpush.bf16.msra.mxu0 0
        %4189 = vmatpush.bf16.msra.mxu0 0
        %4190 = vmatpush.bf16.msra.mxu0 0
        %4191 = vmatpush.bf16.msra.mxu0 0
        %4192 = vmatpush.bf16.msra.mxu0 0
        %4193 = vmatpush.bf16.msra.mxu0 %v4128
        %4194 = vmatmul.bf16.gmra.mxu0 %v4122
        %v4195 = vpop.f32.mrf.mxu0
        %v4196 = vadd.f32 %v3916, %v4195
        %v4197 = vpop.f32.mrf.mxu0
        %v4198 = vadd.f32 %v3918, %v4197
        %4199 = vdwg.mxu0
        %4200 = vmatpush.bf16.msra.mxu0 0
        %4201 = vmatpush.bf16.msra.mxu0 0
        %4202 = vmatpush.bf16.msra.mxu0 0
        %4203 = vmatpush.bf16.msra.mxu0 0
        %4204 = vmatpush.bf16.msra.mxu0 0
        %4205 = vmatpush.bf16.msra.mxu0 0
        %4206 = vmatpush.bf16.msra.mxu0 0
        %4207 = vmatpush.bf16.msra.mxu0 %v4131
        %4208 = vmatmul.bf16.gmra.mxu0 %v4122
        %v4209 = vpop.f32.mrf.mxu0
        %v4210 = vadd.f32 %v3930, %v4209
        %v4211 = vpop.f32.mrf.mxu0
        %v4212 = vadd.f32 %v3932, %v4211
        %4213 = vdwg.mxu0
        %4214 = vmatpush.bf16.msra.mxu0 0
        %4215 = vmatpush.bf16.msra.mxu0 0
        %4216 = vmatpush.bf16.msra.mxu0 0
        %4217 = vmatpush.bf16.msra.mxu0 0
        %4218 = vmatpush.bf16.msra.mxu0 0
        %4219 = vmatpush.bf16.msra.mxu0 0
        %4220 = vmatpush.bf16.msra.mxu0 0
        %4221 = vmatpush.bf16.msra.mxu0 %v4134
        %4222 = vmatmul.bf16.gmra.mxu0 %v4122
        %v4223 = vpop.f32.mrf.mxu0
        %v4224 = vadd.f32 %v3944, %v4223
        %v4225 = vpop.f32.mrf.mxu0
        %v4226 = vadd.f32 %v3946, %v4225
        %4227 = vdwg.mxu0
        %4228 = vmatpush.bf16.msra.mxu0 0
        %4229 = vmatpush.bf16.msra.mxu0 0
        %4230 = vmatpush.bf16.msra.mxu0 0
        %4231 = vmatpush.bf16.msra.mxu0 0
        %4232 = vmatpush.bf16.msra.mxu0 0
        %4233 = vmatpush.bf16.msra.mxu0 0
        %4234 = vmatpush.bf16.msra.mxu0 0
        %4235 = vmatpush.bf16.msra.mxu0 %v4137
        %4236 = vmatmul.bf16.gmra.mxu0 %v4122
        %v4237 = vpop.f32.mrf.mxu0
        %v4238 = vadd.f32 %v3958, %v4237
        %v4239 = vpop.f32.mrf.mxu0
        %v4240 = vadd.f32 %v3960, %v4239
        %4241 = vdwg.mxu0
        %4242 = vmatpush.bf16.msra.mxu0 0
        %4243 = vmatpush.bf16.msra.mxu0 0
        %4244 = vmatpush.bf16.msra.mxu0 0
        %4245 = vmatpush.bf16.msra.mxu0 0
        %4246 = vmatpush.bf16.msra.mxu0 0
        %4247 = vmatpush.bf16.msra.mxu0 0
        %4248 = vmatpush.bf16.msra.mxu0 0
        %4249 = vmatpush.bf16.msra.mxu0 %v4140
        %4250 = vmatmul.bf16.gmra.mxu0 %v4122
        %v4251 = vpop.f32.mrf.mxu0
        %v4252 = vadd.f32 %v3972, %v4251
        %v4253 = vpop.f32.mrf.mxu0
        %v4254 = vadd.f32 %v3974, %v4253
        %4255 = vdwg.mxu0
        %4256 = vmatpush.bf16.msra.mxu0 0
        %4257 = vmatpush.bf16.msra.mxu0 0
        %4258 = vmatpush.bf16.msra.mxu0 0
        %4259 = vmatpush.bf16.msra.mxu0 0
        %4260 = vmatpush.bf16.msra.mxu0 0
        %4261 = vmatpush.bf16.msra.mxu0 0
        %4262 = vmatpush.bf16.msra.mxu0 0
        %4263 = vmatpush.bf16.msra.mxu0 %v4143
        %4264 = vmatmul.bf16.gmra.mxu0 %v4122
        %v4265 = vpop.f32.mrf.mxu0
        %v4266 = vadd.f32 %v3986, %v4265
        %v4267 = vpop.f32.mrf.mxu0
        %v4268 = vadd.f32 %v3988, %v4267
        %4269 = vdwg.mxu0
        %4270 = vmatpush.bf16.msra.mxu0 0
        %4271 = vmatpush.bf16.msra.mxu0 0
        %4272 = vmatpush.bf16.msra.mxu0 0
        %4273 = vmatpush.bf16.msra.mxu0 0
        %4274 = vmatpush.bf16.msra.mxu0 0
        %4275 = vmatpush.bf16.msra.mxu0 0
        %4276 = vmatpush.bf16.msra.mxu0 0
        %4277 = vmatpush.bf16.msra.mxu0 %v4146
        %4278 = vmatmul.bf16.gmra.mxu0 %v4122
        %v4279 = vpop.f32.mrf.mxu0
        %v4280 = vadd.f32 %v4000, %v4279
        %v4281 = vpop.f32.mrf.mxu0
        %v4282 = vadd.f32 %v4002, %v4281
        %4283 = vdwg.mxu0
        %4284 = vmatpush.bf16.msra.mxu0 0
        %4285 = vmatpush.bf16.msra.mxu0 0
        %4286 = vmatpush.bf16.msra.mxu0 0
        %4287 = vmatpush.bf16.msra.mxu0 0
        %4288 = vmatpush.bf16.msra.mxu0 0
        %4289 = vmatpush.bf16.msra.mxu0 0
        %4290 = vmatpush.bf16.msra.mxu0 0
        %4291 = vmatpush.bf16.msra.mxu0 %v4149
        %4292 = vmatmul.bf16.gmra.mxu0 %v4122
        %v4293 = vpop.f32.mrf.mxu0
        %v4294 = vadd.f32 %v4014, %v4293
        %v4295 = vpop.f32.mrf.mxu0
        %v4296 = vadd.f32 %v4016, %v4295
        %4297 = vdwg.mxu0
        %4298 = vmatpush.bf16.msra.mxu0 0
        %4299 = vmatpush.bf16.msra.mxu0 0
        %4300 = vmatpush.bf16.msra.mxu0 0
        %4301 = vmatpush.bf16.msra.mxu0 0
        %4302 = vmatpush.bf16.msra.mxu0 0
        %4303 = vmatpush.bf16.msra.mxu0 0
        %4304 = vmatpush.bf16.msra.mxu0 0
        %4305 = vmatpush.bf16.msra.mxu0 %v4152
        %4306 = vmatmul.bf16.gmra.mxu0 %v4122
        %v4307 = vpop.f32.mrf.mxu0
        %v4308 = vadd.f32 %v4028, %v4307
        %v4309 = vpop.f32.mrf.mxu0
        %v4310 = vadd.f32 %v4030, %v4309
        %4311 = vdwg.mxu0
        %4312 = vmatpush.bf16.msra.mxu0 0
        %4313 = vmatpush.bf16.msra.mxu0 0
        %4314 = vmatpush.bf16.msra.mxu0 0
        %4315 = vmatpush.bf16.msra.mxu0 0
        %4316 = vmatpush.bf16.msra.mxu0 0
        %4317 = vmatpush.bf16.msra.mxu0 0
        %4318 = vmatpush.bf16.msra.mxu0 0
        %4319 = vmatpush.bf16.msra.mxu0 %v4155
        %4320 = vmatmul.bf16.gmra.mxu0 %v4122
        %v4321 = vpop.f32.mrf.mxu0
        %v4322 = vadd.f32 %v4042, %v4321
        %v4323 = vpop.f32.mrf.mxu0
        %v4324 = vadd.f32 %v4044, %v4323
        %4325 = vdwg.mxu0
        %4326 = vmatpush.bf16.msra.mxu0 0
        %4327 = vmatpush.bf16.msra.mxu0 0
        %4328 = vmatpush.bf16.msra.mxu0 0
        %4329 = vmatpush.bf16.msra.mxu0 0
        %4330 = vmatpush.bf16.msra.mxu0 0
        %4331 = vmatpush.bf16.msra.mxu0 0
        %4332 = vmatpush.bf16.msra.mxu0 0
        %4333 = vmatpush.bf16.msra.mxu0 %v4158
        %4334 = vmatmul.bf16.gmra.mxu0 %v4122
        %v4335 = vpop.f32.mrf.mxu0
        %v4336 = vadd.f32 %v4056, %v4335
        %v4337 = vpop.f32.mrf.mxu0
        %v4338 = vadd.f32 %v4058, %v4337
        %4339 = vdwg.mxu0
        %4340 = vmatpush.bf16.msra.mxu0 0
        %4341 = vmatpush.bf16.msra.mxu0 0
        %4342 = vmatpush.bf16.msra.mxu0 0
        %4343 = vmatpush.bf16.msra.mxu0 0
        %4344 = vmatpush.bf16.msra.mxu0 0
        %4345 = vmatpush.bf16.msra.mxu0 0
        %4346 = vmatpush.bf16.msra.mxu0 0
        %4347 = vmatpush.bf16.msra.mxu0 %v4161
        %4348 = vmatmul.bf16.gmra.mxu0 %v4122
        %v4349 = vpop.f32.mrf.mxu0
        %v4350 = vadd.f32 %v4070, %v4349
        %v4351 = vpop.f32.mrf.mxu0
        %v4352 = vadd.f32 %v4072, %v4351
        %4353 = vdwg.mxu0
        %4354 = vmatpush.bf16.msra.mxu0 0
        %4355 = vmatpush.bf16.msra.mxu0 0
        %4356 = vmatpush.bf16.msra.mxu0 0
        %4357 = vmatpush.bf16.msra.mxu0 0
        %4358 = vmatpush.bf16.msra.mxu0 0
        %4359 = vmatpush.bf16.msra.mxu0 0
        %4360 = vmatpush.bf16.msra.mxu0 0
        %4361 = vmatpush.bf16.msra.mxu0 %v4164
        %4362 = vmatmul.bf16.gmra.mxu0 %v4122
        %v4363 = vpop.f32.mrf.mxu0
        %v4364 = vadd.f32 %v4084, %v4363
        %v4365 = vpop.f32.mrf.mxu0
        %v4366 = vadd.f32 %v4086, %v4365
        %4367 = vdwg.mxu0
        %4368 = vmatpush.bf16.msra.mxu0 0
        %4369 = vmatpush.bf16.msra.mxu0 0
        %4370 = vmatpush.bf16.msra.mxu0 0
        %4371 = vmatpush.bf16.msra.mxu0 0
        %4372 = vmatpush.bf16.msra.mxu0 0
        %4373 = vmatpush.bf16.msra.mxu0 0
        %4374 = vmatpush.bf16.msra.mxu0 0
        %4375 = vmatpush.bf16.msra.mxu0 %v4167
        %4376 = vmatmul.bf16.gmra.mxu0 %v4122
        %v4377 = vpop.f32.mrf.mxu0
        %v4378 = vadd.f32 %v4098, %v4377
        %v4379 = vpop.f32.mrf.mxu0
        %v4380 = vadd.f32 %v4100, %v4379
        %4381 = vdwg.mxu0
        %4382 = vmatpush.bf16.msra.mxu0 0
        %4383 = vmatpush.bf16.msra.mxu0 0
        %4384 = vmatpush.bf16.msra.mxu0 0
        %4385 = vmatpush.bf16.msra.mxu0 0
        %4386 = vmatpush.bf16.msra.mxu0 0
        %4387 = vmatpush.bf16.msra.mxu0 0
        %4388 = vmatpush.bf16.msra.mxu0 0
        %4389 = vmatpush.bf16.msra.mxu0 %v4170
        %4390 = vmatmul.bf16.gmra.mxu0 %v4122
        %v4391 = vpop.f32.mrf.mxu0
        %v4392 = vadd.f32 %v4112, %v4391
        %v4393 = vpop.f32.mrf.mxu0
        %v4394 = vadd.f32 %v4114, %v4393
        %4395 = vdwg.mxu0
        %4396 = vrot.lane.b32.xlu0 %v3653, 15
        %v4397 = vpop.permute.xlu0 %4396
        %4398 = vrot.lane.b32.xlu0 %v3654, 15
        %v4399 = vpop.permute.xlu0 %4398
        %4400 = vrot.lane.b32.xlu0 %v3655, 15
        %v4401 = vpop.permute.xlu0 %4400
        %4402 = vrot.lane.b32.xlu0 %v3656, 15
        %v4403 = vpop.permute.xlu0 %4402
        %4404 = vrot.lane.b32.xlu0 %v3657, 15
        %v4405 = vpop.permute.xlu0 %4404
        %4406 = vrot.lane.b32.xlu0 %v3658, 15
        %v4407 = vpop.permute.xlu0 %4406
        %4408 = vrot.lane.b32.xlu0 %v3659, 15
        %v4409 = vpop.permute.xlu0 %4408
        %4410 = vrot.lane.b32.xlu0 %v3660, 15
        %v4411 = vpop.permute.xlu0 %4410
        %4412 = vrot.lane.b32.xlu0 %v3661, 15
        %v4413 = vpop.permute.xlu0 %4412
        %4414 = vrot.lane.b32.xlu0 %v3662, 15
        %v4415 = vpop.permute.xlu0 %4414
        %4416 = vrot.lane.b32.xlu0 %v3663, 15
        %v4417 = vpop.permute.xlu0 %4416
        %4418 = vrot.lane.b32.xlu0 %v3664, 15
        %v4419 = vpop.permute.xlu0 %4418
        %4420 = vrot.lane.b32.xlu0 %v3665, 15
        %v4421 = vpop.permute.xlu0 %4420
        %4422 = vrot.lane.b32.xlu0 %v3666, 15
        %v4423 = vpop.permute.xlu0 %4422
        %4424 = vrot.lane.b32.xlu0 %v3667, 15
        %v4425 = vpop.permute.xlu0 %4424
        %4426 = vrot.lane.b32.xlu0 %v3668, 15
        %v4427 = vpop.permute.xlu0 %4426
        %v4428 = vsel %vm1389, %v4425, %v4427
        %v4429 = vsel %vm1389, %v4423, %v4425
        %v4430 = vsel %vm1389, %v4421, %v4423
        %v4431 = vsel %vm1389, %v4419, %v4421
        %v4432 = vsel %vm1389, %v4417, %v4419
        %v4433 = vsel %vm1389, %v4415, %v4417
        %v4434 = vsel %vm1389, %v4413, %v4415
        %v4435 = vsel %vm1389, %v4411, %v4413
        %v4436 = vsel %vm1389, %v4409, %v4411
        %v4437 = vsel %vm1389, %v4407, %v4409
        %v4438 = vsel %vm1389, %v4405, %v4407
        %v4439 = vsel %vm1389, %v4403, %v4405
        %v4440 = vsel %vm1389, %v4401, %v4403
        %v4441 = vsel %vm1389, %v4399, %v4401
        %v4442 = vsel %vm1389, %v4397, %v4399
        %v4443 = vsel %vm1389, %v4427, %v4397
        %v4444 = vmul.f32 %v4443, %v1432
        %v4445 = vmul.f32 %v4442, %v1433
        %v4446 = vmul.f32 %v4441, %v1434
        %v4447 = vmul.f32 %v4440, %v1435
        %v4448 = vmul.f32 %v4439, %v1436
        %v4449 = vmul.f32 %v4438, %v1437
        %v4450 = vmul.f32 %v4437, %v1438
        %v4451 = vmul.f32 %v4436, %v1439
        %v4452 = vmul.f32 %v4435, %v1440
        %v4453 = vmul.f32 %v4434, %v1441
        %v4454 = vmul.f32 %v4433, %v1442
        %v4455 = vmul.f32 %v4432, %v1443
        %v4456 = vmul.f32 %v4431, %v1444
        %v4457 = vmul.f32 %v4430, %v1445
        %v4458 = vmul.f32 %v4429, %v1446
        %v4459 = vmul.f32 %v4428, %v1447
        %v4460 = vpack.c.bf16 %v4444, %v4444
        %v4461 = vpack.c.bf16 %v4445, %v4445
        %v4462 = vpack.c.bf16 %v4446, %v4446
        %v4463 = vpack.c.bf16 %v4447, %v4447
        %v4464 = vpack.c.bf16 %v4448, %v4448
        %v4465 = vpack.c.bf16 %v4449, %v4449
        %v4466 = vpack.c.bf16 %v4450, %v4450
        %v4467 = vpack.c.bf16 %v4451, %v4451
        %v4468 = vpack.c.bf16 %v4452, %v4452
        %v4469 = vpack.c.bf16 %v4453, %v4453
        %v4470 = vpack.c.bf16 %v4454, %v4454
        %v4471 = vpack.c.bf16 %v4455, %v4455
        %v4472 = vpack.c.bf16 %v4456, %v4456
        %v4473 = vpack.c.bf16 %v4457, %v4457
        %v4474 = vpack.c.bf16 %v4458, %v4458
        %v4475 = vpack.c.bf16 %v4459, %v4459
        %s4476 = scalar_lea.vmem %s10, 16
        %v4477 = vld [vmem:[%s4476] sm:$0xf]
        %v4478 = vld [vmem:[%s4476 + $0x4] sm:$0xf]
        %v4481 = vunpack.c.l.b16 %v4477
        %v4482 = vunpack.c.l.b16 %v4478
        %v4483 = vpack.c.b16 %v4482, %v4481
        %v4485 = vsel %vm3839, %v4483, 0
        %v4488 = vsel %vm3843, %v4460, 0
        %v4491 = vsel %vm3843, %v4461, 0
        %v4494 = vsel %vm3843, %v4462, 0
        %v4497 = vsel %vm3843, %v4463, 0
        %v4500 = vsel %vm3843, %v4464, 0
        %v4503 = vsel %vm3843, %v4465, 0
        %v4506 = vsel %vm3843, %v4466, 0
        %v4509 = vsel %vm3843, %v4467, 0
        %v4512 = vsel %vm3843, %v4468, 0
        %v4515 = vsel %vm3843, %v4469, 0
        %v4518 = vsel %vm3843, %v4470, 0
        %v4521 = vsel %vm3843, %v4471, 0
        %v4524 = vsel %vm3843, %v4472, 0
        %v4527 = vsel %vm3843, %v4473, 0
        %v4530 = vsel %vm3843, %v4474, 0
        %v4533 = vsel %vm3843, %v4475, 0
        %4535 = vmatpush.bf16.msra.mxu0 0
        %4536 = vmatpush.bf16.msra.mxu0 0
        %4537 = vmatpush.bf16.msra.mxu0 0
        %4538 = vmatpush.bf16.msra.mxu0 0
        %4539 = vmatpush.bf16.msra.mxu0 0
        %4540 = vmatpush.bf16.msra.mxu0 0
        %4541 = vmatpush.bf16.msra.mxu0 0
        %4542 = vmatpush.bf16.msra.mxu0 %v4488
        %4543 = vmatmul.bf16.gmra.mxu0 %v4485
        %v4544 = vpop.f32.mrf.mxu0
        %v4545 = vadd.f32 0.0, %v4544
        %v4546 = vpop.f32.mrf.mxu0
        %v4547 = vadd.f32 0.0, %v4546
        %4548 = vdwg.mxu0
        %4549 = vmatpush.bf16.msra.mxu0 0
        %4550 = vmatpush.bf16.msra.mxu0 0
        %4551 = vmatpush.bf16.msra.mxu0 0
        %4552 = vmatpush.bf16.msra.mxu0 0
        %4553 = vmatpush.bf16.msra.mxu0 0
        %4554 = vmatpush.bf16.msra.mxu0 0
        %4555 = vmatpush.bf16.msra.mxu0 0
        %4556 = vmatpush.bf16.msra.mxu0 %v4491
        %4557 = vmatmul.bf16.gmra.mxu0 %v4485
        %v4558 = vpop.f32.mrf.mxu0
        %v4559 = vadd.f32 0.0, %v4558
        %v4560 = vpop.f32.mrf.mxu0
        %v4561 = vadd.f32 0.0, %v4560
        %4562 = vdwg.mxu0
        %4563 = vmatpush.bf16.msra.mxu0 0
        %4564 = vmatpush.bf16.msra.mxu0 0
        %4565 = vmatpush.bf16.msra.mxu0 0
        %4566 = vmatpush.bf16.msra.mxu0 0
        %4567 = vmatpush.bf16.msra.mxu0 0
        %4568 = vmatpush.bf16.msra.mxu0 0
        %4569 = vmatpush.bf16.msra.mxu0 0
        %4570 = vmatpush.bf16.msra.mxu0 %v4494
        %4571 = vmatmul.bf16.gmra.mxu0 %v4485
        %v4572 = vpop.f32.mrf.mxu0
        %v4573 = vadd.f32 0.0, %v4572
        %v4574 = vpop.f32.mrf.mxu0
        %v4575 = vadd.f32 0.0, %v4574
        %4576 = vdwg.mxu0
        %4577 = vmatpush.bf16.msra.mxu0 0
        %4578 = vmatpush.bf16.msra.mxu0 0
        %4579 = vmatpush.bf16.msra.mxu0 0
        %4580 = vmatpush.bf16.msra.mxu0 0
        %4581 = vmatpush.bf16.msra.mxu0 0
        %4582 = vmatpush.bf16.msra.mxu0 0
        %4583 = vmatpush.bf16.msra.mxu0 0
        %4584 = vmatpush.bf16.msra.mxu0 %v4497
        %4585 = vmatmul.bf16.gmra.mxu0 %v4485
        %v4586 = vpop.f32.mrf.mxu0
        %v4587 = vadd.f32 0.0, %v4586
        %v4588 = vpop.f32.mrf.mxu0
        %v4589 = vadd.f32 0.0, %v4588
        %4590 = vdwg.mxu0
        %4591 = vmatpush.bf16.msra.mxu0 0
        %4592 = vmatpush.bf16.msra.mxu0 0
        %4593 = vmatpush.bf16.msra.mxu0 0
        %4594 = vmatpush.bf16.msra.mxu0 0
        %4595 = vmatpush.bf16.msra.mxu0 0
        %4596 = vmatpush.bf16.msra.mxu0 0
        %4597 = vmatpush.bf16.msra.mxu0 0
        %4598 = vmatpush.bf16.msra.mxu0 %v4500
        %4599 = vmatmul.bf16.gmra.mxu0 %v4485
        %v4600 = vpop.f32.mrf.mxu0
        %v4601 = vadd.f32 0.0, %v4600
        %v4602 = vpop.f32.mrf.mxu0
        %v4603 = vadd.f32 0.0, %v4602
        %4604 = vdwg.mxu0
        %4605 = vmatpush.bf16.msra.mxu0 0
        %4606 = vmatpush.bf16.msra.mxu0 0
        %4607 = vmatpush.bf16.msra.mxu0 0
        %4608 = vmatpush.bf16.msra.mxu0 0
        %4609 = vmatpush.bf16.msra.mxu0 0
        %4610 = vmatpush.bf16.msra.mxu0 0
        %4611 = vmatpush.bf16.msra.mxu0 0
        %4612 = vmatpush.bf16.msra.mxu0 %v4503
        %4613 = vmatmul.bf16.gmra.mxu0 %v4485
        %v4614 = vpop.f32.mrf.mxu0
        %v4615 = vadd.f32 0.0, %v4614
        %v4616 = vpop.f32.mrf.mxu0
        %v4617 = vadd.f32 0.0, %v4616
        %4618 = vdwg.mxu0
        %4619 = vmatpush.bf16.msra.mxu0 0
        %4620 = vmatpush.bf16.msra.mxu0 0
        %4621 = vmatpush.bf16.msra.mxu0 0
        %4622 = vmatpush.bf16.msra.mxu0 0
        %4623 = vmatpush.bf16.msra.mxu0 0
        %4624 = vmatpush.bf16.msra.mxu0 0
        %4625 = vmatpush.bf16.msra.mxu0 0
        %4626 = vmatpush.bf16.msra.mxu0 %v4506
        %4627 = vmatmul.bf16.gmra.mxu0 %v4485
        %v4628 = vpop.f32.mrf.mxu0
        %v4629 = vadd.f32 0.0, %v4628
        %v4630 = vpop.f32.mrf.mxu0
        %v4631 = vadd.f32 0.0, %v4630
        %4632 = vdwg.mxu0
        %4633 = vmatpush.bf16.msra.mxu0 0
        %4634 = vmatpush.bf16.msra.mxu0 0
        %4635 = vmatpush.bf16.msra.mxu0 0
        %4636 = vmatpush.bf16.msra.mxu0 0
        %4637 = vmatpush.bf16.msra.mxu0 0
        %4638 = vmatpush.bf16.msra.mxu0 0
        %4639 = vmatpush.bf16.msra.mxu0 0
        %4640 = vmatpush.bf16.msra.mxu0 %v4509
        %4641 = vmatmul.bf16.gmra.mxu0 %v4485
        %v4642 = vpop.f32.mrf.mxu0
        %v4643 = vadd.f32 0.0, %v4642
        %v4644 = vpop.f32.mrf.mxu0
        %v4645 = vadd.f32 0.0, %v4644
        %4646 = vdwg.mxu0
        %4647 = vmatpush.bf16.msra.mxu0 0
        %4648 = vmatpush.bf16.msra.mxu0 0
        %4649 = vmatpush.bf16.msra.mxu0 0
        %4650 = vmatpush.bf16.msra.mxu0 0
        %4651 = vmatpush.bf16.msra.mxu0 0
        %4652 = vmatpush.bf16.msra.mxu0 0
        %4653 = vmatpush.bf16.msra.mxu0 0
        %4654 = vmatpush.bf16.msra.mxu0 %v4512
        %4655 = vmatmul.bf16.gmra.mxu0 %v4485
        %v4656 = vpop.f32.mrf.mxu0
        %v4657 = vadd.f32 0.0, %v4656
        %v4658 = vpop.f32.mrf.mxu0
        %v4659 = vadd.f32 0.0, %v4658
        %4660 = vdwg.mxu0
        %4661 = vmatpush.bf16.msra.mxu0 0
        %4662 = vmatpush.bf16.msra.mxu0 0
        %4663 = vmatpush.bf16.msra.mxu0 0
        %4664 = vmatpush.bf16.msra.mxu0 0
        %4665 = vmatpush.bf16.msra.mxu0 0
        %4666 = vmatpush.bf16.msra.mxu0 0
        %4667 = vmatpush.bf16.msra.mxu0 0
        %4668 = vmatpush.bf16.msra.mxu0 %v4515
        %4669 = vmatmul.bf16.gmra.mxu0 %v4485
        %v4670 = vpop.f32.mrf.mxu0
        %v4671 = vadd.f32 0.0, %v4670
        %v4672 = vpop.f32.mrf.mxu0
        %v4673 = vadd.f32 0.0, %v4672
        %4674 = vdwg.mxu0
        %4675 = vmatpush.bf16.msra.mxu0 0
        %4676 = vmatpush.bf16.msra.mxu0 0
        %4677 = vmatpush.bf16.msra.mxu0 0
        %4678 = vmatpush.bf16.msra.mxu0 0
        %4679 = vmatpush.bf16.msra.mxu0 0
        %4680 = vmatpush.bf16.msra.mxu0 0
        %4681 = vmatpush.bf16.msra.mxu0 0
        %4682 = vmatpush.bf16.msra.mxu0 %v4518
        %4683 = vmatmul.bf16.gmra.mxu0 %v4485
        %v4684 = vpop.f32.mrf.mxu0
        %v4685 = vadd.f32 0.0, %v4684
        %v4686 = vpop.f32.mrf.mxu0
        %v4687 = vadd.f32 0.0, %v4686
        %4688 = vdwg.mxu0
        %4689 = vmatpush.bf16.msra.mxu0 0
        %4690 = vmatpush.bf16.msra.mxu0 0
        %4691 = vmatpush.bf16.msra.mxu0 0
        %4692 = vmatpush.bf16.msra.mxu0 0
        %4693 = vmatpush.bf16.msra.mxu0 0
        %4694 = vmatpush.bf16.msra.mxu0 0
        %4695 = vmatpush.bf16.msra.mxu0 0
        %4696 = vmatpush.bf16.msra.mxu0 %v4521
        %4697 = vmatmul.bf16.gmra.mxu0 %v4485
        %v4698 = vpop.f32.mrf.mxu0
        %v4699 = vadd.f32 0.0, %v4698
        %v4700 = vpop.f32.mrf.mxu0
        %v4701 = vadd.f32 0.0, %v4700
        %4702 = vdwg.mxu0
        %4703 = vmatpush.bf16.msra.mxu0 0
        %4704 = vmatpush.bf16.msra.mxu0 0
        %4705 = vmatpush.bf16.msra.mxu0 0
        %4706 = vmatpush.bf16.msra.mxu0 0
        %4707 = vmatpush.bf16.msra.mxu0 0
        %4708 = vmatpush.bf16.msra.mxu0 0
        %4709 = vmatpush.bf16.msra.mxu0 0
        %4710 = vmatpush.bf16.msra.mxu0 %v4524
        %4711 = vmatmul.bf16.gmra.mxu0 %v4485
        %v4712 = vpop.f32.mrf.mxu0
        %v4713 = vadd.f32 0.0, %v4712
        %v4714 = vpop.f32.mrf.mxu0
        %v4715 = vadd.f32 0.0, %v4714
        %4716 = vdwg.mxu0
        %4717 = vmatpush.bf16.msra.mxu0 0
        %4718 = vmatpush.bf16.msra.mxu0 0
        %4719 = vmatpush.bf16.msra.mxu0 0
        %4720 = vmatpush.bf16.msra.mxu0 0
        %4721 = vmatpush.bf16.msra.mxu0 0
        %4722 = vmatpush.bf16.msra.mxu0 0
        %4723 = vmatpush.bf16.msra.mxu0 0
        %4724 = vmatpush.bf16.msra.mxu0 %v4527
        %4725 = vmatmul.bf16.gmra.mxu0 %v4485
        %v4726 = vpop.f32.mrf.mxu0
        %v4727 = vadd.f32 0.0, %v4726
        %v4728 = vpop.f32.mrf.mxu0
        %v4729 = vadd.f32 0.0, %v4728
        %4730 = vdwg.mxu0
        %4731 = vmatpush.bf16.msra.mxu0 0
        %4732 = vmatpush.bf16.msra.mxu0 0
        %4733 = vmatpush.bf16.msra.mxu0 0
        %4734 = vmatpush.bf16.msra.mxu0 0
        %4735 = vmatpush.bf16.msra.mxu0 0
        %4736 = vmatpush.bf16.msra.mxu0 0
        %4737 = vmatpush.bf16.msra.mxu0 0
        %4738 = vmatpush.bf16.msra.mxu0 %v4530
        %4739 = vmatmul.bf16.gmra.mxu0 %v4485
        %v4740 = vpop.f32.mrf.mxu0
        %v4741 = vadd.f32 0.0, %v4740
        %v4742 = vpop.f32.mrf.mxu0
        %v4743 = vadd.f32 0.0, %v4742
        %4744 = vdwg.mxu0
        %4745 = vmatpush.bf16.msra.mxu0 0
        %4746 = vmatpush.bf16.msra.mxu0 0
        %4747 = vmatpush.bf16.msra.mxu0 0
        %4748 = vmatpush.bf16.msra.mxu0 0
        %4749 = vmatpush.bf16.msra.mxu0 0
        %4750 = vmatpush.bf16.msra.mxu0 0
        %4751 = vmatpush.bf16.msra.mxu0 0
        %4752 = vmatpush.bf16.msra.mxu0 %v4533
        %4753 = vmatmul.bf16.gmra.mxu0 %v4485
        %v4754 = vpop.f32.mrf.mxu0
        %v4755 = vadd.f32 0.0, %v4754
        %v4756 = vpop.f32.mrf.mxu0
        %v4757 = vadd.f32 0.0, %v4756
        %4758 = vdwg.mxu0
        %v4759 = vadd.f32 %v4182, %v4545
        %v4760 = vadd.f32 %v4196, %v4559
        %v4761 = vadd.f32 %v4210, %v4573
        %v4762 = vadd.f32 %v4224, %v4587
        %v4763 = vadd.f32 %v4238, %v4601
        %v4764 = vadd.f32 %v4252, %v4615
        %v4765 = vadd.f32 %v4266, %v4629
        %v4766 = vadd.f32 %v4280, %v4643
        %v4767 = vadd.f32 %v4294, %v4657
        %v4768 = vadd.f32 %v4308, %v4671
        %v4769 = vadd.f32 %v4322, %v4685
        %v4770 = vadd.f32 %v4336, %v4699
        %v4771 = vadd.f32 %v4350, %v4713
        %v4772 = vadd.f32 %v4364, %v4727
        %v4773 = vadd.f32 %v4378, %v4741
        %v4774 = vadd.f32 %v4392, %v4755
        %v4775 = vadd.f32 %v4184, %v4547
        %v4776 = vadd.f32 %v4198, %v4561
        %v4777 = vadd.f32 %v4212, %v4575
        %v4778 = vadd.f32 %v4226, %v4589
        %v4779 = vadd.f32 %v4240, %v4603
        %v4780 = vadd.f32 %v4254, %v4617
        %v4781 = vadd.f32 %v4268, %v4631
        %v4782 = vadd.f32 %v4282, %v4645
        %v4783 = vadd.f32 %v4296, %v4659
        %v4784 = vadd.f32 %v4310, %v4673
        %v4785 = vadd.f32 %v4324, %v4687
        %v4786 = vadd.f32 %v4338, %v4701
        %v4787 = vadd.f32 %v4352, %v4715
        %v4788 = vadd.f32 %v4366, %v4729
        %v4789 = vadd.f32 %v4380, %v4743
        %v4790 = vadd.f32 %v4394, %v4757
        %4791 = vrot.lane.b32.xlu0 %v3653, 1
        %v4792 = vpop.permute.xlu0 %4791
        %4793 = vrot.lane.b32.xlu0 %v3654, 1
        %v4794 = vpop.permute.xlu0 %4793
        %4795 = vrot.lane.b32.xlu0 %v3655, 1
        %v4796 = vpop.permute.xlu0 %4795
        %4797 = vrot.lane.b32.xlu0 %v3656, 1
        %v4798 = vpop.permute.xlu0 %4797
        %4799 = vrot.lane.b32.xlu0 %v3657, 1
        %v4800 = vpop.permute.xlu0 %4799
        %4801 = vrot.lane.b32.xlu0 %v3658, 1
        %v4802 = vpop.permute.xlu0 %4801
        %4803 = vrot.lane.b32.xlu0 %v3659, 1
        %v4804 = vpop.permute.xlu0 %4803
        %4805 = vrot.lane.b32.xlu0 %v3660, 1
        %v4806 = vpop.permute.xlu0 %4805
        %4807 = vrot.lane.b32.xlu0 %v3661, 1
        %v4808 = vpop.permute.xlu0 %4807
        %4809 = vrot.lane.b32.xlu0 %v3662, 1
        %v4810 = vpop.permute.xlu0 %4809
        %4811 = vrot.lane.b32.xlu0 %v3663, 1
        %v4812 = vpop.permute.xlu0 %4811
        %4813 = vrot.lane.b32.xlu0 %v3664, 1
        %v4814 = vpop.permute.xlu0 %4813
        %4815 = vrot.lane.b32.xlu0 %v3665, 1
        %v4816 = vpop.permute.xlu0 %4815
        %4817 = vrot.lane.b32.xlu0 %v3666, 1
        %v4818 = vpop.permute.xlu0 %4817
        %4819 = vrot.lane.b32.xlu0 %v3667, 1
        %v4820 = vpop.permute.xlu0 %4819
        %4821 = vrot.lane.b32.xlu0 %v3668, 1
        %v4822 = vpop.permute.xlu0 %4821
        %v4823 = vsel %vm1576, %v4820, %v4822
        %v4824 = vsel %vm1576, %v4818, %v4820
        %v4825 = vsel %vm1576, %v4816, %v4818
        %v4826 = vsel %vm1576, %v4814, %v4816
        %v4827 = vsel %vm1576, %v4812, %v4814
        %v4828 = vsel %vm1576, %v4810, %v4812
        %v4829 = vsel %vm1576, %v4808, %v4810
        %v4830 = vsel %vm1576, %v4806, %v4808
        %v4831 = vsel %vm1576, %v4804, %v4806
        %v4832 = vsel %vm1576, %v4802, %v4804
        %v4833 = vsel %vm1576, %v4800, %v4802
        %v4834 = vsel %vm1576, %v4798, %v4800
        %v4835 = vsel %vm1576, %v4796, %v4798
        %v4836 = vsel %vm1576, %v4794, %v4796
        %v4837 = vsel %vm1576, %v4792, %v4794
        %v4838 = vsel %vm1576, %v4822, %v4792
        %v4839 = vmul.f32 %v4838, %v1619
        %v4840 = vmul.f32 %v4837, %v1620
        %v4841 = vmul.f32 %v4836, %v1621
        %v4842 = vmul.f32 %v4835, %v1622
        %v4843 = vmul.f32 %v4834, %v1623
        %v4844 = vmul.f32 %v4833, %v1624
        %v4845 = vmul.f32 %v4832, %v1625
        %v4846 = vmul.f32 %v4831, %v1626
        %v4847 = vmul.f32 %v4830, %v1627
        %v4848 = vmul.f32 %v4829, %v1628
        %v4849 = vmul.f32 %v4828, %v1629
        %v4850 = vmul.f32 %v4827, %v1630
        %v4851 = vmul.f32 %v4826, %v1631
        %v4852 = vmul.f32 %v4825, %v1632
        %v4853 = vmul.f32 %v4824, %v1633
        %v4854 = vmul.f32 %v4823, %v1634
        %v4855 = vpack.c.bf16 %v4839, %v4839
        %v4856 = vpack.c.bf16 %v4840, %v4840
        %v4857 = vpack.c.bf16 %v4841, %v4841
        %v4858 = vpack.c.bf16 %v4842, %v4842
        %v4859 = vpack.c.bf16 %v4843, %v4843
        %v4860 = vpack.c.bf16 %v4844, %v4844
        %v4861 = vpack.c.bf16 %v4845, %v4845
        %v4862 = vpack.c.bf16 %v4846, %v4846
        %v4863 = vpack.c.bf16 %v4847, %v4847
        %v4864 = vpack.c.bf16 %v4848, %v4848
        %v4865 = vpack.c.bf16 %v4849, %v4849
        %v4866 = vpack.c.bf16 %v4850, %v4850
        %v4867 = vpack.c.bf16 %v4851, %v4851
        %v4868 = vpack.c.bf16 %v4852, %v4852
        %v4869 = vpack.c.bf16 %v4853, %v4853
        %v4870 = vpack.c.bf16 %v4854, %v4854
        %s4871 = scalar_lea.vmem %s10, 24
        %v4872 = vld [vmem:[%s4871] sm:$0xf]
        %v4873 = vld [vmem:[%s4871 + $0x4] sm:$0xf]
        %v4876 = vunpack.c.l.b16 %v4872
        %v4877 = vunpack.c.l.b16 %v4873
        %v4878 = vpack.c.b16 %v4877, %v4876
        %v4880 = vsel %vm3839, %v4878, 0
        %v4883 = vsel %vm3843, %v4855, 0
        %v4886 = vsel %vm3843, %v4856, 0
        %v4889 = vsel %vm3843, %v4857, 0
        %v4892 = vsel %vm3843, %v4858, 0
        %v4895 = vsel %vm3843, %v4859, 0
        %v4898 = vsel %vm3843, %v4860, 0
        %v4901 = vsel %vm3843, %v4861, 0
        %v4904 = vsel %vm3843, %v4862, 0
        %v4907 = vsel %vm3843, %v4863, 0
        %v4910 = vsel %vm3843, %v4864, 0
        %v4913 = vsel %vm3843, %v4865, 0
        %v4916 = vsel %vm3843, %v4866, 0
        %v4919 = vsel %vm3843, %v4867, 0
        %v4922 = vsel %vm3843, %v4868, 0
        %v4925 = vsel %vm3843, %v4869, 0
        %v4928 = vsel %vm3843, %v4870, 0
        %4930 = vmatpush.bf16.msra.mxu0 0
        %4931 = vmatpush.bf16.msra.mxu0 0
        %4932 = vmatpush.bf16.msra.mxu0 0
        %4933 = vmatpush.bf16.msra.mxu0 0
        %4934 = vmatpush.bf16.msra.mxu0 0
        %4935 = vmatpush.bf16.msra.mxu0 0
        %4936 = vmatpush.bf16.msra.mxu0 0
        %4937 = vmatpush.bf16.msra.mxu0 %v4883
        %4938 = vmatmul.bf16.gmra.mxu0 %v4880
        %v4939 = vpop.f32.mrf.mxu0
        %v4940 = vadd.f32 0.0, %v4939
        %v4941 = vpop.f32.mrf.mxu0
        %v4942 = vadd.f32 0.0, %v4941
        %4943 = vdwg.mxu0
        %4944 = vmatpush.bf16.msra.mxu0 0
        %4945 = vmatpush.bf16.msra.mxu0 0
        %4946 = vmatpush.bf16.msra.mxu0 0
        %4947 = vmatpush.bf16.msra.mxu0 0
        %4948 = vmatpush.bf16.msra.mxu0 0
        %4949 = vmatpush.bf16.msra.mxu0 0
        %4950 = vmatpush.bf16.msra.mxu0 0
        %4951 = vmatpush.bf16.msra.mxu0 %v4886
        %4952 = vmatmul.bf16.gmra.mxu0 %v4880
        %v4953 = vpop.f32.mrf.mxu0
        %v4954 = vadd.f32 0.0, %v4953
        %v4955 = vpop.f32.mrf.mxu0
        %v4956 = vadd.f32 0.0, %v4955
        %4957 = vdwg.mxu0
        %4958 = vmatpush.bf16.msra.mxu0 0
        %4959 = vmatpush.bf16.msra.mxu0 0
        %4960 = vmatpush.bf16.msra.mxu0 0
        %4961 = vmatpush.bf16.msra.mxu0 0
        %4962 = vmatpush.bf16.msra.mxu0 0
        %4963 = vmatpush.bf16.msra.mxu0 0
        %4964 = vmatpush.bf16.msra.mxu0 0
        %4965 = vmatpush.bf16.msra.mxu0 %v4889
        %4966 = vmatmul.bf16.gmra.mxu0 %v4880
        %v4967 = vpop.f32.mrf.mxu0
        %v4968 = vadd.f32 0.0, %v4967
        %v4969 = vpop.f32.mrf.mxu0
        %v4970 = vadd.f32 0.0, %v4969
        %4971 = vdwg.mxu0
        %4972 = vmatpush.bf16.msra.mxu0 0
        %4973 = vmatpush.bf16.msra.mxu0 0
        %4974 = vmatpush.bf16.msra.mxu0 0
        %4975 = vmatpush.bf16.msra.mxu0 0
        %4976 = vmatpush.bf16.msra.mxu0 0
        %4977 = vmatpush.bf16.msra.mxu0 0
        %4978 = vmatpush.bf16.msra.mxu0 0
        %4979 = vmatpush.bf16.msra.mxu0 %v4892
        %4980 = vmatmul.bf16.gmra.mxu0 %v4880
        %v4981 = vpop.f32.mrf.mxu0
        %v4982 = vadd.f32 0.0, %v4981
        %v4983 = vpop.f32.mrf.mxu0
        %v4984 = vadd.f32 0.0, %v4983
        %4985 = vdwg.mxu0
        %4986 = vmatpush.bf16.msra.mxu0 0
        %4987 = vmatpush.bf16.msra.mxu0 0
        %4988 = vmatpush.bf16.msra.mxu0 0
        %4989 = vmatpush.bf16.msra.mxu0 0
        %4990 = vmatpush.bf16.msra.mxu0 0
        %4991 = vmatpush.bf16.msra.mxu0 0
        %4992 = vmatpush.bf16.msra.mxu0 0
        %4993 = vmatpush.bf16.msra.mxu0 %v4895
        %4994 = vmatmul.bf16.gmra.mxu0 %v4880
        %v4995 = vpop.f32.mrf.mxu0
        %v4996 = vadd.f32 0.0, %v4995
        %v4997 = vpop.f32.mrf.mxu0
        %v4998 = vadd.f32 0.0, %v4997
        %4999 = vdwg.mxu0
        %5000 = vmatpush.bf16.msra.mxu0 0
        %5001 = vmatpush.bf16.msra.mxu0 0
        %5002 = vmatpush.bf16.msra.mxu0 0
        %5003 = vmatpush.bf16.msra.mxu0 0
        %5004 = vmatpush.bf16.msra.mxu0 0
        %5005 = vmatpush.bf16.msra.mxu0 0
        %5006 = vmatpush.bf16.msra.mxu0 0
        %5007 = vmatpush.bf16.msra.mxu0 %v4898
        %5008 = vmatmul.bf16.gmra.mxu0 %v4880
        %v5009 = vpop.f32.mrf.mxu0
        %v5010 = vadd.f32 0.0, %v5009
        %v5011 = vpop.f32.mrf.mxu0
        %v5012 = vadd.f32 0.0, %v5011
        %5013 = vdwg.mxu0
        %5014 = vmatpush.bf16.msra.mxu0 0
        %5015 = vmatpush.bf16.msra.mxu0 0
        %5016 = vmatpush.bf16.msra.mxu0 0
        %5017 = vmatpush.bf16.msra.mxu0 0
        %5018 = vmatpush.bf16.msra.mxu0 0
        %5019 = vmatpush.bf16.msra.mxu0 0
        %5020 = vmatpush.bf16.msra.mxu0 0
        %5021 = vmatpush.bf16.msra.mxu0 %v4901
        %5022 = vmatmul.bf16.gmra.mxu0 %v4880
        %v5023 = vpop.f32.mrf.mxu0
        %v5024 = vadd.f32 0.0, %v5023
        %v5025 = vpop.f32.mrf.mxu0
        %v5026 = vadd.f32 0.0, %v5025
        %5027 = vdwg.mxu0
        %5028 = vmatpush.bf16.msra.mxu0 0
        %5029 = vmatpush.bf16.msra.mxu0 0
        %5030 = vmatpush.bf16.msra.mxu0 0
        %5031 = vmatpush.bf16.msra.mxu0 0
        %5032 = vmatpush.bf16.msra.mxu0 0
        %5033 = vmatpush.bf16.msra.mxu0 0
        %5034 = vmatpush.bf16.msra.mxu0 0
        %5035 = vmatpush.bf16.msra.mxu0 %v4904
        %5036 = vmatmul.bf16.gmra.mxu0 %v4880
        %v5037 = vpop.f32.mrf.mxu0
        %v5038 = vadd.f32 0.0, %v5037
        %v5039 = vpop.f32.mrf.mxu0
        %v5040 = vadd.f32 0.0, %v5039
        %5041 = vdwg.mxu0
        %5042 = vmatpush.bf16.msra.mxu0 0
        %5043 = vmatpush.bf16.msra.mxu0 0
        %5044 = vmatpush.bf16.msra.mxu0 0
        %5045 = vmatpush.bf16.msra.mxu0 0
        %5046 = vmatpush.bf16.msra.mxu0 0
        %5047 = vmatpush.bf16.msra.mxu0 0
        %5048 = vmatpush.bf16.msra.mxu0 0
        %5049 = vmatpush.bf16.msra.mxu0 %v4907
        %5050 = vmatmul.bf16.gmra.mxu0 %v4880
        %v5051 = vpop.f32.mrf.mxu0
        %v5052 = vadd.f32 0.0, %v5051
        %v5053 = vpop.f32.mrf.mxu0
        %v5054 = vadd.f32 0.0, %v5053
        %5055 = vdwg.mxu0
        %5056 = vmatpush.bf16.msra.mxu0 0
        %5057 = vmatpush.bf16.msra.mxu0 0
        %5058 = vmatpush.bf16.msra.mxu0 0
        %5059 = vmatpush.bf16.msra.mxu0 0
        %5060 = vmatpush.bf16.msra.mxu0 0
        %5061 = vmatpush.bf16.msra.mxu0 0
        %5062 = vmatpush.bf16.msra.mxu0 0
        %5063 = vmatpush.bf16.msra.mxu0 %v4910
        %5064 = vmatmul.bf16.gmra.mxu0 %v4880
        %v5065 = vpop.f32.mrf.mxu0
        %v5066 = vadd.f32 0.0, %v5065
        %v5067 = vpop.f32.mrf.mxu0
        %v5068 = vadd.f32 0.0, %v5067
        %5069 = vdwg.mxu0
        %5070 = vmatpush.bf16.msra.mxu0 0
        %5071 = vmatpush.bf16.msra.mxu0 0
        %5072 = vmatpush.bf16.msra.mxu0 0
        %5073 = vmatpush.bf16.msra.mxu0 0
        %5074 = vmatpush.bf16.msra.mxu0 0
        %5075 = vmatpush.bf16.msra.mxu0 0
        %5076 = vmatpush.bf16.msra.mxu0 0
        %5077 = vmatpush.bf16.msra.mxu0 %v4913
        %5078 = vmatmul.bf16.gmra.mxu0 %v4880
        %v5079 = vpop.f32.mrf.mxu0
        %v5080 = vadd.f32 0.0, %v5079
        %v5081 = vpop.f32.mrf.mxu0
        %v5082 = vadd.f32 0.0, %v5081
        %5083 = vdwg.mxu0
        %5084 = vmatpush.bf16.msra.mxu0 0
        %5085 = vmatpush.bf16.msra.mxu0 0
        %5086 = vmatpush.bf16.msra.mxu0 0
        %5087 = vmatpush.bf16.msra.mxu0 0
        %5088 = vmatpush.bf16.msra.mxu0 0
        %5089 = vmatpush.bf16.msra.mxu0 0
        %5090 = vmatpush.bf16.msra.mxu0 0
        %5091 = vmatpush.bf16.msra.mxu0 %v4916
        %5092 = vmatmul.bf16.gmra.mxu0 %v4880
        %v5093 = vpop.f32.mrf.mxu0
        %v5094 = vadd.f32 0.0, %v5093
        %v5095 = vpop.f32.mrf.mxu0
        %v5096 = vadd.f32 0.0, %v5095
        %5097 = vdwg.mxu0
        %5098 = vmatpush.bf16.msra.mxu0 0
        %5099 = vmatpush.bf16.msra.mxu0 0
        %5100 = vmatpush.bf16.msra.mxu0 0
        %5101 = vmatpush.bf16.msra.mxu0 0
        %5102 = vmatpush.bf16.msra.mxu0 0
        %5103 = vmatpush.bf16.msra.mxu0 0
        %5104 = vmatpush.bf16.msra.mxu0 0
        %5105 = vmatpush.bf16.msra.mxu0 %v4919
        %5106 = vmatmul.bf16.gmra.mxu0 %v4880
        %v5107 = vpop.f32.mrf.mxu0
        %v5108 = vadd.f32 0.0, %v5107
        %v5109 = vpop.f32.mrf.mxu0
        %v5110 = vadd.f32 0.0, %v5109
        %5111 = vdwg.mxu0
        %5112 = vmatpush.bf16.msra.mxu0 0
        %5113 = vmatpush.bf16.msra.mxu0 0
        %5114 = vmatpush.bf16.msra.mxu0 0
        %5115 = vmatpush.bf16.msra.mxu0 0
        %5116 = vmatpush.bf16.msra.mxu0 0
        %5117 = vmatpush.bf16.msra.mxu0 0
        %5118 = vmatpush.bf16.msra.mxu0 0
        %5119 = vmatpush.bf16.msra.mxu0 %v4922
        %5120 = vmatmul.bf16.gmra.mxu0 %v4880
        %v5121 = vpop.f32.mrf.mxu0
        %v5122 = vadd.f32 0.0, %v5121
        %v5123 = vpop.f32.mrf.mxu0
        %v5124 = vadd.f32 0.0, %v5123
        %5125 = vdwg.mxu0
        %5126 = vmatpush.bf16.msra.mxu0 0
        %5127 = vmatpush.bf16.msra.mxu0 0
        %5128 = vmatpush.bf16.msra.mxu0 0
        %5129 = vmatpush.bf16.msra.mxu0 0
        %5130 = vmatpush.bf16.msra.mxu0 0
        %5131 = vmatpush.bf16.msra.mxu0 0
        %5132 = vmatpush.bf16.msra.mxu0 0
        %5133 = vmatpush.bf16.msra.mxu0 %v4925
        %5134 = vmatmul.bf16.gmra.mxu0 %v4880
        %v5135 = vpop.f32.mrf.mxu0
        %v5136 = vadd.f32 0.0, %v5135
        %v5137 = vpop.f32.mrf.mxu0
        %v5138 = vadd.f32 0.0, %v5137
        %5139 = vdwg.mxu0
        %5140 = vmatpush.bf16.msra.mxu0 0
        %5141 = vmatpush.bf16.msra.mxu0 0
        %5142 = vmatpush.bf16.msra.mxu0 0
        %5143 = vmatpush.bf16.msra.mxu0 0
        %5144 = vmatpush.bf16.msra.mxu0 0
        %5145 = vmatpush.bf16.msra.mxu0 0
        %5146 = vmatpush.bf16.msra.mxu0 0
        %5147 = vmatpush.bf16.msra.mxu0 %v4928
        %5148 = vmatmul.bf16.gmra.mxu0 %v4880
        %v5149 = vpop.f32.mrf.mxu0
        %v5150 = vadd.f32 0.0, %v5149
        %v5151 = vpop.f32.mrf.mxu0
        %v5152 = vadd.f32 0.0, %v5151
        %5153 = vdwg.mxu0
        %v5154 = vadd.f32 %v4759, %v4940
        %v5155 = vadd.f32 %v4760, %v4954
        %v5156 = vadd.f32 %v4761, %v4968
        %v5157 = vadd.f32 %v4762, %v4982
        %v5158 = vadd.f32 %v4763, %v4996
        %v5159 = vadd.f32 %v4764, %v5010
        %v5160 = vadd.f32 %v4765, %v5024
        %v5161 = vadd.f32 %v4766, %v5038
        %v5162 = vadd.f32 %v4767, %v5052
        %v5163 = vadd.f32 %v4768, %v5066
        %v5164 = vadd.f32 %v4769, %v5080
        %v5165 = vadd.f32 %v4770, %v5094
        %v5166 = vadd.f32 %v4771, %v5108
        %v5167 = vadd.f32 %v4772, %v5122
        %v5168 = vadd.f32 %v4773, %v5136
        %v5169 = vadd.f32 %v4774, %v5150
        %v5170 = vadd.f32 %v4775, %v4942
        %v5171 = vadd.f32 %v4776, %v4956
        %v5172 = vadd.f32 %v4777, %v4970
        %v5173 = vadd.f32 %v4778, %v4984
        %v5174 = vadd.f32 %v4779, %v4998
        %v5175 = vadd.f32 %v4780, %v5012
        %v5176 = vadd.f32 %v4781, %v5026
        %v5177 = vadd.f32 %v4782, %v5040
        %v5178 = vadd.f32 %v4783, %v5054
        %v5179 = vadd.f32 %v4784, %v5068
        %v5180 = vadd.f32 %v4785, %v5082
        %v5181 = vadd.f32 %v4786, %v5096
        %v5182 = vadd.f32 %v4787, %v5110
        %v5183 = vadd.f32 %v4788, %v5124
        %v5184 = vadd.f32 %v4789, %v5138
        %v5185 = vadd.f32 %v4790, %v5152
        %v5186 = vpack.c.bf16 %v3653, %v3653
        %v5187 = vpack.c.bf16 %v3654, %v3654
        %v5188 = vpack.c.bf16 %v3655, %v3655
        %v5189 = vpack.c.bf16 %v3656, %v3656
        %v5190 = vpack.c.bf16 %v3657, %v3657
        %v5191 = vpack.c.bf16 %v3658, %v3658
        %v5192 = vpack.c.bf16 %v3659, %v3659
        %v5193 = vpack.c.bf16 %v3660, %v3660
        %v5194 = vpack.c.bf16 %v3661, %v3661
        %v5195 = vpack.c.bf16 %v3662, %v3662
        %v5196 = vpack.c.bf16 %v3663, %v3663
        %v5197 = vpack.c.bf16 %v3664, %v3664
        %v5198 = vpack.c.bf16 %v3665, %v3665
        %v5199 = vpack.c.bf16 %v3666, %v3666
        %v5200 = vpack.c.bf16 %v3667, %v3667
        %v5201 = vpack.c.bf16 %v3668, %v3668
        %s5202 = scalar_lea.vmem %s10, 32
        %v5203 = vld [vmem:[%s5202] sm:$0xf]
        %v5204 = vld [vmem:[%s5202 + $0x4] sm:$0xf]
        %v5207 = vunpack.c.l.b16 %v5203
        %v5208 = vunpack.c.l.b16 %v5204
        %v5209 = vpack.c.b16 %v5208, %v5207
        %v5211 = vsel %vm3839, %v5209, 0
        %v5214 = vsel %vm3843, %v5186, 0
        %v5217 = vsel %vm3843, %v5187, 0
        %v5220 = vsel %vm3843, %v5188, 0
        %v5223 = vsel %vm3843, %v5189, 0
        %v5226 = vsel %vm3843, %v5190, 0
        %v5229 = vsel %vm3843, %v5191, 0
        %v5232 = vsel %vm3843, %v5192, 0
        %v5235 = vsel %vm3843, %v5193, 0
        %v5238 = vsel %vm3843, %v5194, 0
        %v5241 = vsel %vm3843, %v5195, 0
        %v5244 = vsel %vm3843, %v5196, 0
        %v5247 = vsel %vm3843, %v5197, 0
        %v5250 = vsel %vm3843, %v5198, 0
        %v5253 = vsel %vm3843, %v5199, 0
        %v5256 = vsel %vm3843, %v5200, 0
        %v5259 = vsel %vm3843, %v5201, 0
        %5261 = vmatpush.bf16.msra.mxu0 0
        %5262 = vmatpush.bf16.msra.mxu0 0
        %5263 = vmatpush.bf16.msra.mxu0 0
        %5264 = vmatpush.bf16.msra.mxu0 0
        %5265 = vmatpush.bf16.msra.mxu0 0
        %5266 = vmatpush.bf16.msra.mxu0 0
        %5267 = vmatpush.bf16.msra.mxu0 0
        %5268 = vmatpush.bf16.msra.mxu0 %v5214
        %5269 = vmatmul.bf16.gmra.mxu0 %v5211
        %v5270 = vpop.f32.mrf.mxu0
        %v5271 = vadd.f32 0.0, %v5270
        %v5272 = vpop.f32.mrf.mxu0
        %v5273 = vadd.f32 0.0, %v5272
        %5274 = vdwg.mxu0
        %5275 = vmatpush.bf16.msra.mxu0 0
        %5276 = vmatpush.bf16.msra.mxu0 0
        %5277 = vmatpush.bf16.msra.mxu0 0
        %5278 = vmatpush.bf16.msra.mxu0 0
        %5279 = vmatpush.bf16.msra.mxu0 0
        %5280 = vmatpush.bf16.msra.mxu0 0
        %5281 = vmatpush.bf16.msra.mxu0 0
        %5282 = vmatpush.bf16.msra.mxu0 %v5217
        %5283 = vmatmul.bf16.gmra.mxu0 %v5211
        %v5284 = vpop.f32.mrf.mxu0
        %v5285 = vadd.f32 0.0, %v5284
        %v5286 = vpop.f32.mrf.mxu0
        %v5287 = vadd.f32 0.0, %v5286
        %5288 = vdwg.mxu0
        %5289 = vmatpush.bf16.msra.mxu0 0
        %5290 = vmatpush.bf16.msra.mxu0 0
        %5291 = vmatpush.bf16.msra.mxu0 0
        %5292 = vmatpush.bf16.msra.mxu0 0
        %5293 = vmatpush.bf16.msra.mxu0 0
        %5294 = vmatpush.bf16.msra.mxu0 0
        %5295 = vmatpush.bf16.msra.mxu0 0
        %5296 = vmatpush.bf16.msra.mxu0 %v5220
        %5297 = vmatmul.bf16.gmra.mxu0 %v5211
        %v5298 = vpop.f32.mrf.mxu0
        %v5299 = vadd.f32 0.0, %v5298
        %v5300 = vpop.f32.mrf.mxu0
        %v5301 = vadd.f32 0.0, %v5300
        %5302 = vdwg.mxu0
        %5303 = vmatpush.bf16.msra.mxu0 0
        %5304 = vmatpush.bf16.msra.mxu0 0
        %5305 = vmatpush.bf16.msra.mxu0 0
        %5306 = vmatpush.bf16.msra.mxu0 0
        %5307 = vmatpush.bf16.msra.mxu0 0
        %5308 = vmatpush.bf16.msra.mxu0 0
        %5309 = vmatpush.bf16.msra.mxu0 0
        %5310 = vmatpush.bf16.msra.mxu0 %v5223
        %5311 = vmatmul.bf16.gmra.mxu0 %v5211
        %v5312 = vpop.f32.mrf.mxu0
        %v5313 = vadd.f32 0.0, %v5312
        %v5314 = vpop.f32.mrf.mxu0
        %v5315 = vadd.f32 0.0, %v5314
        %5316 = vdwg.mxu0
        %5317 = vmatpush.bf16.msra.mxu0 0
        %5318 = vmatpush.bf16.msra.mxu0 0
        %5319 = vmatpush.bf16.msra.mxu0 0
        %5320 = vmatpush.bf16.msra.mxu0 0
        %5321 = vmatpush.bf16.msra.mxu0 0
        %5322 = vmatpush.bf16.msra.mxu0 0
        %5323 = vmatpush.bf16.msra.mxu0 0
        %5324 = vmatpush.bf16.msra.mxu0 %v5226
        %5325 = vmatmul.bf16.gmra.mxu0 %v5211
        %v5326 = vpop.f32.mrf.mxu0
        %v5327 = vadd.f32 0.0, %v5326
        %v5328 = vpop.f32.mrf.mxu0
        %v5329 = vadd.f32 0.0, %v5328
        %5330 = vdwg.mxu0
        %5331 = vmatpush.bf16.msra.mxu0 0
        %5332 = vmatpush.bf16.msra.mxu0 0
        %5333 = vmatpush.bf16.msra.mxu0 0
        %5334 = vmatpush.bf16.msra.mxu0 0
        %5335 = vmatpush.bf16.msra.mxu0 0
        %5336 = vmatpush.bf16.msra.mxu0 0
        %5337 = vmatpush.bf16.msra.mxu0 0
        %5338 = vmatpush.bf16.msra.mxu0 %v5229
        %5339 = vmatmul.bf16.gmra.mxu0 %v5211
        %v5340 = vpop.f32.mrf.mxu0
        %v5341 = vadd.f32 0.0, %v5340
        %v5342 = vpop.f32.mrf.mxu0
        %v5343 = vadd.f32 0.0, %v5342
        %5344 = vdwg.mxu0
        %5345 = vmatpush.bf16.msra.mxu0 0
        %5346 = vmatpush.bf16.msra.mxu0 0
        %5347 = vmatpush.bf16.msra.mxu0 0
        %5348 = vmatpush.bf16.msra.mxu0 0
        %5349 = vmatpush.bf16.msra.mxu0 0
        %5350 = vmatpush.bf16.msra.mxu0 0
        %5351 = vmatpush.bf16.msra.mxu0 0
        %5352 = vmatpush.bf16.msra.mxu0 %v5232
        %5353 = vmatmul.bf16.gmra.mxu0 %v5211
        %v5354 = vpop.f32.mrf.mxu0
        %v5355 = vadd.f32 0.0, %v5354
        %v5356 = vpop.f32.mrf.mxu0
        %v5357 = vadd.f32 0.0, %v5356
        %5358 = vdwg.mxu0
        %5359 = vmatpush.bf16.msra.mxu0 0
        %5360 = vmatpush.bf16.msra.mxu0 0
        %5361 = vmatpush.bf16.msra.mxu0 0
        %5362 = vmatpush.bf16.msra.mxu0 0
        %5363 = vmatpush.bf16.msra.mxu0 0
        %5364 = vmatpush.bf16.msra.mxu0 0
        %5365 = vmatpush.bf16.msra.mxu0 0
        %5366 = vmatpush.bf16.msra.mxu0 %v5235
        %5367 = vmatmul.bf16.gmra.mxu0 %v5211
        %v5368 = vpop.f32.mrf.mxu0
        %v5369 = vadd.f32 0.0, %v5368
        %v5370 = vpop.f32.mrf.mxu0
        %v5371 = vadd.f32 0.0, %v5370
        %5372 = vdwg.mxu0
        %5373 = vmatpush.bf16.msra.mxu0 0
        %5374 = vmatpush.bf16.msra.mxu0 0
        %5375 = vmatpush.bf16.msra.mxu0 0
        %5376 = vmatpush.bf16.msra.mxu0 0
        %5377 = vmatpush.bf16.msra.mxu0 0
        %5378 = vmatpush.bf16.msra.mxu0 0
        %5379 = vmatpush.bf16.msra.mxu0 0
        %5380 = vmatpush.bf16.msra.mxu0 %v5238
        %5381 = vmatmul.bf16.gmra.mxu0 %v5211
        %v5382 = vpop.f32.mrf.mxu0
        %v5383 = vadd.f32 0.0, %v5382
        %v5384 = vpop.f32.mrf.mxu0
        %v5385 = vadd.f32 0.0, %v5384
        %5386 = vdwg.mxu0
        %5387 = vmatpush.bf16.msra.mxu0 0
        %5388 = vmatpush.bf16.msra.mxu0 0
        %5389 = vmatpush.bf16.msra.mxu0 0
        %5390 = vmatpush.bf16.msra.mxu0 0
        %5391 = vmatpush.bf16.msra.mxu0 0
        %5392 = vmatpush.bf16.msra.mxu0 0
        %5393 = vmatpush.bf16.msra.mxu0 0
        %5394 = vmatpush.bf16.msra.mxu0 %v5241
        %5395 = vmatmul.bf16.gmra.mxu0 %v5211
        %v5396 = vpop.f32.mrf.mxu0
        %v5397 = vadd.f32 0.0, %v5396
        %v5398 = vpop.f32.mrf.mxu0
        %v5399 = vadd.f32 0.0, %v5398
        %5400 = vdwg.mxu0
        %5401 = vmatpush.bf16.msra.mxu0 0
        %5402 = vmatpush.bf16.msra.mxu0 0
        %5403 = vmatpush.bf16.msra.mxu0 0
        %5404 = vmatpush.bf16.msra.mxu0 0
        %5405 = vmatpush.bf16.msra.mxu0 0
        %5406 = vmatpush.bf16.msra.mxu0 0
        %5407 = vmatpush.bf16.msra.mxu0 0
        %5408 = vmatpush.bf16.msra.mxu0 %v5244
        %5409 = vmatmul.bf16.gmra.mxu0 %v5211
        %v5410 = vpop.f32.mrf.mxu0
        %v5411 = vadd.f32 0.0, %v5410
        %v5412 = vpop.f32.mrf.mxu0
        %v5413 = vadd.f32 0.0, %v5412
        %5414 = vdwg.mxu0
        %5415 = vmatpush.bf16.msra.mxu0 0
        %5416 = vmatpush.bf16.msra.mxu0 0
        %5417 = vmatpush.bf16.msra.mxu0 0
        %5418 = vmatpush.bf16.msra.mxu0 0
        %5419 = vmatpush.bf16.msra.mxu0 0
        %5420 = vmatpush.bf16.msra.mxu0 0
        %5421 = vmatpush.bf16.msra.mxu0 0
        %5422 = vmatpush.bf16.msra.mxu0 %v5247
        %5423 = vmatmul.bf16.gmra.mxu0 %v5211
        %v5424 = vpop.f32.mrf.mxu0
        %v5425 = vadd.f32 0.0, %v5424
        %v5426 = vpop.f32.mrf.mxu0
        %v5427 = vadd.f32 0.0, %v5426
        %5428 = vdwg.mxu0
        %5429 = vmatpush.bf16.msra.mxu0 0
        %5430 = vmatpush.bf16.msra.mxu0 0
        %5431 = vmatpush.bf16.msra.mxu0 0
        %5432 = vmatpush.bf16.msra.mxu0 0
        %5433 = vmatpush.bf16.msra.mxu0 0
        %5434 = vmatpush.bf16.msra.mxu0 0
        %5435 = vmatpush.bf16.msra.mxu0 0
        %5436 = vmatpush.bf16.msra.mxu0 %v5250
        %5437 = vmatmul.bf16.gmra.mxu0 %v5211
        %v5438 = vpop.f32.mrf.mxu0
        %v5439 = vadd.f32 0.0, %v5438
        %v5440 = vpop.f32.mrf.mxu0
        %v5441 = vadd.f32 0.0, %v5440
        %5442 = vdwg.mxu0
        %5443 = vmatpush.bf16.msra.mxu0 0
        %5444 = vmatpush.bf16.msra.mxu0 0
        %5445 = vmatpush.bf16.msra.mxu0 0
        %5446 = vmatpush.bf16.msra.mxu0 0
        %5447 = vmatpush.bf16.msra.mxu0 0
        %5448 = vmatpush.bf16.msra.mxu0 0
        %5449 = vmatpush.bf16.msra.mxu0 0
        %5450 = vmatpush.bf16.msra.mxu0 %v5253
        %5451 = vmatmul.bf16.gmra.mxu0 %v5211
        %v5452 = vpop.f32.mrf.mxu0
        %v5453 = vadd.f32 0.0, %v5452
        %v5454 = vpop.f32.mrf.mxu0
        %v5455 = vadd.f32 0.0, %v5454
        %5456 = vdwg.mxu0
        %5457 = vmatpush.bf16.msra.mxu0 0
        %5458 = vmatpush.bf16.msra.mxu0 0
        %5459 = vmatpush.bf16.msra.mxu0 0
        %5460 = vmatpush.bf16.msra.mxu0 0
        %5461 = vmatpush.bf16.msra.mxu0 0
        %5462 = vmatpush.bf16.msra.mxu0 0
        %5463 = vmatpush.bf16.msra.mxu0 0
        %5464 = vmatpush.bf16.msra.mxu0 %v5256
        %5465 = vmatmul.bf16.gmra.mxu0 %v5211
        %v5466 = vpop.f32.mrf.mxu0
        %v5467 = vadd.f32 0.0, %v5466
        %v5468 = vpop.f32.mrf.mxu0
        %v5469 = vadd.f32 0.0, %v5468
        %5470 = vdwg.mxu0
        %5471 = vmatpush.bf16.msra.mxu0 0
        %5472 = vmatpush.bf16.msra.mxu0 0
        %5473 = vmatpush.bf16.msra.mxu0 0
        %5474 = vmatpush.bf16.msra.mxu0 0
        %5475 = vmatpush.bf16.msra.mxu0 0
        %5476 = vmatpush.bf16.msra.mxu0 0
        %5477 = vmatpush.bf16.msra.mxu0 0
        %5478 = vmatpush.bf16.msra.mxu0 %v5259
        %5479 = vmatmul.bf16.gmra.mxu0 %v5211
        %v5480 = vpop.f32.mrf.mxu0
        %v5481 = vadd.f32 0.0, %v5480
        %v5482 = vpop.f32.mrf.mxu0
        %v5483 = vadd.f32 0.0, %v5482
        %5484 = vdwg.mxu0
        %v5485 = vadd.f32 %v5154, %v5271
        %v5486 = vadd.f32 %v5155, %v5285
        %v5487 = vadd.f32 %v5156, %v5299
        %v5488 = vadd.f32 %v5157, %v5313
        %v5489 = vadd.f32 %v5158, %v5327
        %v5490 = vadd.f32 %v5159, %v5341
        %v5491 = vadd.f32 %v5160, %v5355
        %v5492 = vadd.f32 %v5161, %v5369
        %v5493 = vadd.f32 %v5162, %v5383
        %v5494 = vadd.f32 %v5163, %v5397
        %v5495 = vadd.f32 %v5164, %v5411
        %v5496 = vadd.f32 %v5165, %v5425
        %v5497 = vadd.f32 %v5166, %v5439
        %v5498 = vadd.f32 %v5167, %v5453
        %v5499 = vadd.f32 %v5168, %v5467
        %v5500 = vadd.f32 %v5169, %v5481
        %v5501 = vadd.f32 %v5170, %v5273
        %v5502 = vadd.f32 %v5171, %v5287
        %v5503 = vadd.f32 %v5172, %v5301
        %v5504 = vadd.f32 %v5173, %v5315
        %v5505 = vadd.f32 %v5174, %v5329
        %v5506 = vadd.f32 %v5175, %v5343
        %v5507 = vadd.f32 %v5176, %v5357
        %v5508 = vadd.f32 %v5177, %v5371
        %v5509 = vadd.f32 %v5178, %v5385
        %v5510 = vadd.f32 %v5179, %v5399
        %v5511 = vadd.f32 %v5180, %v5413
        %v5512 = vadd.f32 %v5181, %v5427
        %v5513 = vadd.f32 %v5182, %v5441
        %v5514 = vadd.f32 %v5183, %v5455
        %v5515 = vadd.f32 %v5184, %v5469
        %v5516 = vadd.f32 %v5185, %v5483
        %5517 = vrot.lane.b32.xlu0 %v3653, 127
        %v5518 = vpop.permute.xlu0 %5517
        %5519 = vrot.lane.b32.xlu0 %v3654, 127
        %v5520 = vpop.permute.xlu0 %5519
        %5521 = vrot.lane.b32.xlu0 %v3655, 127
        %v5522 = vpop.permute.xlu0 %5521
        %5523 = vrot.lane.b32.xlu0 %v3656, 127
        %v5524 = vpop.permute.xlu0 %5523
        %5525 = vrot.lane.b32.xlu0 %v3657, 127
        %v5526 = vpop.permute.xlu0 %5525
        %5527 = vrot.lane.b32.xlu0 %v3658, 127
        %v5528 = vpop.permute.xlu0 %5527
        %5529 = vrot.lane.b32.xlu0 %v3659, 127
        %v5530 = vpop.permute.xlu0 %5529
        %5531 = vrot.lane.b32.xlu0 %v3660, 127
        %v5532 = vpop.permute.xlu0 %5531
        %5533 = vrot.lane.b32.xlu0 %v3661, 127
        %v5534 = vpop.permute.xlu0 %5533
        %5535 = vrot.lane.b32.xlu0 %v3662, 127
        %v5536 = vpop.permute.xlu0 %5535
        %5537 = vrot.lane.b32.xlu0 %v3663, 127
        %v5538 = vpop.permute.xlu0 %5537
        %5539 = vrot.lane.b32.xlu0 %v3664, 127
        %v5540 = vpop.permute.xlu0 %5539
        %5541 = vrot.lane.b32.xlu0 %v3665, 127
        %v5542 = vpop.permute.xlu0 %5541
        %5543 = vrot.lane.b32.xlu0 %v3666, 127
        %v5544 = vpop.permute.xlu0 %5543
        %5545 = vrot.lane.b32.xlu0 %v3667, 127
        %v5546 = vpop.permute.xlu0 %5545
        %5547 = vrot.lane.b32.xlu0 %v3668, 127
        %v5548 = vpop.permute.xlu0 %5547
        %v5549 = vsel %vm1779, %v5546, %v5548
        %v5550 = vsel %vm1779, %v5544, %v5546
        %v5551 = vsel %vm1779, %v5542, %v5544
        %v5552 = vsel %vm1779, %v5540, %v5542
        %v5553 = vsel %vm1779, %v5538, %v5540
        %v5554 = vsel %vm1779, %v5536, %v5538
        %v5555 = vsel %vm1779, %v5534, %v5536
        %v5556 = vsel %vm1779, %v5532, %v5534
        %v5557 = vsel %vm1779, %v5530, %v5532
        %v5558 = vsel %vm1779, %v5528, %v5530
        %v5559 = vsel %vm1779, %v5526, %v5528
        %v5560 = vsel %vm1779, %v5524, %v5526
        %v5561 = vsel %vm1779, %v5522, %v5524
        %v5562 = vsel %vm1779, %v5520, %v5522
        %v5563 = vsel %vm1779, %v5518, %v5520
        %v5564 = vsel %vm1779, %v5548, %v5518
        %v5565 = vmul.f32 %v5563, %v1822
        %v5566 = vmul.f32 %v5562, %v1823
        %v5567 = vmul.f32 %v5561, %v1824
        %v5568 = vmul.f32 %v5560, %v1825
        %v5569 = vmul.f32 %v5559, %v1826
        %v5570 = vmul.f32 %v5558, %v1827
        %v5571 = vmul.f32 %v5557, %v1828
        %v5572 = vmul.f32 %v5556, %v1829
        %v5573 = vmul.f32 %v5555, %v1830
        %v5574 = vmul.f32 %v5554, %v1831
        %v5575 = vmul.f32 %v5553, %v1832
        %v5576 = vmul.f32 %v5552, %v1833
        %v5577 = vmul.f32 %v5551, %v1834
        %v5578 = vmul.f32 %v5550, %v1835
        %v5579 = vmul.f32 %v5549, %v1836
        %v5580 = vmul.f32 %v5564, %v1837
        %v5581 = vpack.c.bf16 %v5565, %v5565
        %v5582 = vpack.c.bf16 %v5566, %v5566
        %v5583 = vpack.c.bf16 %v5567, %v5567
        %v5584 = vpack.c.bf16 %v5568, %v5568
        %v5585 = vpack.c.bf16 %v5569, %v5569
        %v5586 = vpack.c.bf16 %v5570, %v5570
        %v5587 = vpack.c.bf16 %v5571, %v5571
        %v5588 = vpack.c.bf16 %v5572, %v5572
        %v5589 = vpack.c.bf16 %v5573, %v5573
        %v5590 = vpack.c.bf16 %v5574, %v5574
        %v5591 = vpack.c.bf16 %v5575, %v5575
        %v5592 = vpack.c.bf16 %v5576, %v5576
        %v5593 = vpack.c.bf16 %v5577, %v5577
        %v5594 = vpack.c.bf16 %v5578, %v5578
        %v5595 = vpack.c.bf16 %v5579, %v5579
        %v5596 = vpack.c.bf16 %v5580, %v5580
        %s5597 = scalar_lea.vmem %s10, 40
        %v5598 = vld [vmem:[%s5597] sm:$0xf]
        %v5599 = vld [vmem:[%s5597 + $0x4] sm:$0xf]
        %v5602 = vunpack.c.l.b16 %v5598
        %v5603 = vunpack.c.l.b16 %v5599
        %v5604 = vpack.c.b16 %v5603, %v5602
        %v5606 = vsel %vm3839, %v5604, 0
        %v5609 = vsel %vm3843, %v5581, 0
        %v5612 = vsel %vm3843, %v5582, 0
        %v5615 = vsel %vm3843, %v5583, 0
        %v5618 = vsel %vm3843, %v5584, 0
        %v5621 = vsel %vm3843, %v5585, 0
        %v5624 = vsel %vm3843, %v5586, 0
        %v5627 = vsel %vm3843, %v5587, 0
        %v5630 = vsel %vm3843, %v5588, 0
        %v5633 = vsel %vm3843, %v5589, 0
        %v5636 = vsel %vm3843, %v5590, 0
        %v5639 = vsel %vm3843, %v5591, 0
        %v5642 = vsel %vm3843, %v5592, 0
        %v5645 = vsel %vm3843, %v5593, 0
        %v5648 = vsel %vm3843, %v5594, 0
        %v5651 = vsel %vm3843, %v5595, 0
        %v5654 = vsel %vm3843, %v5596, 0
        %5656 = vmatpush.bf16.msra.mxu0 0
        %5657 = vmatpush.bf16.msra.mxu0 0
        %5658 = vmatpush.bf16.msra.mxu0 0
        %5659 = vmatpush.bf16.msra.mxu0 0
        %5660 = vmatpush.bf16.msra.mxu0 0
        %5661 = vmatpush.bf16.msra.mxu0 0
        %5662 = vmatpush.bf16.msra.mxu0 0
        %5663 = vmatpush.bf16.msra.mxu0 %v5609
        %5664 = vmatmul.bf16.gmra.mxu0 %v5606
        %v5665 = vpop.f32.mrf.mxu0
        %v5666 = vadd.f32 0.0, %v5665
        %v5667 = vpop.f32.mrf.mxu0
        %v5668 = vadd.f32 0.0, %v5667
        %5669 = vdwg.mxu0
        %5670 = vmatpush.bf16.msra.mxu0 0
        %5671 = vmatpush.bf16.msra.mxu0 0
        %5672 = vmatpush.bf16.msra.mxu0 0
        %5673 = vmatpush.bf16.msra.mxu0 0
        %5674 = vmatpush.bf16.msra.mxu0 0
        %5675 = vmatpush.bf16.msra.mxu0 0
        %5676 = vmatpush.bf16.msra.mxu0 0
        %5677 = vmatpush.bf16.msra.mxu0 %v5612
        %5678 = vmatmul.bf16.gmra.mxu0 %v5606
        %v5679 = vpop.f32.mrf.mxu0
        %v5680 = vadd.f32 0.0, %v5679
        %v5681 = vpop.f32.mrf.mxu0
        %v5682 = vadd.f32 0.0, %v5681
        %5683 = vdwg.mxu0
        %5684 = vmatpush.bf16.msra.mxu0 0
        %5685 = vmatpush.bf16.msra.mxu0 0
        %5686 = vmatpush.bf16.msra.mxu0 0
        %5687 = vmatpush.bf16.msra.mxu0 0
        %5688 = vmatpush.bf16.msra.mxu0 0
        %5689 = vmatpush.bf16.msra.mxu0 0
        %5690 = vmatpush.bf16.msra.mxu0 0
        %5691 = vmatpush.bf16.msra.mxu0 %v5615
        %5692 = vmatmul.bf16.gmra.mxu0 %v5606
        %v5693 = vpop.f32.mrf.mxu0
        %v5694 = vadd.f32 0.0, %v5693
        %v5695 = vpop.f32.mrf.mxu0
        %v5696 = vadd.f32 0.0, %v5695
        %5697 = vdwg.mxu0
        %5698 = vmatpush.bf16.msra.mxu0 0
        %5699 = vmatpush.bf16.msra.mxu0 0
        %5700 = vmatpush.bf16.msra.mxu0 0
        %5701 = vmatpush.bf16.msra.mxu0 0
        %5702 = vmatpush.bf16.msra.mxu0 0
        %5703 = vmatpush.bf16.msra.mxu0 0
        %5704 = vmatpush.bf16.msra.mxu0 0
        %5705 = vmatpush.bf16.msra.mxu0 %v5618
        %5706 = vmatmul.bf16.gmra.mxu0 %v5606
        %v5707 = vpop.f32.mrf.mxu0
        %v5708 = vadd.f32 0.0, %v5707
        %v5709 = vpop.f32.mrf.mxu0
        %v5710 = vadd.f32 0.0, %v5709
        %5711 = vdwg.mxu0
        %5712 = vmatpush.bf16.msra.mxu0 0
        %5713 = vmatpush.bf16.msra.mxu0 0
        %5714 = vmatpush.bf16.msra.mxu0 0
        %5715 = vmatpush.bf16.msra.mxu0 0
        %5716 = vmatpush.bf16.msra.mxu0 0
        %5717 = vmatpush.bf16.msra.mxu0 0
        %5718 = vmatpush.bf16.msra.mxu0 0
        %5719 = vmatpush.bf16.msra.mxu0 %v5621
        %5720 = vmatmul.bf16.gmra.mxu0 %v5606
        %v5721 = vpop.f32.mrf.mxu0
        %v5722 = vadd.f32 0.0, %v5721
        %v5723 = vpop.f32.mrf.mxu0
        %v5724 = vadd.f32 0.0, %v5723
        %5725 = vdwg.mxu0
        %5726 = vmatpush.bf16.msra.mxu0 0
        %5727 = vmatpush.bf16.msra.mxu0 0
        %5728 = vmatpush.bf16.msra.mxu0 0
        %5729 = vmatpush.bf16.msra.mxu0 0
        %5730 = vmatpush.bf16.msra.mxu0 0
        %5731 = vmatpush.bf16.msra.mxu0 0
        %5732 = vmatpush.bf16.msra.mxu0 0
        %5733 = vmatpush.bf16.msra.mxu0 %v5624
        %5734 = vmatmul.bf16.gmra.mxu0 %v5606
        %v5735 = vpop.f32.mrf.mxu0
        %v5736 = vadd.f32 0.0, %v5735
        %v5737 = vpop.f32.mrf.mxu0
        %v5738 = vadd.f32 0.0, %v5737
        %5739 = vdwg.mxu0
        %5740 = vmatpush.bf16.msra.mxu0 0
        %5741 = vmatpush.bf16.msra.mxu0 0
        %5742 = vmatpush.bf16.msra.mxu0 0
        %5743 = vmatpush.bf16.msra.mxu0 0
        %5744 = vmatpush.bf16.msra.mxu0 0
        %5745 = vmatpush.bf16.msra.mxu0 0
        %5746 = vmatpush.bf16.msra.mxu0 0
        %5747 = vmatpush.bf16.msra.mxu0 %v5627
        %5748 = vmatmul.bf16.gmra.mxu0 %v5606
        %v5749 = vpop.f32.mrf.mxu0
        %v5750 = vadd.f32 0.0, %v5749
        %v5751 = vpop.f32.mrf.mxu0
        %v5752 = vadd.f32 0.0, %v5751
        %5753 = vdwg.mxu0
        %5754 = vmatpush.bf16.msra.mxu0 0
        %5755 = vmatpush.bf16.msra.mxu0 0
        %5756 = vmatpush.bf16.msra.mxu0 0
        %5757 = vmatpush.bf16.msra.mxu0 0
        %5758 = vmatpush.bf16.msra.mxu0 0
        %5759 = vmatpush.bf16.msra.mxu0 0
        %5760 = vmatpush.bf16.msra.mxu0 0
        %5761 = vmatpush.bf16.msra.mxu0 %v5630
        %5762 = vmatmul.bf16.gmra.mxu0 %v5606
        %v5763 = vpop.f32.mrf.mxu0
        %v5764 = vadd.f32 0.0, %v5763
        %v5765 = vpop.f32.mrf.mxu0
        %v5766 = vadd.f32 0.0, %v5765
        %5767 = vdwg.mxu0
        %5768 = vmatpush.bf16.msra.mxu0 0
        %5769 = vmatpush.bf16.msra.mxu0 0
        %5770 = vmatpush.bf16.msra.mxu0 0
        %5771 = vmatpush.bf16.msra.mxu0 0
        %5772 = vmatpush.bf16.msra.mxu0 0
        %5773 = vmatpush.bf16.msra.mxu0 0
        %5774 = vmatpush.bf16.msra.mxu0 0
        %5775 = vmatpush.bf16.msra.mxu0 %v5633
        %5776 = vmatmul.bf16.gmra.mxu0 %v5606
        %v5777 = vpop.f32.mrf.mxu0
        %v5778 = vadd.f32 0.0, %v5777
        %v5779 = vpop.f32.mrf.mxu0
        %v5780 = vadd.f32 0.0, %v5779
        %5781 = vdwg.mxu0
        %5782 = vmatpush.bf16.msra.mxu0 0
        %5783 = vmatpush.bf16.msra.mxu0 0
        %5784 = vmatpush.bf16.msra.mxu0 0
        %5785 = vmatpush.bf16.msra.mxu0 0
        %5786 = vmatpush.bf16.msra.mxu0 0
        %5787 = vmatpush.bf16.msra.mxu0 0
        %5788 = vmatpush.bf16.msra.mxu0 0
        %5789 = vmatpush.bf16.msra.mxu0 %v5636
        %5790 = vmatmul.bf16.gmra.mxu0 %v5606
        %v5791 = vpop.f32.mrf.mxu0
        %v5792 = vadd.f32 0.0, %v5791
        %v5793 = vpop.f32.mrf.mxu0
        %v5794 = vadd.f32 0.0, %v5793
        %5795 = vdwg.mxu0
        %5796 = vmatpush.bf16.msra.mxu0 0
        %5797 = vmatpush.bf16.msra.mxu0 0
        %5798 = vmatpush.bf16.msra.mxu0 0
        %5799 = vmatpush.bf16.msra.mxu0 0
        %5800 = vmatpush.bf16.msra.mxu0 0
        %5801 = vmatpush.bf16.msra.mxu0 0
        %5802 = vmatpush.bf16.msra.mxu0 0
        %5803 = vmatpush.bf16.msra.mxu0 %v5639
        %5804 = vmatmul.bf16.gmra.mxu0 %v5606
        %v5805 = vpop.f32.mrf.mxu0
        %v5806 = vadd.f32 0.0, %v5805
        %v5807 = vpop.f32.mrf.mxu0
        %v5808 = vadd.f32 0.0, %v5807
        %5809 = vdwg.mxu0
        %5810 = vmatpush.bf16.msra.mxu0 0
        %5811 = vmatpush.bf16.msra.mxu0 0
        %5812 = vmatpush.bf16.msra.mxu0 0
        %5813 = vmatpush.bf16.msra.mxu0 0
        %5814 = vmatpush.bf16.msra.mxu0 0
        %5815 = vmatpush.bf16.msra.mxu0 0
        %5816 = vmatpush.bf16.msra.mxu0 0
        %5817 = vmatpush.bf16.msra.mxu0 %v5642
        %5818 = vmatmul.bf16.gmra.mxu0 %v5606
        %v5819 = vpop.f32.mrf.mxu0
        %v5820 = vadd.f32 0.0, %v5819
        %v5821 = vpop.f32.mrf.mxu0
        %v5822 = vadd.f32 0.0, %v5821
        %5823 = vdwg.mxu0
        %5824 = vmatpush.bf16.msra.mxu0 0
        %5825 = vmatpush.bf16.msra.mxu0 0
        %5826 = vmatpush.bf16.msra.mxu0 0
        %5827 = vmatpush.bf16.msra.mxu0 0
        %5828 = vmatpush.bf16.msra.mxu0 0
        %5829 = vmatpush.bf16.msra.mxu0 0
        %5830 = vmatpush.bf16.msra.mxu0 0
        %5831 = vmatpush.bf16.msra.mxu0 %v5645
        %5832 = vmatmul.bf16.gmra.mxu0 %v5606
        %v5833 = vpop.f32.mrf.mxu0
        %v5834 = vadd.f32 0.0, %v5833
        %v5835 = vpop.f32.mrf.mxu0
        %v5836 = vadd.f32 0.0, %v5835
        %5837 = vdwg.mxu0
        %5838 = vmatpush.bf16.msra.mxu0 0
        %5839 = vmatpush.bf16.msra.mxu0 0
        %5840 = vmatpush.bf16.msra.mxu0 0
        %5841 = vmatpush.bf16.msra.mxu0 0
        %5842 = vmatpush.bf16.msra.mxu0 0
        %5843 = vmatpush.bf16.msra.mxu0 0
        %5844 = vmatpush.bf16.msra.mxu0 0
        %5845 = vmatpush.bf16.msra.mxu0 %v5648
        %5846 = vmatmul.bf16.gmra.mxu0 %v5606
        %v5847 = vpop.f32.mrf.mxu0
        %v5848 = vadd.f32 0.0, %v5847
        %v5849 = vpop.f32.mrf.mxu0
        %v5850 = vadd.f32 0.0, %v5849
        %5851 = vdwg.mxu0
        %5852 = vmatpush.bf16.msra.mxu0 0
        %5853 = vmatpush.bf16.msra.mxu0 0
        %5854 = vmatpush.bf16.msra.mxu0 0
        %5855 = vmatpush.bf16.msra.mxu0 0
        %5856 = vmatpush.bf16.msra.mxu0 0
        %5857 = vmatpush.bf16.msra.mxu0 0
        %5858 = vmatpush.bf16.msra.mxu0 0
        %5859 = vmatpush.bf16.msra.mxu0 %v5651
        %5860 = vmatmul.bf16.gmra.mxu0 %v5606
        %v5861 = vpop.f32.mrf.mxu0
        %v5862 = vadd.f32 0.0, %v5861
        %v5863 = vpop.f32.mrf.mxu0
        %v5864 = vadd.f32 0.0, %v5863
        %5865 = vdwg.mxu0
        %5866 = vmatpush.bf16.msra.mxu0 0
        %5867 = vmatpush.bf16.msra.mxu0 0
        %5868 = vmatpush.bf16.msra.mxu0 0
        %5869 = vmatpush.bf16.msra.mxu0 0
        %5870 = vmatpush.bf16.msra.mxu0 0
        %5871 = vmatpush.bf16.msra.mxu0 0
        %5872 = vmatpush.bf16.msra.mxu0 0
        %5873 = vmatpush.bf16.msra.mxu0 %v5654
        %5874 = vmatmul.bf16.gmra.mxu0 %v5606
        %v5875 = vpop.f32.mrf.mxu0
        %v5876 = vadd.f32 0.0, %v5875
        %v5877 = vpop.f32.mrf.mxu0
        %v5878 = vadd.f32 0.0, %v5877
        %5879 = vdwg.mxu0
        %v5880 = vadd.f32 %v5485, %v5666
        %v5881 = vadd.f32 %v5486, %v5680
        %v5882 = vadd.f32 %v5487, %v5694
        %v5883 = vadd.f32 %v5488, %v5708
        %v5884 = vadd.f32 %v5489, %v5722
        %v5885 = vadd.f32 %v5490, %v5736
        %v5886 = vadd.f32 %v5491, %v5750
        %v5887 = vadd.f32 %v5492, %v5764
        %v5888 = vadd.f32 %v5493, %v5778
        %v5889 = vadd.f32 %v5494, %v5792
        %v5890 = vadd.f32 %v5495, %v5806
        %v5891 = vadd.f32 %v5496, %v5820
        %v5892 = vadd.f32 %v5497, %v5834
        %v5893 = vadd.f32 %v5498, %v5848
        %v5894 = vadd.f32 %v5499, %v5862
        %v5895 = vadd.f32 %v5500, %v5876
        %v5896 = vadd.f32 %v5501, %v5668
        %v5897 = vadd.f32 %v5502, %v5682
        %v5898 = vadd.f32 %v5503, %v5696
        %v5899 = vadd.f32 %v5504, %v5710
        %v5900 = vadd.f32 %v5505, %v5724
        %v5901 = vadd.f32 %v5506, %v5738
        %v5902 = vadd.f32 %v5507, %v5752
        %v5903 = vadd.f32 %v5508, %v5766
        %v5904 = vadd.f32 %v5509, %v5780
        %v5905 = vadd.f32 %v5510, %v5794
        %v5906 = vadd.f32 %v5511, %v5808
        %v5907 = vadd.f32 %v5512, %v5822
        %v5908 = vadd.f32 %v5513, %v5836
        %v5909 = vadd.f32 %v5514, %v5850
        %v5910 = vadd.f32 %v5515, %v5864
        %v5911 = vadd.f32 %v5516, %v5878
        %5912 = vrot.lane.b32.xlu0 %v3653, 113
        %v5913 = vpop.permute.xlu0 %5912
        %5914 = vrot.lane.b32.xlu0 %v3654, 113
        %v5915 = vpop.permute.xlu0 %5914
        %5916 = vrot.lane.b32.xlu0 %v3655, 113
        %v5917 = vpop.permute.xlu0 %5916
        %5918 = vrot.lane.b32.xlu0 %v3656, 113
        %v5919 = vpop.permute.xlu0 %5918
        %5920 = vrot.lane.b32.xlu0 %v3657, 113
        %v5921 = vpop.permute.xlu0 %5920
        %5922 = vrot.lane.b32.xlu0 %v3658, 113
        %v5923 = vpop.permute.xlu0 %5922
        %5924 = vrot.lane.b32.xlu0 %v3659, 113
        %v5925 = vpop.permute.xlu0 %5924
        %5926 = vrot.lane.b32.xlu0 %v3660, 113
        %v5927 = vpop.permute.xlu0 %5926
        %5928 = vrot.lane.b32.xlu0 %v3661, 113
        %v5929 = vpop.permute.xlu0 %5928
        %5930 = vrot.lane.b32.xlu0 %v3662, 113
        %v5931 = vpop.permute.xlu0 %5930
        %5932 = vrot.lane.b32.xlu0 %v3663, 113
        %v5933 = vpop.permute.xlu0 %5932
        %5934 = vrot.lane.b32.xlu0 %v3664, 113
        %v5935 = vpop.permute.xlu0 %5934
        %5936 = vrot.lane.b32.xlu0 %v3665, 113
        %v5937 = vpop.permute.xlu0 %5936
        %5938 = vrot.lane.b32.xlu0 %v3666, 113
        %v5939 = vpop.permute.xlu0 %5938
        %5940 = vrot.lane.b32.xlu0 %v3667, 113
        %v5941 = vpop.permute.xlu0 %5940
        %5942 = vrot.lane.b32.xlu0 %v3668, 113
        %v5943 = vpop.permute.xlu0 %5942
        %v5944 = vsel %vm1966, %v5941, %v5943
        %v5945 = vsel %vm1966, %v5939, %v5941
        %v5946 = vsel %vm1966, %v5937, %v5939
        %v5947 = vsel %vm1966, %v5935, %v5937
        %v5948 = vsel %vm1966, %v5933, %v5935
        %v5949 = vsel %vm1966, %v5931, %v5933
        %v5950 = vsel %vm1966, %v5929, %v5931
        %v5951 = vsel %vm1966, %v5927, %v5929
        %v5952 = vsel %vm1966, %v5925, %v5927
        %v5953 = vsel %vm1966, %v5923, %v5925
        %v5954 = vsel %vm1966, %v5921, %v5923
        %v5955 = vsel %vm1966, %v5919, %v5921
        %v5956 = vsel %vm1966, %v5917, %v5919
        %v5957 = vsel %vm1966, %v5915, %v5917
        %v5958 = vsel %vm1966, %v5913, %v5915
        %v5959 = vsel %vm1966, %v5943, %v5913
        %v5960 = vmul.f32 %v5958, %v2009
        %v5961 = vmul.f32 %v5957, %v2010
        %v5962 = vmul.f32 %v5956, %v2011
        %v5963 = vmul.f32 %v5955, %v2012
        %v5964 = vmul.f32 %v5954, %v2013
        %v5965 = vmul.f32 %v5953, %v2014
        %v5966 = vmul.f32 %v5952, %v2015
        %v5967 = vmul.f32 %v5951, %v2016
        %v5968 = vmul.f32 %v5950, %v2017
        %v5969 = vmul.f32 %v5949, %v2018
        %v5970 = vmul.f32 %v5948, %v2019
        %v5971 = vmul.f32 %v5947, %v2020
        %v5972 = vmul.f32 %v5946, %v2021
        %v5973 = vmul.f32 %v5945, %v2022
        %v5974 = vmul.f32 %v5944, %v2023
        %v5975 = vmul.f32 %v5959, %v2024
        %v5976 = vpack.c.bf16 %v5960, %v5960
        %v5977 = vpack.c.bf16 %v5961, %v5961
        %v5978 = vpack.c.bf16 %v5962, %v5962
        %v5979 = vpack.c.bf16 %v5963, %v5963
        %v5980 = vpack.c.bf16 %v5964, %v5964
        %v5981 = vpack.c.bf16 %v5965, %v5965
        %v5982 = vpack.c.bf16 %v5966, %v5966
        %v5983 = vpack.c.bf16 %v5967, %v5967
        %v5984 = vpack.c.bf16 %v5968, %v5968
        %v5985 = vpack.c.bf16 %v5969, %v5969
        %v5986 = vpack.c.bf16 %v5970, %v5970
        %v5987 = vpack.c.bf16 %v5971, %v5971
        %v5988 = vpack.c.bf16 %v5972, %v5972
        %v5989 = vpack.c.bf16 %v5973, %v5973
        %v5990 = vpack.c.bf16 %v5974, %v5974
        %v5991 = vpack.c.bf16 %v5975, %v5975
        %s5992 = scalar_lea.vmem %s10, 48
        %v5993 = vld [vmem:[%s5992] sm:$0xf]
        %v5994 = vld [vmem:[%s5992 + $0x4] sm:$0xf]
        %v5997 = vunpack.c.l.b16 %v5993
        %v5998 = vunpack.c.l.b16 %v5994
        %v5999 = vpack.c.b16 %v5998, %v5997
        %v6001 = vsel %vm3839, %v5999, 0
        %v6004 = vsel %vm3843, %v5976, 0
        %v6007 = vsel %vm3843, %v5977, 0
        %v6010 = vsel %vm3843, %v5978, 0
        %v6013 = vsel %vm3843, %v5979, 0
        %v6016 = vsel %vm3843, %v5980, 0
        %v6019 = vsel %vm3843, %v5981, 0
        %v6022 = vsel %vm3843, %v5982, 0
        %v6025 = vsel %vm3843, %v5983, 0
        %v6028 = vsel %vm3843, %v5984, 0
        %v6031 = vsel %vm3843, %v5985, 0
        %v6034 = vsel %vm3843, %v5986, 0
        %v6037 = vsel %vm3843, %v5987, 0
        %v6040 = vsel %vm3843, %v5988, 0
        %v6043 = vsel %vm3843, %v5989, 0
        %v6046 = vsel %vm3843, %v5990, 0
        %v6049 = vsel %vm3843, %v5991, 0
        %6051 = vmatpush.bf16.msra.mxu0 0
        %6052 = vmatpush.bf16.msra.mxu0 0
        %6053 = vmatpush.bf16.msra.mxu0 0
        %6054 = vmatpush.bf16.msra.mxu0 0
        %6055 = vmatpush.bf16.msra.mxu0 0
        %6056 = vmatpush.bf16.msra.mxu0 0
        %6057 = vmatpush.bf16.msra.mxu0 0
        %6058 = vmatpush.bf16.msra.mxu0 %v6004
        %6059 = vmatmul.bf16.gmra.mxu0 %v6001
        %v6060 = vpop.f32.mrf.mxu0
        %v6061 = vadd.f32 0.0, %v6060
        %v6062 = vpop.f32.mrf.mxu0
        %v6063 = vadd.f32 0.0, %v6062
        %6064 = vdwg.mxu0
        %6065 = vmatpush.bf16.msra.mxu0 0
        %6066 = vmatpush.bf16.msra.mxu0 0
        %6067 = vmatpush.bf16.msra.mxu0 0
        %6068 = vmatpush.bf16.msra.mxu0 0
        %6069 = vmatpush.bf16.msra.mxu0 0
        %6070 = vmatpush.bf16.msra.mxu0 0
        %6071 = vmatpush.bf16.msra.mxu0 0
        %6072 = vmatpush.bf16.msra.mxu0 %v6007
        %6073 = vmatmul.bf16.gmra.mxu0 %v6001
        %v6074 = vpop.f32.mrf.mxu0
        %v6075 = vadd.f32 0.0, %v6074
        %v6076 = vpop.f32.mrf.mxu0
        %v6077 = vadd.f32 0.0, %v6076
        %6078 = vdwg.mxu0
        %6079 = vmatpush.bf16.msra.mxu0 0
        %6080 = vmatpush.bf16.msra.mxu0 0
        %6081 = vmatpush.bf16.msra.mxu0 0
        %6082 = vmatpush.bf16.msra.mxu0 0
        %6083 = vmatpush.bf16.msra.mxu0 0
        %6084 = vmatpush.bf16.msra.mxu0 0
        %6085 = vmatpush.bf16.msra.mxu0 0
        %6086 = vmatpush.bf16.msra.mxu0 %v6010
        %6087 = vmatmul.bf16.gmra.mxu0 %v6001
        %v6088 = vpop.f32.mrf.mxu0
        %v6089 = vadd.f32 0.0, %v6088
        %v6090 = vpop.f32.mrf.mxu0
        %v6091 = vadd.f32 0.0, %v6090
        %6092 = vdwg.mxu0
        %6093 = vmatpush.bf16.msra.mxu0 0
        %6094 = vmatpush.bf16.msra.mxu0 0
        %6095 = vmatpush.bf16.msra.mxu0 0
        %6096 = vmatpush.bf16.msra.mxu0 0
        %6097 = vmatpush.bf16.msra.mxu0 0
        %6098 = vmatpush.bf16.msra.mxu0 0
        %6099 = vmatpush.bf16.msra.mxu0 0
        %6100 = vmatpush.bf16.msra.mxu0 %v6013
        %6101 = vmatmul.bf16.gmra.mxu0 %v6001
        %v6102 = vpop.f32.mrf.mxu0
        %v6103 = vadd.f32 0.0, %v6102
        %v6104 = vpop.f32.mrf.mxu0
        %v6105 = vadd.f32 0.0, %v6104
        %6106 = vdwg.mxu0
        %6107 = vmatpush.bf16.msra.mxu0 0
        %6108 = vmatpush.bf16.msra.mxu0 0
        %6109 = vmatpush.bf16.msra.mxu0 0
        %6110 = vmatpush.bf16.msra.mxu0 0
        %6111 = vmatpush.bf16.msra.mxu0 0
        %6112 = vmatpush.bf16.msra.mxu0 0
        %6113 = vmatpush.bf16.msra.mxu0 0
        %6114 = vmatpush.bf16.msra.mxu0 %v6016
        %6115 = vmatmul.bf16.gmra.mxu0 %v6001
        %v6116 = vpop.f32.mrf.mxu0
        %v6117 = vadd.f32 0.0, %v6116
        %v6118 = vpop.f32.mrf.mxu0
        %v6119 = vadd.f32 0.0, %v6118
        %6120 = vdwg.mxu0
        %6121 = vmatpush.bf16.msra.mxu0 0
        %6122 = vmatpush.bf16.msra.mxu0 0
        %6123 = vmatpush.bf16.msra.mxu0 0
        %6124 = vmatpush.bf16.msra.mxu0 0
        %6125 = vmatpush.bf16.msra.mxu0 0
        %6126 = vmatpush.bf16.msra.mxu0 0
        %6127 = vmatpush.bf16.msra.mxu0 0
        %6128 = vmatpush.bf16.msra.mxu0 %v6019
        %6129 = vmatmul.bf16.gmra.mxu0 %v6001
        %v6130 = vpop.f32.mrf.mxu0
        %v6131 = vadd.f32 0.0, %v6130
        %v6132 = vpop.f32.mrf.mxu0
        %v6133 = vadd.f32 0.0, %v6132
        %6134 = vdwg.mxu0
        %6135 = vmatpush.bf16.msra.mxu0 0
        %6136 = vmatpush.bf16.msra.mxu0 0
        %6137 = vmatpush.bf16.msra.mxu0 0
        %6138 = vmatpush.bf16.msra.mxu0 0
        %6139 = vmatpush.bf16.msra.mxu0 0
        %6140 = vmatpush.bf16.msra.mxu0 0
        %6141 = vmatpush.bf16.msra.mxu0 0
        %6142 = vmatpush.bf16.msra.mxu0 %v6022
        %6143 = vmatmul.bf16.gmra.mxu0 %v6001
        %v6144 = vpop.f32.mrf.mxu0
        %v6145 = vadd.f32 0.0, %v6144
        %v6146 = vpop.f32.mrf.mxu0
        %v6147 = vadd.f32 0.0, %v6146
        %6148 = vdwg.mxu0
        %6149 = vmatpush.bf16.msra.mxu0 0
        %6150 = vmatpush.bf16.msra.mxu0 0
        %6151 = vmatpush.bf16.msra.mxu0 0
        %6152 = vmatpush.bf16.msra.mxu0 0
        %6153 = vmatpush.bf16.msra.mxu0 0
        %6154 = vmatpush.bf16.msra.mxu0 0
        %6155 = vmatpush.bf16.msra.mxu0 0
        %6156 = vmatpush.bf16.msra.mxu0 %v6025
        %6157 = vmatmul.bf16.gmra.mxu0 %v6001
        %v6158 = vpop.f32.mrf.mxu0
        %v6159 = vadd.f32 0.0, %v6158
        %v6160 = vpop.f32.mrf.mxu0
        %v6161 = vadd.f32 0.0, %v6160
        %6162 = vdwg.mxu0
        %6163 = vmatpush.bf16.msra.mxu0 0
        %6164 = vmatpush.bf16.msra.mxu0 0
        %6165 = vmatpush.bf16.msra.mxu0 0
        %6166 = vmatpush.bf16.msra.mxu0 0
        %6167 = vmatpush.bf16.msra.mxu0 0
        %6168 = vmatpush.bf16.msra.mxu0 0
        %6169 = vmatpush.bf16.msra.mxu0 0
        %6170 = vmatpush.bf16.msra.mxu0 %v6028
        %6171 = vmatmul.bf16.gmra.mxu0 %v6001
        %v6172 = vpop.f32.mrf.mxu0
        %v6173 = vadd.f32 0.0, %v6172
        %v6174 = vpop.f32.mrf.mxu0
        %v6175 = vadd.f32 0.0, %v6174
        %6176 = vdwg.mxu0
        %6177 = vmatpush.bf16.msra.mxu0 0
        %6178 = vmatpush.bf16.msra.mxu0 0
        %6179 = vmatpush.bf16.msra.mxu0 0
        %6180 = vmatpush.bf16.msra.mxu0 0
        %6181 = vmatpush.bf16.msra.mxu0 0
        %6182 = vmatpush.bf16.msra.mxu0 0
        %6183 = vmatpush.bf16.msra.mxu0 0
        %6184 = vmatpush.bf16.msra.mxu0 %v6031
        %6185 = vmatmul.bf16.gmra.mxu0 %v6001
        %v6186 = vpop.f32.mrf.mxu0
        %v6187 = vadd.f32 0.0, %v6186
        %v6188 = vpop.f32.mrf.mxu0
        %v6189 = vadd.f32 0.0, %v6188
        %6190 = vdwg.mxu0
        %6191 = vmatpush.bf16.msra.mxu0 0
        %6192 = vmatpush.bf16.msra.mxu0 0
        %6193 = vmatpush.bf16.msra.mxu0 0
        %6194 = vmatpush.bf16.msra.mxu0 0
        %6195 = vmatpush.bf16.msra.mxu0 0
        %6196 = vmatpush.bf16.msra.mxu0 0
        %6197 = vmatpush.bf16.msra.mxu0 0
        %6198 = vmatpush.bf16.msra.mxu0 %v6034
        %6199 = vmatmul.bf16.gmra.mxu0 %v6001
        %v6200 = vpop.f32.mrf.mxu0
        %v6201 = vadd.f32 0.0, %v6200
        %v6202 = vpop.f32.mrf.mxu0
        %v6203 = vadd.f32 0.0, %v6202
        %6204 = vdwg.mxu0
        %6205 = vmatpush.bf16.msra.mxu0 0
        %6206 = vmatpush.bf16.msra.mxu0 0
        %6207 = vmatpush.bf16.msra.mxu0 0
        %6208 = vmatpush.bf16.msra.mxu0 0
        %6209 = vmatpush.bf16.msra.mxu0 0
        %6210 = vmatpush.bf16.msra.mxu0 0
        %6211 = vmatpush.bf16.msra.mxu0 0
        %6212 = vmatpush.bf16.msra.mxu0 %v6037
        %6213 = vmatmul.bf16.gmra.mxu0 %v6001
        %v6214 = vpop.f32.mrf.mxu0
        %v6215 = vadd.f32 0.0, %v6214
        %v6216 = vpop.f32.mrf.mxu0
        %v6217 = vadd.f32 0.0, %v6216
        %6218 = vdwg.mxu0
        %6219 = vmatpush.bf16.msra.mxu0 0
        %6220 = vmatpush.bf16.msra.mxu0 0
        %6221 = vmatpush.bf16.msra.mxu0 0
        %6222 = vmatpush.bf16.msra.mxu0 0
        %6223 = vmatpush.bf16.msra.mxu0 0
        %6224 = vmatpush.bf16.msra.mxu0 0
        %6225 = vmatpush.bf16.msra.mxu0 0
        %6226 = vmatpush.bf16.msra.mxu0 %v6040
        %6227 = vmatmul.bf16.gmra.mxu0 %v6001
        %v6228 = vpop.f32.mrf.mxu0
        %v6229 = vadd.f32 0.0, %v6228
        %v6230 = vpop.f32.mrf.mxu0
        %v6231 = vadd.f32 0.0, %v6230
        %6232 = vdwg.mxu0
        %6233 = vmatpush.bf16.msra.mxu0 0
        %6234 = vmatpush.bf16.msra.mxu0 0
        %6235 = vmatpush.bf16.msra.mxu0 0
        %6236 = vmatpush.bf16.msra.mxu0 0
        %6237 = vmatpush.bf16.msra.mxu0 0
        %6238 = vmatpush.bf16.msra.mxu0 0
        %6239 = vmatpush.bf16.msra.mxu0 0
        %6240 = vmatpush.bf16.msra.mxu0 %v6043
        %6241 = vmatmul.bf16.gmra.mxu0 %v6001
        %v6242 = vpop.f32.mrf.mxu0
        %v6243 = vadd.f32 0.0, %v6242
        %v6244 = vpop.f32.mrf.mxu0
        %v6245 = vadd.f32 0.0, %v6244
        %6246 = vdwg.mxu0
        %6247 = vmatpush.bf16.msra.mxu0 0
        %6248 = vmatpush.bf16.msra.mxu0 0
        %6249 = vmatpush.bf16.msra.mxu0 0
        %6250 = vmatpush.bf16.msra.mxu0 0
        %6251 = vmatpush.bf16.msra.mxu0 0
        %6252 = vmatpush.bf16.msra.mxu0 0
        %6253 = vmatpush.bf16.msra.mxu0 0
        %6254 = vmatpush.bf16.msra.mxu0 %v6046
        %6255 = vmatmul.bf16.gmra.mxu0 %v6001
        %v6256 = vpop.f32.mrf.mxu0
        %v6257 = vadd.f32 0.0, %v6256
        %v6258 = vpop.f32.mrf.mxu0
        %v6259 = vadd.f32 0.0, %v6258
        %6260 = vdwg.mxu0
        %6261 = vmatpush.bf16.msra.mxu0 0
        %6262 = vmatpush.bf16.msra.mxu0 0
        %6263 = vmatpush.bf16.msra.mxu0 0
        %6264 = vmatpush.bf16.msra.mxu0 0
        %6265 = vmatpush.bf16.msra.mxu0 0
        %6266 = vmatpush.bf16.msra.mxu0 0
        %6267 = vmatpush.bf16.msra.mxu0 0
        %6268 = vmatpush.bf16.msra.mxu0 %v6049
        %6269 = vmatmul.bf16.gmra.mxu0 %v6001
        %v6270 = vpop.f32.mrf.mxu0
        %v6271 = vadd.f32 0.0, %v6270
        %v6272 = vpop.f32.mrf.mxu0
        %v6273 = vadd.f32 0.0, %v6272
        %6274 = vdwg.mxu0
        %v6275 = vadd.f32 %v5880, %v6061
        %v6276 = vadd.f32 %v5881, %v6075
        %v6277 = vadd.f32 %v5882, %v6089
        %v6278 = vadd.f32 %v5883, %v6103
        %v6279 = vadd.f32 %v5884, %v6117
        %v6280 = vadd.f32 %v5885, %v6131
        %v6281 = vadd.f32 %v5886, %v6145
        %v6282 = vadd.f32 %v5887, %v6159
        %v6283 = vadd.f32 %v5888, %v6173
        %v6284 = vadd.f32 %v5889, %v6187
        %v6285 = vadd.f32 %v5890, %v6201
        %v6286 = vadd.f32 %v5891, %v6215
        %v6287 = vadd.f32 %v5892, %v6229
        %v6288 = vadd.f32 %v5893, %v6243
        %v6289 = vadd.f32 %v5894, %v6257
        %v6290 = vadd.f32 %v5895, %v6271
        %v6291 = vadd.f32 %v5896, %v6063
        %v6292 = vadd.f32 %v5897, %v6077
        %v6293 = vadd.f32 %v5898, %v6091
        %v6294 = vadd.f32 %v5899, %v6105
        %v6295 = vadd.f32 %v5900, %v6119
        %v6296 = vadd.f32 %v5901, %v6133
        %v6297 = vadd.f32 %v5902, %v6147
        %v6298 = vadd.f32 %v5903, %v6161
        %v6299 = vadd.f32 %v5904, %v6175
        %v6300 = vadd.f32 %v5905, %v6189
        %v6301 = vadd.f32 %v5906, %v6203
        %v6302 = vadd.f32 %v5907, %v6217
        %v6303 = vadd.f32 %v5908, %v6231
        %v6304 = vadd.f32 %v5909, %v6245
        %v6305 = vadd.f32 %v5910, %v6259
        %v6306 = vadd.f32 %v5911, %v6273
        %6307 = vrot.lane.b32.xlu0 %v3653, 112
        %v6308 = vpop.permute.xlu0 %6307
        %6309 = vrot.lane.b32.xlu0 %v3654, 112
        %v6310 = vpop.permute.xlu0 %6309
        %6311 = vrot.lane.b32.xlu0 %v3655, 112
        %v6312 = vpop.permute.xlu0 %6311
        %6313 = vrot.lane.b32.xlu0 %v3656, 112
        %v6314 = vpop.permute.xlu0 %6313
        %6315 = vrot.lane.b32.xlu0 %v3657, 112
        %v6316 = vpop.permute.xlu0 %6315
        %6317 = vrot.lane.b32.xlu0 %v3658, 112
        %v6318 = vpop.permute.xlu0 %6317
        %6319 = vrot.lane.b32.xlu0 %v3659, 112
        %v6320 = vpop.permute.xlu0 %6319
        %6321 = vrot.lane.b32.xlu0 %v3660, 112
        %v6322 = vpop.permute.xlu0 %6321
        %6323 = vrot.lane.b32.xlu0 %v3661, 112
        %v6324 = vpop.permute.xlu0 %6323
        %6325 = vrot.lane.b32.xlu0 %v3662, 112
        %v6326 = vpop.permute.xlu0 %6325
        %6327 = vrot.lane.b32.xlu0 %v3663, 112
        %v6328 = vpop.permute.xlu0 %6327
        %6329 = vrot.lane.b32.xlu0 %v3664, 112
        %v6330 = vpop.permute.xlu0 %6329
        %6331 = vrot.lane.b32.xlu0 %v3665, 112
        %v6332 = vpop.permute.xlu0 %6331
        %6333 = vrot.lane.b32.xlu0 %v3666, 112
        %v6334 = vpop.permute.xlu0 %6333
        %6335 = vrot.lane.b32.xlu0 %v3667, 112
        %v6336 = vpop.permute.xlu0 %6335
        %6337 = vrot.lane.b32.xlu0 %v3668, 112
        %v6338 = vpop.permute.xlu0 %6337
        %v6339 = vsel %vm2153, %v6336, %v6338
        %v6340 = vsel %vm2153, %v6334, %v6336
        %v6341 = vsel %vm2153, %v6332, %v6334
        %v6342 = vsel %vm2153, %v6330, %v6332
        %v6343 = vsel %vm2153, %v6328, %v6330
        %v6344 = vsel %vm2153, %v6326, %v6328
        %v6345 = vsel %vm2153, %v6324, %v6326
        %v6346 = vsel %vm2153, %v6322, %v6324
        %v6347 = vsel %vm2153, %v6320, %v6322
        %v6348 = vsel %vm2153, %v6318, %v6320
        %v6349 = vsel %vm2153, %v6316, %v6318
        %v6350 = vsel %vm2153, %v6314, %v6316
        %v6351 = vsel %vm2153, %v6312, %v6314
        %v6352 = vsel %vm2153, %v6310, %v6312
        %v6353 = vsel %vm2153, %v6308, %v6310
        %v6354 = vsel %vm2153, %v6338, %v6308
        %v6355 = vmul.f32 %v6353, %v2196
        %v6356 = vmul.f32 %v6352, %v2197
        %v6357 = vmul.f32 %v6351, %v2198
        %v6358 = vmul.f32 %v6350, %v2199
        %v6359 = vmul.f32 %v6349, %v2200
        %v6360 = vmul.f32 %v6348, %v2201
        %v6361 = vmul.f32 %v6347, %v2202
        %v6362 = vmul.f32 %v6346, %v2203
        %v6363 = vmul.f32 %v6345, %v2204
        %v6364 = vmul.f32 %v6344, %v2205
        %v6365 = vmul.f32 %v6343, %v2206
        %v6366 = vmul.f32 %v6342, %v2207
        %v6367 = vmul.f32 %v6341, %v2208
        %v6368 = vmul.f32 %v6340, %v2209
        %v6369 = vmul.f32 %v6339, %v2210
        %v6370 = vmul.f32 %v6354, %v2211
        %v6371 = vpack.c.bf16 %v6355, %v6355
        %v6372 = vpack.c.bf16 %v6356, %v6356
        %v6373 = vpack.c.bf16 %v6357, %v6357
        %v6374 = vpack.c.bf16 %v6358, %v6358
        %v6375 = vpack.c.bf16 %v6359, %v6359
        %v6376 = vpack.c.bf16 %v6360, %v6360
        %v6377 = vpack.c.bf16 %v6361, %v6361
        %v6378 = vpack.c.bf16 %v6362, %v6362
        %v6379 = vpack.c.bf16 %v6363, %v6363
        %v6380 = vpack.c.bf16 %v6364, %v6364
        %v6381 = vpack.c.bf16 %v6365, %v6365
        %v6382 = vpack.c.bf16 %v6366, %v6366
        %v6383 = vpack.c.bf16 %v6367, %v6367
        %v6384 = vpack.c.bf16 %v6368, %v6368
        %v6385 = vpack.c.bf16 %v6369, %v6369
        %v6386 = vpack.c.bf16 %v6370, %v6370
        %s6387 = scalar_lea.vmem %s10, 56
        %v6388 = vld [vmem:[%s6387] sm:$0xf]
        %v6389 = vld [vmem:[%s6387 + $0x4] sm:$0xf]
        %v6392 = vunpack.c.l.b16 %v6388
        %v6393 = vunpack.c.l.b16 %v6389
        %v6394 = vpack.c.b16 %v6393, %v6392
        %v6396 = vsel %vm3839, %v6394, 0
        %v6399 = vsel %vm3843, %v6371, 0
        %v6402 = vsel %vm3843, %v6372, 0
        %v6405 = vsel %vm3843, %v6373, 0
        %v6408 = vsel %vm3843, %v6374, 0
        %v6411 = vsel %vm3843, %v6375, 0
        %v6414 = vsel %vm3843, %v6376, 0
        %v6417 = vsel %vm3843, %v6377, 0
        %v6420 = vsel %vm3843, %v6378, 0
        %v6423 = vsel %vm3843, %v6379, 0
        %v6426 = vsel %vm3843, %v6380, 0
        %v6429 = vsel %vm3843, %v6381, 0
        %v6432 = vsel %vm3843, %v6382, 0
        %v6435 = vsel %vm3843, %v6383, 0
        %v6438 = vsel %vm3843, %v6384, 0
        %v6441 = vsel %vm3843, %v6385, 0
        %v6444 = vsel %vm3843, %v6386, 0
        %6446 = vmatpush.bf16.msra.mxu0 0
        %6447 = vmatpush.bf16.msra.mxu0 0
        %6448 = vmatpush.bf16.msra.mxu0 0
        %6449 = vmatpush.bf16.msra.mxu0 0
        %6450 = vmatpush.bf16.msra.mxu0 0
        %6451 = vmatpush.bf16.msra.mxu0 0
        %6452 = vmatpush.bf16.msra.mxu0 0
        %6453 = vmatpush.bf16.msra.mxu0 %v6399
        %6454 = vmatmul.bf16.gmra.mxu0 %v6396
        %v6455 = vpop.f32.mrf.mxu0
        %v6456 = vadd.f32 0.0, %v6455
        %v6457 = vpop.f32.mrf.mxu0
        %v6458 = vadd.f32 0.0, %v6457
        %6459 = vdwg.mxu0
        %6460 = vmatpush.bf16.msra.mxu0 0
        %6461 = vmatpush.bf16.msra.mxu0 0
        %6462 = vmatpush.bf16.msra.mxu0 0
        %6463 = vmatpush.bf16.msra.mxu0 0
        %6464 = vmatpush.bf16.msra.mxu0 0
        %6465 = vmatpush.bf16.msra.mxu0 0
        %6466 = vmatpush.bf16.msra.mxu0 0
        %6467 = vmatpush.bf16.msra.mxu0 %v6402
        %6468 = vmatmul.bf16.gmra.mxu0 %v6396
        %v6469 = vpop.f32.mrf.mxu0
        %v6470 = vadd.f32 0.0, %v6469
        %v6471 = vpop.f32.mrf.mxu0
        %v6472 = vadd.f32 0.0, %v6471
        %6473 = vdwg.mxu0
        %6474 = vmatpush.bf16.msra.mxu0 0
        %6475 = vmatpush.bf16.msra.mxu0 0
        %6476 = vmatpush.bf16.msra.mxu0 0
        %6477 = vmatpush.bf16.msra.mxu0 0
        %6478 = vmatpush.bf16.msra.mxu0 0
        %6479 = vmatpush.bf16.msra.mxu0 0
        %6480 = vmatpush.bf16.msra.mxu0 0
        %6481 = vmatpush.bf16.msra.mxu0 %v6405
        %6482 = vmatmul.bf16.gmra.mxu0 %v6396
        %v6483 = vpop.f32.mrf.mxu0
        %v6484 = vadd.f32 0.0, %v6483
        %v6485 = vpop.f32.mrf.mxu0
        %v6486 = vadd.f32 0.0, %v6485
        %6487 = vdwg.mxu0
        %6488 = vmatpush.bf16.msra.mxu0 0
        %6489 = vmatpush.bf16.msra.mxu0 0
        %6490 = vmatpush.bf16.msra.mxu0 0
        %6491 = vmatpush.bf16.msra.mxu0 0
        %6492 = vmatpush.bf16.msra.mxu0 0
        %6493 = vmatpush.bf16.msra.mxu0 0
        %6494 = vmatpush.bf16.msra.mxu0 0
        %6495 = vmatpush.bf16.msra.mxu0 %v6408
        %6496 = vmatmul.bf16.gmra.mxu0 %v6396
        %v6497 = vpop.f32.mrf.mxu0
        %v6498 = vadd.f32 0.0, %v6497
        %v6499 = vpop.f32.mrf.mxu0
        %v6500 = vadd.f32 0.0, %v6499
        %6501 = vdwg.mxu0
        %6502 = vmatpush.bf16.msra.mxu0 0
        %6503 = vmatpush.bf16.msra.mxu0 0
        %6504 = vmatpush.bf16.msra.mxu0 0
        %6505 = vmatpush.bf16.msra.mxu0 0
        %6506 = vmatpush.bf16.msra.mxu0 0
        %6507 = vmatpush.bf16.msra.mxu0 0
        %6508 = vmatpush.bf16.msra.mxu0 0
        %6509 = vmatpush.bf16.msra.mxu0 %v6411
        %6510 = vmatmul.bf16.gmra.mxu0 %v6396
        %v6511 = vpop.f32.mrf.mxu0
        %v6512 = vadd.f32 0.0, %v6511
        %v6513 = vpop.f32.mrf.mxu0
        %v6514 = vadd.f32 0.0, %v6513
        %6515 = vdwg.mxu0
        %6516 = vmatpush.bf16.msra.mxu0 0
        %6517 = vmatpush.bf16.msra.mxu0 0
        %6518 = vmatpush.bf16.msra.mxu0 0
        %6519 = vmatpush.bf16.msra.mxu0 0
        %6520 = vmatpush.bf16.msra.mxu0 0
        %6521 = vmatpush.bf16.msra.mxu0 0
        %6522 = vmatpush.bf16.msra.mxu0 0
        %6523 = vmatpush.bf16.msra.mxu0 %v6414
        %6524 = vmatmul.bf16.gmra.mxu0 %v6396
        %v6525 = vpop.f32.mrf.mxu0
        %v6526 = vadd.f32 0.0, %v6525
        %v6527 = vpop.f32.mrf.mxu0
        %v6528 = vadd.f32 0.0, %v6527
        %6529 = vdwg.mxu0
        %6530 = vmatpush.bf16.msra.mxu0 0
        %6531 = vmatpush.bf16.msra.mxu0 0
        %6532 = vmatpush.bf16.msra.mxu0 0
        %6533 = vmatpush.bf16.msra.mxu0 0
        %6534 = vmatpush.bf16.msra.mxu0 0
        %6535 = vmatpush.bf16.msra.mxu0 0
        %6536 = vmatpush.bf16.msra.mxu0 0
        %6537 = vmatpush.bf16.msra.mxu0 %v6417
        %6538 = vmatmul.bf16.gmra.mxu0 %v6396
        %v6539 = vpop.f32.mrf.mxu0
        %v6540 = vadd.f32 0.0, %v6539
        %v6541 = vpop.f32.mrf.mxu0
        %v6542 = vadd.f32 0.0, %v6541
        %6543 = vdwg.mxu0
        %6544 = vmatpush.bf16.msra.mxu0 0
        %6545 = vmatpush.bf16.msra.mxu0 0
        %6546 = vmatpush.bf16.msra.mxu0 0
        %6547 = vmatpush.bf16.msra.mxu0 0
        %6548 = vmatpush.bf16.msra.mxu0 0
        %6549 = vmatpush.bf16.msra.mxu0 0
        %6550 = vmatpush.bf16.msra.mxu0 0
        %6551 = vmatpush.bf16.msra.mxu0 %v6420
        %6552 = vmatmul.bf16.gmra.mxu0 %v6396
        %v6553 = vpop.f32.mrf.mxu0
        %v6554 = vadd.f32 0.0, %v6553
        %v6555 = vpop.f32.mrf.mxu0
        %v6556 = vadd.f32 0.0, %v6555
        %6557 = vdwg.mxu0
        %6558 = vmatpush.bf16.msra.mxu0 0
        %6559 = vmatpush.bf16.msra.mxu0 0
        %6560 = vmatpush.bf16.msra.mxu0 0
        %6561 = vmatpush.bf16.msra.mxu0 0
        %6562 = vmatpush.bf16.msra.mxu0 0
        %6563 = vmatpush.bf16.msra.mxu0 0
        %6564 = vmatpush.bf16.msra.mxu0 0
        %6565 = vmatpush.bf16.msra.mxu0 %v6423
        %6566 = vmatmul.bf16.gmra.mxu0 %v6396
        %v6567 = vpop.f32.mrf.mxu0
        %v6568 = vadd.f32 0.0, %v6567
        %v6569 = vpop.f32.mrf.mxu0
        %v6570 = vadd.f32 0.0, %v6569
        %6571 = vdwg.mxu0
        %6572 = vmatpush.bf16.msra.mxu0 0
        %6573 = vmatpush.bf16.msra.mxu0 0
        %6574 = vmatpush.bf16.msra.mxu0 0
        %6575 = vmatpush.bf16.msra.mxu0 0
        %6576 = vmatpush.bf16.msra.mxu0 0
        %6577 = vmatpush.bf16.msra.mxu0 0
        %6578 = vmatpush.bf16.msra.mxu0 0
        %6579 = vmatpush.bf16.msra.mxu0 %v6426
        %6580 = vmatmul.bf16.gmra.mxu0 %v6396
        %v6581 = vpop.f32.mrf.mxu0
        %v6582 = vadd.f32 0.0, %v6581
        %v6583 = vpop.f32.mrf.mxu0
        %v6584 = vadd.f32 0.0, %v6583
        %6585 = vdwg.mxu0
        %6586 = vmatpush.bf16.msra.mxu0 0
        %6587 = vmatpush.bf16.msra.mxu0 0
        %6588 = vmatpush.bf16.msra.mxu0 0
        %6589 = vmatpush.bf16.msra.mxu0 0
        %6590 = vmatpush.bf16.msra.mxu0 0
        %6591 = vmatpush.bf16.msra.mxu0 0
        %6592 = vmatpush.bf16.msra.mxu0 0
        %6593 = vmatpush.bf16.msra.mxu0 %v6429
        %6594 = vmatmul.bf16.gmra.mxu0 %v6396
        %v6595 = vpop.f32.mrf.mxu0
        %v6596 = vadd.f32 0.0, %v6595
        %v6597 = vpop.f32.mrf.mxu0
        %v6598 = vadd.f32 0.0, %v6597
        %6599 = vdwg.mxu0
        %6600 = vmatpush.bf16.msra.mxu0 0
        %6601 = vmatpush.bf16.msra.mxu0 0
        %6602 = vmatpush.bf16.msra.mxu0 0
        %6603 = vmatpush.bf16.msra.mxu0 0
        %6604 = vmatpush.bf16.msra.mxu0 0
        %6605 = vmatpush.bf16.msra.mxu0 0
        %6606 = vmatpush.bf16.msra.mxu0 0
        %6607 = vmatpush.bf16.msra.mxu0 %v6432
        %6608 = vmatmul.bf16.gmra.mxu0 %v6396
        %v6609 = vpop.f32.mrf.mxu0
        %v6610 = vadd.f32 0.0, %v6609
        %v6611 = vpop.f32.mrf.mxu0
        %v6612 = vadd.f32 0.0, %v6611
        %6613 = vdwg.mxu0
        %6614 = vmatpush.bf16.msra.mxu0 0
        %6615 = vmatpush.bf16.msra.mxu0 0
        %6616 = vmatpush.bf16.msra.mxu0 0
        %6617 = vmatpush.bf16.msra.mxu0 0
        %6618 = vmatpush.bf16.msra.mxu0 0
        %6619 = vmatpush.bf16.msra.mxu0 0
        %6620 = vmatpush.bf16.msra.mxu0 0
        %6621 = vmatpush.bf16.msra.mxu0 %v6435
        %6622 = vmatmul.bf16.gmra.mxu0 %v6396
        %v6623 = vpop.f32.mrf.mxu0
        %v6624 = vadd.f32 0.0, %v6623
        %v6625 = vpop.f32.mrf.mxu0
        %v6626 = vadd.f32 0.0, %v6625
        %6627 = vdwg.mxu0
        %6628 = vmatpush.bf16.msra.mxu0 0
        %6629 = vmatpush.bf16.msra.mxu0 0
        %6630 = vmatpush.bf16.msra.mxu0 0
        %6631 = vmatpush.bf16.msra.mxu0 0
        %6632 = vmatpush.bf16.msra.mxu0 0
        %6633 = vmatpush.bf16.msra.mxu0 0
        %6634 = vmatpush.bf16.msra.mxu0 0
        %6635 = vmatpush.bf16.msra.mxu0 %v6438
        %6636 = vmatmul.bf16.gmra.mxu0 %v6396
        %v6637 = vpop.f32.mrf.mxu0
        %v6638 = vadd.f32 0.0, %v6637
        %v6639 = vpop.f32.mrf.mxu0
        %v6640 = vadd.f32 0.0, %v6639
        %6641 = vdwg.mxu0
        %6642 = vmatpush.bf16.msra.mxu0 0
        %6643 = vmatpush.bf16.msra.mxu0 0
        %6644 = vmatpush.bf16.msra.mxu0 0
        %6645 = vmatpush.bf16.msra.mxu0 0
        %6646 = vmatpush.bf16.msra.mxu0 0
        %6647 = vmatpush.bf16.msra.mxu0 0
        %6648 = vmatpush.bf16.msra.mxu0 0
        %6649 = vmatpush.bf16.msra.mxu0 %v6441
        %6650 = vmatmul.bf16.gmra.mxu0 %v6396
        %v6651 = vpop.f32.mrf.mxu0
        %v6652 = vadd.f32 0.0, %v6651
        %v6653 = vpop.f32.mrf.mxu0
        %v6654 = vadd.f32 0.0, %v6653
        %6655 = vdwg.mxu0
        %6656 = vmatpush.bf16.msra.mxu0 0
        %6657 = vmatpush.bf16.msra.mxu0 0
        %6658 = vmatpush.bf16.msra.mxu0 0
        %6659 = vmatpush.bf16.msra.mxu0 0
        %6660 = vmatpush.bf16.msra.mxu0 0
        %6661 = vmatpush.bf16.msra.mxu0 0
        %6662 = vmatpush.bf16.msra.mxu0 0
        %6663 = vmatpush.bf16.msra.mxu0 %v6444
        %6664 = vmatmul.bf16.gmra.mxu0 %v6396
        %v6665 = vpop.f32.mrf.mxu0
        %v6666 = vadd.f32 0.0, %v6665
        %v6667 = vpop.f32.mrf.mxu0
        %v6668 = vadd.f32 0.0, %v6667
        %6669 = vdwg.mxu0
        %v6670 = vadd.f32 %v6275, %v6456
        %v6671 = vadd.f32 %v6276, %v6470
        %v6672 = vadd.f32 %v6277, %v6484
        %v6673 = vadd.f32 %v6278, %v6498
        %v6674 = vadd.f32 %v6279, %v6512
        %v6675 = vadd.f32 %v6280, %v6526
        %v6676 = vadd.f32 %v6281, %v6540
        %v6677 = vadd.f32 %v6282, %v6554
        %v6678 = vadd.f32 %v6283, %v6568
        %v6679 = vadd.f32 %v6284, %v6582
        %v6680 = vadd.f32 %v6285, %v6596
        %v6681 = vadd.f32 %v6286, %v6610
        %v6682 = vadd.f32 %v6287, %v6624
        %v6683 = vadd.f32 %v6288, %v6638
        %v6684 = vadd.f32 %v6289, %v6652
        %v6685 = vadd.f32 %v6290, %v6666
        %v6686 = vadd.f32 %v6291, %v6458
        %v6687 = vadd.f32 %v6292, %v6472
        %v6688 = vadd.f32 %v6293, %v6486
        %v6689 = vadd.f32 %v6294, %v6500
        %v6690 = vadd.f32 %v6295, %v6514
        %v6691 = vadd.f32 %v6296, %v6528
        %v6692 = vadd.f32 %v6297, %v6542
        %v6693 = vadd.f32 %v6298, %v6556
        %v6694 = vadd.f32 %v6299, %v6570
        %v6695 = vadd.f32 %v6300, %v6584
        %v6696 = vadd.f32 %v6301, %v6598
        %v6697 = vadd.f32 %v6302, %v6612
        %v6698 = vadd.f32 %v6303, %v6626
        %v6699 = vadd.f32 %v6304, %v6640
        %v6700 = vadd.f32 %v6305, %v6654
        %v6701 = vadd.f32 %v6306, %v6668
        %6702 = vrot.lane.b32.xlu0 %v3653, 111
        %v6703 = vpop.permute.xlu0 %6702
        %6704 = vrot.lane.b32.xlu0 %v3654, 111
        %v6705 = vpop.permute.xlu0 %6704
        %6706 = vrot.lane.b32.xlu0 %v3655, 111
        %v6707 = vpop.permute.xlu0 %6706
        %6708 = vrot.lane.b32.xlu0 %v3656, 111
        %v6709 = vpop.permute.xlu0 %6708
        %6710 = vrot.lane.b32.xlu0 %v3657, 111
        %v6711 = vpop.permute.xlu0 %6710
        %6712 = vrot.lane.b32.xlu0 %v3658, 111
        %v6713 = vpop.permute.xlu0 %6712
        %6714 = vrot.lane.b32.xlu0 %v3659, 111
        %v6715 = vpop.permute.xlu0 %6714
        %6716 = vrot.lane.b32.xlu0 %v3660, 111
        %v6717 = vpop.permute.xlu0 %6716
        %6718 = vrot.lane.b32.xlu0 %v3661, 111
        %v6719 = vpop.permute.xlu0 %6718
        %6720 = vrot.lane.b32.xlu0 %v3662, 111
        %v6721 = vpop.permute.xlu0 %6720
        %6722 = vrot.lane.b32.xlu0 %v3663, 111
        %v6723 = vpop.permute.xlu0 %6722
        %6724 = vrot.lane.b32.xlu0 %v3664, 111
        %v6725 = vpop.permute.xlu0 %6724
        %6726 = vrot.lane.b32.xlu0 %v3665, 111
        %v6727 = vpop.permute.xlu0 %6726
        %6728 = vrot.lane.b32.xlu0 %v3666, 111
        %v6729 = vpop.permute.xlu0 %6728
        %6730 = vrot.lane.b32.xlu0 %v3667, 111
        %v6731 = vpop.permute.xlu0 %6730
        %6732 = vrot.lane.b32.xlu0 %v3668, 111
        %v6733 = vpop.permute.xlu0 %6732
        %v6734 = vsel %vm2340, %v6731, %v6733
        %v6735 = vsel %vm2340, %v6729, %v6731
        %v6736 = vsel %vm2340, %v6727, %v6729
        %v6737 = vsel %vm2340, %v6725, %v6727
        %v6738 = vsel %vm2340, %v6723, %v6725
        %v6739 = vsel %vm2340, %v6721, %v6723
        %v6740 = vsel %vm2340, %v6719, %v6721
        %v6741 = vsel %vm2340, %v6717, %v6719
        %v6742 = vsel %vm2340, %v6715, %v6717
        %v6743 = vsel %vm2340, %v6713, %v6715
        %v6744 = vsel %vm2340, %v6711, %v6713
        %v6745 = vsel %vm2340, %v6709, %v6711
        %v6746 = vsel %vm2340, %v6707, %v6709
        %v6747 = vsel %vm2340, %v6705, %v6707
        %v6748 = vsel %vm2340, %v6703, %v6705
        %v6749 = vsel %vm2340, %v6733, %v6703
        %v6750 = vmul.f32 %v6748, %v2383
        %v6751 = vmul.f32 %v6747, %v2384
        %v6752 = vmul.f32 %v6746, %v2385
        %v6753 = vmul.f32 %v6745, %v2386
        %v6754 = vmul.f32 %v6744, %v2387
        %v6755 = vmul.f32 %v6743, %v2388
        %v6756 = vmul.f32 %v6742, %v2389
        %v6757 = vmul.f32 %v6741, %v2390
        %v6758 = vmul.f32 %v6740, %v2391
        %v6759 = vmul.f32 %v6739, %v2392
        %v6760 = vmul.f32 %v6738, %v2393
        %v6761 = vmul.f32 %v6737, %v2394
        %v6762 = vmul.f32 %v6736, %v2395
        %v6763 = vmul.f32 %v6735, %v2396
        %v6764 = vmul.f32 %v6734, %v2397
        %v6765 = vmul.f32 %v6749, %v2398
        %v6766 = vpack.c.bf16 %v6750, %v6750
        %v6767 = vpack.c.bf16 %v6751, %v6751
        %v6768 = vpack.c.bf16 %v6752, %v6752
        %v6769 = vpack.c.bf16 %v6753, %v6753
        %v6770 = vpack.c.bf16 %v6754, %v6754
        %v6771 = vpack.c.bf16 %v6755, %v6755
        %v6772 = vpack.c.bf16 %v6756, %v6756
        %v6773 = vpack.c.bf16 %v6757, %v6757
        %v6774 = vpack.c.bf16 %v6758, %v6758
        %v6775 = vpack.c.bf16 %v6759, %v6759
        %v6776 = vpack.c.bf16 %v6760, %v6760
        %v6777 = vpack.c.bf16 %v6761, %v6761
        %v6778 = vpack.c.bf16 %v6762, %v6762
        %v6779 = vpack.c.bf16 %v6763, %v6763
        %v6780 = vpack.c.bf16 %v6764, %v6764
        %v6781 = vpack.c.bf16 %v6765, %v6765
        %s6782 = scalar_lea.vmem %s10, 64
        %v6783 = vld [vmem:[%s6782] sm:$0xf]
        %v6784 = vld [vmem:[%s6782 + $0x4] sm:$0xf]
        %v6787 = vunpack.c.l.b16 %v6783
        %v6788 = vunpack.c.l.b16 %v6784
        %v6789 = vpack.c.b16 %v6788, %v6787
        %v6791 = vsel %vm3839, %v6789, 0
        %v6794 = vsel %vm3843, %v6766, 0
        %v6797 = vsel %vm3843, %v6767, 0
        %v6800 = vsel %vm3843, %v6768, 0
        %v6803 = vsel %vm3843, %v6769, 0
        %v6806 = vsel %vm3843, %v6770, 0
        %v6809 = vsel %vm3843, %v6771, 0
        %v6812 = vsel %vm3843, %v6772, 0
        %v6815 = vsel %vm3843, %v6773, 0
        %v6818 = vsel %vm3843, %v6774, 0
        %v6821 = vsel %vm3843, %v6775, 0
        %v6824 = vsel %vm3843, %v6776, 0
        %v6827 = vsel %vm3843, %v6777, 0
        %v6830 = vsel %vm3843, %v6778, 0
        %v6833 = vsel %vm3843, %v6779, 0
        %v6836 = vsel %vm3843, %v6780, 0
        %v6839 = vsel %vm3843, %v6781, 0
        %6841 = vmatpush.bf16.msra.mxu0 0
        %6842 = vmatpush.bf16.msra.mxu0 0
        %6843 = vmatpush.bf16.msra.mxu0 0
        %6844 = vmatpush.bf16.msra.mxu0 0
        %6845 = vmatpush.bf16.msra.mxu0 0
        %6846 = vmatpush.bf16.msra.mxu0 0
        %6847 = vmatpush.bf16.msra.mxu0 0
        %6848 = vmatpush.bf16.msra.mxu0 %v6794
        %6849 = vmatmul.bf16.gmra.mxu0 %v6791
        %v6850 = vpop.f32.mrf.mxu0
        %v6851 = vadd.f32 0.0, %v6850
        %v6852 = vpop.f32.mrf.mxu0
        %v6853 = vadd.f32 0.0, %v6852
        %6854 = vdwg.mxu0
        %6855 = vmatpush.bf16.msra.mxu0 0
        %6856 = vmatpush.bf16.msra.mxu0 0
        %6857 = vmatpush.bf16.msra.mxu0 0
        %6858 = vmatpush.bf16.msra.mxu0 0
        %6859 = vmatpush.bf16.msra.mxu0 0
        %6860 = vmatpush.bf16.msra.mxu0 0
        %6861 = vmatpush.bf16.msra.mxu0 0
        %6862 = vmatpush.bf16.msra.mxu0 %v6797
        %6863 = vmatmul.bf16.gmra.mxu0 %v6791
        %v6864 = vpop.f32.mrf.mxu0
        %v6865 = vadd.f32 0.0, %v6864
        %v6866 = vpop.f32.mrf.mxu0
        %v6867 = vadd.f32 0.0, %v6866
        %6868 = vdwg.mxu0
        %6869 = vmatpush.bf16.msra.mxu0 0
        %6870 = vmatpush.bf16.msra.mxu0 0
        %6871 = vmatpush.bf16.msra.mxu0 0
        %6872 = vmatpush.bf16.msra.mxu0 0
        %6873 = vmatpush.bf16.msra.mxu0 0
        %6874 = vmatpush.bf16.msra.mxu0 0
        %6875 = vmatpush.bf16.msra.mxu0 0
        %6876 = vmatpush.bf16.msra.mxu0 %v6800
        %6877 = vmatmul.bf16.gmra.mxu0 %v6791
        %v6878 = vpop.f32.mrf.mxu0
        %v6879 = vadd.f32 0.0, %v6878
        %v6880 = vpop.f32.mrf.mxu0
        %v6881 = vadd.f32 0.0, %v6880
        %6882 = vdwg.mxu0
        %6883 = vmatpush.bf16.msra.mxu0 0
        %6884 = vmatpush.bf16.msra.mxu0 0
        %6885 = vmatpush.bf16.msra.mxu0 0
        %6886 = vmatpush.bf16.msra.mxu0 0
        %6887 = vmatpush.bf16.msra.mxu0 0
        %6888 = vmatpush.bf16.msra.mxu0 0
        %6889 = vmatpush.bf16.msra.mxu0 0
        %6890 = vmatpush.bf16.msra.mxu0 %v6803
        %6891 = vmatmul.bf16.gmra.mxu0 %v6791
        %v6892 = vpop.f32.mrf.mxu0
        %v6893 = vadd.f32 0.0, %v6892
        %v6894 = vpop.f32.mrf.mxu0
        %v6895 = vadd.f32 0.0, %v6894
        %6896 = vdwg.mxu0
        %6897 = vmatpush.bf16.msra.mxu0 0
        %6898 = vmatpush.bf16.msra.mxu0 0
        %6899 = vmatpush.bf16.msra.mxu0 0
        %6900 = vmatpush.bf16.msra.mxu0 0
        %6901 = vmatpush.bf16.msra.mxu0 0
        %6902 = vmatpush.bf16.msra.mxu0 0
        %6903 = vmatpush.bf16.msra.mxu0 0
        %6904 = vmatpush.bf16.msra.mxu0 %v6806
        %6905 = vmatmul.bf16.gmra.mxu0 %v6791
        %v6906 = vpop.f32.mrf.mxu0
        %v6907 = vadd.f32 0.0, %v6906
        %v6908 = vpop.f32.mrf.mxu0
        %v6909 = vadd.f32 0.0, %v6908
        %6910 = vdwg.mxu0
        %6911 = vmatpush.bf16.msra.mxu0 0
        %6912 = vmatpush.bf16.msra.mxu0 0
        %6913 = vmatpush.bf16.msra.mxu0 0
        %6914 = vmatpush.bf16.msra.mxu0 0
        %6915 = vmatpush.bf16.msra.mxu0 0
        %6916 = vmatpush.bf16.msra.mxu0 0
        %6917 = vmatpush.bf16.msra.mxu0 0
        %6918 = vmatpush.bf16.msra.mxu0 %v6809
        %6919 = vmatmul.bf16.gmra.mxu0 %v6791
        %v6920 = vpop.f32.mrf.mxu0
        %v6921 = vadd.f32 0.0, %v6920
        %v6922 = vpop.f32.mrf.mxu0
        %v6923 = vadd.f32 0.0, %v6922
        %6924 = vdwg.mxu0
        %6925 = vmatpush.bf16.msra.mxu0 0
        %6926 = vmatpush.bf16.msra.mxu0 0
        %6927 = vmatpush.bf16.msra.mxu0 0
        %6928 = vmatpush.bf16.msra.mxu0 0
        %6929 = vmatpush.bf16.msra.mxu0 0
        %6930 = vmatpush.bf16.msra.mxu0 0
        %6931 = vmatpush.bf16.msra.mxu0 0
        %6932 = vmatpush.bf16.msra.mxu0 %v6812
        %6933 = vmatmul.bf16.gmra.mxu0 %v6791
        %v6934 = vpop.f32.mrf.mxu0
        %v6935 = vadd.f32 0.0, %v6934
        %v6936 = vpop.f32.mrf.mxu0
        %v6937 = vadd.f32 0.0, %v6936
        %6938 = vdwg.mxu0
        %6939 = vmatpush.bf16.msra.mxu0 0
        %6940 = vmatpush.bf16.msra.mxu0 0
        %6941 = vmatpush.bf16.msra.mxu0 0
        %6942 = vmatpush.bf16.msra.mxu0 0
        %6943 = vmatpush.bf16.msra.mxu0 0
        %6944 = vmatpush.bf16.msra.mxu0 0
        %6945 = vmatpush.bf16.msra.mxu0 0
        %6946 = vmatpush.bf16.msra.mxu0 %v6815
        %6947 = vmatmul.bf16.gmra.mxu0 %v6791
        %v6948 = vpop.f32.mrf.mxu0
        %v6949 = vadd.f32 0.0, %v6948
        %v6950 = vpop.f32.mrf.mxu0
        %v6951 = vadd.f32 0.0, %v6950
        %6952 = vdwg.mxu0
        %6953 = vmatpush.bf16.msra.mxu0 0
        %6954 = vmatpush.bf16.msra.mxu0 0
        %6955 = vmatpush.bf16.msra.mxu0 0
        %6956 = vmatpush.bf16.msra.mxu0 0
        %6957 = vmatpush.bf16.msra.mxu0 0
        %6958 = vmatpush.bf16.msra.mxu0 0
        %6959 = vmatpush.bf16.msra.mxu0 0
        %6960 = vmatpush.bf16.msra.mxu0 %v6818
        %6961 = vmatmul.bf16.gmra.mxu0 %v6791
        %v6962 = vpop.f32.mrf.mxu0
        %v6963 = vadd.f32 0.0, %v6962
        %v6964 = vpop.f32.mrf.mxu0
        %v6965 = vadd.f32 0.0, %v6964
        %6966 = vdwg.mxu0
        %6967 = vmatpush.bf16.msra.mxu0 0
        %6968 = vmatpush.bf16.msra.mxu0 0
        %6969 = vmatpush.bf16.msra.mxu0 0
        %6970 = vmatpush.bf16.msra.mxu0 0
        %6971 = vmatpush.bf16.msra.mxu0 0
        %6972 = vmatpush.bf16.msra.mxu0 0
        %6973 = vmatpush.bf16.msra.mxu0 0
        %6974 = vmatpush.bf16.msra.mxu0 %v6821
        %6975 = vmatmul.bf16.gmra.mxu0 %v6791
        %v6976 = vpop.f32.mrf.mxu0
        %v6977 = vadd.f32 0.0, %v6976
        %v6978 = vpop.f32.mrf.mxu0
        %v6979 = vadd.f32 0.0, %v6978
        %6980 = vdwg.mxu0
        %6981 = vmatpush.bf16.msra.mxu0 0
        %6982 = vmatpush.bf16.msra.mxu0 0
        %6983 = vmatpush.bf16.msra.mxu0 0
        %6984 = vmatpush.bf16.msra.mxu0 0
        %6985 = vmatpush.bf16.msra.mxu0 0
        %6986 = vmatpush.bf16.msra.mxu0 0
        %6987 = vmatpush.bf16.msra.mxu0 0
        %6988 = vmatpush.bf16.msra.mxu0 %v6824
        %6989 = vmatmul.bf16.gmra.mxu0 %v6791
        %v6990 = vpop.f32.mrf.mxu0
        %v6991 = vadd.f32 0.0, %v6990
        %v6992 = vpop.f32.mrf.mxu0
        %v6993 = vadd.f32 0.0, %v6992
        %6994 = vdwg.mxu0
        %6995 = vmatpush.bf16.msra.mxu0 0
        %6996 = vmatpush.bf16.msra.mxu0 0
        %6997 = vmatpush.bf16.msra.mxu0 0
        %6998 = vmatpush.bf16.msra.mxu0 0
        %6999 = vmatpush.bf16.msra.mxu0 0
        %7000 = vmatpush.bf16.msra.mxu0 0
        %7001 = vmatpush.bf16.msra.mxu0 0
        %7002 = vmatpush.bf16.msra.mxu0 %v6827
        %7003 = vmatmul.bf16.gmra.mxu0 %v6791
        %v7004 = vpop.f32.mrf.mxu0
        %v7005 = vadd.f32 0.0, %v7004
        %v7006 = vpop.f32.mrf.mxu0
        %v7007 = vadd.f32 0.0, %v7006
        %7008 = vdwg.mxu0
        %7009 = vmatpush.bf16.msra.mxu0 0
        %7010 = vmatpush.bf16.msra.mxu0 0
        %7011 = vmatpush.bf16.msra.mxu0 0
        %7012 = vmatpush.bf16.msra.mxu0 0
        %7013 = vmatpush.bf16.msra.mxu0 0
        %7014 = vmatpush.bf16.msra.mxu0 0
        %7015 = vmatpush.bf16.msra.mxu0 0
        %7016 = vmatpush.bf16.msra.mxu0 %v6830
        %7017 = vmatmul.bf16.gmra.mxu0 %v6791
        %v7018 = vpop.f32.mrf.mxu0
        %v7019 = vadd.f32 0.0, %v7018
        %v7020 = vpop.f32.mrf.mxu0
        %v7021 = vadd.f32 0.0, %v7020
        %7022 = vdwg.mxu0
        %7023 = vmatpush.bf16.msra.mxu0 0
        %7024 = vmatpush.bf16.msra.mxu0 0
        %7025 = vmatpush.bf16.msra.mxu0 0
        %7026 = vmatpush.bf16.msra.mxu0 0
        %7027 = vmatpush.bf16.msra.mxu0 0
        %7028 = vmatpush.bf16.msra.mxu0 0
        %7029 = vmatpush.bf16.msra.mxu0 0
        %7030 = vmatpush.bf16.msra.mxu0 %v6833
        %7031 = vmatmul.bf16.gmra.mxu0 %v6791
        %v7032 = vpop.f32.mrf.mxu0
        %v7033 = vadd.f32 0.0, %v7032
        %v7034 = vpop.f32.mrf.mxu0
        %v7035 = vadd.f32 0.0, %v7034
        %7036 = vdwg.mxu0
        %7037 = vmatpush.bf16.msra.mxu0 0
        %7038 = vmatpush.bf16.msra.mxu0 0
        %7039 = vmatpush.bf16.msra.mxu0 0
        %7040 = vmatpush.bf16.msra.mxu0 0
        %7041 = vmatpush.bf16.msra.mxu0 0
        %7042 = vmatpush.bf16.msra.mxu0 0
        %7043 = vmatpush.bf16.msra.mxu0 0
        %7044 = vmatpush.bf16.msra.mxu0 %v6836
        %7045 = vmatmul.bf16.gmra.mxu0 %v6791
        %v7046 = vpop.f32.mrf.mxu0
        %v7047 = vadd.f32 0.0, %v7046
        %v7048 = vpop.f32.mrf.mxu0
        %v7049 = vadd.f32 0.0, %v7048
        %7050 = vdwg.mxu0
        %7051 = vmatpush.bf16.msra.mxu0 0
        %7052 = vmatpush.bf16.msra.mxu0 0
        %7053 = vmatpush.bf16.msra.mxu0 0
        %7054 = vmatpush.bf16.msra.mxu0 0
        %7055 = vmatpush.bf16.msra.mxu0 0
        %7056 = vmatpush.bf16.msra.mxu0 0
        %7057 = vmatpush.bf16.msra.mxu0 0
        %7058 = vmatpush.bf16.msra.mxu0 %v6839
        %7059 = vmatmul.bf16.gmra.mxu0 %v6791
        %v7060 = vpop.f32.mrf.mxu0
        %v7061 = vadd.f32 0.0, %v7060
        %v7062 = vpop.f32.mrf.mxu0
        %v7063 = vadd.f32 0.0, %v7062
        %7064 = vdwg.mxu0
        %v7065 = vadd.f32 %v6670, %v6851
        %v7066 = vadd.f32 %v6671, %v6865
        %v7067 = vadd.f32 %v6672, %v6879
        %v7068 = vadd.f32 %v6673, %v6893
        %v7069 = vadd.f32 %v6674, %v6907
        %v7070 = vadd.f32 %v6675, %v6921
        %v7071 = vadd.f32 %v6676, %v6935
        %v7072 = vadd.f32 %v6677, %v6949
        %v7073 = vadd.f32 %v6678, %v6963
        %v7074 = vadd.f32 %v6679, %v6977
        %v7075 = vadd.f32 %v6680, %v6991
        %v7076 = vadd.f32 %v6681, %v7005
        %v7077 = vadd.f32 %v6682, %v7019
        %v7078 = vadd.f32 %v6683, %v7033
        %v7079 = vadd.f32 %v6684, %v7047
        %v7080 = vadd.f32 %v6685, %v7061
        %v7081 = vadd.f32 %v6686, %v6853
        %v7082 = vadd.f32 %v6687, %v6867
        %v7083 = vadd.f32 %v6688, %v6881
        %v7084 = vadd.f32 %v6689, %v6895
        %v7085 = vadd.f32 %v6690, %v6909
        %v7086 = vadd.f32 %v6691, %v6923
        %v7087 = vadd.f32 %v6692, %v6937
        %v7088 = vadd.f32 %v6693, %v6951
        %v7089 = vadd.f32 %v6694, %v6965
        %v7090 = vadd.f32 %v6695, %v6979
        %v7091 = vadd.f32 %v6696, %v6993
        %v7092 = vadd.f32 %v6697, %v7007
        %v7093 = vadd.f32 %v6698, %v7021
        %v7094 = vadd.f32 %v6699, %v7035
        %v7095 = vadd.f32 %v6700, %v7049
        %v7096 = vadd.f32 %v6701, %v7063
        %v7113 = vrot.slane %v7065, 4
        %v7114 = vrot.slane %v7066, 4
        %v7115 = vrot.slane %v7067, 4
        %v7116 = vrot.slane %v7068, 4
        %v7117 = vrot.slane %v7069, 4
        %v7118 = vrot.slane %v7070, 4
        %v7119 = vrot.slane %v7071, 4
        %v7120 = vrot.slane %v7072, 4
        %v7121 = vrot.slane %v7073, 4
        %v7122 = vrot.slane %v7074, 4
        %v7123 = vrot.slane %v7075, 4
        %v7124 = vrot.slane %v7076, 4
        %v7125 = vrot.slane %v7077, 4
        %v7126 = vrot.slane %v7078, 4
        %v7127 = vrot.slane %v7079, 4
        %v7128 = vrot.slane %v7080, 4
        %v7145 = vmax.f32 %v7065, %v7113
        %v7146 = vmax.f32 %v7066, %v7114
        %v7147 = vmax.f32 %v7067, %v7115
        %v7148 = vmax.f32 %v7068, %v7116
        %v7149 = vmax.f32 %v7069, %v7117
        %v7150 = vmax.f32 %v7070, %v7118
        %v7151 = vmax.f32 %v7071, %v7119
        %v7152 = vmax.f32 %v7072, %v7120
        %v7153 = vmax.f32 %v7073, %v7121
        %v7154 = vmax.f32 %v7074, %v7122
        %v7155 = vmax.f32 %v7075, %v7123
        %v7156 = vmax.f32 %v7076, %v7124
        %v7157 = vmax.f32 %v7077, %v7125
        %v7158 = vmax.f32 %v7078, %v7126
        %v7159 = vmax.f32 %v7079, %v7127
        %v7160 = vmax.f32 %v7080, %v7128
        %v7161 = vmax.f32 %v7145, %v7081
        %v7162 = vmax.f32 %v7146, %v7082
        %v7163 = vmax.f32 %v7147, %v7083
        %v7164 = vmax.f32 %v7148, %v7084
        %v7165 = vmax.f32 %v7149, %v7085
        %v7166 = vmax.f32 %v7150, %v7086
        %v7167 = vmax.f32 %v7151, %v7087
        %v7168 = vmax.f32 %v7152, %v7088
        %v7169 = vmax.f32 %v7153, %v7089
        %v7170 = vmax.f32 %v7154, %v7090
        %v7171 = vmax.f32 %v7155, %v7091
        %v7172 = vmax.f32 %v7156, %v7092
        %v7173 = vmax.f32 %v7157, %v7093
        %v7174 = vmax.f32 %v7158, %v7094
        %v7175 = vmax.f32 %v7159, %v7095
        %v7176 = vmax.f32 %v7160, %v7096
        %v7193 = vrot.slane %v7081, 4
        %v7194 = vrot.slane %v7082, 4
        %v7195 = vrot.slane %v7083, 4
        %v7196 = vrot.slane %v7084, 4
        %v7197 = vrot.slane %v7085, 4
        %v7198 = vrot.slane %v7086, 4
        %v7199 = vrot.slane %v7087, 4
        %v7200 = vrot.slane %v7088, 4
        %v7201 = vrot.slane %v7089, 4
        %v7202 = vrot.slane %v7090, 4
        %v7203 = vrot.slane %v7091, 4
        %v7204 = vrot.slane %v7092, 4
        %v7205 = vrot.slane %v7093, 4
        %v7206 = vrot.slane %v7094, 4
        %v7207 = vrot.slane %v7095, 4
        %v7208 = vrot.slane %v7096, 4
        %v7225 = vmax.f32 %v7161, %v7193
        %v7226 = vmax.f32 %v7162, %v7194
        %v7227 = vmax.f32 %v7163, %v7195
        %v7228 = vmax.f32 %v7164, %v7196
        %v7229 = vmax.f32 %v7165, %v7197
        %v7230 = vmax.f32 %v7166, %v7198
        %v7231 = vmax.f32 %v7167, %v7199
        %v7232 = vmax.f32 %v7168, %v7200
        %v7233 = vmax.f32 %v7169, %v7201
        %v7234 = vmax.f32 %v7170, %v7202
        %v7235 = vmax.f32 %v7171, %v7203
        %v7236 = vmax.f32 %v7172, %v7204
        %v7237 = vmax.f32 %v7173, %v7205
        %v7238 = vmax.f32 %v7174, %v7206
        %v7239 = vmax.f32 %v7175, %v7207
        %v7240 = vmax.f32 %v7176, %v7208
        %v7257 = vrot.slane %v3216, 4
        %v7258 = vrot.slane %v3242, 4
        %v7259 = vrot.slane %v3268, 4
        %v7260 = vrot.slane %v3294, 4
        %v7261 = vrot.slane %v3320, 4
        %v7262 = vrot.slane %v3346, 4
        %v7263 = vrot.slane %v3372, 4
        %v7264 = vrot.slane %v3398, 4
        %v7265 = vrot.slane %v3424, 4
        %v7266 = vrot.slane %v3450, 4
        %v7267 = vrot.slane %v3476, 4
        %v7268 = vrot.slane %v3502, 4
        %v7269 = vrot.slane %v3528, 4
        %v7270 = vrot.slane %v3554, 4
        %v7271 = vrot.slane %v3580, 4
        %v7272 = vrot.slane %v3606, 4
        %v7289 = vsel %vm3843, %v7225, %v7257
        %v7290 = vsel %vm3843, %v7226, %v7258
        %v7291 = vsel %vm3843, %v7227, %v7259
        %v7292 = vsel %vm3843, %v7228, %v7260
        %v7293 = vsel %vm3843, %v7229, %v7261
        %v7294 = vsel %vm3843, %v7230, %v7262
        %v7295 = vsel %vm3843, %v7231, %v7263
        %v7296 = vsel %vm3843, %v7232, %v7264
        %v7297 = vsel %vm3843, %v7233, %v7265
        %v7298 = vsel %vm3843, %v7234, %v7266
        %v7299 = vsel %vm3843, %v7235, %v7267
        %v7300 = vsel %vm3843, %v7236, %v7268
        %v7301 = vsel %vm3843, %v7237, %v7269
        %v7302 = vsel %vm3843, %v7238, %v7270
        %v7303 = vsel %vm3843, %v7239, %v7271
        %v7304 = vsel %vm3843, %v7240, %v7272
        %7305 = vst [vmem:[%s423] sm:$0xff] %v7289
        %7306 = vst [vmem:[%s423 + $0x8] sm:$0xff] %v7290
        %7307 = vst [vmem:[%s423 + $0x10] sm:$0xff] %v7291
        %7308 = vst [vmem:[%s423 + $0x18] sm:$0xff] %v7292
        %7309 = vst [vmem:[%s423 + $0x20] sm:$0xff] %v7293
        %7310 = vst [vmem:[%s423 + $0x28] sm:$0xff] %v7294
        %7311 = vst [vmem:[%s423 + $0x30] sm:$0xff] %v7295
        %7312 = vst [vmem:[%s423 + $0x38] sm:$0xff] %v7296
        %7313 = vst [vmem:[%s423 + $0x40] sm:$0xff] %v7297
        %7314 = vst [vmem:[%s423 + $0x48] sm:$0xff] %v7298
        %7315 = vst [vmem:[%s423 + $0x50] sm:$0xff] %v7299
        %7316 = vst [vmem:[%s423 + $0x58] sm:$0xff] %v7300
        %7317 = vst [vmem:[%s423 + $0x60] sm:$0xff] %v7301
        %7318 = vst [vmem:[%s423 + $0x68] sm:$0xff] %v7302
        %7319 = vst [vmem:[%s423 + $0x70] sm:$0xff] %v7303
        %7320 = vst [vmem:[%s423 + $0x78] sm:$0xff] %v7304
        %7321 = vst [vmem:[%s423 + $0x80] sm:$0xff] %v427
        %7322 = vst [vmem:[%s423 + $0x88] sm:$0xff] %v428
        %7323 = vst [vmem:[%s423 + $0x90] sm:$0xff] %v429
        %7324 = vst [vmem:[%s423 + $0x98] sm:$0xff] %v430
        %7325 = vst [vmem:[%s423 + $0xa0] sm:$0xff] %v431
        %7326 = vst [vmem:[%s423 + $0xa8] sm:$0xff] %v432
        %7327 = vst [vmem:[%s423 + $0xb0] sm:$0xff] %v433
        %7328 = vst [vmem:[%s423 + $0xb8] sm:$0xff] %v434
        %7329 = vst [vmem:[%s423 + $0xc0] sm:$0xff] %v435
        %7330 = vst [vmem:[%s423 + $0xc8] sm:$0xff] %v436
        %7331 = vst [vmem:[%s423 + $0xd0] sm:$0xff] %v437
        %7332 = vst [vmem:[%s423 + $0xd8] sm:$0xff] %v438
        %7333 = vst [vmem:[%s423 + $0xe0] sm:$0xff] %v439
        %7334 = vst [vmem:[%s423 + $0xe8] sm:$0xff] %v440
        %7335 = vst [vmem:[%s423 + $0xf0] sm:$0xff] %v441
        %7336 = vst [vmem:[%s423 + $0xf8] sm:$0xff] %v442
        %s7337 = sand.u32 %s273, 1
        %s7338 = scalar_lea.sflag [#allocation4], %s7337
        %s7339 = sand.u32 %s273, 1
        %s7340 = smul.addr %s7339, 256
        %s7341 = scalar_lea.vmem [#allocation7], %s7340
        // Predicated region
        $region73: #{tpu_custom_call.1} parent=63 // pred_check
          %p7342 = pneg %p283
        $region74: #{tpu_custom_call.1} parent=63 // pred_check_branch
          %7344 = sbr.rel (%p7342) target = $region76
        $region75: #{tpu_custom_call.1} parent=63 // pred_region
          %s7345 = smul.u32 16, %s29
          %7347 = vsyncadd %s7338, 0
          %s7348 = smul.addr %s7345, 8
          %s7349 = scalar_lea.hbm %s11, %s7348
          %s7350 = sshll.u32 %s7341, 4
          %s7351 = int_to_ptr.vmem [resolvable:$true] %s7350
          %s7352 = sshll.u32 %s7349, 4
          %s7353 = int_to_ptr.hbm [resolvable:$true] %s7352
          %7358 = dma.vmem_to_hbm [thread:$0]  %s7351, 4096, %s7353, %s7338, 2048, 4096, 128
        $region76: #{tpu_custom_call.1} parent=63 // pred_fallthru
          _
      $region64: #{tpu_custom_call.1} parent=5 // pred_fallthru
        _
      %p7359 = scmp.le.s32.totalorder 2, %s24
      // Predicated region
      $region77: #{tpu_custom_call.1} parent=5 // pred_check
        %p7360 = pneg %p7359
      $region78: #{tpu_custom_call.1} parent=5 // pred_check_branch
        %7362 = sbr.rel (%p7360) target = $region80
      $region79: #{tpu_custom_call.1} parent=5 // pred_region
        %s7363 = ssub.s32 %s24, 2
        // Predicated region
        $region81: #{tpu_custom_call.1} parent=79 // pred_check
          %p7364 = pneg %p289
        $region82: #{tpu_custom_call.1} parent=79 // pred_check_branch
          %7366 = sbr.rel (%p7364) target = $region84
        $region83: #{tpu_custom_call.1} parent=79 // pred_region
          %s7367 = sand.u32 %s274, 1
          %s7368 = scalar_lea.sflag [#allocation4], %s7367
          %s7369 = sand.u32 %s274, 1
          %s7370 = smul.addr %s7369, 256
          %s7371 = scalar_lea.vmem [#allocation7], %s7370
          %7373 = dma.done %s7368, 4096
        $region84: #{tpu_custom_call.1} parent=79 // pred_fallthru
          _
      $region80: #{tpu_custom_call.1} parent=5 // pred_fallthru
        _
    $region6: #{tpu_custom_call.1} parent=1 // loop_footer
      %s28 = sadd.s32 1, %s24
    $region7: #{tpu_custom_call.1} parent=1 // loop_footer_branch
      %23 = sbr.rel target = $region3
    $region8: #{tpu_custom_call.1} parent=1 // loop_exit
      _
    %7374 = vsyncpa [#allocation3], 1
    %s7375 = scalar_lea.sflag [#allocation3], 1
    %7376 = vsyncpa %s7375, 1
    %7377 = vsyncpa [#allocation6], 1
    %7378 = vsyncpa [#allocation4], 1
    %s7379 = scalar_lea.sflag [#allocation4], 1
    %7380 = vsyncpa %s7379, 1

</llo_original>
